<compile_context>
chip_gen: v7x
topology: tpu7x:2x2x1
jax: 0.10.0
libtpu: 0.0.40
codegen_flags: <defaults>
</compile_context>

<pallas_src>
import functools

import jax
import jax.numpy as jnp
from jax import lax
from jax.experimental import pallas as pl
from jax.experimental.pallas import tpu as pltpu


_VMEM_LIMIT = 32 * 1024 * 1024          # explicit scoped-VMEM budget (safe on v5e/v6e/v7x)


def _round_up(a, b):
    return (a + b - 1) // b * b


def _choose_tile(dim, target):
    """Return (tile, padded_dim) with tile | padded_dim and tile friendly to (8/16,128) tiling."""
    if dim <= target:
        return dim, dim
    for t in (target, target // 2, target // 4):
        if dim % t == 0:
            return t, dim
    return target, _round_up(dim, target)


# ---------------------------------------------------------------------------
# Kernel 1: K-tiled fused matmul   out = act(x @ w + bias)
# ---------------------------------------------------------------------------
def _fused_matmul_kernel(x_ref, w_ref, b_ref, o_ref, acc_ref, *, relu):
    @pl.when(pl.program_id(1) == 0)
    def _init():
        acc_ref[...] = jnp.zeros_like(acc_ref)

    acc_ref[...] += jnp.dot(x_ref[...], w_ref[...], preferred_element_type=jnp.float32)

    @pl.when(pl.program_id(1) == pl.num_programs(1) - 1)
    def _finalize():
        out = acc_ref[...] + b_ref[...]
        if relu:
            out = jnp.maximum(out, 0.0)
        o_ref[...] = out.astype(o_ref.dtype)


def fused_matmul(x, w, bias, *, relu, out_dtype):
    """x: [M, K], w: [K, N] (bf16, BN scale pre-folded), bias: [1, N] f32 -> [M, N]."""
    x = x.astype(jnp.bfloat16)
    w = w.astype(jnp.bfloat16)
    M, K = x.shape
    N = w.shape[1]
    tm, Mp = _choose_tile(_round_up(M, 16), 256)
    tk, Kp = _choose_tile(_round_up(K, 128), 512)
    if (Mp, Kp) != (M, K):
        x = jnp.pad(x, ((0, Mp - M), (0, Kp - K)))
    if Kp != K:
        w = jnp.pad(w, ((0, Kp - K), (0, 0)))
    bias2 = bias.reshape(1, N).astype(jnp.float32)
    nm, nk = Mp // tm, Kp // tk

    out = pl.pallas_call(
        functools.partial(_fused_matmul_kernel, relu=relu),
        out_shape=jax.ShapeDtypeStruct((Mp, N), out_dtype),
        grid_spec=pltpu.PrefetchScalarGridSpec(
            num_scalar_prefetch=0,
            grid=(nm, nk),
            in_specs=[
                pl.BlockSpec((tm, tk), lambda i, k: (i, k)),
                pl.BlockSpec((tk, N), lambda i, k: (k, 0)),
                pl.BlockSpec((1, N), lambda i, k: (0, 0)),
            ],
            out_specs=pl.BlockSpec((tm, N), lambda i, k: (i, 0)),
            scratch_shapes=[pltpu.VMEM((tm, N), jnp.float32)],
        ),
        compiler_params=pltpu.CompilerParams(
            dimension_semantics=("parallel", "arbitrary"),
            vmem_limit_bytes=_VMEM_LIMIT,
        ),
        cost_estimate=pl.CostEstimate(
            flops=2 * Mp * Kp * N,
            transcendentals=0,
            bytes_accessed=Mp * Kp * 2 + Kp * N * 2 + Mp * N * jnp.dtype(out_dtype).itemsize,
        ),
    )(x, w, bias2)
    return out[:M] if Mp != M else out


# ---------------------------------------------------------------------------
# Kernel 2: fused ASPP concat + 1x1 projection (+BN+ReLU).  cat is never materialized.
# ---------------------------------------------------------------------------
def _aspp_proj_kernel(b0_ref, b1_ref, b2_ref, b3_ref, w_ref, pool_ref, bias_ref, o_ref):
    acc = jnp.dot(b0_ref[0], w_ref[0], preferred_element_type=jnp.float32)
    acc += jnp.dot(b1_ref[0], w_ref[1], preferred_element_type=jnp.float32)
    acc += jnp.dot(b2_ref[0], w_ref[2], preferred_element_type=jnp.float32)
    acc += jnp.dot(b3_ref[0], w_ref[3], preferred_element_type=jnp.float32)
    acc = acc + pool_ref[0] + bias_ref[...]
    o_ref[0] = jnp.maximum(acc, 0.0).astype(o_ref.dtype)


def aspp_project(b0, b1, b2, b3, w_stack, pool_row, bias):
    """b*: [B,HW,256] bf16, w_stack: [4,256,256] bf16, pool_row: [B,1,256] f32 -> [B,HW,256] bf16."""
    B, HW, C = b0.shape
    thw, HWp = _choose_tile(_round_up(HW, 16), 256)
    if HWp != HW:
        pad = ((0, 0), (0, HWp - HW), (0, 0))
        b0, b1, b2, b3 = (jnp.pad(t, pad) for t in (b0, b1, b2, b3))

    out = pl.pallas_call(
        _aspp_proj_kernel,
        out_shape=jax.ShapeDtypeStruct((B, HWp, C), jnp.bfloat16),
        grid_spec=pltpu.PrefetchScalarGridSpec(
            num_scalar_prefetch=0,
            grid=(B, HWp // thw),
            in_specs=[
                pl.BlockSpec((1, thw, C), lambda b, m: (b, m, 0)),
                pl.BlockSpec((1, thw, C), lambda b, m: (b, m, 0)),
                pl.BlockSpec((1, thw, C), lambda b, m: (b, m, 0)),
                pl.BlockSpec((1, thw, C), lambda b, m: (b, m, 0)),
                pl.BlockSpec((4, C, C), lambda b, m: (0, 0, 0)),
                pl.BlockSpec((1, 1, C), lambda b, m: (b, 0, 0)),
                pl.BlockSpec((1, C), lambda b, m: (0, 0)),
            ],
            out_specs=pl.BlockSpec((1, thw, C), lambda b, m: (b, m, 0)),
        ),
        compiler_params=pltpu.CompilerParams(
            dimension_semantics=("parallel", "parallel"),
            vmem_limit_bytes=_VMEM_LIMIT,
        ),
        cost_estimate=pl.CostEstimate(
            flops=2 * B * HWp * C * (4 * C),
            transcendentals=0,
            bytes_accessed=4 * B * HWp * C * 2 + 4 * C * C * 2 + B * HWp * C * 2,
        ),
    )(b0, b1, b2, b3, w_stack, pool_row, bias)
    return out[:, :HW] if HWp != HW else out


# ---------------------------------------------------------------------------
# Kernel 3: classifier with per-sample folded weights, lane-dense (128-padded) output.
# ---------------------------------------------------------------------------
def _classifier_kernel(x_ref, w_ref, b_ref, o_ref):
    acc = jnp.dot(x_ref[0], w_ref[0], preferred_element_type=jnp.float32)
    o_ref[0] = (acc + b_ref[...]).astype(o_ref.dtype)


def classifier_call(x_flat, w_fold, bias_pad):
    """x_flat: [B,HW,256] bf16, w_fold: [B,256,NCp] bf16, bias_pad: [1,NCp] f32 -> [B,HW,NCp] f32."""
    B, HW, C = x_flat.shape
    NCp = w_fold.shape[-1]
    thw, HWp = _choose_tile(_round_up(HW, 16), 256)
    if HWp != HW:
        x_flat = jnp.pad(x_flat, ((0, 0), (0, HWp - HW), (0, 0)))

    out = pl.pallas_call(
        _classifier_kernel,
        out_shape=jax.ShapeDtypeStruct((B, HWp, NCp), jnp.float32),
        grid_spec=pltpu.PrefetchScalarGridSpec(
            num_scalar_prefetch=0,
            grid=(B, HWp // thw),
            in_specs=[
                pl.BlockSpec((1, thw, C), lambda b, m: (b, m, 0)),
                pl.BlockSpec((1, C, NCp), lambda b, m: (b, 0, 0)),
                pl.BlockSpec((1, NCp), lambda b, m: (0, 0)),
            ],
            out_specs=pl.BlockSpec((1, thw, NCp), lambda b, m: (b, m, 0)),
        ),
        compiler_params=pltpu.CompilerParams(
            dimension_semantics=("parallel", "parallel"),
            vmem_limit_bytes=_VMEM_LIMIT,
        ),
        cost_estimate=pl.CostEstimate(
            flops=2 * B * HWp * C * NCp,
            transcendentals=0,
            bytes_accessed=B * HWp * C * 2 + B * C * NCp * 2 + B * HWp * NCp * 4,
        ),
    )(x_flat, w_fold, bias_pad)
    return out[:, :HW] if HWp != HW else out


# ---------------------------------------------------------------------------
# Glue: im2col for (possibly dilated) 3x3 "same" convs (runs in bf16)
# ---------------------------------------------------------------------------
def im2col_3x3(x_nhwc, dilation):
    B, H, W, C = x_nhwc.shape
    r = dilation
    xp = jnp.pad(x_nhwc, ((0, 0), (r, r), (r, r), (0, 0)))
    cols = []
    for ky in range(3):
        for kx in range(3):
            cols.append(xp[:, ky * r:ky * r + H, kx * r:kx * r + W, :])
    return jnp.concatenate(cols, axis=-1)          # [B, H, W, 9*C], last axis (ky, kx, c)


# ---------------------------------------------------------------------------
# Parameters: raw f32 (weights HWIO / [K,N], BN folded to scale/bias) + bf16 kernel-side prep
# ---------------------------------------------------------------------------
def init_params(key, in_channels, num_classes):
    keys = iter(jax.random.split(key, 48))

    def conv_w(shape):
        fan_in = 1
        for d in shape[:-1]:
            fan_in *= d
        return jax.random.normal(next(keys), shape, jnp.float32) / jnp.sqrt(float(fan_in))

    def bn(c):  # eval-mode BatchNorm folded into affine scale/bias
        gamma = 1.0 + 0.1 * jax.random.normal(next(keys), (c,), jnp.float32)
        beta = 0.1 * jax.random.normal(next(keys), (c,), jnp.float32)
        mean = 0.1 * jax.random.normal(next(keys), (c,), jnp.float32)
        var = 1.0 + 0.1 * jnp.abs(jax.random.normal(next(keys), (c,), jnp.float32))
        scale = gamma / jnp.sqrt(var + 1e-5)
        bias = beta - mean * scale
        return scale, bias

    p = {}
    p['aspp0_w'] = conv_w((in_channels, 256))                    # ASPP 1x1 branch
    p['aspp0_scale'], p['aspp0_bias'] = bn(256)
    for i, _r in enumerate((12, 24, 36), start=1):               # ASPP dilated 3x3 branches
        p[f'aspp{i}_w'] = conv_w((3, 3, in_channels, 256))
        p[f'aspp{i}_scale'], p[f'aspp{i}_bias'] = bn(256)
    p['aspp_pool_w'] = conv_w((in_channels, 256))                # ASPP global-pool branch
    p['aspp_pool_scale'], p['aspp_pool_bias'] = bn(256)
    p['proj_w'] = conv_w((5 * 256, 256))                         # ASPP projection 1x1
    p['proj_scale'], p['proj_bias'] = bn(256)
    p['feat_w'] = conv_w((3, 3, 256, 256))                       # head 3x3 conv
    p['feat_scale'], p['feat_bias'] = bn(256)
    p['cls_w'] = conv_w((256, num_classes))                      # classifier 1x1 conv (+bias)
    p['cls_b'] = 0.1 * jax.random.normal(next(keys), (num_classes,), jnp.float32)
    return p


def prepare_params(p, num_classes):
    """Fold BN scale into weights, cast weights to bf16, pad classifier to 128 lanes."""
    q = {}
    q['aspp0_w'] = (p['aspp0_w'] * p['aspp0_scale'][None, :]).astype(jnp.bfloat16)
    q['aspp0_b'] = p['aspp0_bias'].reshape(1, -1)
    for i in (1, 2, 3):
        w = p[f'aspp{i}_w'].reshape(-1, 256) * p[f'aspp{i}_scale'][None, :]
        q[f'aspp{i}_w'] = w.astype(jnp.bfloat16)
        q[f'aspp{i}_b'] = p[f'aspp{i}_bias'].reshape(1, -1)
    q['pool_w'] = (p['aspp_pool_w'] * p['aspp_pool_scale'][None, :]).astype(jnp.bfloat16)
    q['pool_b'] = p['aspp_pool_bias'].reshape(1, -1)
    wproj = (p['proj_w'] * p['proj_scale'][None, :]).reshape(5, 256, 256)
    q['proj_w03'] = wproj[:4].astype(jnp.bfloat16)               # chunks multiplying b0..b3
    q['proj_w4'] = wproj[4].astype(jnp.bfloat16)                 # chunk multiplying pooled branch
    q['proj_b'] = p['proj_bias'].reshape(1, -1)
    q['feat_w'] = (p['feat_w'].reshape(-1, 256) * p['feat_scale'][None, :]).astype(jnp.bfloat16)
    q['feat_b'] = p['feat_bias'].reshape(1, -1)
    ncp = max(128, _round_up(num_classes, 128))
    q['cls_w_pad'] = jnp.zeros((256, ncp), jnp.float32).at[:, :num_classes].set(p['cls_w'])
    q['cls_b_pad'] = jnp.zeros((1, ncp), jnp.float32).at[0, :num_classes].set(p['cls_b'])
    return q


# ---------------------------------------------------------------------------
# Forward pass (tensor-alpha branch of NbsDeepLabHead.forward)
# ---------------------------------------------------------------------------
def nbs_deeplab_head_forward(x_nchw, alpha, params, num_classes):
    x = jnp.transpose(x_nchw, (0, 2, 3, 1)).astype(jnp.float32)  # NCHW -> NHWC
    B, H, W, Cin = x.shape
    HW = H * W
    q = prepare_params(params, num_classes)
    x_bf = x.astype(jnp.bfloat16)

    # --- ASPP branches: 1x1 and dilated 3x3 convs as bf16 MXU matmuls (BN folded) ---
    b0 = fused_matmul(x_bf.reshape(-1, Cin), q['aspp0_w'], q['aspp0_b'],
                      relu=True, out_dtype=jnp.bfloat16)
    branches = [b0.reshape(B, HW, 256)]
    for i, rate in enumerate((12, 24, 36), start=1):
        patches = im2col_3x3(x_bf, rate).reshape(-1, 9 * Cin)
        bi = fused_matmul(patches, q[f'aspp{i}_w'], q[f'aspp{i}_b'],
                          relu=True, out_dtype=jnp.bfloat16)
        branches.append(bi.reshape(B, HW, 256))

    # --- ASPP global-pool branch: AdaptiveAvgPool2d(1) + 1x1 conv + BN + ReLU ---
    pooled = jnp.mean(x, axis=(1, 2))                            # [B, Cin]
    b4 = fused_matmul(pooled, q['pool_w'], q['pool_b'], relu=True, out_dtype=jnp.float32)
    # bilinear upsample of a 1x1 map == broadcast; fold it into the projection as a per-batch row
    pool_row = jnp.dot(b4.astype(jnp.bfloat16), q['proj_w4'],
                       preferred_element_type=jnp.float32).reshape(B, 1, 256)

    # --- fused concat + 1x1 projection + BN + ReLU (cat [B,H,W,1280] never materialized) ---
    proj = aspp_project(branches[0], branches[1], branches[2], branches[3],
                        q['proj_w03'], pool_row, q['proj_b'])    # [B, HW, 256] bf16
    # nn.Dropout(0.5) is identity in eval mode.

    # --- head 3x3 conv (pad 1) + BN + ReLU ---
    patches = im2col_3x3(proj.reshape(B, H, W, 256), 1).reshape(-1, 9 * 256)
    feat = fused_matmul(patches, q['feat_w'], q['feat_b'], relu=True, out_dtype=jnp.bfloat16)
    feat = feat.reshape(B, HW, 256)

    # --- classifier with tensor alpha: w = exp(-interp_nearest(alpha, 256)), folded into Wc ---
    Ka = alpha.shape[1]
    idx = (jnp.arange(256) * Ka) // 256                          # PyTorch nearest interpolation
    w_chan = jnp.exp(-alpha[:, idx]).astype(jnp.float32)         # [B, 256]
    w_fold = (w_chan[:, :, None] * q['cls_w_pad'][None]).astype(jnp.bfloat16)  # [B, 256, NCp]
    out = classifier_call(feat, w_fold, q['cls_b_pad'])          # [B, HW, NCp] f32, lane-dense
    out = out[:, :, :num_classes].reshape(B, H, W, num_classes)
    # TODO(synk): the `isinstance(alpha, int)` branch (torch.rand Monte-Carlo channel masks +
    # bilinear F.interpolate to 513x513) is stochastic and not implemented here.
    return jnp.transpose(out, (0, 3, 1, 2))                      # back to NCHW


# ---------------------------------------------------------------------------
# Pure-JAX f32 reference (lax.conv_general_dilated) for correctness checking
# ---------------------------------------------------------------------------
def ref_forward(x_nchw, alpha, params, num_classes):
    x = jnp.transpose(x_nchw, (0, 2, 3, 1)).astype(jnp.float32)
    B, H, W, Cin = x.shape
    dn = ('NHWC', 'HWIO', 'NHWC')

    def c1(inp, w, s, b, relu=True):
        y = lax.conv_general_dilated(inp, w.reshape(1, 1, *w.shape), (1, 1), 'VALID',
                                     dimension_numbers=dn)
        y = y * s + b
        return jnp.maximum(y, 0.0) if relu else y

    def c3(inp, w, s, b, r, relu=True):
        y = lax.conv_general_dilated(inp, w, (1, 1), [(r, r), (r, r)],
                                     rhs_dilation=(r, r), dimension_numbers=dn)
        y = y * s + b
        return jnp.maximum(y, 0.0) if relu else y

    b0 = c1(x, params['aspp0_w'], params['aspp0_scale'], params['aspp0_bias'])
    b1 = c3(x, params['aspp1_w'], params['aspp1_scale'], params['aspp1_bias'], 12)
    b2 = c3(x, params['aspp2_w'], params['aspp2_scale'], params['aspp2_bias'], 24)
    b3 = c3(x, params['aspp3_w'], params['aspp3_scale'], params['aspp3_bias'], 36)
    pooled = jnp.mean(x, axis=(1, 2), keepdims=True)
    b4 = c1(pooled, params['aspp_pool_w'], params['aspp_pool_scale'], params['aspp_pool_bias'])
    b4 = jnp.broadcast_to(b4, (B, H, W, 256))
    cat = jnp.concatenate([b0, b1, b2, b3, b4], axis=-1)
    proj = c1(cat, params['proj_w'], params['proj_scale'], params['proj_bias'])
    feat = c3(proj, params['feat_w'], params['feat_scale'], params['feat_bias'], 1)
    K = alpha.shape[1]
    idx = (jnp.arange(256) * K) // 256
    w_chan = jnp.exp(-alpha[:, idx])
    out = jnp.einsum('bhwc,cn->bhwn', feat * w_chan[:, None, None, :], params['cls_w'])
    out = out + params['cls_b']
    return jnp.transpose(out, (0, 3, 1, 2))


# ---------------------------------------------------------------------------
if __name__ == "__main__":
    key = jax.random.PRNGKey(0)
    k_x, k_a, k_p = jax.random.split(key, 3)

    in_channels, num_classes = 4, 5
    B, H, W = 2, 16, 16

    x = jax.random.normal(k_x, (B, in_channels, H, W), jnp.float32)     # NCHW like PyTorch
    alpha = jax.random.uniform(k_a, (B, 8), jnp.float32)                # tensor-alpha branch
    params = init_params(k_p, in_channels, num_classes)

    fwd = jax.jit(functools.partial(nbs_deeplab_head_forward, num_classes=num_classes))
    out = jax.block_until_ready(fwd(x, alpha, params))
    ref = jax.block_until_ready(ref_forward(x, alpha, params, num_classes))

    assert out.shape == (B, num_classes, H, W), out.shape
    max_err = float(jnp.max(jnp.abs(out - ref)))
    # bf16 MXU operands + bf16 intermediates vs f32 reference -> relaxed tolerance.
    assert jnp.allclose(out, ref, rtol=5e-2, atol=5e-2), f"max_err={max_err}"
    print("KERNEL_OK")
</pallas_src>

<mosaic_0001>
module attributes {stable_mosaic.version = 11 : i64} {
  func.func @_fused_matmul_kernel(%arg0: i32, %arg1: i32, %arg2: memref<256x128xbf16, #tpu.memory_space<vmem>>, %arg3: memref<128x256xbf16, #tpu.memory_space<vmem>>, %arg4: memref<1x256xf32, #tpu.memory_space<vmem>>, %arg5: memref<256x256xbf16, #tpu.memory_space<vmem>>, %arg6: memref<256x256xf32, #tpu.memory_space<vmem>>) attributes {dimension_semantics = [#tpu.dimension_semantics<parallel>, #tpu.dimension_semantics<arbitrary>], iteration_bounds = array<i64: 2, 1>, scalar_prefetch = 0 : i64, scratch_operands = 1 : i64, tpu.core_type = #tpu.core_type<tc>, window_params = [{transform_indices = @transform_0, window_bounds = array<i64: 256, 128>}, {transform_indices = @transform_1, window_bounds = array<i64: 128, 256>}, {pipeline_mode = #tpu.pipeline_mode<synchronous>, transform_indices = @transform_2, window_bounds = array<i64: 1, 256>}, {transform_indices = @transform_3, window_bounds = array<i64: 256, 256>}]} {
    %c0_i32 = arith.constant 0 : i32
    %0 = arith.cmpi eq, %arg1, %c0_i32 : i32
    %1 = arith.extui %0 : i1 to i32
    %c0_i32_0 = arith.constant 0 : i32
    %2 = arith.cmpi ne, %1, %c0_i32_0 : i32
    scf.if %2 {
      %cst_10 = arith.constant 0.000000e+00 : f32
      %12 = vector.broadcast %cst_10 : f32 to vector<256x256xf32>
      %c0_11 = arith.constant 0 : index
      %c0_12 = arith.constant 0 : index
      %13 = vector.load %arg6[%c0_11, %c0_12] : memref<256x256xf32, #tpu.memory_space<vmem>>, vector<256x256xf32>
      tpu.vector_store %arg6[%c0_11, %c0_12], %12 {strides = array<i32>} : memref<256x256xf32, #tpu.memory_space<vmem>>, vector<256x256xf32>,
    } else {
    }
    %c0 = arith.constant 0 : index
    %c0_1 = arith.constant 0 : index
    %3 = vector.load %arg6[%c0, %c0_1] : memref<256x256xf32, #tpu.memory_space<vmem>>, vector<256x256xf32>
    %c0_2 = arith.constant 0 : index
    %c0_3 = arith.constant 0 : index
    %4 = vector.load %arg2[%c0_2, %c0_3] : memref<256x128xbf16, #tpu.memory_space<vmem>>, vector<256x128xbf16>
    %c0_4 = arith.constant 0 : index
    %c0_5 = arith.constant 0 : index
    %5 = vector.load %arg3[%c0_4, %c0_5] : memref<128x256xbf16, #tpu.memory_space<vmem>>, vector<128x256xbf16>
    %cst = arith.constant dense<0.000000e+00> : vector<256x256xf32>
    %6 = tpu.matmul %4, %5, %cst {dimension_numbers = #tpu.dot_dimension_numbers<[1], [0], [0], [1], [0, 0, 1, 1], [], []>} : vector<256x128xbf16>, vector<128x256xbf16>, vector<256x256xf32> -> vector<256x256xf32>
    %7 = arith.addf %3, %6 : vector<256x256xf32>
    %c0_6 = arith.constant 0 : index
    %c0_7 = arith.constant 0 : index
    %8 = vector.load %arg6[%c0_6, %c0_7] : memref<256x256xf32, #tpu.memory_space<vmem>>, vector<256x256xf32>
    tpu.vector_store %arg6[%c0_6, %c0_7], %7 {strides = array<i32>} : memref<256x256xf32, #tpu.memory_space<vmem>>, vector<256x256xf32>,
    %c0_i32_8 = arith.constant 0 : i32
    %9 = arith.cmpi eq, %arg1, %c0_i32_8 : i32
    %10 = arith.extui %9 : i1 to i32
    %c0_i32_9 = arith.constant 0 : i32
    %11 = arith.cmpi ne, %10, %c0_i32_9 : i32
    scf.if %11 {
      %c0_10 = arith.constant 0 : index
      %c0_11 = arith.constant 0 : index
      %12 = vector.load %arg6[%c0_10, %c0_11] : memref<256x256xf32, #tpu.memory_space<vmem>>, vector<256x256xf32>
      %c0_12 = arith.constant 0 : index
      %c0_13 = arith.constant 0 : index
      %13 = vector.load %arg4[%c0_12, %c0_13] : memref<1x256xf32, #tpu.memory_space<vmem>>, vector<1x256xf32>
      %14 = vector.broadcast %13 : vector<1x256xf32> to vector<256x256xf32>
      %15 = arith.addf %12, %14 : vector<256x256xf32>
      %cst_14 = arith.constant 0.000000e+00 : f32
      %16 = vector.broadcast %cst_14 : f32 to vector<256x256xf32>
      %17 = arith.maximumf %15, %16 : vector<256x256xf32>
      %18 = arith.truncf %17 : vector<256x256xf32> to vector<256x256xbf16>
      %c0_15 = arith.constant 0 : index
      %c0_16 = arith.constant 0 : index
      %19 = vector.load %arg5[%c0_15, %c0_16] : memref<256x256xbf16, #tpu.memory_space<vmem>>, vector<256x256xbf16>
      tpu.vector_store %arg5[%c0_15, %c0_16], %18 {strides = array<i32>} : memref<256x256xbf16, #tpu.memory_space<vmem>>, vector<256x256xbf16>,
    } else {
    }
    return
  }
  func.func @transform_0(%arg0: i32, %arg1: i32) -> (i32, i32) {
    %c0_i32 = arith.constant 0 : i32
    return %arg0, %arg1 : i32, i32
  }
  func.func @transform_1(%arg0: i32, %arg1: i32) -> (i32, i32) {
    %c0_i32 = arith.constant 0 : i32
    %c0_i32_0 = arith.constant 0 : i32
    return %arg1, %c0_i32 : i32, i32
  }
  func.func @transform_2(%arg0: i32, %arg1: i32) -> (i32, i32) {
    %c0_i32 = arith.constant 0 : i32
    %c0_i32_0 = arith.constant 0 : i32
    %c0_i32_1 = arith.constant 0 : i32
    return %c0_i32, %c0_i32_0 : i32, i32
  }
  func.func @transform_3(%arg0: i32, %arg1: i32) -> (i32, i32) {
    %c0_i32 = arith.constant 0 : i32
    %c0_i32_0 = arith.constant 0 : i32
    return %arg0, %c0_i32 : i32, i32
  }
}

module attributes {stable_mosaic.version = 11 : i64} {
  func.func @_fused_matmul_kernel(%arg0: i32, %arg1: i32, %arg2: memref<16x128xbf16, #tpu.memory_space<vmem>>, %arg3: memref<128x256xbf16, #tpu.memory_space<vmem>>, %arg4: memref<1x256xf32, #tpu.memory_space<vmem>>, %arg5: memref<16x256xf32, #tpu.memory_space<vmem>>, %arg6: memref<16x256xf32, #tpu.memory_space<vmem>>) attributes {dimension_semantics = [#tpu.dimension_semantics<parallel>, #tpu.dimension_semantics<arbitrary>], iteration_bounds = array<i64: 1, 1>, scalar_prefetch = 0 : i64, scratch_operands = 1 : i64, tpu.core_type = #tpu.core_type<tc>, window_params = [{transform_indices = @transform_0, window_bounds = array<i64: 16, 128>}, {transform_indices = @transform_1, window_bounds = array<i64: 128, 256>}, {pipeline_mode = #tpu.pipeline_mode<synchronous>, transform_indices = @transform_2, window_bounds = array<i64: 1, 256>}, {transform_indices = @transform_3, window_bounds = array<i64: 16, 256>}]} {
    %c0_i32 = arith.constant 0 : i32
    %0 = arith.cmpi eq, %arg1, %c0_i32 : i32
    %1 = arith.extui %0 : i1 to i32
    %c0_i32_0 = arith.constant 0 : i32
    %2 = arith.cmpi ne, %1, %c0_i32_0 : i32
    scf.if %2 {
      %cst_10 = arith.constant 0.000000e+00 : f32
      %12 = vector.broadcast %cst_10 : f32 to vector<16x256xf32>
      %c0_11 = arith.constant 0 : index
      %c0_12 = arith.constant 0 : index
      %13 = vector.load %arg6[%c0_11, %c0_12] : memref<16x256xf32, #tpu.memory_space<vmem>>, vector<16x256xf32>
      tpu.vector_store %arg6[%c0_11, %c0_12], %12 {strides = array<i32>} : memref<16x256xf32, #tpu.memory_space<vmem>>, vector<16x256xf32>,
    } else {
    }
    %c0 = arith.constant 0 : index
    %c0_1 = arith.constant 0 : index
    %3 = vector.load %arg6[%c0, %c0_1] : memref<16x256xf32, #tpu.memory_space<vmem>>, vector<16x256xf32>
    %c0_2 = arith.constant 0 : index
    %c0_3 = arith.constant 0 : index
    %4 = vector.load %arg2[%c0_2, %c0_3] : memref<16x128xbf16, #tpu.memory_space<vmem>>, vector<16x128xbf16>
    %c0_4 = arith.constant 0 : index
    %c0_5 = arith.constant 0 : index
    %5 = vector.load %arg3[%c0_4, %c0_5] : memref<128x256xbf16, #tpu.memory_space<vmem>>, vector<128x256xbf16>
    %cst = arith.constant dense<0.000000e+00> : vector<16x256xf32>
    %6 = tpu.matmul %4, %5, %cst {dimension_numbers = #tpu.dot_dimension_numbers<[1], [0], [0], [1], [0, 0, 1, 1], [], []>} : vector<16x128xbf16>, vector<128x256xbf16>, vector<16x256xf32> -> vector<16x256xf32>
    %7 = arith.addf %3, %6 : vector<16x256xf32>
    %c0_6 = arith.constant 0 : index
    %c0_7 = arith.constant 0 : index
    %8 = vector.load %arg6[%c0_6, %c0_7] : memref<16x256xf32, #tpu.memory_space<vmem>>, vector<16x256xf32>
    tpu.vector_store %arg6[%c0_6, %c0_7], %7 {strides = array<i32>} : memref<16x256xf32, #tpu.memory_space<vmem>>, vector<16x256xf32>,
    %c0_i32_8 = arith.constant 0 : i32
    %9 = arith.cmpi eq, %arg1, %c0_i32_8 : i32
    %10 = arith.extui %9 : i1 to i32
    %c0_i32_9 = arith.constant 0 : i32
    %11 = arith.cmpi ne, %10, %c0_i32_9 : i32
    scf.if %11 {
      %c0_10 = arith.constant 0 : index
      %c0_11 = arith.constant 0 : index
      %12 = vector.load %arg6[%c0_10, %c0_11] : memref<16x256xf32, #tpu.memory_space<vmem>>, vector<16x256xf32>
      %c0_12 = arith.constant 0 : index
      %c0_13 = arith.constant 0 : index
      %13 = vector.load %arg4[%c0_12, %c0_13] : memref<1x256xf32, #tpu.memory_space<vmem>>, vector<1x256xf32>
      %14 = vector.broadcast %13 : vector<1x256xf32> to vector<16x256xf32>
      %15 = arith.addf %12, %14 : vector<16x256xf32>
      %cst_14 = arith.constant 0.000000e+00 : f32
      %16 = vector.broadcast %cst_14 : f32 to vector<16x256xf32>
      %17 = arith.maximumf %15, %16 : vector<16x256xf32>
      %c0_15 = arith.constant 0 : index
      %c0_16 = arith.constant 0 : index
      %18 = vector.load %arg5[%c0_15, %c0_16] : memref<16x256xf32, #tpu.memory_space<vmem>>, vector<16x256xf32>
      tpu.vector_store %arg5[%c0_15, %c0_16], %17 {strides = array<i32>} : memref<16x256xf32, #tpu.memory_space<vmem>>, vector<16x256xf32>,
    } else {
    }
    return
  }
  func.func @transform_0(%arg0: i32, %arg1: i32) -> (i32, i32) {
    %c0_i32 = arith.constant 0 : i32
    return %arg0, %arg1 : i32, i32
  }
  func.func @transform_1(%arg0: i32, %arg1: i32) -> (i32, i32) {
    %c0_i32 = arith.constant 0 : i32
    %c0_i32_0 = arith.constant 0 : i32
    return %arg1, %c0_i32 : i32, i32
  }
  func.func @transform_2(%arg0: i32, %arg1: i32) -> (i32, i32) {
    %c0_i32 = arith.constant 0 : i32
    %c0_i32_0 = arith.constant 0 : i32
    %c0_i32_1 = arith.constant 0 : i32
    return %c0_i32, %c0_i32_0 : i32, i32
  }
  func.func @transform_3(%arg0: i32, %arg1: i32) -> (i32, i32) {
    %c0_i32 = arith.constant 0 : i32
    %c0_i32_0 = arith.constant 0 : i32
    return %arg0, %c0_i32 : i32, i32
  }
}

module attributes {stable_mosaic.version = 11 : i64} {
  func.func @_aspp_proj_kernel(%arg0: i32, %arg1: i32, %arg2: memref<1x256x256xbf16, #tpu.memory_space<vmem>>, %arg3: memref<1x256x256xbf16, #tpu.memory_space<vmem>>, %arg4: memref<1x256x256xbf16, #tpu.memory_space<vmem>>, %arg5: memref<1x256x256xbf16, #tpu.memory_space<vmem>>, %arg6: memref<4x256x256xbf16, #tpu.memory_space<vmem>>, %arg7: memref<1x1x256xf32, #tpu.memory_space<vmem>>, %arg8: memref<1x256xf32, #tpu.memory_space<vmem>>, %arg9: memref<1x256x256xbf16, #tpu.memory_space<vmem>>) attributes {dimension_semantics = [#tpu.dimension_semantics<parallel>, #tpu.dimension_semantics<parallel>], iteration_bounds = array<i64: 2, 1>, scalar_prefetch = 0 : i64, scratch_operands = 0 : i64, tpu.core_type = #tpu.core_type<tc>, window_params = [{transform_indices = @transform_0, window_bounds = array<i64: 1, 256, 256>}, {transform_indices = @transform_1, window_bounds = array<i64: 1, 256, 256>}, {transform_indices = @transform_2, window_bounds = array<i64: 1, 256, 256>}, {transform_indices = @transform_3, window_bounds = array<i64: 1, 256, 256>}, {pipeline_mode = #tpu.pipeline_mode<synchronous>, transform_indices = @transform_4, window_bounds = array<i64: 4, 256, 256>}, {transform_indices = @transform_5, window_bounds = array<i64: 1, 1, 256>}, {pipeline_mode = #tpu.pipeline_mode<synchronous>, transform_indices = @transform_6, window_bounds = array<i64: 1, 256>}, {transform_indices = @transform_7, window_bounds = array<i64: 1, 256, 256>}]} {
    %c0 = arith.constant 0 : index
    %c0_0 = arith.constant 0 : index
    %c0_1 = arith.constant 0 : index
    %0 = vector.load %arg2[%c0, %c0_0, %c0_1] : memref<1x256x256xbf16, #tpu.memory_space<vmem>>, vector<1x256x256xbf16>
    %1 = vector.shape_cast %0 : vector<1x256x256xbf16> to vector<256x256xbf16>
    %c0_2 = arith.constant 0 : index
    %c0_3 = arith.constant 0 : index
    %c0_4 = arith.constant 0 : index
    %2 = vector.load %arg6[%c0_2, %c0_3, %c0_4] : memref<4x256x256xbf16, #tpu.memory_space<vmem>>, vector<1x256x256xbf16>
    %3 = vector.shape_cast %2 : vector<1x256x256xbf16> to vector<256x256xbf16>
    %cst = arith.constant dense<0.000000e+00> : vector<256x256xf32>
    %4 = tpu.matmul %1, %3, %cst {dimension_numbers = #tpu.dot_dimension_numbers<[1], [0], [0], [1], [0, 0, 1, 1], [], []>} : vector<256x256xbf16>, vector<256x256xbf16>, vector<256x256xf32> -> vector<256x256xf32>
    %c0_5 = arith.constant 0 : index
    %c0_6 = arith.constant 0 : index
    %c0_7 = arith.constant 0 : index
    %5 = vector.load %arg3[%c0_5, %c0_6, %c0_7] : memref<1x256x256xbf16, #tpu.memory_space<vmem>>, vector<1x256x256xbf16>
    %6 = vector.shape_cast %5 : vector<1x256x256xbf16> to vector<256x256xbf16>
    %c1 = arith.constant 1 : index
    %c0_8 = arith.constant 0 : index
    %c0_9 = arith.constant 0 : index
    %7 = vector.load %arg6[%c1, %c0_8, %c0_9] : memref<4x256x256xbf16, #tpu.memory_space<vmem>>, vector<1x256x256xbf16>
    %8 = vector.shape_cast %7 : vector<1x256x256xbf16> to vector<256x256xbf16>
    %cst_10 = arith.constant dense<0.000000e+00> : vector<256x256xf32>
    %9 = tpu.matmul %6, %8, %cst_10 {dimension_numbers = #tpu.dot_dimension_numbers<[1], [0], [0], [1], [0, 0, 1, 1], [], []>} : vector<256x256xbf16>, vector<256x256xbf16>, vector<256x256xf32> -> vector<256x256xf32>
    %10 = arith.addf %4, %9 : vector<256x256xf32>
    %c0_11 = arith.constant 0 : index
    %c0_12 = arith.constant 0 : index
    %c0_13 = arith.constant 0 : index
    %11 = vector.load %arg4[%c0_11, %c0_12, %c0_13] : memref<1x256x256xbf16, #tpu.memory_space<vmem>>, vector<1x256x256xbf16>
    %12 = vector.shape_cast %11 : vector<1x256x256xbf16> to vector<256x256xbf16>
    %c2 = arith.constant 2 : index
    %c0_14 = arith.constant 0 : index
    %c0_15 = arith.constant 0 : index
    %13 = vector.load %arg6[%c2, %c0_14, %c0_15] : memref<4x256x256xbf16, #tpu.memory_space<vmem>>, vector<1x256x256xbf16>
    %14 = vector.shape_cast %13 : vector<1x256x256xbf16> to vector<256x256xbf16>
    %cst_16 = arith.constant dense<0.000000e+00> : vector<256x256xf32>
    %15 = tpu.matmul %12, %14, %cst_16 {dimension_numbers = #tpu.dot_dimension_numbers<[1], [0], [0], [1], [0, 0, 1, 1], [], []>} : vector<256x256xbf16>, vector<256x256xbf16>, vector<256x256xf32> -> vector<256x256xf32>
    %16 = arith.addf %10, %15 : vector<256x256xf32>
    %c0_17 = arith.constant 0 : index
    %c0_18 = arith.constant 0 : index
    %c0_19 = arith.constant 0 : index
    %17 = vector.load %arg5[%c0_17, %c0_18, %c0_19] : memref<1x256x256xbf16, #tpu.memory_space<vmem>>, vector<1x256x256xbf16>
    %18 = vector.shape_cast %17 : vector<1x256x256xbf16> to vector<256x256xbf16>
    %c3 = arith.constant 3 : index
    %c0_20 = arith.constant 0 : index
    %c0_21 = arith.constant 0 : index
    %19 = vector.load %arg6[%c3, %c0_20, %c0_21] : memref<4x256x256xbf16, #tpu.memory_space<vmem>>, vector<1x256x256xbf16>
    %20 = vector.shape_cast %19 : vector<1x256x256xbf16> to vector<256x256xbf16>
    %cst_22 = arith.constant dense<0.000000e+00> : vector<256x256xf32>
    %21 = tpu.matmul %18, %20, %cst_22 {dimension_numbers = #tpu.dot_dimension_numbers<[1], [0], [0], [1], [0, 0, 1, 1], [], []>} : vector<256x256xbf16>, vector<256x256xbf16>, vector<256x256xf32> -> vector<256x256xf32>
    %22 = arith.addf %16, %21 : vector<256x256xf32>
    %c0_23 = arith.constant 0 : index
    %c0_24 = arith.constant 0 : index
    %c0_25 = arith.constant 0 : index
    %23 = vector.load %arg7[%c0_23, %c0_24, %c0_25] : memref<1x1x256xf32, #tpu.memory_space<vmem>>, vector<1x1x256xf32>
    %24 = vector.shape_cast %23 : vector<1x1x256xf32> to vector<1x256xf32>
    %25 = vector.broadcast %24 : vector<1x256xf32> to vector<256x256xf32>
    %26 = arith.addf %22, %25 : vector<256x256xf32>
    %c0_26 = arith.constant 0 : index
    %c0_27 = arith.constant 0 : index
    %27 = vector.load %arg8[%c0_26, %c0_27] : memref<1x256xf32, #tpu.memory_space<vmem>>, vector<1x256xf32>
    %28 = vector.broadcast %27 : vector<1x256xf32> to vector<256x256xf32>
    %29 = arith.addf %26, %28 : vector<256x256xf32>
    %cst_28 = arith.constant 0.000000e+00 : f32
    %30 = vector.broadcast %cst_28 : f32 to vector<256x256xf32>
    %31 = arith.maximumf %29, %30 : vector<256x256xf32>
    %32 = arith.truncf %31 : vector<256x256xf32> to vector<256x256xbf16>
    %c0_29 = arith.constant 0 : index
    %c0_30 = arith.constant 0 : index
    %c0_31 = arith.constant 0 : index
    %33 = vector.load %arg9[%c0_29, %c0_30, %c0_31] : memref<1x256x256xbf16, #tpu.memory_space<vmem>>, vector<1x256x256xbf16>
    %34 = vector.shape_cast %33 : vector<1x256x256xbf16> to vector<256x256xbf16>
    %35 = vector.shape_cast %32 : vector<256x256xbf16> to vector<1x256x256xbf16>
    tpu.vector_store %arg9[%c0_29, %c0_30, %c0_31], %35 {strides = array<i32>} : memref<1x256x256xbf16, #tpu.memory_space<vmem>>, vector<1x256x256xbf16>,
    return
  }
  func.func @transform_0(%arg0: i32, %arg1: i32) -> (i32, i32, i32) {
    %c0_i32 = arith.constant 0 : i32
    %c0_i32_0 = arith.constant 0 : i32
    return %arg0, %arg1, %c0_i32 : i32, i32, i32
  }
  func.func @transform_1(%arg0: i32, %arg1: i32) -> (i32, i32, i32) {
    %c0_i32 = arith.constant 0 : i32
    %c0_i32_0 = arith.constant 0 : i32
    return %arg0, %arg1, %c0_i32 : i32, i32, i32
  }
  func.func @transform_2(%arg0: i32, %arg1: i32) -> (i32, i32, i32) {
    %c0_i32 = arith.constant 0 : i32
    %c0_i32_0 = arith.constant 0 : i32
    return %arg0, %arg1, %c0_i32 : i32, i32, i32
  }
  func.func @transform_3(%arg0: i32, %arg1: i32) -> (i32, i32, i32) {
    %c0_i32 = arith.constant 0 : i32
    %c0_i32_0 = arith.constant 0 : i32
    return %arg0, %arg1, %c0_i32 : i32, i32, i32
  }
  func.func @transform_4(%arg0: i32, %arg1: i32) -> (i32, i32, i32) {
    %c0_i32 = arith.constant 0 : i32
    %c0_i32_0 = arith.constant 0 : i32
    %c0_i32_1 = arith.constant 0 : i32
    %c0_i32_2 = arith.constant 0 : i32
    return %c0_i32, %c0_i32_0, %c0_i32_1 : i32, i32, i32
  }
  func.func @transform_5(%arg0: i32, %arg1: i32) -> (i32, i32, i32) {
    %c0_i32 = arith.constant 0 : i32
    %c0_i32_0 = arith.constant 0 : i32
    %c0_i32_1 = arith.constant 0 : i32
    return %arg0, %c0_i32, %c0_i32_0 : i32, i32, i32
  }
  func.func @transform_6(%arg0: i32, %arg1: i32) -> (i32, i32) {
    %c0_i32 = arith.constant 0 : i32
    %c0_i32_0 = arith.constant 0 : i32
    %c0_i32_1 = arith.constant 0 : i32
    return %c0_i32, %c0_i32_0 : i32, i32
  }
  func.func @transform_7(%arg0: i32, %arg1: i32) -> (i32, i32, i32) {
    %c0_i32 = arith.constant 0 : i32
    %c0_i32_0 = arith.constant 0 : i32
    return %arg0, %arg1, %c0_i32 : i32, i32, i32
  }
}

module attributes {stable_mosaic.version = 11 : i64} {
  func.func @_fused_matmul_kernel(%arg0: i32, %arg1: i32, %arg2: memref<256x256xbf16, #tpu.memory_space<vmem>>, %arg3: memref<256x256xbf16, #tpu.memory_space<vmem>>, %arg4: memref<1x256xf32, #tpu.memory_space<vmem>>, %arg5: memref<256x256xbf16, #tpu.memory_space<vmem>>, %arg6: memref<256x256xf32, #tpu.memory_space<vmem>>) attributes {dimension_semantics = [#tpu.dimension_semantics<parallel>, #tpu.dimension_semantics<arbitrary>], iteration_bounds = array<i64: 2, 9>, scalar_prefetch = 0 : i64, scratch_operands = 1 : i64, tpu.core_type = #tpu.core_type<tc>, window_params = [{transform_indices = @transform_0, window_bounds = array<i64: 256, 256>}, {transform_indices = @transform_1, window_bounds = array<i64: 256, 256>}, {pipeline_mode = #tpu.pipeline_mode<synchronous>, transform_indices = @transform_2, window_bounds = array<i64: 1, 256>}, {transform_indices = @transform_3, window_bounds = array<i64: 256, 256>}]} {
    %c0_i32 = arith.constant 0 : i32
    %0 = arith.cmpi eq, %arg1, %c0_i32 : i32
    %1 = arith.extui %0 : i1 to i32
    %c0_i32_0 = arith.constant 0 : i32
    %2 = arith.cmpi ne, %1, %c0_i32_0 : i32
    scf.if %2 {
      %cst_9 = arith.constant 0.000000e+00 : f32
      %12 = vector.broadcast %cst_9 : f32 to vector<256x256xf32>
      %c0_10 = arith.constant 0 : index
      %c0_11 = arith.constant 0 : index
      %13 = vector.load %arg6[%c0_10, %c0_11] : memref<256x256xf32, #tpu.memory_space<vmem>>, vector<256x256xf32>
      tpu.vector_store %arg6[%c0_10, %c0_11], %12 {strides = array<i32>} : memref<256x256xf32, #tpu.memory_space<vmem>>, vector<256x256xf32>,
    } else {
    }
    %c0 = arith.constant 0 : index
    %c0_1 = arith.constant 0 : index
    %3 = vector.load %arg6[%c0, %c0_1] : memref<256x256xf32, #tpu.memory_space<vmem>>, vector<256x256xf32>
    %c0_2 = arith.constant 0 : index
    %c0_3 = arith.constant 0 : index
    %4 = vector.load %arg2[%c0_2, %c0_3] : memref<256x256xbf16, #tpu.memory_space<vmem>>, vector<256x256xbf16>
    %c0_4 = arith.constant 0 : index
    %c0_5 = arith.constant 0 : index
    %5 = vector.load %arg3[%c0_4, %c0_5] : memref<256x256xbf16, #tpu.memory_space<vmem>>, vector<256x256xbf16>
    %cst = arith.constant dense<0.000000e+00> : vector<256x256xf32>
    %6 = tpu.matmul %4, %5, %cst {dimension_numbers = #tpu.dot_dimension_numbers<[1], [0], [0], [1], [0, 0, 1, 1], [], []>} : vector<256x256xbf16>, vector<256x256xbf16>, vector<256x256xf32> -> vector<256x256xf32>
    %7 = arith.addf %3, %6 : vector<256x256xf32>
    %c0_6 = arith.constant 0 : index
    %c0_7 = arith.constant 0 : index
    %8 = vector.load %arg6[%c0_6, %c0_7] : memref<256x256xf32, #tpu.memory_space<vmem>>, vector<256x256xf32>
    tpu.vector_store %arg6[%c0_6, %c0_7], %7 {strides = array<i32>} : memref<256x256xf32, #tpu.memory_space<vmem>>, vector<256x256xf32>,
    %c8_i32 = arith.constant 8 : i32
    %9 = arith.cmpi eq, %arg1, %c8_i32 : i32
    %10 = arith.extui %9 : i1 to i32
    %c0_i32_8 = arith.constant 0 : i32
    %11 = arith.cmpi ne, %10, %c0_i32_8 : i32
    scf.if %11 {
      %c0_9 = arith.constant 0 : index
      %c0_10 = arith.constant 0 : index
      %12 = vector.load %arg6[%c0_9, %c0_10] : memref<256x256xf32, #tpu.memory_space<vmem>>, vector<256x256xf32>
      %c0_11 = arith.constant 0 : index
      %c0_12 = arith.constant 0 : index
      %13 = vector.load %arg4[%c0_11, %c0_12] : memref<1x256xf32, #tpu.memory_space<vmem>>, vector<1x256xf32>
      %14 = vector.broadcast %13 : vector<1x256xf32> to vector<256x256xf32>
      %15 = arith.addf %12, %14 : vector<256x256xf32>
      %cst_13 = arith.constant 0.000000e+00 : f32
      %16 = vector.broadcast %cst_13 : f32 to vector<256x256xf32>
      %17 = arith.maximumf %15, %16 : vector<256x256xf32>
      %18 = arith.truncf %17 : vector<256x256xf32> to vector<256x256xbf16>
      %c0_14 = arith.constant 0 : index
      %c0_15 = arith.constant 0 : index
      %19 = vector.load %arg5[%c0_14, %c0_15] : memref<256x256xbf16, #tpu.memory_space<vmem>>, vector<256x256xbf16>
      tpu.vector_store %arg5[%c0_14, %c0_15], %18 {strides = array<i32>} : memref<256x256xbf16, #tpu.memory_space<vmem>>, vector<256x256xbf16>,
    } else {
    }
    return
  }
  func.func @transform_0(%arg0: i32, %arg1: i32) -> (i32, i32) {
    %c0_i32 = arith.constant 0 : i32
    return %arg0, %arg1 : i32, i32
  }
  func.func @transform_1(%arg0: i32, %arg1: i32) -> (i32, i32) {
    %c0_i32 = arith.constant 0 : i32
    %c0_i32_0 = arith.constant 0 : i32
    return %arg1, %c0_i32 : i32, i32
  }
  func.func @transform_2(%arg0: i32, %arg1: i32) -> (i32, i32) {
    %c0_i32 = arith.constant 0 : i32
    %c0_i32_0 = arith.constant 0 : i32
    %c0_i32_1 = arith.constant 0 : i32
    return %c0_i32, %c0_i32_0 : i32, i32
  }
  func.func @transform_3(%arg0: i32, %arg1: i32) -> (i32, i32) {
    %c0_i32 = arith.constant 0 : i32
    %c0_i32_0 = arith.constant 0 : i32
    return %arg0, %c0_i32 : i32, i32
  }
}

module attributes {stable_mosaic.version = 11 : i64} {
  func.func @_classifier_kernel(%arg0: i32, %arg1: i32, %arg2: memref<1x256x256xbf16, #tpu.memory_space<vmem>>, %arg3: memref<1x256x128xbf16, #tpu.memory_space<vmem>>, %arg4: memref<1x128xf32, #tpu.memory_space<vmem>>, %arg5: memref<1x256x128xf32, #tpu.memory_space<vmem>>) attributes {dimension_semantics = [#tpu.dimension_semantics<parallel>, #tpu.dimension_semantics<parallel>], iteration_bounds = array<i64: 2, 1>, scalar_prefetch = 0 : i64, scratch_operands = 0 : i64, tpu.core_type = #tpu.core_type<tc>, window_params = [{transform_indices = @transform_0, window_bounds = array<i64: 1, 256, 256>}, {transform_indices = @transform_1, window_bounds = array<i64: 1, 256, 128>}, {pipeline_mode = #tpu.pipeline_mode<synchronous>, transform_indices = @transform_2, window_bounds = array<i64: 1, 128>}, {transform_indices = @transform_3, window_bounds = array<i64: 1, 256, 128>}]} {
    %c0 = arith.constant 0 : index
    %c0_0 = arith.constant 0 : index
    %c0_1 = arith.constant 0 : index
    %0 = vector.load %arg2[%c0, %c0_0, %c0_1] : memref<1x256x256xbf16, #tpu.memory_space<vmem>>, vector<1x256x256xbf16>
    %1 = vector.shape_cast %0 : vector<1x256x256xbf16> to vector<256x256xbf16>
    %c0_2 = arith.constant 0 : index
    %c0_3 = arith.constant 0 : index
    %c0_4 = arith.constant 0 : index
    %2 = vector.load %arg3[%c0_2, %c0_3, %c0_4] : memref<1x256x128xbf16, #tpu.memory_space<vmem>>, vector<1x256x128xbf16>
    %3 = vector.shape_cast %2 : vector<1x256x128xbf16> to vector<256x128xbf16>
    %cst = arith.constant dense<0.000000e+00> : vector<256x128xf32>
    %4 = tpu.matmul %1, %3, %cst {dimension_numbers = #tpu.dot_dimension_numbers<[1], [0], [0], [1], [0, 0, 1, 1], [], []>} : vector<256x256xbf16>, vector<256x128xbf16>, vector<256x128xf32> -> vector<256x128xf32>
    %c0_5 = arith.constant 0 : index
    %c0_6 = arith.constant 0 : index
    %5 = vector.load %arg4[%c0_5, %c0_6] : memref<1x128xf32, #tpu.memory_space<vmem>>, vector<1x128xf32>
    %6 = vector.broadcast %5 : vector<1x128xf32> to vector<256x128xf32>
    %7 = arith.addf %4, %6 : vector<256x128xf32>
    %c0_7 = arith.constant 0 : index
    %c0_8 = arith.constant 0 : index
    %c0_9 = arith.constant 0 : index
    %8 = vector.load %arg5[%c0_7, %c0_8, %c0_9] : memref<1x256x128xf32, #tpu.memory_space<vmem>>, vector<1x256x128xf32>
    %9 = vector.shape_cast %8 : vector<1x256x128xf32> to vector<256x128xf32>
    %10 = vector.shape_cast %7 : vector<256x128xf32> to vector<1x256x128xf32>
    tpu.vector_store %arg5[%c0_7, %c0_8, %c0_9], %10 {strides = array<i32>} : memref<1x256x128xf32, #tpu.memory_space<vmem>>, vector<1x256x128xf32>,
    return
  }
  func.func @transform_0(%arg0: i32, %arg1: i32) -> (i32, i32, i32) {
    %c0_i32 = arith.constant 0 : i32
    %c0_i32_0 = arith.constant 0 : i32
    return %arg0, %arg1, %c0_i32 : i32, i32, i32
  }
  func.func @transform_1(%arg0: i32, %arg1: i32) -> (i32, i32, i32) {
    %c0_i32 = arith.constant 0 : i32
    %c0_i32_0 = arith.constant 0 : i32
    %c0_i32_1 = arith.constant 0 : i32
    return %arg0, %c0_i32, %c0_i32_0 : i32, i32, i32
  }
  func.func @transform_2(%arg0: i32, %arg1: i32) -> (i32, i32) {
    %c0_i32 = arith.constant 0 : i32
    %c0_i32_0 = arith.constant 0 : i32
    %c0_i32_1 = arith.constant 0 : i32
    return %c0_i32, %c0_i32_0 : i32, i32
  }
  func.func @transform_3(%arg0: i32, %arg1: i32) -> (i32, i32, i32) {
    %c0_i32 = arith.constant 0 : i32
    %c0_i32_0 = arith.constant 0 : i32
    return %arg0, %arg1, %c0_i32 : i32, i32, i32
  }
}

</mosaic_0001>

<llo_original>
// kernel: nbs_deeplab_head_forward.12
$region0: #{nbs_deeplab_head_forward.12}
  #allocation0 [shape = 'u32[]', space=smem, size = 0x4, offset = 0x4, fixed_abs, tag = 'smem constant byte address 0x4 - core index']
  #allocation1 [shape = 'u32[144,128]{1,0:T(1,128)}', space=vmem, size = 0x12000, scoped, tag = 'internal scratch']
  #allocation2 [shape = 'f32[16,256]{1,0:T(8,128)}', space=vmem, size = 0x4000, scoped, tag = 'scratch operand']
  %s0 = inlined_call_operand.vmem [shape: bf16[16,128], index: 0, kind: input, shape index: {}]
  %s1 = inlined_call_operand.vmem [shape: bf16[128,256], index: 1, kind: input, shape index: {}]
  %s2 = inlined_call_operand.vmem [shape: f32[1,256], index: 2, kind: input, shape index: {}]
  %s3 = inlined_call_operand.vmem [shape: f32[16,256], index: 3, kind: output, shape index: {}]
  %s4 = sld [smem:[#allocation0]]
  $region30: #{nbs_deeplab_head_forward.12} parent=0
    _
  %s6 = ssub.s32 1, %s4
  %s7 = scalar_select 0, %s6, %s4
  // Predicated region
  $region2: #{nbs_deeplab_head_forward.12} parent=0 // pred_check
    _
  $region3: #{nbs_deeplab_head_forward.12} parent=0 // pred_check_branch
    %9 = sbr.rel (0) target = $region5
  $region4: #{nbs_deeplab_head_forward.12} parent=0 // pred_region
    _
  $region5: #{nbs_deeplab_head_forward.12} parent=0 // pred_fallthru
    _
  // Predicated region
  $region6: #{nbs_deeplab_head_forward.12} parent=0 // pred_check
    _
  $region7: #{nbs_deeplab_head_forward.12} parent=0 // pred_check_branch
    %11 = sbr.rel (0) target = $region9
  $region8: #{nbs_deeplab_head_forward.12} parent=0 // pred_region
    _
  $region9: #{nbs_deeplab_head_forward.12} parent=0 // pred_fallthru
    _
  // Predicated region
  $region10: #{nbs_deeplab_head_forward.12} parent=0 // pred_check
    _
  $region11: #{nbs_deeplab_head_forward.12} parent=0 // pred_check_branch
    %13 = sbr.rel (0) target = $region13
  $region12: #{nbs_deeplab_head_forward.12} parent=0 // pred_region
    _
  $region13: #{nbs_deeplab_head_forward.12} parent=0 // pred_fallthru
    _
  %p15 = scmp.eq.s32.totalorder 0, 0
  // Predicated region
  $region14: #{nbs_deeplab_head_forward.12} parent=0 // pred_check
    %p16 = pneg %p15
  $region15: #{nbs_deeplab_head_forward.12} parent=0 // pred_check_branch
    %18 = sbr.rel (%p16) target = $region17
  $region16: #{nbs_deeplab_head_forward.12} parent=0 // pred_region
    %19 = vst [vmem:[#allocation2] sm:$0xff] 0.0
    %20 = vst [vmem:[#allocation2 + $0x8] sm:$0xff] 0.0
    %21 = vst [vmem:[#allocation2 + $0x10] sm:$0xff] 0.0
    %22 = vst [vmem:[#allocation2 + $0x18] sm:$0xff] 0.0
  $region17: #{nbs_deeplab_head_forward.12} parent=0 // pred_fallthru
    _
  %v23 = vld [vmem:[#allocation2] sm:$0xff]
  %v24 = vld [vmem:[#allocation2 + $0x8] sm:$0xff]
  %v25 = vld [vmem:[#allocation2 + $0x10] sm:$0xff]
  %v26 = vld [vmem:[#allocation2 + $0x18] sm:$0xff]
  %v27 = vld [vmem:[%s0] sm:$0xf]
  %v28 = vld [vmem:[%s0 + $0x4] sm:$0xf]
  %v29 = vld [vmem:[%s1] sm:$0xff]
  %v30 = vld [vmem:[%s1 + $0x8] sm:$0xff]
  %v31 = vld [vmem:[%s1 + $0x10] sm:$0xff]
  %v32 = vld [vmem:[%s1 + $0x18] sm:$0xff]
  %v33 = vld [vmem:[%s1 + $0x20] sm:$0xff]
  %v34 = vld [vmem:[%s1 + $0x28] sm:$0xff]
  %v35 = vld [vmem:[%s1 + $0x30] sm:$0xff]
  %v36 = vld [vmem:[%s1 + $0x38] sm:$0xff]
  %v37 = vld [vmem:[%s1 + $0x40] sm:$0xff]
  %v38 = vld [vmem:[%s1 + $0x48] sm:$0xff]
  %v39 = vld [vmem:[%s1 + $0x50] sm:$0xff]
  %v40 = vld [vmem:[%s1 + $0x58] sm:$0xff]
  %v41 = vld [vmem:[%s1 + $0x60] sm:$0xff]
  %v42 = vld [vmem:[%s1 + $0x68] sm:$0xff]
  %v43 = vld [vmem:[%s1 + $0x70] sm:$0xff]
  %v44 = vld [vmem:[%s1 + $0x78] sm:$0xff]
  %v47 = vunpack.c.l.b16 %v27
  %v48 = vunpack.c.l.b16 %v28
  %v49 = vpack.c.b16 %v48, %v47
  %v67 = vunpack.c.l.b16 %v29
  %v68 = vunpack.c.h.b16 %v29
  %v69 = vunpack.c.l.b16 %v30
  %v70 = vunpack.c.h.b16 %v30
  %v71 = vunpack.c.l.b16 %v31
  %v72 = vunpack.c.h.b16 %v31
  %v73 = vunpack.c.l.b16 %v32
  %v74 = vunpack.c.h.b16 %v32
  %v75 = vunpack.c.l.b16 %v33
  %v76 = vunpack.c.h.b16 %v33
  %v77 = vunpack.c.l.b16 %v34
  %v78 = vunpack.c.h.b16 %v34
  %v79 = vunpack.c.l.b16 %v35
  %v80 = vunpack.c.h.b16 %v35
  %v81 = vunpack.c.l.b16 %v36
  %v82 = vunpack.c.h.b16 %v36
  %v83 = vunpack.c.l.b16 %v37
  %v84 = vunpack.c.h.b16 %v37
  %v85 = vunpack.c.l.b16 %v38
  %v86 = vunpack.c.h.b16 %v38
  %v87 = vunpack.c.l.b16 %v39
  %v88 = vunpack.c.h.b16 %v39
  %v89 = vunpack.c.l.b16 %v40
  %v90 = vunpack.c.h.b16 %v40
  %v91 = vunpack.c.l.b16 %v41
  %v92 = vunpack.c.h.b16 %v41
  %v93 = vunpack.c.l.b16 %v42
  %v94 = vunpack.c.h.b16 %v42
  %v95 = vunpack.c.l.b16 %v43
  %v96 = vunpack.c.h.b16 %v43
  %v97 = vunpack.c.l.b16 %v44
  %v98 = vunpack.c.h.b16 %v44
  %v99 = vpack.c.b16 %v69, %v67
  %v100 = vpack.c.b16 %v70, %v68
  %v101 = vpack.c.b16 %v73, %v71
  %v102 = vpack.c.b16 %v74, %v72
  %v103 = vpack.c.b16 %v77, %v75
  %v104 = vpack.c.b16 %v78, %v76
  %v105 = vpack.c.b16 %v81, %v79
  %v106 = vpack.c.b16 %v82, %v80
  %v107 = vpack.c.b16 %v85, %v83
  %v108 = vpack.c.b16 %v86, %v84
  %v109 = vpack.c.b16 %v89, %v87
  %v110 = vpack.c.b16 %v90, %v88
  %v111 = vpack.c.b16 %v93, %v91
  %v112 = vpack.c.b16 %v94, %v92
  %v113 = vpack.c.b16 %v97, %v95
  %v114 = vpack.c.b16 %v98, %v96
  %131 = vmatprep.subr.bf16.mxu0 %v100
  %132 = vmatpush1.bf16.msra.mxu0 %v99
  %133 = vmatprep.subr.bf16.mxu0 %v102
  %134 = vmatpush1.bf16.msra.mxu0 %v101
  %135 = vmatprep.subr.bf16.mxu0 %v104
  %136 = vmatpush1.bf16.msra.mxu0 %v103
  %137 = vmatprep.subr.bf16.mxu0 %v106
  %138 = vmatpush1.bf16.msra.mxu0 %v105
  %139 = vmatprep.subr.bf16.mxu0 %v108
  %140 = vmatpush1.bf16.msra.mxu0 %v107
  %141 = vmatprep.subr.bf16.mxu0 %v110
  %142 = vmatpush1.bf16.msra.mxu0 %v109
  %143 = vmatprep.subr.bf16.mxu0 %v112
  %144 = vmatpush1.bf16.msra.mxu0 %v111
  %145 = vmatprep.subr.bf16.mxu0 %v114
  %146 = vmatpush1.bf16.msra.mxu0 %v113
  %147 = vmatprep.subr.bf16.mxu0 0
  %148 = vmatpush1.bf16.msra.mxu0 0
  %149 = vmatprep.subr.bf16.mxu0 0
  %150 = vmatpush1.bf16.msra.mxu0 0
  %151 = vmatprep.subr.bf16.mxu0 0
  %152 = vmatpush1.bf16.msra.mxu0 0
  %153 = vmatprep.subr.bf16.mxu0 0
  %154 = vmatpush1.bf16.msra.mxu0 0
  %155 = vmatprep.subr.bf16.mxu0 0
  %156 = vmatpush1.bf16.msra.mxu0 0
  %157 = vmatprep.subr.bf16.mxu0 0
  %158 = vmatpush1.bf16.msra.mxu0 0
  %159 = vmatprep.subr.bf16.mxu0 0
  %160 = vmatpush1.bf16.msra.mxu0 0
  %161 = vmatprep.subr.bf16.mxu0 0
  %162 = vmatpush1.bf16.msra.mxu0 0
  %163 = vmatprep.mubr.bf16.mxu0 0
  %164 = vmatmul.mubr.bf16.gmra.mrb[0].mxu0 %v49
  %v165 = vpop.f32.mrb[0].mxu0
  %v166 = vadd.f32 0.0, %v165
  %v167 = vpop.f32.mrb[0].mxu0
  %v168 = vadd.f32 0.0, %v167
  %v169 = vpop.f32.mrb[0].mxu0
  %v170 = vadd.f32 0.0, %v169
  %v171 = vpop.f32.mrb[0].mxu0
  %v172 = vadd.f32 0.0, %v171
  %173 = vdwg.mxu0
  %v174 = vadd.f32 %v23, %v166
  %v175 = vadd.f32 %v24, %v168
  %v176 = vadd.f32 %v25, %v170
  %v177 = vadd.f32 %v26, %v172
  %178 = vst [vmem:[#allocation2] sm:$0xff] %v174
  %179 = vst [vmem:[#allocation2 + $0x8] sm:$0xff] %v175
  %180 = vst [vmem:[#allocation2 + $0x10] sm:$0xff] %v176
  %181 = vst [vmem:[#allocation2 + $0x18] sm:$0xff] %v177
  // Predicated region
  $region18: #{nbs_deeplab_head_forward.12} parent=0 // pred_check
    %p182 = pneg %p15
  $region19: #{nbs_deeplab_head_forward.12} parent=0 // pred_check_branch
    %184 = sbr.rel (%p182) target = $region21
  $region20: #{nbs_deeplab_head_forward.12} parent=0 // pred_region
    %v185 = vld [vmem:[#allocation2] sm:$0xff]
    %v186 = vld [vmem:[#allocation2 + $0x8] sm:$0xff]
    %v187 = vld [vmem:[#allocation2 + $0x10] sm:$0xff]
    %v188 = vld [vmem:[#allocation2 + $0x18] sm:$0xff]
    %v189 = vld [vmem:[%s2] sm:$0x3]
    %v191 = vlaneseq
    %v192 = vshrl.u32 %v191, 7
    %v193 = vsub.s32 0, %v192
    %v194 = vrot.slane %v189, %v193
    %v195 = vlaneseq
    %v196 = vshrl.u32 %v195, 7
    %v197 = vsub.s32 1, %v196
    %v198 = vrot.slane %v189, %v197
    %v201 = vadd.f32 %v185, %v194
    %v202 = vadd.f32 %v186, %v198
    %v203 = vadd.f32 %v187, %v194
    %v204 = vadd.f32 %v188, %v198
    %v205 = vmax.f32 %v201, 0.0
    %v206 = vmax.f32 %v202, 0.0
    %v207 = vmax.f32 %v203, 0.0
    %v208 = vmax.f32 %v204, 0.0
    %209 = vst [vmem:[%s3] sm:$0xff] %v205
    %210 = vst [vmem:[%s3 + $0x8] sm:$0xff] %v206
    %211 = vst [vmem:[%s3 + $0x10] sm:$0xff] %v207
    %212 = vst [vmem:[%s3 + $0x18] sm:$0xff] %v208
  $region21: #{nbs_deeplab_head_forward.12} parent=0 // pred_fallthru
    _
  // Predicated region
  $region22: #{nbs_deeplab_head_forward.12} parent=0 // pred_check
    _
  $region23: #{nbs_deeplab_head_forward.12} parent=0 // pred_check_branch
    %214 = sbr.rel (0) target = $region25
  $region24: #{nbs_deeplab_head_forward.12} parent=0 // pred_region
    _
  $region25: #{nbs_deeplab_head_forward.12} parent=0 // pred_fallthru
    _
  // Predicated region
  $region26: #{nbs_deeplab_head_forward.12} parent=0 // pred_check
    _
  $region27: #{nbs_deeplab_head_forward.12} parent=0 // pred_check_branch
    %216 = sbr.rel (0) target = $region29
  $region28: #{nbs_deeplab_head_forward.12} parent=0 // pred_region
    _
  $region29: #{nbs_deeplab_head_forward.12} parent=0 // pred_fallthru
    _

// kernel: nbs_deeplab_head_forward.9
$region0: #{nbs_deeplab_head_forward.9}
  #allocation0 [shape = 'u32[]', space=smem, size = 0x4, offset = 0x4, fixed_abs, tag = 'smem constant byte address 0x4 - core index']
  #allocation1 [shape = 'u32[144,128]{1,0:T(1,128)}', space=vmem, size = 0x12000, scoped, tag = 'internal scratch']
  #allocation2 [shape = 'f32[256,256]{1,0:T(8,128)}', space=vmem, size = 0x40000, scoped, tag = 'scratch operand']
  %s0 = inlined_call_operand.vmem [shape: bf16[512,128], index: 0, kind: input, shape index: {}]
  %s1 = inlined_call_operand.vmem [shape: bf16[128,256], index: 1, kind: input, shape index: {}]
  %s2 = inlined_call_operand.vmem [shape: f32[1,256], index: 2, kind: input, shape index: {}]
  %s3 = inlined_call_operand.vmem [shape: bf16[512,256], index: 3, kind: output, shape index: {}]
  %s4 = sld [smem:[#allocation0]]
  $region53: #{nbs_deeplab_head_forward.9} parent=0
    _
  %s6 = ssub.s32 1, %s4
  %s7 = scalar_select 0, %s6, %s4
  loop: start=0, step=1, limit=4
  $region2: #{nbs_deeplab_head_forward.9} parent=0 // loop_pre_header
    _
  $region3: #{nbs_deeplab_head_forward.9} parent=0 // loop_header
    %s9 = sphi 0, %s13
    %p10 = scmp.ge.s32.totalorder %s9, 4
    %s16 = sphi 0, %s28
    %s17 = sphi 0, %s24
    %s18 = sphi 0, %s16
    %s19 = sphi 0, %s17
    %s20 = sphi 0, %s18
    %s21 = sphi 0, %s19
    %s33 = sphi 0, %s35
    %s36 = sphi 0, %s33
    %s37 = sphi 0, %s36
    %s53 = sphi 0, %s37
    %s59 = sphi 0, %s61
    %s62 = sphi 0, %s59
    %s63 = sphi 0, %s62
    %s79 = sphi 0, %s63
    %s83 = sphi 0, %s83
    %s85 = sphi 0, %s83
    %s86 = sphi 0, %s85
    %s100 = sphi 0, %s86
    %s106 = sphi 0, %s108
    %s109 = sphi 0, %s106
    %s110 = sphi 0, %s109
    %s126 = sphi 0, %s110
  $region4: #{nbs_deeplab_head_forward.9} parent=0 // loop_header_branch
    %12 = sbr.rel (%p10) target = $region8
  $region5: #{nbs_deeplab_head_forward.9} parent=0 // loop_body
    %s14 = ssub.s32 %s9, 1
    %s15 = ssub.s32 %s9, 2
    %s22 = sadd.s32 1, %s17
    %p23 = scmp.ge.s32.totalorder %s22, 1
    %s24 = scalar_select %p23, 0, %s22
    %s25 = sadd.s32 1, %s16
    %s26 = scalar_select %p23, %s25, %s16
    %p27 = scmp.ge.s32.totalorder %s26, 2
    %s28 = scalar_select %p27, 0, %s26
    %s29 = ssub.s32 %s16, %s28
    %s30 = ssub.s32 %s17, %s24
    %s31 = sor.u32 %s29, %s30
    %p32 = scmp.eq.s32.totalorder %s31, 0
    %s34 = sadd.s32 %s33, 1
    %s35 = scalar_select %p32, %s33, %s34
    %p38 = pneg %p32
    %p39 = scmp.eq.s32.totalorder %s9, 1
    %p40 = por %p38, %p39
    %p41 = scmp.ne.s32.totalorder %s33, %s36
    %p42 = scmp.eq.s32.totalorder %s9, 0
    %p43 = por %p41, %p42
    %p44 = scmp.ne.s32.totalorder %s33, %s36
    %p45 = scmp.eq.s32.totalorder %s14, 1
    %p46 = por %p44, %p45
    %p47 = scmp.ne.s32.totalorder %s36, %s37
    %p48 = scmp.eq.s32.totalorder %s14, 0
    %p49 = por %p47, %p48
    %p50 = scmp.ne.s32.totalorder %s36, %s37
    %p51 = scmp.eq.s32.totalorder %s15, 1
    %p52 = por %p50, %p51
    %p54 = scmp.ne.s32.totalorder %s37, %s53
    %p55 = scmp.eq.s32.totalorder %s15, 0
    %p56 = por %p54, %p55
    %s57 = ssub.s32 %s17, %s24
    %p58 = scmp.eq.s32.totalorder %s57, 0
    %s60 = sadd.s32 %s59, 1
    %s61 = scalar_select %p58, %s59, %s60
    %p64 = pneg %p58
    %p65 = scmp.eq.s32.totalorder %s9, 1
    %p66 = por %p64, %p65
    %p67 = scmp.ne.s32.totalorder %s59, %s62
    %p68 = scmp.eq.s32.totalorder %s9, 0
    %p69 = por %p67, %p68
    %p70 = scmp.ne.s32.totalorder %s59, %s62
    %p71 = scmp.eq.s32.totalorder %s14, 1
    %p72 = por %p70, %p71
    %p73 = scmp.ne.s32.totalorder %s62, %s63
    %p74 = scmp.eq.s32.totalorder %s14, 0
    %p75 = por %p73, %p74
    %p76 = scmp.ne.s32.totalorder %s62, %s63
    %p77 = scmp.eq.s32.totalorder %s15, 1
    %p78 = por %p76, %p77
    %p80 = scmp.ne.s32.totalorder %s63, %s79
    %p81 = scmp.eq.s32.totalorder %s15, 0
    %p82 = por %p80, %p81
    %s84 = sadd.s32 %s83, 1
    %p87 = scmp.eq.s32.totalorder %s9, 1
    %p88 = scmp.ne.s32.totalorder %s83, %s85
    %p89 = scmp.eq.s32.totalorder %s9, 0
    %p90 = por %p88, %p89
    %p91 = scmp.ne.s32.totalorder %s83, %s85
    %p92 = scmp.eq.s32.totalorder %s14, 1
    %p93 = por %p91, %p92
    %p94 = scmp.ne.s32.totalorder %s85, %s86
    %p95 = scmp.eq.s32.totalorder %s14, 0
    %p96 = por %p94, %p95
    %p97 = scmp.ne.s32.totalorder %s85, %s86
    %p98 = scmp.eq.s32.totalorder %s15, 1
    %p99 = por %p97, %p98
    %p101 = scmp.ne.s32.totalorder %s86, %s100
    %p102 = scmp.eq.s32.totalorder %s15, 0
    %p103 = por %p101, %p102
    %s104 = ssub.s32 %s16, %s28
    %p105 = scmp.eq.s32.totalorder %s104, 0
    %s107 = sadd.s32 %s106, 1
    %s108 = scalar_select %p105, %s106, %s107
    %p111 = pneg %p105
    %p112 = scmp.eq.s32.totalorder %s9, 1
    %p113 = por %p111, %p112
    %p114 = scmp.ne.s32.totalorder %s106, %s109
    %p115 = scmp.eq.s32.totalorder %s9, 0
    %p116 = por %p114, %p115
    %p117 = scmp.ne.s32.totalorder %s106, %s109
    %p118 = scmp.eq.s32.totalorder %s14, 1
    %p119 = por %p117, %p118
    %p120 = scmp.ne.s32.totalorder %s109, %s110
    %p121 = scmp.eq.s32.totalorder %s14, 0
    %p122 = por %p120, %p121
    %p123 = scmp.ne.s32.totalorder %s109, %s110
    %p124 = scmp.eq.s32.totalorder %s15, 1
    %p125 = por %p123, %p124
    %p127 = scmp.ne.s32.totalorder %s110, %s126
    %p128 = scmp.eq.s32.totalorder %s15, 0
    %p129 = por %p127, %p128
    %p130 = scmp.le.s32.totalorder 1, %s9
    %p131 = scmp.lt.s32.totalorder %s9, 3
    %p132 = pnand %p130, %p131
    %p133 = pneg %p132
    // Predicated region
    $region9: #{nbs_deeplab_head_forward.9} parent=5 // pred_check
      _
    $region10: #{nbs_deeplab_head_forward.9} parent=5 // pred_check_branch
      %135 = sbr.rel (%p132) target = $region12
    $region11: #{nbs_deeplab_head_forward.9} parent=5 // pred_region
      %s136 = ssub.s32 %s9, 1
      // Predicated region
      $region13: #{nbs_deeplab_head_forward.9} parent=11 // pred_check
        %p137 = pneg %p75
      $region14: #{nbs_deeplab_head_forward.9} parent=11 // pred_check_branch
        %139 = sbr.rel (%p137) target = $region16
      $region15: #{nbs_deeplab_head_forward.9} parent=11 // pred_region
        %s140 = smul.u32 16, %s19
        %p141 = scmp.lt.s32.totalorder %s140, 15
        %s142 = scalar_select %p141, %s140, 15
        %s143 = smul.addr %s142, 2
        %s144 = smul.addr %s143, 4
        %s145 = scalar_lea.vmem %s1, %s144
        %s146 = smul.u32 16, %s19
      $region16: #{nbs_deeplab_head_forward.9} parent=11 // pred_fallthru
        _
      // Predicated region
      $region17: #{nbs_deeplab_head_forward.9} parent=11 // pred_check
        %p147 = pneg %p96
      $region18: #{nbs_deeplab_head_forward.9} parent=11 // pred_check_branch
        %149 = sbr.rel (%p147) target = $region20
      $region19: #{nbs_deeplab_head_forward.9} parent=11 // pred_region
        _
      $region20: #{nbs_deeplab_head_forward.9} parent=11 // pred_fallthru
        _
    $region12: #{nbs_deeplab_head_forward.9} parent=5 // pred_fallthru
      _
    %p150 = scmp.lt.s32.totalorder %s9, 2
    // Predicated region
    $region21: #{nbs_deeplab_head_forward.9} parent=5 // pred_check
      %p151 = pneg %p150
    $region22: #{nbs_deeplab_head_forward.9} parent=5 // pred_check_branch
      %153 = sbr.rel (%p151) target = $region24
    $region23: #{nbs_deeplab_head_forward.9} parent=5 // pred_region
      // Predicated region
      $region25: #{nbs_deeplab_head_forward.9} parent=23 // pred_check
        %p154 = pneg %p43
      $region26: #{nbs_deeplab_head_forward.9} parent=23 // pred_check_branch
        %156 = sbr.rel (%p154) target = $region28
      $region27: #{nbs_deeplab_head_forward.9} parent=23 // pred_region
        %s157 = smul.u32 32, %s16
        %p158 = scmp.lt.s32.totalorder %s157, 63
        %s159 = scalar_select %p158, %s157, 63
        %p160 = scmp.lt.s32.totalorder %s17, 0
        %s161 = scalar_select %p160, %s17, 0
        %s162 = sadd.s32 %s161, %s159
        %s163 = smul.addr %s162, 4
        %s164 = scalar_lea.vmem %s0, %s163
        %s165 = smul.u32 32, %s16
      $region28: #{nbs_deeplab_head_forward.9} parent=23 // pred_fallthru
        _
    $region24: #{nbs_deeplab_head_forward.9} parent=5 // pred_fallthru
      _
    %p166 = scmp.le.s32.totalorder 1, %s9
    %p167 = scmp.lt.s32.totalorder %s9, 3
    %p168 = pnand %p166, %p167
    %p169 = pneg %p168
    // Predicated region
    $region29: #{nbs_deeplab_head_forward.9} parent=5 // pred_check
      _
    $region30: #{nbs_deeplab_head_forward.9} parent=5 // pred_check_branch
      %171 = sbr.rel (%p168) target = $region32
    $region31: #{nbs_deeplab_head_forward.9} parent=5 // pred_region
      %s172 = ssub.s32 %s9, 1
      %s173 = smul.u32 32, %s18
      %p174 = scmp.lt.s32.totalorder %s173, 63
      %s175 = scalar_select %p174, %s173, 63
      %p176 = scmp.lt.s32.totalorder %s19, 0
      %s177 = scalar_select %p176, %s19, 0
      %s178 = sadd.s32 %s177, %s175
      %s179 = smul.addr %s178, 4
      %s180 = scalar_lea.vmem %s0, %s179
      %p181 = pneg %p49
      %p182 = pneg %p46
      %s183 = smul.u32 16, %s19
      %p184 = scmp.lt.s32.totalorder %s183, 15
      %s185 = scalar_select %p184, %s183, 15
      %s186 = smul.addr %s185, 2
      %s187 = smul.addr %s186, 4
      %s188 = scalar_lea.vmem %s1, %s187
      %p189 = pneg %p75
      %p190 = pneg %p72
      %p191 = pneg %p96
      %p192 = pneg %p93
      %p193 = pneg %p122
      %p194 = pneg %p119
      %s195 = smul.u32 32, %s18
      %p196 = scmp.lt.s32.totalorder %s195, 63
      %s197 = scalar_select %p196, %s195, 63
      %s198 = smul.addr %s197, 2
      %s199 = smul.addr %s198, 4
      %s200 = scalar_lea.vmem %s3, %s199
      %s201 = smul.u32 32, %s18
      %p202 = scmp.lt.s32.totalorder %s201, 63
      %s203 = scalar_select %p202, %s201, 63
      %p204 = scmp.lt.s32.totalorder %s19, 0
      %s205 = scalar_select %p204, %s19, 0
      %s206 = sadd.s32 %s205, %s203
      %s207 = smul.addr %s206, 4
      %s208 = scalar_lea.vmem %s0, %s207
      %s209 = smul.u32 32, %s18
      %s210 = smul.u32 16, %s19
      %p211 = scmp.lt.s32.totalorder %s210, 15
      %s212 = scalar_select %p211, %s210, 15
      %s213 = smul.addr %s212, 2
      %s214 = smul.addr %s213, 4
      %s215 = scalar_lea.vmem %s1, %s214
      %s216 = smul.u32 16, %s19
      %s217 = smul.u32 32, %s18
      %p218 = scmp.lt.s32.totalorder %s217, 63
      %s219 = scalar_select %p218, %s217, 63
      %s220 = smul.addr %s219, 2
      %s221 = smul.addr %s220, 4
      %s222 = scalar_lea.vmem %s3, %s221
      %s223 = smul.u32 32, %s18
      %p225 = scmp.eq.s32.totalorder %s19, 0
      // Predicated region
      $region33: #{nbs_deeplab_head_forward.9} parent=31 // pred_check
        %p226 = pneg %p225
      $region34: #{nbs_deeplab_head_forward.9} parent=31 // pred_check_branch
        %228 = sbr.rel (%p226) target = $region36
      $region35: #{nbs_deeplab_head_forward.9} parent=31 // pred_region
        %229 = vst [vmem:[#allocation2] sm:$0xff] 0.0
        %230 = vst [vmem:[#allocation2 + $0x8] sm:$0xff] 0.0
        %231 = vst [vmem:[#allocation2 + $0x10] sm:$0xff] 0.0
        %232 = vst [vmem:[#allocation2 + $0x18] sm:$0xff] 0.0
        %233 = vst [vmem:[#allocation2 + $0x20] sm:$0xff] 0.0
        %234 = vst [vmem:[#allocation2 + $0x28] sm:$0xff] 0.0
        %235 = vst [vmem:[#allocation2 + $0x30] sm:$0xff] 0.0
        %236 = vst [vmem:[#allocation2 + $0x38] sm:$0xff] 0.0
        %237 = vst [vmem:[#allocation2 + $0x40] sm:$0xff] 0.0
        %238 = vst [vmem:[#allocation2 + $0x48] sm:$0xff] 0.0
        %239 = vst [vmem:[#allocation2 + $0x50] sm:$0xff] 0.0
        %240 = vst [vmem:[#allocation2 + $0x58] sm:$0xff] 0.0
        %241 = vst [vmem:[#allocation2 + $0x60] sm:$0xff] 0.0
        %242 = vst [vmem:[#allocation2 + $0x68] sm:$0xff] 0.0
        %243 = vst [vmem:[#allocation2 + $0x70] sm:$0xff] 0.0
        %244 = vst [vmem:[#allocation2 + $0x78] sm:$0xff] 0.0
        %245 = vst [vmem:[#allocation2 + $0x80] sm:$0xff] 0.0
        %246 = vst [vmem:[#allocation2 + $0x88] sm:$0xff] 0.0
        %247 = vst [vmem:[#allocation2 + $0x90] sm:$0xff] 0.0
        %248 = vst [vmem:[#allocation2 + $0x98] sm:$0xff] 0.0
        %249 = vst [vmem:[#allocation2 + $0xa0] sm:$0xff] 0.0
        %250 = vst [vmem:[#allocation2 + $0xa8] sm:$0xff] 0.0
        %251 = vst [vmem:[#allocation2 + $0xb0] sm:$0xff] 0.0
        %252 = vst [vmem:[#allocation2 + $0xb8] sm:$0xff] 0.0
        %253 = vst [vmem:[#allocation2 + $0xc0] sm:$0xff] 0.0
        %254 = vst [vmem:[#allocation2 + $0xc8] sm:$0xff] 0.0
        %255 = vst [vmem:[#allocation2 + $0xd0] sm:$0xff] 0.0
        %256 = vst [vmem:[#allocation2 + $0xd8] sm:$0xff] 0.0
        %257 = vst [vmem:[#allocation2 + $0xe0] sm:$0xff] 0.0
        %258 = vst [vmem:[#allocation2 + $0xe8] sm:$0xff] 0.0
        %259 = vst [vmem:[#allocation2 + $0xf0] sm:$0xff] 0.0
        %260 = vst [vmem:[#allocation2 + $0xf8] sm:$0xff] 0.0
        %261 = vst [vmem:[#allocation2 + $0x100] sm:$0xff] 0.0
        %262 = vst [vmem:[#allocation2 + $0x108] sm:$0xff] 0.0
        %263 = vst [vmem:[#allocation2 + $0x110] sm:$0xff] 0.0
        %264 = vst [vmem:[#allocation2 + $0x118] sm:$0xff] 0.0
        %265 = vst [vmem:[#allocation2 + $0x120] sm:$0xff] 0.0
        %266 = vst [vmem:[#allocation2 + $0x128] sm:$0xff] 0.0
        %267 = vst [vmem:[#allocation2 + $0x130] sm:$0xff] 0.0
        %268 = vst [vmem:[#allocation2 + $0x138] sm:$0xff] 0.0
        %269 = vst [vmem:[#allocation2 + $0x140] sm:$0xff] 0.0
        %270 = vst [vmem:[#allocation2 + $0x148] sm:$0xff] 0.0
        %271 = vst [vmem:[#allocation2 + $0x150] sm:$0xff] 0.0
        %272 = vst [vmem:[#allocation2 + $0x158] sm:$0xff] 0.0
        %273 = vst [vmem:[#allocation2 + $0x160] sm:$0xff] 0.0
        %274 = vst [vmem:[#allocation2 + $0x168] sm:$0xff] 0.0
        %275 = vst [vmem:[#allocation2 + $0x170] sm:$0xff] 0.0
        %276 = vst [vmem:[#allocation2 + $0x178] sm:$0xff] 0.0
        %277 = vst [vmem:[#allocation2 + $0x180] sm:$0xff] 0.0
        %278 = vst [vmem:[#allocation2 + $0x188] sm:$0xff] 0.0
        %279 = vst [vmem:[#allocation2 + $0x190] sm:$0xff] 0.0
        %280 = vst [vmem:[#allocation2 + $0x198] sm:$0xff] 0.0
        %281 = vst [vmem:[#allocation2 + $0x1a0] sm:$0xff] 0.0
        %282 = vst [vmem:[#allocation2 + $0x1a8] sm:$0xff] 0.0
        %283 = vst [vmem:[#allocation2 + $0x1b0] sm:$0xff] 0.0
        %284 = vst [vmem:[#allocation2 + $0x1b8] sm:$0xff] 0.0
        %285 = vst [vmem:[#allocation2 + $0x1c0] sm:$0xff] 0.0
        %286 = vst [vmem:[#allocation2 + $0x1c8] sm:$0xff] 0.0
        %287 = vst [vmem:[#allocation2 + $0x1d0] sm:$0xff] 0.0
        %288 = vst [vmem:[#allocation2 + $0x1d8] sm:$0xff] 0.0
        %289 = vst [vmem:[#allocation2 + $0x1e0] sm:$0xff] 0.0
        %290 = vst [vmem:[#allocation2 + $0x1e8] sm:$0xff] 0.0
        %291 = vst [vmem:[#allocation2 + $0x1f0] sm:$0xff] 0.0
        %292 = vst [vmem:[#allocation2 + $0x1f8] sm:$0xff] 0.0
      $region36: #{nbs_deeplab_head_forward.9} parent=31 // pred_fallthru
        _
      %v293 = vld [vmem:[#allocation2] sm:$0xff]
      %v294 = vld [vmem:[#allocation2 + $0x8] sm:$0xff]
      %v295 = vld [vmem:[#allocation2 + $0x10] sm:$0xff]
      %v296 = vld [vmem:[#allocation2 + $0x18] sm:$0xff]
      %v297 = vld [vmem:[#allocation2 + $0x20] sm:$0xff]
      %v298 = vld [vmem:[#allocation2 + $0x28] sm:$0xff]
      %v299 = vld [vmem:[#allocation2 + $0x30] sm:$0xff]
      %v300 = vld [vmem:[#allocation2 + $0x38] sm:$0xff]
      %v301 = vld [vmem:[#allocation2 + $0x40] sm:$0xff]
      %v302 = vld [vmem:[#allocation2 + $0x48] sm:$0xff]
      %v303 = vld [vmem:[#allocation2 + $0x50] sm:$0xff]
      %v304 = vld [vmem:[#allocation2 + $0x58] sm:$0xff]
      %v305 = vld [vmem:[#allocation2 + $0x60] sm:$0xff]
      %v306 = vld [vmem:[#allocation2 + $0x68] sm:$0xff]
      %v307 = vld [vmem:[#allocation2 + $0x70] sm:$0xff]
      %v308 = vld [vmem:[#allocation2 + $0x78] sm:$0xff]
      %v309 = vld [vmem:[#allocation2 + $0x80] sm:$0xff]
      %v310 = vld [vmem:[#allocation2 + $0x88] sm:$0xff]
      %v311 = vld [vmem:[#allocation2 + $0x90] sm:$0xff]
      %v312 = vld [vmem:[#allocation2 + $0x98] sm:$0xff]
      %v313 = vld [vmem:[#allocation2 + $0xa0] sm:$0xff]
      %v314 = vld [vmem:[#allocation2 + $0xa8] sm:$0xff]
      %v315 = vld [vmem:[#allocation2 + $0xb0] sm:$0xff]
      %v316 = vld [vmem:[#allocation2 + $0xb8] sm:$0xff]
      %v317 = vld [vmem:[#allocation2 + $0xc0] sm:$0xff]
      %v318 = vld [vmem:[#allocation2 + $0xc8] sm:$0xff]
      %v319 = vld [vmem:[#allocation2 + $0xd0] sm:$0xff]
      %v320 = vld [vmem:[#allocation2 + $0xd8] sm:$0xff]
      %v321 = vld [vmem:[#allocation2 + $0xe0] sm:$0xff]
      %v322 = vld [vmem:[#allocation2 + $0xe8] sm:$0xff]
      %v323 = vld [vmem:[#allocation2 + $0xf0] sm:$0xff]
      %v324 = vld [vmem:[#allocation2 + $0xf8] sm:$0xff]
      %v325 = vld [vmem:[#allocation2 + $0x100] sm:$0xff]
      %v326 = vld [vmem:[#allocation2 + $0x108] sm:$0xff]
      %v327 = vld [vmem:[#allocation2 + $0x110] sm:$0xff]
      %v328 = vld [vmem:[#allocation2 + $0x118] sm:$0xff]
      %v329 = vld [vmem:[#allocation2 + $0x120] sm:$0xff]
      %v330 = vld [vmem:[#allocation2 + $0x128] sm:$0xff]
      %v331 = vld [vmem:[#allocation2 + $0x130] sm:$0xff]
      %v332 = vld [vmem:[#allocation2 + $0x138] sm:$0xff]
      %v333 = vld [vmem:[#allocation2 + $0x140] sm:$0xff]
      %v334 = vld [vmem:[#allocation2 + $0x148] sm:$0xff]
      %v335 = vld [vmem:[#allocation2 + $0x150] sm:$0xff]
      %v336 = vld [vmem:[#allocation2 + $0x158] sm:$0xff]
      %v337 = vld [vmem:[#allocation2 + $0x160] sm:$0xff]
      %v338 = vld [vmem:[#allocation2 + $0x168] sm:$0xff]
      %v339 = vld [vmem:[#allocation2 + $0x170] sm:$0xff]
      %v340 = vld [vmem:[#allocation2 + $0x178] sm:$0xff]
      %v341 = vld [vmem:[#allocation2 + $0x180] sm:$0xff]
      %v342 = vld [vmem:[#allocation2 + $0x188] sm:$0xff]
      %v343 = vld [vmem:[#allocation2 + $0x190] sm:$0xff]
      %v344 = vld [vmem:[#allocation2 + $0x198] sm:$0xff]
      %v345 = vld [vmem:[#allocation2 + $0x1a0] sm:$0xff]
      %v346 = vld [vmem:[#allocation2 + $0x1a8] sm:$0xff]
      %v347 = vld [vmem:[#allocation2 + $0x1b0] sm:$0xff]
      %v348 = vld [vmem:[#allocation2 + $0x1b8] sm:$0xff]
      %v349 = vld [vmem:[#allocation2 + $0x1c0] sm:$0xff]
      %v350 = vld [vmem:[#allocation2 + $0x1c8] sm:$0xff]
      %v351 = vld [vmem:[#allocation2 + $0x1d0] sm:$0xff]
      %v352 = vld [vmem:[#allocation2 + $0x1d8] sm:$0xff]
      %v353 = vld [vmem:[#allocation2 + $0x1e0] sm:$0xff]
      %v354 = vld [vmem:[#allocation2 + $0x1e8] sm:$0xff]
      %v355 = vld [vmem:[#allocation2 + $0x1f0] sm:$0xff]
      %v356 = vld [vmem:[#allocation2 + $0x1f8] sm:$0xff]
      %v357 = vld [vmem:[%s208] sm:$0xf]
      %v358 = vld [vmem:[%s208 + $0x4] sm:$0xf]
      %v359 = vld [vmem:[%s208 + $0x8] sm:$0xf]
      %v360 = vld [vmem:[%s208 + $0xc] sm:$0xf]
      %v361 = vld [vmem:[%s208 + $0x10] sm:$0xf]
      %v362 = vld [vmem:[%s208 + $0x14] sm:$0xf]
      %v363 = vld [vmem:[%s208 + $0x18] sm:$0xf]
      %v364 = vld [vmem:[%s208 + $0x1c] sm:$0xf]
      %v365 = vld [vmem:[%s208 + $0x20] sm:$0xf]
      %v366 = vld [vmem:[%s208 + $0x24] sm:$0xf]
      %v367 = vld [vmem:[%s208 + $0x28] sm:$0xf]
      %v368 = vld [vmem:[%s208 + $0x2c] sm:$0xf]
      %v369 = vld [vmem:[%s208 + $0x30] sm:$0xf]
      %v370 = vld [vmem:[%s208 + $0x34] sm:$0xf]
      %v371 = vld [vmem:[%s208 + $0x38] sm:$0xf]
      %v372 = vld [vmem:[%s208 + $0x3c] sm:$0xf]
      %v373 = vld [vmem:[%s208 + $0x40] sm:$0xf]
      %v374 = vld [vmem:[%s208 + $0x44] sm:$0xf]
      %v375 = vld [vmem:[%s208 + $0x48] sm:$0xf]
      %v376 = vld [vmem:[%s208 + $0x4c] sm:$0xf]
      %v377 = vld [vmem:[%s208 + $0x50] sm:$0xf]
      %v378 = vld [vmem:[%s208 + $0x54] sm:$0xf]
      %v379 = vld [vmem:[%s208 + $0x58] sm:$0xf]
      %v380 = vld [vmem:[%s208 + $0x5c] sm:$0xf]
      %v381 = vld [vmem:[%s208 + $0x60] sm:$0xf]
      %v382 = vld [vmem:[%s208 + $0x64] sm:$0xf]
      %v383 = vld [vmem:[%s208 + $0x68] sm:$0xf]
      %v384 = vld [vmem:[%s208 + $0x6c] sm:$0xf]
      %v385 = vld [vmem:[%s208 + $0x70] sm:$0xf]
      %v386 = vld [vmem:[%s208 + $0x74] sm:$0xf]
      %v387 = vld [vmem:[%s208 + $0x78] sm:$0xf]
      %v388 = vld [vmem:[%s208 + $0x7c] sm:$0xf]
      %v389 = vld [vmem:[%s215] sm:$0xff]
      %v390 = vld [vmem:[%s215 + $0x8] sm:$0xff]
      %v391 = vld [vmem:[%s215 + $0x10] sm:$0xff]
      %v392 = vld [vmem:[%s215 + $0x18] sm:$0xff]
      %v393 = vld [vmem:[%s215 + $0x20] sm:$0xff]
      %v394 = vld [vmem:[%s215 + $0x28] sm:$0xff]
      %v395 = vld [vmem:[%s215 + $0x30] sm:$0xff]
      %v396 = vld [vmem:[%s215 + $0x38] sm:$0xff]
      %v397 = vld [vmem:[%s215 + $0x40] sm:$0xff]
      %v398 = vld [vmem:[%s215 + $0x48] sm:$0xff]
      %v399 = vld [vmem:[%s215 + $0x50] sm:$0xff]
      %v400 = vld [vmem:[%s215 + $0x58] sm:$0xff]
      %v401 = vld [vmem:[%s215 + $0x60] sm:$0xff]
      %v402 = vld [vmem:[%s215 + $0x68] sm:$0xff]
      %v403 = vld [vmem:[%s215 + $0x70] sm:$0xff]
      %v404 = vld [vmem:[%s215 + $0x78] sm:$0xff]
      %v437 = vunpack.c.l.b16 %v357
      %v438 = vunpack.c.l.b16 %v358
      %v439 = vunpack.c.l.b16 %v359
      %v440 = vunpack.c.l.b16 %v360
      %v441 = vunpack.c.l.b16 %v361
      %v442 = vunpack.c.l.b16 %v362
      %v443 = vunpack.c.l.b16 %v363
      %v444 = vunpack.c.l.b16 %v364
      %v445 = vunpack.c.l.b16 %v365
      %v446 = vunpack.c.l.b16 %v366
      %v447 = vunpack.c.l.b16 %v367
      %v448 = vunpack.c.l.b16 %v368
      %v449 = vunpack.c.l.b16 %v369
      %v450 = vunpack.c.l.b16 %v370
      %v451 = vunpack.c.l.b16 %v371
      %v452 = vunpack.c.l.b16 %v372
      %v453 = vunpack.c.l.b16 %v373
      %v454 = vunpack.c.l.b16 %v374
      %v455 = vunpack.c.l.b16 %v375
      %v456 = vunpack.c.l.b16 %v376
      %v457 = vunpack.c.l.b16 %v377
      %v458 = vunpack.c.l.b16 %v378
      %v459 = vunpack.c.l.b16 %v379
      %v460 = vunpack.c.l.b16 %v380
      %v461 = vunpack.c.l.b16 %v381
      %v462 = vunpack.c.l.b16 %v382
      %v463 = vunpack.c.l.b16 %v383
      %v464 = vunpack.c.l.b16 %v384
      %v465 = vunpack.c.l.b16 %v385
      %v466 = vunpack.c.l.b16 %v386
      %v467 = vunpack.c.l.b16 %v387
      %v468 = vunpack.c.l.b16 %v388
      %v469 = vpack.c.b16 %v438, %v437
      %v470 = vpack.c.b16 %v440, %v439
      %v471 = vpack.c.b16 %v442, %v441
      %v472 = vpack.c.b16 %v444, %v443
      %v473 = vpack.c.b16 %v446, %v445
      %v474 = vpack.c.b16 %v448, %v447
      %v475 = vpack.c.b16 %v450, %v449
      %v476 = vpack.c.b16 %v452, %v451
      %v477 = vpack.c.b16 %v454, %v453
      %v478 = vpack.c.b16 %v456, %v455
      %v479 = vpack.c.b16 %v458, %v457
      %v480 = vpack.c.b16 %v460, %v459
      %v481 = vpack.c.b16 %v462, %v461
      %v482 = vpack.c.b16 %v464, %v463
      %v483 = vpack.c.b16 %v466, %v465
      %v484 = vpack.c.b16 %v468, %v467
      %v517 = vunpack.c.l.b16 %v389
      %v518 = vunpack.c.h.b16 %v389
      %v519 = vunpack.c.l.b16 %v390
      %v520 = vunpack.c.h.b16 %v390
      %v521 = vunpack.c.l.b16 %v391
      %v522 = vunpack.c.h.b16 %v391
      %v523 = vunpack.c.l.b16 %v392
      %v524 = vunpack.c.h.b16 %v392
      %v525 = vunpack.c.l.b16 %v393
      %v526 = vunpack.c.h.b16 %v393
      %v527 = vunpack.c.l.b16 %v394
      %v528 = vunpack.c.h.b16 %v394
      %v529 = vunpack.c.l.b16 %v395
      %v530 = vunpack.c.h.b16 %v395
      %v531 = vunpack.c.l.b16 %v396
      %v532 = vunpack.c.h.b16 %v396
      %v533 = vunpack.c.l.b16 %v397
      %v534 = vunpack.c.h.b16 %v397
      %v535 = vunpack.c.l.b16 %v398
      %v536 = vunpack.c.h.b16 %v398
      %v537 = vunpack.c.l.b16 %v399
      %v538 = vunpack.c.h.b16 %v399
      %v539 = vunpack.c.l.b16 %v400
      %v540 = vunpack.c.h.b16 %v400
      %v541 = vunpack.c.l.b16 %v401
      %v542 = vunpack.c.h.b16 %v401
      %v543 = vunpack.c.l.b16 %v402
      %v544 = vunpack.c.h.b16 %v402
      %v545 = vunpack.c.l.b16 %v403
      %v546 = vunpack.c.h.b16 %v403
      %v547 = vunpack.c.l.b16 %v404
      %v548 = vunpack.c.h.b16 %v404
      %v549 = vpack.c.b16 %v519, %v517
      %v550 = vpack.c.b16 %v520, %v518
      %v551 = vpack.c.b16 %v523, %v521
      %v552 = vpack.c.b16 %v524, %v522
      %v553 = vpack.c.b16 %v527, %v525
      %v554 = vpack.c.b16 %v528, %v526
      %v555 = vpack.c.b16 %v531, %v529
      %v556 = vpack.c.b16 %v532, %v530
      %v557 = vpack.c.b16 %v535, %v533
      %v558 = vpack.c.b16 %v536, %v534
      %v559 = vpack.c.b16 %v539, %v537
      %v560 = vpack.c.b16 %v540, %v538
      %v561 = vpack.c.b16 %v543, %v541
      %v562 = vpack.c.b16 %v544, %v542
      %v563 = vpack.c.b16 %v547, %v545
      %v564 = vpack.c.b16 %v548, %v546
      %581 = vmatprep.subr.bf16.mxu0 %v550
      %582 = vmatpush1.bf16.msra.mxu0 %v549
      %583 = vmatprep.subr.bf16.mxu0 %v552
      %584 = vmatpush1.bf16.msra.mxu0 %v551
      %585 = vmatprep.subr.bf16.mxu0 %v554
      %586 = vmatpush1.bf16.msra.mxu0 %v553
      %587 = vmatprep.subr.bf16.mxu0 %v556
      %588 = vmatpush1.bf16.msra.mxu0 %v555
      %589 = vmatprep.subr.bf16.mxu0 %v558
      %590 = vmatpush1.bf16.msra.mxu0 %v557
      %591 = vmatprep.subr.bf16.mxu0 %v560
      %592 = vmatpush1.bf16.msra.mxu0 %v559
      %593 = vmatprep.subr.bf16.mxu0 %v562
      %594 = vmatpush1.bf16.msra.mxu0 %v561
      %595 = vmatprep.subr.bf16.mxu0 %v564
      %596 = vmatpush1.bf16.msra.mxu0 %v563
      %597 = vmatprep.subr.bf16.mxu0 0
      %598 = vmatpush1.bf16.msra.mxu0 0
      %599 = vmatprep.subr.bf16.mxu0 0
      %600 = vmatpush1.bf16.msra.mxu0 0
      %601 = vmatprep.subr.bf16.mxu0 0
      %602 = vmatpush1.bf16.msra.mxu0 0
      %603 = vmatprep.subr.bf16.mxu0 0
      %604 = vmatpush1.bf16.msra.mxu0 0
      %605 = vmatprep.subr.bf16.mxu0 0
      %606 = vmatpush1.bf16.msra.mxu0 0
      %607 = vmatprep.subr.bf16.mxu0 0
      %608 = vmatpush1.bf16.msra.mxu0 0
      %609 = vmatprep.subr.bf16.mxu0 0
      %610 = vmatpush1.bf16.msra.mxu0 0
      %611 = vmatprep.subr.bf16.mxu0 0
      %612 = vmatpush1.bf16.msra.mxu0 0
      %613 = vmatprep.mubr.bf16.mxu0 0
      %614 = vmatmul.mubr.bf16.gmra.mrb[0].mxu0 %v469
      %v615 = vpop.f32.mrb[0].mxu0
      %v616 = vadd.f32 0.0, %v615
      %v617 = vpop.f32.mrb[0].mxu0
      %v618 = vadd.f32 0.0, %v617
      %v619 = vpop.f32.mrb[0].mxu0
      %v620 = vadd.f32 0.0, %v619
      %v621 = vpop.f32.mrb[0].mxu0
      %v622 = vadd.f32 0.0, %v621
      %623 = vmatprep.mubr.bf16.mxu0 0
      %624 = vmatmul.mubr.bf16.gmra.mrb[0].mxu0 %v470
      %v625 = vpop.f32.mrb[0].mxu0
      %v626 = vadd.f32 0.0, %v625
      %v627 = vpop.f32.mrb[0].mxu0
      %v628 = vadd.f32 0.0, %v627
      %v629 = vpop.f32.mrb[0].mxu0
      %v630 = vadd.f32 0.0, %v629
      %v631 = vpop.f32.mrb[0].mxu0
      %v632 = vadd.f32 0.0, %v631
      %633 = vmatprep.mubr.bf16.mxu0 0
      %634 = vmatmul.mubr.bf16.gmra.mrb[0].mxu0 %v471
      %v635 = vpop.f32.mrb[0].mxu0
      %v636 = vadd.f32 0.0, %v635
      %v637 = vpop.f32.mrb[0].mxu0
      %v638 = vadd.f32 0.0, %v637
      %v639 = vpop.f32.mrb[0].mxu0
      %v640 = vadd.f32 0.0, %v639
      %v641 = vpop.f32.mrb[0].mxu0
      %v642 = vadd.f32 0.0, %v641
      %643 = vmatprep.mubr.bf16.mxu0 0
      %644 = vmatmul.mubr.bf16.gmra.mrb[0].mxu0 %v472
      %v645 = vpop.f32.mrb[0].mxu0
      %v646 = vadd.f32 0.0, %v645
      %v647 = vpop.f32.mrb[0].mxu0
      %v648 = vadd.f32 0.0, %v647
      %v649 = vpop.f32.mrb[0].mxu0
      %v650 = vadd.f32 0.0, %v649
      %v651 = vpop.f32.mrb[0].mxu0
      %v652 = vadd.f32 0.0, %v651
      %653 = vmatprep.mubr.bf16.mxu0 0
      %654 = vmatmul.mubr.bf16.gmra.mrb[0].mxu0 %v473
      %v655 = vpop.f32.mrb[0].mxu0
      %v656 = vadd.f32 0.0, %v655
      %v657 = vpop.f32.mrb[0].mxu0
      %v658 = vadd.f32 0.0, %v657
      %v659 = vpop.f32.mrb[0].mxu0
      %v660 = vadd.f32 0.0, %v659
      %v661 = vpop.f32.mrb[0].mxu0
      %v662 = vadd.f32 0.0, %v661
      %663 = vmatprep.mubr.bf16.mxu0 0
      %664 = vmatmul.mubr.bf16.gmra.mrb[0].mxu0 %v474
      %v665 = vpop.f32.mrb[0].mxu0
      %v666 = vadd.f32 0.0, %v665
      %v667 = vpop.f32.mrb[0].mxu0
      %v668 = vadd.f32 0.0, %v667
      %v669 = vpop.f32.mrb[0].mxu0
      %v670 = vadd.f32 0.0, %v669
      %v671 = vpop.f32.mrb[0].mxu0
      %v672 = vadd.f32 0.0, %v671
      %673 = vmatprep.mubr.bf16.mxu0 0
      %674 = vmatmul.mubr.bf16.gmra.mrb[0].mxu0 %v475
      %v675 = vpop.f32.mrb[0].mxu0
      %v676 = vadd.f32 0.0, %v675
      %v677 = vpop.f32.mrb[0].mxu0
      %v678 = vadd.f32 0.0, %v677
      %v679 = vpop.f32.mrb[0].mxu0
      %v680 = vadd.f32 0.0, %v679
      %v681 = vpop.f32.mrb[0].mxu0
      %v682 = vadd.f32 0.0, %v681
      %683 = vmatprep.mubr.bf16.mxu0 0
      %684 = vmatmul.mubr.bf16.gmra.mrb[0].mxu0 %v476
      %v685 = vpop.f32.mrb[0].mxu0
      %v686 = vadd.f32 0.0, %v685
      %v687 = vpop.f32.mrb[0].mxu0
      %v688 = vadd.f32 0.0, %v687
      %v689 = vpop.f32.mrb[0].mxu0
      %v690 = vadd.f32 0.0, %v689
      %v691 = vpop.f32.mrb[0].mxu0
      %v692 = vadd.f32 0.0, %v691
      %693 = vmatprep.mubr.bf16.mxu0 0
      %694 = vmatmul.mubr.bf16.gmra.mrb[0].mxu0 %v477
      %v695 = vpop.f32.mrb[0].mxu0
      %v696 = vadd.f32 0.0, %v695
      %v697 = vpop.f32.mrb[0].mxu0
      %v698 = vadd.f32 0.0, %v697
      %v699 = vpop.f32.mrb[0].mxu0
      %v700 = vadd.f32 0.0, %v699
      %v701 = vpop.f32.mrb[0].mxu0
      %v702 = vadd.f32 0.0, %v701
      %703 = vmatprep.mubr.bf16.mxu0 0
      %704 = vmatmul.mubr.bf16.gmra.mrb[0].mxu0 %v478
      %v705 = vpop.f32.mrb[0].mxu0
      %v706 = vadd.f32 0.0, %v705
      %v707 = vpop.f32.mrb[0].mxu0
      %v708 = vadd.f32 0.0, %v707
      %v709 = vpop.f32.mrb[0].mxu0
      %v710 = vadd.f32 0.0, %v709
      %v711 = vpop.f32.mrb[0].mxu0
      %v712 = vadd.f32 0.0, %v711
      %713 = vmatprep.mubr.bf16.mxu0 0
      %714 = vmatmul.mubr.bf16.gmra.mrb[0].mxu0 %v479
      %v715 = vpop.f32.mrb[0].mxu0
      %v716 = vadd.f32 0.0, %v715
      %v717 = vpop.f32.mrb[0].mxu0
      %v718 = vadd.f32 0.0, %v717
      %v719 = vpop.f32.mrb[0].mxu0
      %v720 = vadd.f32 0.0, %v719
      %v721 = vpop.f32.mrb[0].mxu0
      %v722 = vadd.f32 0.0, %v721
      %723 = vmatprep.mubr.bf16.mxu0 0
      %724 = vmatmul.mubr.bf16.gmra.mrb[0].mxu0 %v480
      %v725 = vpop.f32.mrb[0].mxu0
      %v726 = vadd.f32 0.0, %v725
      %v727 = vpop.f32.mrb[0].mxu0
      %v728 = vadd.f32 0.0, %v727
      %v729 = vpop.f32.mrb[0].mxu0
      %v730 = vadd.f32 0.0, %v729
      %v731 = vpop.f32.mrb[0].mxu0
      %v732 = vadd.f32 0.0, %v731
      %733 = vmatprep.mubr.bf16.mxu0 0
      %734 = vmatmul.mubr.bf16.gmra.mrb[0].mxu0 %v481
      %v735 = vpop.f32.mrb[0].mxu0
      %v736 = vadd.f32 0.0, %v735
      %v737 = vpop.f32.mrb[0].mxu0
      %v738 = vadd.f32 0.0, %v737
      %v739 = vpop.f32.mrb[0].mxu0
      %v740 = vadd.f32 0.0, %v739
      %v741 = vpop.f32.mrb[0].mxu0
      %v742 = vadd.f32 0.0, %v741
      %743 = vmatprep.mubr.bf16.mxu0 0
      %744 = vmatmul.mubr.bf16.gmra.mrb[0].mxu0 %v482
      %v745 = vpop.f32.mrb[0].mxu0
      %v746 = vadd.f32 0.0, %v745
      %v747 = vpop.f32.mrb[0].mxu0
      %v748 = vadd.f32 0.0, %v747
      %v749 = vpop.f32.mrb[0].mxu0
      %v750 = vadd.f32 0.0, %v749
      %v751 = vpop.f32.mrb[0].mxu0
      %v752 = vadd.f32 0.0, %v751
      %753 = vmatprep.mubr.bf16.mxu0 0
      %754 = vmatmul.mubr.bf16.gmra.mrb[0].mxu0 %v483
      %v755 = vpop.f32.mrb[0].mxu0
      %v756 = vadd.f32 0.0, %v755
      %v757 = vpop.f32.mrb[0].mxu0
      %v758 = vadd.f32 0.0, %v757
      %v759 = vpop.f32.mrb[0].mxu0
      %v760 = vadd.f32 0.0, %v759
      %v761 = vpop.f32.mrb[0].mxu0
      %v762 = vadd.f32 0.0, %v761
      %763 = vmatprep.mubr.bf16.mxu0 0
      %764 = vmatmul.mubr.bf16.gmra.mrb[0].mxu0 %v484
      %v765 = vpop.f32.mrb[0].mxu0
      %v766 = vadd.f32 0.0, %v765
      %v767 = vpop.f32.mrb[0].mxu0
      %v768 = vadd.f32 0.0, %v767
      %v769 = vpop.f32.mrb[0].mxu0
      %v770 = vadd.f32 0.0, %v769
      %v771 = vpop.f32.mrb[0].mxu0
      %v772 = vadd.f32 0.0, %v771
      %773 = vdwg.mxu0
      %v774 = vadd.f32 %v293, %v616
      %v775 = vadd.f32 %v294, %v618
      %v776 = vadd.f32 %v295, %v620
      %v777 = vadd.f32 %v296, %v622
      %v778 = vadd.f32 %v297, %v626
      %v779 = vadd.f32 %v298, %v628
      %v780 = vadd.f32 %v299, %v630
      %v781 = vadd.f32 %v300, %v632
      %v782 = vadd.f32 %v301, %v636
      %v783 = vadd.f32 %v302, %v638
      %v784 = vadd.f32 %v303, %v640
      %v785 = vadd.f32 %v304, %v642
      %v786 = vadd.f32 %v305, %v646
      %v787 = vadd.f32 %v306, %v648
      %v788 = vadd.f32 %v307, %v650
      %v789 = vadd.f32 %v308, %v652
      %v790 = vadd.f32 %v309, %v656
      %v791 = vadd.f32 %v310, %v658
      %v792 = vadd.f32 %v311, %v660
      %v793 = vadd.f32 %v312, %v662
      %v794 = vadd.f32 %v313, %v666
      %v795 = vadd.f32 %v314, %v668
      %v796 = vadd.f32 %v315, %v670
      %v797 = vadd.f32 %v316, %v672
      %v798 = vadd.f32 %v317, %v676
      %v799 = vadd.f32 %v318, %v678
      %v800 = vadd.f32 %v319, %v680
      %v801 = vadd.f32 %v320, %v682
      %v802 = vadd.f32 %v321, %v686
      %v803 = vadd.f32 %v322, %v688
      %v804 = vadd.f32 %v323, %v690
      %v805 = vadd.f32 %v324, %v692
      %v806 = vadd.f32 %v325, %v696
      %v807 = vadd.f32 %v326, %v698
      %v808 = vadd.f32 %v327, %v700
      %v809 = vadd.f32 %v328, %v702
      %v810 = vadd.f32 %v329, %v706
      %v811 = vadd.f32 %v330, %v708
      %v812 = vadd.f32 %v331, %v710
      %v813 = vadd.f32 %v332, %v712
      %v814 = vadd.f32 %v333, %v716
      %v815 = vadd.f32 %v334, %v718
      %v816 = vadd.f32 %v335, %v720
      %v817 = vadd.f32 %v336, %v722
      %v818 = vadd.f32 %v337, %v726
      %v819 = vadd.f32 %v338, %v728
      %v820 = vadd.f32 %v339, %v730
      %v821 = vadd.f32 %v340, %v732
      %v822 = vadd.f32 %v341, %v736
      %v823 = vadd.f32 %v342, %v738
      %v824 = vadd.f32 %v343, %v740
      %v825 = vadd.f32 %v344, %v742
      %v826 = vadd.f32 %v345, %v746
      %v827 = vadd.f32 %v346, %v748
      %v828 = vadd.f32 %v347, %v750
      %v829 = vadd.f32 %v348, %v752
      %v830 = vadd.f32 %v349, %v756
      %v831 = vadd.f32 %v350, %v758
      %v832 = vadd.f32 %v351, %v760
      %v833 = vadd.f32 %v352, %v762
      %v834 = vadd.f32 %v353, %v766
      %v835 = vadd.f32 %v354, %v768
      %v836 = vadd.f32 %v355, %v770
      %v837 = vadd.f32 %v356, %v772
      %838 = vst [vmem:[#allocation2] sm:$0xff] %v774
      %839 = vst [vmem:[#allocation2 + $0x8] sm:$0xff] %v775
      %840 = vst [vmem:[#allocation2 + $0x10] sm:$0xff] %v776
      %841 = vst [vmem:[#allocation2 + $0x18] sm:$0xff] %v777
      %842 = vst [vmem:[#allocation2 + $0x20] sm:$0xff] %v778
      %843 = vst [vmem:[#allocation2 + $0x28] sm:$0xff] %v779
      %844 = vst [vmem:[#allocation2 + $0x30] sm:$0xff] %v780
      %845 = vst [vmem:[#allocation2 + $0x38] sm:$0xff] %v781
      %846 = vst [vmem:[#allocation2 + $0x40] sm:$0xff] %v782
      %847 = vst [vmem:[#allocation2 + $0x48] sm:$0xff] %v783
      %848 = vst [vmem:[#allocation2 + $0x50] sm:$0xff] %v784
      %849 = vst [vmem:[#allocation2 + $0x58] sm:$0xff] %v785
      %850 = vst [vmem:[#allocation2 + $0x60] sm:$0xff] %v786
      %851 = vst [vmem:[#allocation2 + $0x68] sm:$0xff] %v787
      %852 = vst [vmem:[#allocation2 + $0x70] sm:$0xff] %v788
      %853 = vst [vmem:[#allocation2 + $0x78] sm:$0xff] %v789
      %854 = vst [vmem:[#allocation2 + $0x80] sm:$0xff] %v790
      %855 = vst [vmem:[#allocation2 + $0x88] sm:$0xff] %v791
      %856 = vst [vmem:[#allocation2 + $0x90] sm:$0xff] %v792
      %857 = vst [vmem:[#allocation2 + $0x98] sm:$0xff] %v793
      %858 = vst [vmem:[#allocation2 + $0xa0] sm:$0xff] %v794
      %859 = vst [vmem:[#allocation2 + $0xa8] sm:$0xff] %v795
      %860 = vst [vmem:[#allocation2 + $0xb0] sm:$0xff] %v796
      %861 = vst [vmem:[#allocation2 + $0xb8] sm:$0xff] %v797
      %862 = vst [vmem:[#allocation2 + $0xc0] sm:$0xff] %v798
      %863 = vst [vmem:[#allocation2 + $0xc8] sm:$0xff] %v799
      %864 = vst [vmem:[#allocation2 + $0xd0] sm:$0xff] %v800
      %865 = vst [vmem:[#allocation2 + $0xd8] sm:$0xff] %v801
      %866 = vst [vmem:[#allocation2 + $0xe0] sm:$0xff] %v802
      %867 = vst [vmem:[#allocation2 + $0xe8] sm:$0xff] %v803
      %868 = vst [vmem:[#allocation2 + $0xf0] sm:$0xff] %v804
      %869 = vst [vmem:[#allocation2 + $0xf8] sm:$0xff] %v805
      %870 = vst [vmem:[#allocation2 + $0x100] sm:$0xff] %v806
      %871 = vst [vmem:[#allocation2 + $0x108] sm:$0xff] %v807
      %872 = vst [vmem:[#allocation2 + $0x110] sm:$0xff] %v808
      %873 = vst [vmem:[#allocation2 + $0x118] sm:$0xff] %v809
      %874 = vst [vmem:[#allocation2 + $0x120] sm:$0xff] %v810
      %875 = vst [vmem:[#allocation2 + $0x128] sm:$0xff] %v811
      %876 = vst [vmem:[#allocation2 + $0x130] sm:$0xff] %v812
      %877 = vst [vmem:[#allocation2 + $0x138] sm:$0xff] %v813
      %878 = vst [vmem:[#allocation2 + $0x140] sm:$0xff] %v814
      %879 = vst [vmem:[#allocation2 + $0x148] sm:$0xff] %v815
      %880 = vst [vmem:[#allocation2 + $0x150] sm:$0xff] %v816
      %881 = vst [vmem:[#allocation2 + $0x158] sm:$0xff] %v817
      %882 = vst [vmem:[#allocation2 + $0x160] sm:$0xff] %v818
      %883 = vst [vmem:[#allocation2 + $0x168] sm:$0xff] %v819
      %884 = vst [vmem:[#allocation2 + $0x170] sm:$0xff] %v820
      %885 = vst [vmem:[#allocation2 + $0x178] sm:$0xff] %v821
      %886 = vst [vmem:[#allocation2 + $0x180] sm:$0xff] %v822
      %887 = vst [vmem:[#allocation2 + $0x188] sm:$0xff] %v823
      %888 = vst [vmem:[#allocation2 + $0x190] sm:$0xff] %v824
      %889 = vst [vmem:[#allocation2 + $0x198] sm:$0xff] %v825
      %890 = vst [vmem:[#allocation2 + $0x1a0] sm:$0xff] %v826
      %891 = vst [vmem:[#allocation2 + $0x1a8] sm:$0xff] %v827
      %892 = vst [vmem:[#allocation2 + $0x1b0] sm:$0xff] %v828
      %893 = vst [vmem:[#allocation2 + $0x1b8] sm:$0xff] %v829
      %894 = vst [vmem:[#allocation2 + $0x1c0] sm:$0xff] %v830
      %895 = vst [vmem:[#allocation2 + $0x1c8] sm:$0xff] %v831
      %896 = vst [vmem:[#allocation2 + $0x1d0] sm:$0xff] %v832
      %897 = vst [vmem:[#allocation2 + $0x1d8] sm:$0xff] %v833
      %898 = vst [vmem:[#allocation2 + $0x1e0] sm:$0xff] %v834
      %899 = vst [vmem:[#allocation2 + $0x1e8] sm:$0xff] %v835
      %900 = vst [vmem:[#allocation2 + $0x1f0] sm:$0xff] %v836
      %901 = vst [vmem:[#allocation2 + $0x1f8] sm:$0xff] %v837
      // Predicated region
      $region37: #{nbs_deeplab_head_forward.9} parent=31 // pred_check
        %p902 = pneg %p225
      $region38: #{nbs_deeplab_head_forward.9} parent=31 // pred_check_branch
        %904 = sbr.rel (%p902) target = $region40
      $region39: #{nbs_deeplab_head_forward.9} parent=31 // pred_region
        %v905 = vld [vmem:[#allocation2] sm:$0xff]
        %v906 = vld [vmem:[#allocation2 + $0x8] sm:$0xff]
        %v907 = vld [vmem:[#allocation2 + $0x10] sm:$0xff]
        %v908 = vld [vmem:[#allocation2 + $0x18] sm:$0xff]
        %v909 = vld [vmem:[#allocation2 + $0x20] sm:$0xff]
        %v910 = vld [vmem:[#allocation2 + $0x28] sm:$0xff]
        %v911 = vld [vmem:[#allocation2 + $0x30] sm:$0xff]
        %v912 = vld [vmem:[#allocation2 + $0x38] sm:$0xff]
        %v913 = vld [vmem:[#allocation2 + $0x40] sm:$0xff]
        %v914 = vld [vmem:[#allocation2 + $0x48] sm:$0xff]
        %v915 = vld [vmem:[#allocation2 + $0x50] sm:$0xff]
        %v916 = vld [vmem:[#allocation2 + $0x58] sm:$0xff]
        %v917 = vld [vmem:[#allocation2 + $0x60] sm:$0xff]
        %v918 = vld [vmem:[#allocation2 + $0x68] sm:$0xff]
        %v919 = vld [vmem:[#allocation2 + $0x70] sm:$0xff]
        %v920 = vld [vmem:[#allocation2 + $0x78] sm:$0xff]
        %v921 = vld [vmem:[#allocation2 + $0x80] sm:$0xff]
        %v922 = vld [vmem:[#allocation2 + $0x88] sm:$0xff]
        %v923 = vld [vmem:[#allocation2 + $0x90] sm:$0xff]
        %v924 = vld [vmem:[#allocation2 + $0x98] sm:$0xff]
        %v925 = vld [vmem:[#allocation2 + $0xa0] sm:$0xff]
        %v926 = vld [vmem:[#allocation2 + $0xa8] sm:$0xff]
        %v927 = vld [vmem:[#allocation2 + $0xb0] sm:$0xff]
        %v928 = vld [vmem:[#allocation2 + $0xb8] sm:$0xff]
        %v929 = vld [vmem:[#allocation2 + $0xc0] sm:$0xff]
        %v930 = vld [vmem:[#allocation2 + $0xc8] sm:$0xff]
        %v931 = vld [vmem:[#allocation2 + $0xd0] sm:$0xff]
        %v932 = vld [vmem:[#allocation2 + $0xd8] sm:$0xff]
        %v933 = vld [vmem:[#allocation2 + $0xe0] sm:$0xff]
        %v934 = vld [vmem:[#allocation2 + $0xe8] sm:$0xff]
        %v935 = vld [vmem:[#allocation2 + $0xf0] sm:$0xff]
        %v936 = vld [vmem:[#allocation2 + $0xf8] sm:$0xff]
        %v937 = vld [vmem:[#allocation2 + $0x100] sm:$0xff]
        %v938 = vld [vmem:[#allocation2 + $0x108] sm:$0xff]
        %v939 = vld [vmem:[#allocation2 + $0x110] sm:$0xff]
        %v940 = vld [vmem:[#allocation2 + $0x118] sm:$0xff]
        %v941 = vld [vmem:[#allocation2 + $0x120] sm:$0xff]
        %v942 = vld [vmem:[#allocation2 + $0x128] sm:$0xff]
        %v943 = vld [vmem:[#allocation2 + $0x130] sm:$0xff]
        %v944 = vld [vmem:[#allocation2 + $0x138] sm:$0xff]
        %v945 = vld [vmem:[#allocation2 + $0x140] sm:$0xff]
        %v946 = vld [vmem:[#allocation2 + $0x148] sm:$0xff]
        %v947 = vld [vmem:[#allocation2 + $0x150] sm:$0xff]
        %v948 = vld [vmem:[#allocation2 + $0x158] sm:$0xff]
        %v949 = vld [vmem:[#allocation2 + $0x160] sm:$0xff]
        %v950 = vld [vmem:[#allocation2 + $0x168] sm:$0xff]
        %v951 = vld [vmem:[#allocation2 + $0x170] sm:$0xff]
        %v952 = vld [vmem:[#allocation2 + $0x178] sm:$0xff]
        %v953 = vld [vmem:[#allocation2 + $0x180] sm:$0xff]
        %v954 = vld [vmem:[#allocation2 + $0x188] sm:$0xff]
        %v955 = vld [vmem:[#allocation2 + $0x190] sm:$0xff]
        %v956 = vld [vmem:[#allocation2 + $0x198] sm:$0xff]
        %v957 = vld [vmem:[#allocation2 + $0x1a0] sm:$0xff]
        %v958 = vld [vmem:[#allocation2 + $0x1a8] sm:$0xff]
        %v959 = vld [vmem:[#allocation2 + $0x1b0] sm:$0xff]
        %v960 = vld [vmem:[#allocation2 + $0x1b8] sm:$0xff]
        %v961 = vld [vmem:[#allocation2 + $0x1c0] sm:$0xff]
        %v962 = vld [vmem:[#allocation2 + $0x1c8] sm:$0xff]
        %v963 = vld [vmem:[#allocation2 + $0x1d0] sm:$0xff]
        %v964 = vld [vmem:[#allocation2 + $0x1d8] sm:$0xff]
        %v965 = vld [vmem:[#allocation2 + $0x1e0] sm:$0xff]
        %v966 = vld [vmem:[#allocation2 + $0x1e8] sm:$0xff]
        %v967 = vld [vmem:[#allocation2 + $0x1f0] sm:$0xff]
        %v968 = vld [vmem:[#allocation2 + $0x1f8] sm:$0xff]
        %v969 = vld [vmem:[%s2] sm:$0x3]
        %v971 = vlaneseq
        %v972 = vshrl.u32 %v971, 7
        %v973 = vsub.s32 0, %v972
        %v974 = vrot.slane %v969, %v973
        %v975 = vlaneseq
        %v976 = vshrl.u32 %v975, 7
        %v977 = vsub.s32 1, %v976
        %v978 = vrot.slane %v969, %v977
        %v981 = vadd.f32 %v905, %v974
        %v982 = vadd.f32 %v906, %v978
        %v983 = vadd.f32 %v907, %v974
        %v984 = vadd.f32 %v908, %v978
        %v985 = vadd.f32 %v909, %v974
        %v986 = vadd.f32 %v910, %v978
        %v987 = vadd.f32 %v911, %v974
        %v988 = vadd.f32 %v912, %v978
        %v989 = vadd.f32 %v913, %v974
        %v990 = vadd.f32 %v914, %v978
        %v991 = vadd.f32 %v915, %v974
        %v992 = vadd.f32 %v916, %v978
        %v993 = vadd.f32 %v917, %v974
        %v994 = vadd.f32 %v918, %v978
        %v995 = vadd.f32 %v919, %v974
        %v996 = vadd.f32 %v920, %v978
        %v997 = vadd.f32 %v921, %v974
        %v998 = vadd.f32 %v922, %v978
        %v999 = vadd.f32 %v923, %v974
        %v1000 = vadd.f32 %v924, %v978
        %v1001 = vadd.f32 %v925, %v974
        %v1002 = vadd.f32 %v926, %v978
        %v1003 = vadd.f32 %v927, %v974
        %v1004 = vadd.f32 %v928, %v978
        %v1005 = vadd.f32 %v929, %v974
        %v1006 = vadd.f32 %v930, %v978
        %v1007 = vadd.f32 %v931, %v974
        %v1008 = vadd.f32 %v932, %v978
        %v1009 = vadd.f32 %v933, %v974
        %v1010 = vadd.f32 %v934, %v978
        %v1011 = vadd.f32 %v935, %v974
        %v1012 = vadd.f32 %v936, %v978
        %v1013 = vadd.f32 %v937, %v974
        %v1014 = vadd.f32 %v938, %v978
        %v1015 = vadd.f32 %v939, %v974
        %v1016 = vadd.f32 %v940, %v978
        %v1017 = vadd.f32 %v941, %v974
        %v1018 = vadd.f32 %v942, %v978
        %v1019 = vadd.f32 %v943, %v974
        %v1020 = vadd.f32 %v944, %v978
        %v1021 = vadd.f32 %v945, %v974
        %v1022 = vadd.f32 %v946, %v978
        %v1023 = vadd.f32 %v947, %v974
        %v1024 = vadd.f32 %v948, %v978
        %v1025 = vadd.f32 %v949, %v974
        %v1026 = vadd.f32 %v950, %v978
        %v1027 = vadd.f32 %v951, %v974
        %v1028 = vadd.f32 %v952, %v978
        %v1029 = vadd.f32 %v953, %v974
        %v1030 = vadd.f32 %v954, %v978
        %v1031 = vadd.f32 %v955, %v974
        %v1032 = vadd.f32 %v956, %v978
        %v1033 = vadd.f32 %v957, %v974
        %v1034 = vadd.f32 %v958, %v978
        %v1035 = vadd.f32 %v959, %v974
        %v1036 = vadd.f32 %v960, %v978
        %v1037 = vadd.f32 %v961, %v974
        %v1038 = vadd.f32 %v962, %v978
        %v1039 = vadd.f32 %v963, %v974
        %v1040 = vadd.f32 %v964, %v978
        %v1041 = vadd.f32 %v965, %v974
        %v1042 = vadd.f32 %v966, %v978
        %v1043 = vadd.f32 %v967, %v974
        %v1044 = vadd.f32 %v968, %v978
        %v1045 = vmax.f32 %v981, 0.0
        %v1046 = vmax.f32 %v982, 0.0
        %v1047 = vmax.f32 %v983, 0.0
        %v1048 = vmax.f32 %v984, 0.0
        %v1049 = vmax.f32 %v985, 0.0
        %v1050 = vmax.f32 %v986, 0.0
        %v1051 = vmax.f32 %v987, 0.0
        %v1052 = vmax.f32 %v988, 0.0
        %v1053 = vmax.f32 %v989, 0.0
        %v1054 = vmax.f32 %v990, 0.0
        %v1055 = vmax.f32 %v991, 0.0
        %v1056 = vmax.f32 %v992, 0.0
        %v1057 = vmax.f32 %v993, 0.0
        %v1058 = vmax.f32 %v994, 0.0
        %v1059 = vmax.f32 %v995, 0.0
        %v1060 = vmax.f32 %v996, 0.0
        %v1061 = vmax.f32 %v997, 0.0
        %v1062 = vmax.f32 %v998, 0.0
        %v1063 = vmax.f32 %v999, 0.0
        %v1064 = vmax.f32 %v1000, 0.0
        %v1065 = vmax.f32 %v1001, 0.0
        %v1066 = vmax.f32 %v1002, 0.0
        %v1067 = vmax.f32 %v1003, 0.0
        %v1068 = vmax.f32 %v1004, 0.0
        %v1069 = vmax.f32 %v1005, 0.0
        %v1070 = vmax.f32 %v1006, 0.0
        %v1071 = vmax.f32 %v1007, 0.0
        %v1072 = vmax.f32 %v1008, 0.0
        %v1073 = vmax.f32 %v1009, 0.0
        %v1074 = vmax.f32 %v1010, 0.0
        %v1075 = vmax.f32 %v1011, 0.0
        %v1076 = vmax.f32 %v1012, 0.0
        %v1077 = vmax.f32 %v1013, 0.0
        %v1078 = vmax.f32 %v1014, 0.0
        %v1079 = vmax.f32 %v1015, 0.0
        %v1080 = vmax.f32 %v1016, 0.0
        %v1081 = vmax.f32 %v1017, 0.0
        %v1082 = vmax.f32 %v1018, 0.0
        %v1083 = vmax.f32 %v1019, 0.0
        %v1084 = vmax.f32 %v1020, 0.0
        %v1085 = vmax.f32 %v1021, 0.0
        %v1086 = vmax.f32 %v1022, 0.0
        %v1087 = vmax.f32 %v1023, 0.0
        %v1088 = vmax.f32 %v1024, 0.0
        %v1089 = vmax.f32 %v1025, 0.0
        %v1090 = vmax.f32 %v1026, 0.0
        %v1091 = vmax.f32 %v1027, 0.0
        %v1092 = vmax.f32 %v1028, 0.0
        %v1093 = vmax.f32 %v1029, 0.0
        %v1094 = vmax.f32 %v1030, 0.0
        %v1095 = vmax.f32 %v1031, 0.0
        %v1096 = vmax.f32 %v1032, 0.0
        %v1097 = vmax.f32 %v1033, 0.0
        %v1098 = vmax.f32 %v1034, 0.0
        %v1099 = vmax.f32 %v1035, 0.0
        %v1100 = vmax.f32 %v1036, 0.0
        %v1101 = vmax.f32 %v1037, 0.0
        %v1102 = vmax.f32 %v1038, 0.0
        %v1103 = vmax.f32 %v1039, 0.0
        %v1104 = vmax.f32 %v1040, 0.0
        %v1105 = vmax.f32 %v1041, 0.0
        %v1106 = vmax.f32 %v1042, 0.0
        %v1107 = vmax.f32 %v1043, 0.0
        %v1108 = vmax.f32 %v1044, 0.0
        %v1109 = vpack.c.bf16 %v1047, %v1045
        %v1110 = vpack.c.bf16 %v1048, %v1046
        %v1111 = vpack.c.bf16 %v1051, %v1049
        %v1112 = vpack.c.bf16 %v1052, %v1050
        %v1113 = vpack.c.bf16 %v1055, %v1053
        %v1114 = vpack.c.bf16 %v1056, %v1054
        %v1115 = vpack.c.bf16 %v1059, %v1057
        %v1116 = vpack.c.bf16 %v1060, %v1058
        %v1117 = vpack.c.bf16 %v1063, %v1061
        %v1118 = vpack.c.bf16 %v1064, %v1062
        %v1119 = vpack.c.bf16 %v1067, %v1065
        %v1120 = vpack.c.bf16 %v1068, %v1066
        %v1121 = vpack.c.bf16 %v1071, %v1069
        %v1122 = vpack.c.bf16 %v1072, %v1070
        %v1123 = vpack.c.bf16 %v1075, %v1073
        %v1124 = vpack.c.bf16 %v1076, %v1074
        %v1125 = vpack.c.bf16 %v1079, %v1077
        %v1126 = vpack.c.bf16 %v1080, %v1078
        %v1127 = vpack.c.bf16 %v1083, %v1081
        %v1128 = vpack.c.bf16 %v1084, %v1082
        %v1129 = vpack.c.bf16 %v1087, %v1085
        %v1130 = vpack.c.bf16 %v1088, %v1086
        %v1131 = vpack.c.bf16 %v1091, %v1089
        %v1132 = vpack.c.bf16 %v1092, %v1090
        %v1133 = vpack.c.bf16 %v1095, %v1093
        %v1134 = vpack.c.bf16 %v1096, %v1094
        %v1135 = vpack.c.bf16 %v1099, %v1097
        %v1136 = vpack.c.bf16 %v1100, %v1098
        %v1137 = vpack.c.bf16 %v1103, %v1101
        %v1138 = vpack.c.bf16 %v1104, %v1102
        %v1139 = vpack.c.bf16 %v1107, %v1105
        %v1140 = vpack.c.bf16 %v1108, %v1106
        %v1173 = vunpack.c.l.b16 %v1109
        %v1174 = vunpack.c.l.b16 %v1110
        %v1175 = vunpack.c.h.b16 %v1109
        %v1176 = vunpack.c.h.b16 %v1110
        %v1177 = vunpack.c.l.b16 %v1111
        %v1178 = vunpack.c.l.b16 %v1112
        %v1179 = vunpack.c.h.b16 %v1111
        %v1180 = vunpack.c.h.b16 %v1112
        %v1181 = vunpack.c.l.b16 %v1113
        %v1182 = vunpack.c.l.b16 %v1114
        %v1183 = vunpack.c.h.b16 %v1113
        %v1184 = vunpack.c.h.b16 %v1114
        %v1185 = vunpack.c.l.b16 %v1115
        %v1186 = vunpack.c.l.b16 %v1116
        %v1187 = vunpack.c.h.b16 %v1115
        %v1188 = vunpack.c.h.b16 %v1116
        %v1189 = vunpack.c.l.b16 %v1117
        %v1190 = vunpack.c.l.b16 %v1118
        %v1191 = vunpack.c.h.b16 %v1117
        %v1192 = vunpack.c.h.b16 %v1118
        %v1193 = vunpack.c.l.b16 %v1119
        %v1194 = vunpack.c.l.b16 %v1120
        %v1195 = vunpack.c.h.b16 %v1119
        %v1196 = vunpack.c.h.b16 %v1120
        %v1197 = vunpack.c.l.b16 %v1121
        %v1198 = vunpack.c.l.b16 %v1122
        %v1199 = vunpack.c.h.b16 %v1121
        %v1200 = vunpack.c.h.b16 %v1122
        %v1201 = vunpack.c.l.b16 %v1123
        %v1202 = vunpack.c.l.b16 %v1124
        %v1203 = vunpack.c.h.b16 %v1123
        %v1204 = vunpack.c.h.b16 %v1124
        %v1205 = vunpack.c.l.b16 %v1125
        %v1206 = vunpack.c.l.b16 %v1126
        %v1207 = vunpack.c.h.b16 %v1125
        %v1208 = vunpack.c.h.b16 %v1126
        %v1209 = vunpack.c.l.b16 %v1127
        %v1210 = vunpack.c.l.b16 %v1128
        %v1211 = vunpack.c.h.b16 %v1127
        %v1212 = vunpack.c.h.b16 %v1128
        %v1213 = vunpack.c.l.b16 %v1129
        %v1214 = vunpack.c.l.b16 %v1130
        %v1215 = vunpack.c.h.b16 %v1129
        %v1216 = vunpack.c.h.b16 %v1130
        %v1217 = vunpack.c.l.b16 %v1131
        %v1218 = vunpack.c.l.b16 %v1132
        %v1219 = vunpack.c.h.b16 %v1131
        %v1220 = vunpack.c.h.b16 %v1132
        %v1221 = vunpack.c.l.b16 %v1133
        %v1222 = vunpack.c.l.b16 %v1134
        %v1223 = vunpack.c.h.b16 %v1133
        %v1224 = vunpack.c.h.b16 %v1134
        %v1225 = vunpack.c.l.b16 %v1135
        %v1226 = vunpack.c.l.b16 %v1136
        %v1227 = vunpack.c.h.b16 %v1135
        %v1228 = vunpack.c.h.b16 %v1136
        %v1229 = vunpack.c.l.b16 %v1137
        %v1230 = vunpack.c.l.b16 %v1138
        %v1231 = vunpack.c.h.b16 %v1137
        %v1232 = vunpack.c.h.b16 %v1138
        %v1233 = vunpack.c.l.b16 %v1139
        %v1234 = vunpack.c.l.b16 %v1140
        %v1235 = vunpack.c.h.b16 %v1139
        %v1236 = vunpack.c.h.b16 %v1140
        %v1237 = vpack.c.b16 %v1174, %v1173
        %v1238 = vpack.c.b16 %v1176, %v1175
        %v1239 = vpack.c.b16 %v1178, %v1177
        %v1240 = vpack.c.b16 %v1180, %v1179
        %v1241 = vpack.c.b16 %v1182, %v1181
        %v1242 = vpack.c.b16 %v1184, %v1183
        %v1243 = vpack.c.b16 %v1186, %v1185
        %v1244 = vpack.c.b16 %v1188, %v1187
        %v1245 = vpack.c.b16 %v1190, %v1189
        %v1246 = vpack.c.b16 %v1192, %v1191
        %v1247 = vpack.c.b16 %v1194, %v1193
        %v1248 = vpack.c.b16 %v1196, %v1195
        %v1249 = vpack.c.b16 %v1198, %v1197
        %v1250 = vpack.c.b16 %v1200, %v1199
        %v1251 = vpack.c.b16 %v1202, %v1201
        %v1252 = vpack.c.b16 %v1204, %v1203
        %v1253 = vpack.c.b16 %v1206, %v1205
        %v1254 = vpack.c.b16 %v1208, %v1207
        %v1255 = vpack.c.b16 %v1210, %v1209
        %v1256 = vpack.c.b16 %v1212, %v1211
        %v1257 = vpack.c.b16 %v1214, %v1213
        %v1258 = vpack.c.b16 %v1216, %v1215
        %v1259 = vpack.c.b16 %v1218, %v1217
        %v1260 = vpack.c.b16 %v1220, %v1219
        %v1261 = vpack.c.b16 %v1222, %v1221
        %v1262 = vpack.c.b16 %v1224, %v1223
        %v1263 = vpack.c.b16 %v1226, %v1225
        %v1264 = vpack.c.b16 %v1228, %v1227
        %v1265 = vpack.c.b16 %v1230, %v1229
        %v1266 = vpack.c.b16 %v1232, %v1231
        %v1267 = vpack.c.b16 %v1234, %v1233
        %v1268 = vpack.c.b16 %v1236, %v1235
        %1301 = vst [vmem:[%s222] sm:$0xff] %v1237
        %1302 = vst [vmem:[%s222 + $0x8] sm:$0xff] %v1238
        %1303 = vst [vmem:[%s222 + $0x10] sm:$0xff] %v1239
        %1304 = vst [vmem:[%s222 + $0x18] sm:$0xff] %v1240
        %1305 = vst [vmem:[%s222 + $0x20] sm:$0xff] %v1241
        %1306 = vst [vmem:[%s222 + $0x28] sm:$0xff] %v1242
        %1307 = vst [vmem:[%s222 + $0x30] sm:$0xff] %v1243
        %1308 = vst [vmem:[%s222 + $0x38] sm:$0xff] %v1244
        %1309 = vst [vmem:[%s222 + $0x40] sm:$0xff] %v1245
        %1310 = vst [vmem:[%s222 + $0x48] sm:$0xff] %v1246
        %1311 = vst [vmem:[%s222 + $0x50] sm:$0xff] %v1247
        %1312 = vst [vmem:[%s222 + $0x58] sm:$0xff] %v1248
        %1313 = vst [vmem:[%s222 + $0x60] sm:$0xff] %v1249
        %1314 = vst [vmem:[%s222 + $0x68] sm:$0xff] %v1250
        %1315 = vst [vmem:[%s222 + $0x70] sm:$0xff] %v1251
        %1316 = vst [vmem:[%s222 + $0x78] sm:$0xff] %v1252
        %1317 = vst [vmem:[%s222 + $0x80] sm:$0xff] %v1253
        %1318 = vst [vmem:[%s222 + $0x88] sm:$0xff] %v1254
        %1319 = vst [vmem:[%s222 + $0x90] sm:$0xff] %v1255
        %1320 = vst [vmem:[%s222 + $0x98] sm:$0xff] %v1256
        %1321 = vst [vmem:[%s222 + $0xa0] sm:$0xff] %v1257
        %1322 = vst [vmem:[%s222 + $0xa8] sm:$0xff] %v1258
        %1323 = vst [vmem:[%s222 + $0xb0] sm:$0xff] %v1259
        %1324 = vst [vmem:[%s222 + $0xb8] sm:$0xff] %v1260
        %1325 = vst [vmem:[%s222 + $0xc0] sm:$0xff] %v1261
        %1326 = vst [vmem:[%s222 + $0xc8] sm:$0xff] %v1262
        %1327 = vst [vmem:[%s222 + $0xd0] sm:$0xff] %v1263
        %1328 = vst [vmem:[%s222 + $0xd8] sm:$0xff] %v1264
        %1329 = vst [vmem:[%s222 + $0xe0] sm:$0xff] %v1265
        %1330 = vst [vmem:[%s222 + $0xe8] sm:$0xff] %v1266
        %1331 = vst [vmem:[%s222 + $0xf0] sm:$0xff] %v1267
        %1332 = vst [vmem:[%s222 + $0xf8] sm:$0xff] %v1268
      $region40: #{nbs_deeplab_head_forward.9} parent=31 // pred_fallthru
        _
      %s1333 = smul.u32 32, %s18
      %p1334 = scmp.lt.s32.totalorder %s1333, 63
      %s1335 = scalar_select %p1334, %s1333, 63
      %s1336 = smul.addr %s1335, 2
      %s1337 = smul.addr %s1336, 4
      %s1338 = scalar_lea.vmem %s3, %s1337
      // Predicated region
      $region41: #{nbs_deeplab_head_forward.9} parent=31 // pred_check
        %p1339 = pneg %p119
      $region42: #{nbs_deeplab_head_forward.9} parent=31 // pred_check_branch
        %1341 = sbr.rel (%p1339) target = $region44
      $region43: #{nbs_deeplab_head_forward.9} parent=31 // pred_region
        %s1342 = smul.u32 32, %s18
      $region44: #{nbs_deeplab_head_forward.9} parent=31 // pred_fallthru
        _
    $region32: #{nbs_deeplab_head_forward.9} parent=5 // pred_fallthru
      _
    %p1343 = scmp.le.s32.totalorder 2, %s9
    // Predicated region
    $region45: #{nbs_deeplab_head_forward.9} parent=5 // pred_check
      %p1344 = pneg %p1343
    $region46: #{nbs_deeplab_head_forward.9} parent=5 // pred_check_branch
      %1346 = sbr.rel (%p1344) target = $region48
    $region47: #{nbs_deeplab_head_forward.9} parent=5 // pred_region
      %s1347 = ssub.s32 %s9, 2
      // Predicated region
      $region49: #{nbs_deeplab_head_forward.9} parent=47 // pred_check
        %p1348 = pneg %p125
      $region50: #{nbs_deeplab_head_forward.9} parent=47 // pred_check_branch
        %1350 = sbr.rel (%p1348) target = $region52
      $region51: #{nbs_deeplab_head_forward.9} parent=47 // pred_region
        %s1351 = smul.u32 32, %s20
        %p1352 = scmp.lt.s32.totalorder %s1351, 63
        %s1353 = scalar_select %p1352, %s1351, 63
        %s1354 = smul.addr %s1353, 2
        %s1355 = smul.addr %s1354, 4
        %s1356 = scalar_lea.vmem %s3, %s1355
      $region52: #{nbs_deeplab_head_forward.9} parent=47 // pred_fallthru
        _
    $region48: #{nbs_deeplab_head_forward.9} parent=5 // pred_fallthru
      _
  $region6: #{nbs_deeplab_head_forward.9} parent=0 // loop_footer
    %s13 = sadd.s32 1, %s9
  $region7: #{nbs_deeplab_head_forward.9} parent=0 // loop_footer_branch
    %8 = sbr.rel target = $region3
  $region8: #{nbs_deeplab_head_forward.9} parent=0 // loop_exit
    _

// kernel: nbs_deeplab_head_forward.13
$region0: #{nbs_deeplab_head_forward.13}
  #allocation0 [shape = 'u32[]', space=smem, size = 0x4, offset = 0x4, fixed_abs, tag = 'smem constant byte address 0x4 - core index']
  #allocation1 [shape = 'u32[144,128]{1,0:T(1,128)}', space=vmem, size = 0x12000, scoped, tag = 'internal scratch']
  %s0 = inlined_call_operand.vmem [shape: bf16[2,256,256], index: 0, kind: input, shape index: {}]
  %s1 = inlined_call_operand.vmem [shape: bf16[2,256,256], index: 1, kind: input, shape index: {}]
  %s2 = inlined_call_operand.vmem [shape: bf16[2,256,256], index: 2, kind: input, shape index: {}]
  %s3 = inlined_call_operand.vmem [shape: bf16[2,256,256], index: 3, kind: input, shape index: {}]
  %s4 = inlined_call_operand.vmem [shape: bf16[4,256,256], index: 4, kind: input, shape index: {}]
  %s5 = inlined_call_operand.vmem [shape: f32[2,1,256], index: 5, kind: input, shape index: {}]
  %s6 = inlined_call_operand.vmem [shape: f32[1,256], index: 6, kind: input, shape index: {}]
  %s7 = inlined_call_operand.vmem [shape: bf16[2,256,256], index: 7, kind: output, shape index: {}]
  %s8 = sld [smem:[#allocation0]]
  $region61: #{nbs_deeplab_head_forward.13} parent=0
    _
  %s10 = ssub.s32 1, %s8
  %s11 = scalar_select 0, %s10, %s8
  loop: start=0, step=1, limit=4
  $region2: #{nbs_deeplab_head_forward.13} parent=0 // loop_pre_header
    _
  $region3: #{nbs_deeplab_head_forward.13} parent=0 // loop_header
    %s13 = sphi 0, %s17
    %p14 = scmp.ge.s32.totalorder %s13, 4
    %s20 = sphi 0, %s32
    %s21 = sphi 0, %s28
    %s22 = sphi 0, %s20
    %s23 = sphi 0, %s21
    %s24 = sphi 0, %s22
    %s25 = sphi 0, %s23
    %s37 = sphi 0, %s39
    %s40 = sphi 0, %s37
    %s41 = sphi 0, %s40
    %s57 = sphi 0, %s41
    %s65 = sphi 0, %s67
    %s68 = sphi 0, %s65
    %s69 = sphi 0, %s68
    %s85 = sphi 0, %s69
    %s93 = sphi 0, %s95
    %s96 = sphi 0, %s93
    %s97 = sphi 0, %s96
    %s113 = sphi 0, %s97
    %s121 = sphi 0, %s123
    %s124 = sphi 0, %s121
    %s125 = sphi 0, %s124
    %s141 = sphi 0, %s125
    %s145 = sphi 0, %s145
    %s147 = sphi 0, %s145
    %s148 = sphi 0, %s147
    %s162 = sphi 0, %s148
    %s168 = sphi 0, %s170
    %s171 = sphi 0, %s168
    %s172 = sphi 0, %s171
    %s188 = sphi 0, %s172
    %s192 = sphi 0, %s192
    %s194 = sphi 0, %s192
    %s195 = sphi 0, %s194
    %s209 = sphi 0, %s195
    %s217 = sphi 0, %s219
    %s220 = sphi 0, %s217
    %s221 = sphi 0, %s220
    %s237 = sphi 0, %s221
  $region4: #{nbs_deeplab_head_forward.13} parent=0 // loop_header_branch
    %16 = sbr.rel (%p14) target = $region8
  $region5: #{nbs_deeplab_head_forward.13} parent=0 // loop_body
    %s18 = ssub.s32 %s13, 1
    %s19 = ssub.s32 %s13, 2
    %s26 = sadd.s32 1, %s21
    %p27 = scmp.ge.s32.totalorder %s26, 1
    %s28 = scalar_select %p27, 0, %s26
    %s29 = sadd.s32 1, %s20
    %s30 = scalar_select %p27, %s29, %s20
    %p31 = scmp.ge.s32.totalorder %s30, 2
    %s32 = scalar_select %p31, 0, %s30
    %s33 = ssub.s32 %s20, %s32
    %s34 = ssub.s32 %s21, %s28
    %s35 = sor.u32 %s33, %s34
    %p36 = scmp.eq.s32.totalorder %s35, 0
    %s38 = sadd.s32 %s37, 1
    %s39 = scalar_select %p36, %s37, %s38
    %p42 = pneg %p36
    %p43 = scmp.eq.s32.totalorder %s13, 1
    %p44 = por %p42, %p43
    %p45 = scmp.ne.s32.totalorder %s37, %s40
    %p46 = scmp.eq.s32.totalorder %s13, 0
    %p47 = por %p45, %p46
    %p48 = scmp.ne.s32.totalorder %s37, %s40
    %p49 = scmp.eq.s32.totalorder %s18, 1
    %p50 = por %p48, %p49
    %p51 = scmp.ne.s32.totalorder %s40, %s41
    %p52 = scmp.eq.s32.totalorder %s18, 0
    %p53 = por %p51, %p52
    %p54 = scmp.ne.s32.totalorder %s40, %s41
    %p55 = scmp.eq.s32.totalorder %s19, 1
    %p56 = por %p54, %p55
    %p58 = scmp.ne.s32.totalorder %s41, %s57
    %p59 = scmp.eq.s32.totalorder %s19, 0
    %p60 = por %p58, %p59
    %s61 = ssub.s32 %s20, %s32
    %s62 = ssub.s32 %s21, %s28
    %s63 = sor.u32 %s61, %s62
    %p64 = scmp.eq.s32.totalorder %s63, 0
    %s66 = sadd.s32 %s65, 1
    %s67 = scalar_select %p64, %s65, %s66
    %p70 = pneg %p64
    %p71 = scmp.eq.s32.totalorder %s13, 1
    %p72 = por %p70, %p71
    %p73 = scmp.ne.s32.totalorder %s65, %s68
    %p74 = scmp.eq.s32.totalorder %s13, 0
    %p75 = por %p73, %p74
    %p76 = scmp.ne.s32.totalorder %s65, %s68
    %p77 = scmp.eq.s32.totalorder %s18, 1
    %p78 = por %p76, %p77
    %p79 = scmp.ne.s32.totalorder %s68, %s69
    %p80 = scmp.eq.s32.totalorder %s18, 0
    %p81 = por %p79, %p80
    %p82 = scmp.ne.s32.totalorder %s68, %s69
    %p83 = scmp.eq.s32.totalorder %s19, 1
    %p84 = por %p82, %p83
    %p86 = scmp.ne.s32.totalorder %s69, %s85
    %p87 = scmp.eq.s32.totalorder %s19, 0
    %p88 = por %p86, %p87
    %s89 = ssub.s32 %s20, %s32
    %s90 = ssub.s32 %s21, %s28
    %s91 = sor.u32 %s89, %s90
    %p92 = scmp.eq.s32.totalorder %s91, 0
    %s94 = sadd.s32 %s93, 1
    %s95 = scalar_select %p92, %s93, %s94
    %p98 = pneg %p92
    %p99 = scmp.eq.s32.totalorder %s13, 1
    %p100 = por %p98, %p99
    %p101 = scmp.ne.s32.totalorder %s93, %s96
    %p102 = scmp.eq.s32.totalorder %s13, 0
    %p103 = por %p101, %p102
    %p104 = scmp.ne.s32.totalorder %s93, %s96
    %p105 = scmp.eq.s32.totalorder %s18, 1
    %p106 = por %p104, %p105
    %p107 = scmp.ne.s32.totalorder %s96, %s97
    %p108 = scmp.eq.s32.totalorder %s18, 0
    %p109 = por %p107, %p108
    %p110 = scmp.ne.s32.totalorder %s96, %s97
    %p111 = scmp.eq.s32.totalorder %s19, 1
    %p112 = por %p110, %p111
    %p114 = scmp.ne.s32.totalorder %s97, %s113
    %p115 = scmp.eq.s32.totalorder %s19, 0
    %p116 = por %p114, %p115
    %s117 = ssub.s32 %s20, %s32
    %s118 = ssub.s32 %s21, %s28
    %s119 = sor.u32 %s117, %s118
    %p120 = scmp.eq.s32.totalorder %s119, 0
    %s122 = sadd.s32 %s121, 1
    %s123 = scalar_select %p120, %s121, %s122
    %p126 = pneg %p120
    %p127 = scmp.eq.s32.totalorder %s13, 1
    %p128 = por %p126, %p127
    %p129 = scmp.ne.s32.totalorder %s121, %s124
    %p130 = scmp.eq.s32.totalorder %s13, 0
    %p131 = por %p129, %p130
    %p132 = scmp.ne.s32.totalorder %s121, %s124
    %p133 = scmp.eq.s32.totalorder %s18, 1
    %p134 = por %p132, %p133
    %p135 = scmp.ne.s32.totalorder %s124, %s125
    %p136 = scmp.eq.s32.totalorder %s18, 0
    %p137 = por %p135, %p136
    %p138 = scmp.ne.s32.totalorder %s124, %s125
    %p139 = scmp.eq.s32.totalorder %s19, 1
    %p140 = por %p138, %p139
    %p142 = scmp.ne.s32.totalorder %s125, %s141
    %p143 = scmp.eq.s32.totalorder %s19, 0
    %p144 = por %p142, %p143
    %s146 = sadd.s32 %s145, 1
    %p149 = scmp.eq.s32.totalorder %s13, 1
    %p150 = scmp.ne.s32.totalorder %s145, %s147
    %p151 = scmp.eq.s32.totalorder %s13, 0
    %p152 = por %p150, %p151
    %p153 = scmp.ne.s32.totalorder %s145, %s147
    %p154 = scmp.eq.s32.totalorder %s18, 1
    %p155 = por %p153, %p154
    %p156 = scmp.ne.s32.totalorder %s147, %s148
    %p157 = scmp.eq.s32.totalorder %s18, 0
    %p158 = por %p156, %p157
    %p159 = scmp.ne.s32.totalorder %s147, %s148
    %p160 = scmp.eq.s32.totalorder %s19, 1
    %p161 = por %p159, %p160
    %p163 = scmp.ne.s32.totalorder %s148, %s162
    %p164 = scmp.eq.s32.totalorder %s19, 0
    %p165 = por %p163, %p164
    %s166 = ssub.s32 %s20, %s32
    %p167 = scmp.eq.s32.totalorder %s166, 0
    %s169 = sadd.s32 %s168, 1
    %s170 = scalar_select %p167, %s168, %s169
    %p173 = pneg %p167
    %p174 = scmp.eq.s32.totalorder %s13, 1
    %p175 = por %p173, %p174
    %p176 = scmp.ne.s32.totalorder %s168, %s171
    %p177 = scmp.eq.s32.totalorder %s13, 0
    %p178 = por %p176, %p177
    %p179 = scmp.ne.s32.totalorder %s168, %s171
    %p180 = scmp.eq.s32.totalorder %s18, 1
    %p181 = por %p179, %p180
    %p182 = scmp.ne.s32.totalorder %s171, %s172
    %p183 = scmp.eq.s32.totalorder %s18, 0
    %p184 = por %p182, %p183
    %p185 = scmp.ne.s32.totalorder %s171, %s172
    %p186 = scmp.eq.s32.totalorder %s19, 1
    %p187 = por %p185, %p186
    %p189 = scmp.ne.s32.totalorder %s172, %s188
    %p190 = scmp.eq.s32.totalorder %s19, 0
    %p191 = por %p189, %p190
    %s193 = sadd.s32 %s192, 1
    %p196 = scmp.eq.s32.totalorder %s13, 1
    %p197 = scmp.ne.s32.totalorder %s192, %s194
    %p198 = scmp.eq.s32.totalorder %s13, 0
    %p199 = por %p197, %p198
    %p200 = scmp.ne.s32.totalorder %s192, %s194
    %p201 = scmp.eq.s32.totalorder %s18, 1
    %p202 = por %p200, %p201
    %p203 = scmp.ne.s32.totalorder %s194, %s195
    %p204 = scmp.eq.s32.totalorder %s18, 0
    %p205 = por %p203, %p204
    %p206 = scmp.ne.s32.totalorder %s194, %s195
    %p207 = scmp.eq.s32.totalorder %s19, 1
    %p208 = por %p206, %p207
    %p210 = scmp.ne.s32.totalorder %s195, %s209
    %p211 = scmp.eq.s32.totalorder %s19, 0
    %p212 = por %p210, %p211
    %s213 = ssub.s32 %s20, %s32
    %s214 = ssub.s32 %s21, %s28
    %s215 = sor.u32 %s213, %s214
    %p216 = scmp.eq.s32.totalorder %s215, 0
    %s218 = sadd.s32 %s217, 1
    %s219 = scalar_select %p216, %s217, %s218
    %p222 = pneg %p216
    %p223 = scmp.eq.s32.totalorder %s13, 1
    %p224 = por %p222, %p223
    %p225 = scmp.ne.s32.totalorder %s217, %s220
    %p226 = scmp.eq.s32.totalorder %s13, 0
    %p227 = por %p225, %p226
    %p228 = scmp.ne.s32.totalorder %s217, %s220
    %p229 = scmp.eq.s32.totalorder %s18, 1
    %p230 = por %p228, %p229
    %p231 = scmp.ne.s32.totalorder %s220, %s221
    %p232 = scmp.eq.s32.totalorder %s18, 0
    %p233 = por %p231, %p232
    %p234 = scmp.ne.s32.totalorder %s220, %s221
    %p235 = scmp.eq.s32.totalorder %s19, 1
    %p236 = por %p234, %p235
    %p238 = scmp.ne.s32.totalorder %s221, %s237
    %p239 = scmp.eq.s32.totalorder %s19, 0
    %p240 = por %p238, %p239
    %p241 = scmp.le.s32.totalorder 1, %s13
    %p242 = scmp.lt.s32.totalorder %s13, 3
    %p243 = pnand %p241, %p242
    %p244 = pneg %p243
    // Predicated region
    $region9: #{nbs_deeplab_head_forward.13} parent=5 // pred_check
      _
    $region10: #{nbs_deeplab_head_forward.13} parent=5 // pred_check_branch
      %246 = sbr.rel (%p243) target = $region12
    $region11: #{nbs_deeplab_head_forward.13} parent=5 // pred_region
      %s247 = ssub.s32 %s13, 1
      // Predicated region
      $region13: #{nbs_deeplab_head_forward.13} parent=11 // pred_check
        %p248 = pneg %p158
      $region14: #{nbs_deeplab_head_forward.13} parent=11 // pred_check_branch
        %250 = sbr.rel (%p248) target = $region16
      $region15: #{nbs_deeplab_head_forward.13} parent=11 // pred_region
        _
      $region16: #{nbs_deeplab_head_forward.13} parent=11 // pred_fallthru
        _
      // Predicated region
      $region17: #{nbs_deeplab_head_forward.13} parent=11 // pred_check
        %p251 = pneg %p205
      $region18: #{nbs_deeplab_head_forward.13} parent=11 // pred_check_branch
        %253 = sbr.rel (%p251) target = $region20
      $region19: #{nbs_deeplab_head_forward.13} parent=11 // pred_region
        _
      $region20: #{nbs_deeplab_head_forward.13} parent=11 // pred_fallthru
        _
    $region12: #{nbs_deeplab_head_forward.13} parent=5 // pred_fallthru
      _
    %p254 = scmp.lt.s32.totalorder %s13, 2
    // Predicated region
    $region21: #{nbs_deeplab_head_forward.13} parent=5 // pred_check
      %p255 = pneg %p254
    $region22: #{nbs_deeplab_head_forward.13} parent=5 // pred_check_branch
      %257 = sbr.rel (%p255) target = $region24
    $region23: #{nbs_deeplab_head_forward.13} parent=5 // pred_region
      // Predicated region
      $region25: #{nbs_deeplab_head_forward.13} parent=23 // pred_check
        %p258 = pneg %p47
      $region26: #{nbs_deeplab_head_forward.13} parent=23 // pred_check_branch
        %260 = sbr.rel (%p258) target = $region28
      $region27: #{nbs_deeplab_head_forward.13} parent=23 // pred_region
        %s261 = smul.u32 32, %s21
        %p262 = scmp.lt.s32.totalorder %s20, 1
        %s263 = scalar_select %p262, %s20, 1
        %p264 = scmp.lt.s32.totalorder %s261, 31
        %s265 = scalar_select %p264, %s261, 31
        %s266 = smul.addr %s265, 2
        %s267 = smul.addr %s263, 64
        %s268 = sadd.s32 %s266, %s267
        %s269 = smul.addr %s268, 4
        %s270 = scalar_lea.vmem %s0, %s269
        %s271 = smul.u32 32, %s21
      $region28: #{nbs_deeplab_head_forward.13} parent=23 // pred_fallthru
        _
      // Predicated region
      $region29: #{nbs_deeplab_head_forward.13} parent=23 // pred_check
        %p272 = pneg %p75
      $region30: #{nbs_deeplab_head_forward.13} parent=23 // pred_check_branch
        %274 = sbr.rel (%p272) target = $region32
      $region31: #{nbs_deeplab_head_forward.13} parent=23 // pred_region
        %s275 = smul.u32 32, %s21
        %p276 = scmp.lt.s32.totalorder %s20, 1
        %s277 = scalar_select %p276, %s20, 1
        %p278 = scmp.lt.s32.totalorder %s275, 31
        %s279 = scalar_select %p278, %s275, 31
        %s280 = smul.addr %s279, 2
        %s281 = smul.addr %s277, 64
        %s282 = sadd.s32 %s280, %s281
        %s283 = smul.addr %s282, 4
        %s284 = scalar_lea.vmem %s1, %s283
        %s285 = smul.u32 32, %s21
      $region32: #{nbs_deeplab_head_forward.13} parent=23 // pred_fallthru
        _
      // Predicated region
      $region33: #{nbs_deeplab_head_forward.13} parent=23 // pred_check
        %p286 = pneg %p103
      $region34: #{nbs_deeplab_head_forward.13} parent=23 // pred_check_branch
        %288 = sbr.rel (%p286) target = $region36
      $region35: #{nbs_deeplab_head_forward.13} parent=23 // pred_region
        %s289 = smul.u32 32, %s21
        %p290 = scmp.lt.s32.totalorder %s20, 1
        %s291 = scalar_select %p290, %s20, 1
        %p292 = scmp.lt.s32.totalorder %s289, 31
        %s293 = scalar_select %p292, %s289, 31
        %s294 = smul.addr %s293, 2
        %s295 = smul.addr %s291, 64
        %s296 = sadd.s32 %s294, %s295
        %s297 = smul.addr %s296, 4
        %s298 = scalar_lea.vmem %s2, %s297
        %s299 = smul.u32 32, %s21
      $region36: #{nbs_deeplab_head_forward.13} parent=23 // pred_fallthru
        _
      // Predicated region
      $region37: #{nbs_deeplab_head_forward.13} parent=23 // pred_check
        %p300 = pneg %p131
      $region38: #{nbs_deeplab_head_forward.13} parent=23 // pred_check_branch
        %302 = sbr.rel (%p300) target = $region40
      $region39: #{nbs_deeplab_head_forward.13} parent=23 // pred_region
        %s303 = smul.u32 32, %s21
        %p304 = scmp.lt.s32.totalorder %s20, 1
        %s305 = scalar_select %p304, %s20, 1
        %p306 = scmp.lt.s32.totalorder %s303, 31
        %s307 = scalar_select %p306, %s303, 31
        %s308 = smul.addr %s307, 2
        %s309 = smul.addr %s305, 64
        %s310 = sadd.s32 %s308, %s309
        %s311 = smul.addr %s310, 4
        %s312 = scalar_lea.vmem %s3, %s311
        %s313 = smul.u32 32, %s21
      $region40: #{nbs_deeplab_head_forward.13} parent=23 // pred_fallthru
        _
      // Predicated region
      $region41: #{nbs_deeplab_head_forward.13} parent=23 // pred_check
        %p314 = pneg %p178
      $region42: #{nbs_deeplab_head_forward.13} parent=23 // pred_check_branch
        %316 = sbr.rel (%p314) target = $region44
      $region43: #{nbs_deeplab_head_forward.13} parent=23 // pred_region
        %p317 = scmp.lt.s32.totalorder %s20, 1
        %s318 = scalar_select %p317, %s20, 1
        %s319 = smul.addr %s318, 2
        %s320 = scalar_lea.vmem %s5, %s319
      $region44: #{nbs_deeplab_head_forward.13} parent=23 // pred_fallthru
        _
    $region24: #{nbs_deeplab_head_forward.13} parent=5 // pred_fallthru
      _
    %p321 = scmp.le.s32.totalorder 1, %s13
    %p322 = scmp.lt.s32.totalorder %s13, 3
    %p323 = pnand %p321, %p322
    %p324 = pneg %p323
    // Predicated region
    $region45: #{nbs_deeplab_head_forward.13} parent=5 // pred_check
      _
    $region46: #{nbs_deeplab_head_forward.13} parent=5 // pred_check_branch
      %326 = sbr.rel (%p323) target = $region48
    $region47: #{nbs_deeplab_head_forward.13} parent=5 // pred_region
      %s327 = ssub.s32 %s13, 1
      %s328 = smul.u32 32, %s23
      %p329 = scmp.lt.s32.totalorder %s22, 1
      %s330 = scalar_select %p329, %s22, 1
      %p331 = scmp.lt.s32.totalorder %s328, 31
      %s332 = scalar_select %p331, %s328, 31
      %s333 = smul.addr %s332, 2
      %s334 = smul.addr %s330, 64
      %s335 = sadd.s32 %s333, %s334
      %s336 = smul.addr %s335, 4
      %s337 = scalar_lea.vmem %s0, %s336
      %p338 = pneg %p53
      %p339 = pneg %p50
      %s340 = smul.u32 32, %s23
      %p341 = scmp.lt.s32.totalorder %s22, 1
      %s342 = scalar_select %p341, %s22, 1
      %p343 = scmp.lt.s32.totalorder %s340, 31
      %s344 = scalar_select %p343, %s340, 31
      %s345 = smul.addr %s344, 2
      %s346 = smul.addr %s342, 64
      %s347 = sadd.s32 %s345, %s346
      %s348 = smul.addr %s347, 4
      %s349 = scalar_lea.vmem %s1, %s348
      %p350 = pneg %p81
      %p351 = pneg %p78
      %s352 = smul.u32 32, %s23
      %p353 = scmp.lt.s32.totalorder %s22, 1
      %s354 = scalar_select %p353, %s22, 1
      %p355 = scmp.lt.s32.totalorder %s352, 31
      %s356 = scalar_select %p355, %s352, 31
      %s357 = smul.addr %s356, 2
      %s358 = smul.addr %s354, 64
      %s359 = sadd.s32 %s357, %s358
      %s360 = smul.addr %s359, 4
      %s361 = scalar_lea.vmem %s2, %s360
      %p362 = pneg %p109
      %p363 = pneg %p106
      %s364 = smul.u32 32, %s23
      %p365 = scmp.lt.s32.totalorder %s22, 1
      %s366 = scalar_select %p365, %s22, 1
      %p367 = scmp.lt.s32.totalorder %s364, 31
      %s368 = scalar_select %p367, %s364, 31
      %s369 = smul.addr %s368, 2
      %s370 = smul.addr %s366, 64
      %s371 = sadd.s32 %s369, %s370
      %s372 = smul.addr %s371, 4
      %s373 = scalar_lea.vmem %s3, %s372
      %p374 = pneg %p137
      %p375 = pneg %p134
      %p376 = pneg %p158
      %p377 = pneg %p155
      %p378 = scmp.lt.s32.totalorder %s22, 1
      %s379 = scalar_select %p378, %s22, 1
      %s380 = smul.addr %s379, 2
      %s381 = scalar_lea.vmem %s5, %s380
      %p382 = pneg %p184
      %p383 = pneg %p181
      %p384 = pneg %p205
      %p385 = pneg %p202
      %p386 = pneg %p233
      %p387 = pneg %p230
      %s388 = smul.u32 32, %s23
      %p389 = scmp.lt.s32.totalorder %s22, 1
      %s390 = scalar_select %p389, %s22, 1
      %p391 = scmp.lt.s32.totalorder %s388, 31
      %s392 = scalar_select %p391, %s388, 31
      %s393 = smul.addr %s392, 2
      %s394 = smul.addr %s390, 64
      %s395 = sadd.s32 %s393, %s394
      %s396 = smul.addr %s395, 4
      %s397 = scalar_lea.vmem %s7, %s396
      %s398 = smul.u32 32, %s23
      %p399 = scmp.lt.s32.totalorder %s22, 1
      %s400 = scalar_select %p399, %s22, 1
      %p401 = scmp.lt.s32.totalorder %s398, 31
      %s402 = scalar_select %p401, %s398, 31
      %s403 = smul.addr %s402, 2
      %s404 = smul.addr %s400, 64
      %s405 = sadd.s32 %s403, %s404
      %s406 = smul.addr %s405, 4
      %s407 = scalar_lea.vmem %s0, %s406
      %s408 = smul.u32 32, %s23
      %s409 = smul.u32 32, %s23
      %p410 = scmp.lt.s32.totalorder %s22, 1
      %s411 = scalar_select %p410, %s22, 1
      %p412 = scmp.lt.s32.totalorder %s409, 31
      %s413 = scalar_select %p412, %s409, 31
      %s414 = smul.addr %s413, 2
      %s415 = smul.addr %s411, 64
      %s416 = sadd.s32 %s414, %s415
      %s417 = smul.addr %s416, 4
      %s418 = scalar_lea.vmem %s1, %s417
      %s419 = smul.u32 32, %s23
      %s420 = smul.u32 32, %s23
      %p421 = scmp.lt.s32.totalorder %s22, 1
      %s422 = scalar_select %p421, %s22, 1
      %p423 = scmp.lt.s32.totalorder %s420, 31
      %s424 = scalar_select %p423, %s420, 31
      %s425 = smul.addr %s424, 2
      %s426 = smul.addr %s422, 64
      %s427 = sadd.s32 %s425, %s426
      %s428 = smul.addr %s427, 4
      %s429 = scalar_lea.vmem %s2, %s428
      %s430 = smul.u32 32, %s23
      %s431 = smul.u32 32, %s23
      %p432 = scmp.lt.s32.totalorder %s22, 1
      %s433 = scalar_select %p432, %s22, 1
      %p434 = scmp.lt.s32.totalorder %s431, 31
      %s435 = scalar_select %p434, %s431, 31
      %s436 = smul.addr %s435, 2
      %s437 = smul.addr %s433, 64
      %s438 = sadd.s32 %s436, %s437
      %s439 = smul.addr %s438, 4
      %s440 = scalar_lea.vmem %s3, %s439
      %s441 = smul.u32 32, %s23
      %p442 = scmp.lt.s32.totalorder %s22, 1
      %s443 = scalar_select %p442, %s22, 1
      %s444 = smul.addr %s443, 2
      %s445 = scalar_lea.vmem %s5, %s444
      %s446 = smul.u32 32, %s23
      %p447 = scmp.lt.s32.totalorder %s22, 1
      %s448 = scalar_select %p447, %s22, 1
      %p449 = scmp.lt.s32.totalorder %s446, 31
      %s450 = scalar_select %p449, %s446, 31
      %s451 = smul.addr %s450, 2
      %s452 = smul.addr %s448, 64
      %s453 = sadd.s32 %s451, %s452
      %s454 = smul.addr %s453, 4
      %s455 = scalar_lea.vmem %s7, %s454
      %s456 = smul.u32 32, %s23
      %v457 = vld [vmem:[%s407] sm:$0xff]
      %v458 = vld [vmem:[%s407 + $0x8] sm:$0xff]
      %v459 = vld [vmem:[%s407 + $0x10] sm:$0xff]
      %v460 = vld [vmem:[%s407 + $0x18] sm:$0xff]
      %v461 = vld [vmem:[%s407 + $0x20] sm:$0xff]
      %v462 = vld [vmem:[%s407 + $0x28] sm:$0xff]
      %v463 = vld [vmem:[%s407 + $0x30] sm:$0xff]
      %v464 = vld [vmem:[%s407 + $0x38] sm:$0xff]
      %v465 = vld [vmem:[%s407 + $0x40] sm:$0xff]
      %v466 = vld [vmem:[%s407 + $0x48] sm:$0xff]
      %v467 = vld [vmem:[%s407 + $0x50] sm:$0xff]
      %v468 = vld [vmem:[%s407 + $0x58] sm:$0xff]
      %v469 = vld [vmem:[%s407 + $0x60] sm:$0xff]
      %v470 = vld [vmem:[%s407 + $0x68] sm:$0xff]
      %v471 = vld [vmem:[%s407 + $0x70] sm:$0xff]
      %v472 = vld [vmem:[%s407 + $0x78] sm:$0xff]
      %v473 = vld [vmem:[%s407 + $0x80] sm:$0xff]
      %v474 = vld [vmem:[%s407 + $0x88] sm:$0xff]
      %v475 = vld [vmem:[%s407 + $0x90] sm:$0xff]
      %v476 = vld [vmem:[%s407 + $0x98] sm:$0xff]
      %v477 = vld [vmem:[%s407 + $0xa0] sm:$0xff]
      %v478 = vld [vmem:[%s407 + $0xa8] sm:$0xff]
      %v479 = vld [vmem:[%s407 + $0xb0] sm:$0xff]
      %v480 = vld [vmem:[%s407 + $0xb8] sm:$0xff]
      %v481 = vld [vmem:[%s407 + $0xc0] sm:$0xff]
      %v482 = vld [vmem:[%s407 + $0xc8] sm:$0xff]
      %v483 = vld [vmem:[%s407 + $0xd0] sm:$0xff]
      %v484 = vld [vmem:[%s407 + $0xd8] sm:$0xff]
      %v485 = vld [vmem:[%s407 + $0xe0] sm:$0xff]
      %v486 = vld [vmem:[%s407 + $0xe8] sm:$0xff]
      %v487 = vld [vmem:[%s407 + $0xf0] sm:$0xff]
      %v488 = vld [vmem:[%s407 + $0xf8] sm:$0xff]
      %v489 = vld [vmem:[%s4] sm:$0xff]
      %v490 = vld [vmem:[%s4 + $0x8] sm:$0xff]
      %v491 = vld [vmem:[%s4 + $0x10] sm:$0xff]
      %v492 = vld [vmem:[%s4 + $0x18] sm:$0xff]
      %v493 = vld [vmem:[%s4 + $0x20] sm:$0xff]
      %v494 = vld [vmem:[%s4 + $0x28] sm:$0xff]
      %v495 = vld [vmem:[%s4 + $0x30] sm:$0xff]
      %v496 = vld [vmem:[%s4 + $0x38] sm:$0xff]
      %v497 = vld [vmem:[%s4 + $0x40] sm:$0xff]
      %v498 = vld [vmem:[%s4 + $0x48] sm:$0xff]
      %v499 = vld [vmem:[%s4 + $0x50] sm:$0xff]
      %v500 = vld [vmem:[%s4 + $0x58] sm:$0xff]
      %v501 = vld [vmem:[%s4 + $0x60] sm:$0xff]
      %v502 = vld [vmem:[%s4 + $0x68] sm:$0xff]
      %v503 = vld [vmem:[%s4 + $0x70] sm:$0xff]
      %v504 = vld [vmem:[%s4 + $0x78] sm:$0xff]
      %v505 = vld [vmem:[%s4 + $0x80] sm:$0xff]
      %v506 = vld [vmem:[%s4 + $0x88] sm:$0xff]
      %v507 = vld [vmem:[%s4 + $0x90] sm:$0xff]
      %v508 = vld [vmem:[%s4 + $0x98] sm:$0xff]
      %v509 = vld [vmem:[%s4 + $0xa0] sm:$0xff]
      %v510 = vld [vmem:[%s4 + $0xa8] sm:$0xff]
      %v511 = vld [vmem:[%s4 + $0xb0] sm:$0xff]
      %v512 = vld [vmem:[%s4 + $0xb8] sm:$0xff]
      %v513 = vld [vmem:[%s4 + $0xc0] sm:$0xff]
      %v514 = vld [vmem:[%s4 + $0xc8] sm:$0xff]
      %v515 = vld [vmem:[%s4 + $0xd0] sm:$0xff]
      %v516 = vld [vmem:[%s4 + $0xd8] sm:$0xff]
      %v517 = vld [vmem:[%s4 + $0xe0] sm:$0xff]
      %v518 = vld [vmem:[%s4 + $0xe8] sm:$0xff]
      %v519 = vld [vmem:[%s4 + $0xf0] sm:$0xff]
      %v520 = vld [vmem:[%s4 + $0xf8] sm:$0xff]
      %v521 = vld [vmem:[%s418] sm:$0xff]
      %v522 = vld [vmem:[%s418 + $0x8] sm:$0xff]
      %v523 = vld [vmem:[%s418 + $0x10] sm:$0xff]
      %v524 = vld [vmem:[%s418 + $0x18] sm:$0xff]
      %v525 = vld [vmem:[%s418 + $0x20] sm:$0xff]
      %v526 = vld [vmem:[%s418 + $0x28] sm:$0xff]
      %v527 = vld [vmem:[%s418 + $0x30] sm:$0xff]
      %v528 = vld [vmem:[%s418 + $0x38] sm:$0xff]
      %v529 = vld [vmem:[%s418 + $0x40] sm:$0xff]
      %v530 = vld [vmem:[%s418 + $0x48] sm:$0xff]
      %v531 = vld [vmem:[%s418 + $0x50] sm:$0xff]
      %v532 = vld [vmem:[%s418 + $0x58] sm:$0xff]
      %v533 = vld [vmem:[%s418 + $0x60] sm:$0xff]
      %v534 = vld [vmem:[%s418 + $0x68] sm:$0xff]
      %v535 = vld [vmem:[%s418 + $0x70] sm:$0xff]
      %v536 = vld [vmem:[%s418 + $0x78] sm:$0xff]
      %v537 = vld [vmem:[%s418 + $0x80] sm:$0xff]
      %v538 = vld [vmem:[%s418 + $0x88] sm:$0xff]
      %v539 = vld [vmem:[%s418 + $0x90] sm:$0xff]
      %v540 = vld [vmem:[%s418 + $0x98] sm:$0xff]
      %v541 = vld [vmem:[%s418 + $0xa0] sm:$0xff]
      %v542 = vld [vmem:[%s418 + $0xa8] sm:$0xff]
      %v543 = vld [vmem:[%s418 + $0xb0] sm:$0xff]
      %v544 = vld [vmem:[%s418 + $0xb8] sm:$0xff]
      %v545 = vld [vmem:[%s418 + $0xc0] sm:$0xff]
      %v546 = vld [vmem:[%s418 + $0xc8] sm:$0xff]
      %v547 = vld [vmem:[%s418 + $0xd0] sm:$0xff]
      %v548 = vld [vmem:[%s418 + $0xd8] sm:$0xff]
      %v549 = vld [vmem:[%s418 + $0xe0] sm:$0xff]
      %v550 = vld [vmem:[%s418 + $0xe8] sm:$0xff]
      %v551 = vld [vmem:[%s418 + $0xf0] sm:$0xff]
      %v552 = vld [vmem:[%s418 + $0xf8] sm:$0xff]
      %s553 = scalar_lea.vmem %s4, 256
      %v554 = vld [vmem:[%s553] sm:$0xff]
      %v555 = vld [vmem:[%s553 + $0x8] sm:$0xff]
      %v556 = vld [vmem:[%s553 + $0x10] sm:$0xff]
      %v557 = vld [vmem:[%s553 + $0x18] sm:$0xff]
      %v558 = vld [vmem:[%s553 + $0x20] sm:$0xff]
      %v559 = vld [vmem:[%s553 + $0x28] sm:$0xff]
      %v560 = vld [vmem:[%s553 + $0x30] sm:$0xff]
      %v561 = vld [vmem:[%s553 + $0x38] sm:$0xff]
      %v562 = vld [vmem:[%s553 + $0x40] sm:$0xff]
      %v563 = vld [vmem:[%s553 + $0x48] sm:$0xff]
      %v564 = vld [vmem:[%s553 + $0x50] sm:$0xff]
      %v565 = vld [vmem:[%s553 + $0x58] sm:$0xff]
      %v566 = vld [vmem:[%s553 + $0x60] sm:$0xff]
      %v567 = vld [vmem:[%s553 + $0x68] sm:$0xff]
      %v568 = vld [vmem:[%s553 + $0x70] sm:$0xff]
      %v569 = vld [vmem:[%s553 + $0x78] sm:$0xff]
      %v570 = vld [vmem:[%s553 + $0x80] sm:$0xff]
      %v571 = vld [vmem:[%s553 + $0x88] sm:$0xff]
      %v572 = vld [vmem:[%s553 + $0x90] sm:$0xff]
      %v573 = vld [vmem:[%s553 + $0x98] sm:$0xff]
      %v574 = vld [vmem:[%s553 + $0xa0] sm:$0xff]
      %v575 = vld [vmem:[%s553 + $0xa8] sm:$0xff]
      %v576 = vld [vmem:[%s553 + $0xb0] sm:$0xff]
      %v577 = vld [vmem:[%s553 + $0xb8] sm:$0xff]
      %v578 = vld [vmem:[%s553 + $0xc0] sm:$0xff]
      %v579 = vld [vmem:[%s553 + $0xc8] sm:$0xff]
      %v580 = vld [vmem:[%s553 + $0xd0] sm:$0xff]
      %v581 = vld [vmem:[%s553 + $0xd8] sm:$0xff]
      %v582 = vld [vmem:[%s553 + $0xe0] sm:$0xff]
      %v583 = vld [vmem:[%s553 + $0xe8] sm:$0xff]
      %v584 = vld [vmem:[%s553 + $0xf0] sm:$0xff]
      %v585 = vld [vmem:[%s553 + $0xf8] sm:$0xff]
      %v618 = vunpack.c.l.b16 %v521
      %v619 = vunpack.c.h.b16 %v521
      %v620 = vunpack.c.l.b16 %v522
      %v621 = vunpack.c.h.b16 %v522
      %v622 = vunpack.c.l.b16 %v523
      %v623 = vunpack.c.h.b16 %v523
      %v624 = vunpack.c.l.b16 %v524
      %v625 = vunpack.c.h.b16 %v524
      %v626 = vunpack.c.l.b16 %v525
      %v627 = vunpack.c.h.b16 %v525
      %v628 = vunpack.c.l.b16 %v526
      %v629 = vunpack.c.h.b16 %v526
      %v630 = vunpack.c.l.b16 %v527
      %v631 = vunpack.c.h.b16 %v527
      %v632 = vunpack.c.l.b16 %v528
      %v633 = vunpack.c.h.b16 %v528
      %v634 = vunpack.c.l.b16 %v529
      %v635 = vunpack.c.h.b16 %v529
      %v636 = vunpack.c.l.b16 %v530
      %v637 = vunpack.c.h.b16 %v530
      %v638 = vunpack.c.l.b16 %v531
      %v639 = vunpack.c.h.b16 %v531
      %v640 = vunpack.c.l.b16 %v532
      %v641 = vunpack.c.h.b16 %v532
      %v642 = vunpack.c.l.b16 %v533
      %v643 = vunpack.c.h.b16 %v533
      %v644 = vunpack.c.l.b16 %v534
      %v645 = vunpack.c.h.b16 %v534
      %v646 = vunpack.c.l.b16 %v535
      %v647 = vunpack.c.h.b16 %v535
      %v648 = vunpack.c.l.b16 %v536
      %v649 = vunpack.c.h.b16 %v536
      %v650 = vunpack.c.l.b16 %v537
      %v651 = vunpack.c.h.b16 %v537
      %v652 = vunpack.c.l.b16 %v538
      %v653 = vunpack.c.h.b16 %v538
      %v654 = vunpack.c.l.b16 %v539
      %v655 = vunpack.c.h.b16 %v539
      %v656 = vunpack.c.l.b16 %v540
      %v657 = vunpack.c.h.b16 %v540
      %v658 = vunpack.c.l.b16 %v541
      %v659 = vunpack.c.h.b16 %v541
      %v660 = vunpack.c.l.b16 %v542
      %v661 = vunpack.c.h.b16 %v542
      %v662 = vunpack.c.l.b16 %v543
      %v663 = vunpack.c.h.b16 %v543
      %v664 = vunpack.c.l.b16 %v544
      %v665 = vunpack.c.h.b16 %v544
      %v666 = vunpack.c.l.b16 %v545
      %v667 = vunpack.c.h.b16 %v545
      %v668 = vunpack.c.l.b16 %v546
      %v669 = vunpack.c.h.b16 %v546
      %v670 = vunpack.c.l.b16 %v547
      %v671 = vunpack.c.h.b16 %v547
      %v672 = vunpack.c.l.b16 %v548
      %v673 = vunpack.c.h.b16 %v548
      %v674 = vunpack.c.l.b16 %v549
      %v675 = vunpack.c.h.b16 %v549
      %v676 = vunpack.c.l.b16 %v550
      %v677 = vunpack.c.h.b16 %v550
      %v678 = vunpack.c.l.b16 %v551
      %v679 = vunpack.c.h.b16 %v551
      %v680 = vunpack.c.l.b16 %v552
      %v681 = vunpack.c.h.b16 %v552
      %v682 = vpack.c.b16 %v620, %v618
      %v683 = vpack.c.b16 %v621, %v619
      %v684 = vpack.c.b16 %v624, %v622
      %v685 = vpack.c.b16 %v625, %v623
      %v686 = vpack.c.b16 %v628, %v626
      %v687 = vpack.c.b16 %v629, %v627
      %v688 = vpack.c.b16 %v632, %v630
      %v689 = vpack.c.b16 %v633, %v631
      %v690 = vpack.c.b16 %v636, %v634
      %v691 = vpack.c.b16 %v637, %v635
      %v692 = vpack.c.b16 %v640, %v638
      %v693 = vpack.c.b16 %v641, %v639
      %v694 = vpack.c.b16 %v644, %v642
      %v695 = vpack.c.b16 %v645, %v643
      %v696 = vpack.c.b16 %v648, %v646
      %v697 = vpack.c.b16 %v649, %v647
      %v698 = vpack.c.b16 %v652, %v650
      %v699 = vpack.c.b16 %v653, %v651
      %v700 = vpack.c.b16 %v656, %v654
      %v701 = vpack.c.b16 %v657, %v655
      %v702 = vpack.c.b16 %v660, %v658
      %v703 = vpack.c.b16 %v661, %v659
      %v704 = vpack.c.b16 %v664, %v662
      %v705 = vpack.c.b16 %v665, %v663
      %v706 = vpack.c.b16 %v668, %v666
      %v707 = vpack.c.b16 %v669, %v667
      %v708 = vpack.c.b16 %v672, %v670
      %v709 = vpack.c.b16 %v673, %v671
      %v710 = vpack.c.b16 %v676, %v674
      %v711 = vpack.c.b16 %v677, %v675
      %v712 = vpack.c.b16 %v680, %v678
      %v713 = vpack.c.b16 %v681, %v679
      %v778 = vunpack.c.l.b16 %v554
      %v779 = vunpack.c.h.b16 %v554
      %v780 = vunpack.c.l.b16 %v555
      %v781 = vunpack.c.h.b16 %v555
      %v782 = vunpack.c.l.b16 %v556
      %v783 = vunpack.c.h.b16 %v556
      %v784 = vunpack.c.l.b16 %v557
      %v785 = vunpack.c.h.b16 %v557
      %v786 = vunpack.c.l.b16 %v558
      %v787 = vunpack.c.h.b16 %v558
      %v788 = vunpack.c.l.b16 %v559
      %v789 = vunpack.c.h.b16 %v559
      %v790 = vunpack.c.l.b16 %v560
      %v791 = vunpack.c.h.b16 %v560
      %v792 = vunpack.c.l.b16 %v561
      %v793 = vunpack.c.h.b16 %v561
      %v794 = vunpack.c.l.b16 %v562
      %v795 = vunpack.c.h.b16 %v562
      %v796 = vunpack.c.l.b16 %v563
      %v797 = vunpack.c.h.b16 %v563
      %v798 = vunpack.c.l.b16 %v564
      %v799 = vunpack.c.h.b16 %v564
      %v800 = vunpack.c.l.b16 %v565
      %v801 = vunpack.c.h.b16 %v565
      %v802 = vunpack.c.l.b16 %v566
      %v803 = vunpack.c.h.b16 %v566
      %v804 = vunpack.c.l.b16 %v567
      %v805 = vunpack.c.h.b16 %v567
      %v806 = vunpack.c.l.b16 %v568
      %v807 = vunpack.c.h.b16 %v568
      %v808 = vunpack.c.l.b16 %v569
      %v809 = vunpack.c.h.b16 %v569
      %v810 = vunpack.c.l.b16 %v570
      %v811 = vunpack.c.h.b16 %v570
      %v812 = vunpack.c.l.b16 %v571
      %v813 = vunpack.c.h.b16 %v571
      %v814 = vunpack.c.l.b16 %v572
      %v815 = vunpack.c.h.b16 %v572
      %v816 = vunpack.c.l.b16 %v573
      %v817 = vunpack.c.h.b16 %v573
      %v818 = vunpack.c.l.b16 %v574
      %v819 = vunpack.c.h.b16 %v574
      %v820 = vunpack.c.l.b16 %v575
      %v821 = vunpack.c.h.b16 %v575
      %v822 = vunpack.c.l.b16 %v576
      %v823 = vunpack.c.h.b16 %v576
      %v824 = vunpack.c.l.b16 %v577
      %v825 = vunpack.c.h.b16 %v577
      %v826 = vunpack.c.l.b16 %v578
      %v827 = vunpack.c.h.b16 %v578
      %v828 = vunpack.c.l.b16 %v579
      %v829 = vunpack.c.h.b16 %v579
      %v830 = vunpack.c.l.b16 %v580
      %v831 = vunpack.c.h.b16 %v580
      %v832 = vunpack.c.l.b16 %v581
      %v833 = vunpack.c.h.b16 %v581
      %v834 = vunpack.c.l.b16 %v582
      %v835 = vunpack.c.h.b16 %v582
      %v836 = vunpack.c.l.b16 %v583
      %v837 = vunpack.c.h.b16 %v583
      %v838 = vunpack.c.l.b16 %v584
      %v839 = vunpack.c.h.b16 %v584
      %v840 = vunpack.c.l.b16 %v585
      %v841 = vunpack.c.h.b16 %v585
      %v842 = vpack.c.b16 %v780, %v778
      %v843 = vpack.c.b16 %v781, %v779
      %v844 = vpack.c.b16 %v784, %v782
      %v845 = vpack.c.b16 %v785, %v783
      %v846 = vpack.c.b16 %v788, %v786
      %v847 = vpack.c.b16 %v789, %v787
      %v848 = vpack.c.b16 %v792, %v790
      %v849 = vpack.c.b16 %v793, %v791
      %v850 = vpack.c.b16 %v796, %v794
      %v851 = vpack.c.b16 %v797, %v795
      %v852 = vpack.c.b16 %v800, %v798
      %v853 = vpack.c.b16 %v801, %v799
      %v854 = vpack.c.b16 %v804, %v802
      %v855 = vpack.c.b16 %v805, %v803
      %v856 = vpack.c.b16 %v808, %v806
      %v857 = vpack.c.b16 %v809, %v807
      %v858 = vpack.c.b16 %v812, %v810
      %v859 = vpack.c.b16 %v813, %v811
      %v860 = vpack.c.b16 %v816, %v814
      %v861 = vpack.c.b16 %v817, %v815
      %v862 = vpack.c.b16 %v820, %v818
      %v863 = vpack.c.b16 %v821, %v819
      %v864 = vpack.c.b16 %v824, %v822
      %v865 = vpack.c.b16 %v825, %v823
      %v866 = vpack.c.b16 %v828, %v826
      %v867 = vpack.c.b16 %v829, %v827
      %v868 = vpack.c.b16 %v832, %v830
      %v869 = vpack.c.b16 %v833, %v831
      %v870 = vpack.c.b16 %v836, %v834
      %v871 = vpack.c.b16 %v837, %v835
      %v872 = vpack.c.b16 %v840, %v838
      %v873 = vpack.c.b16 %v841, %v839
      %906 = vmatprep.subr.bf16.mxu0 %v843
      %907 = vmatpush1.bf16.msra.mxu0 %v842
      %908 = vmatprep.subr.bf16.mxu0 %v845
      %909 = vmatpush1.bf16.msra.mxu0 %v844
      %910 = vmatprep.subr.bf16.mxu0 %v847
      %911 = vmatpush1.bf16.msra.mxu0 %v846
      %912 = vmatprep.subr.bf16.mxu0 %v849
      %913 = vmatpush1.bf16.msra.mxu0 %v848
      %914 = vmatprep.subr.bf16.mxu0 %v851
      %915 = vmatpush1.bf16.msra.mxu0 %v850
      %916 = vmatprep.subr.bf16.mxu0 %v853
      %917 = vmatpush1.bf16.msra.mxu0 %v852
      %918 = vmatprep.subr.bf16.mxu0 %v855
      %919 = vmatpush1.bf16.msra.mxu0 %v854
      %920 = vmatprep.subr.bf16.mxu0 %v857
      %921 = vmatpush1.bf16.msra.mxu0 %v856
      %922 = vmatprep.subr.bf16.mxu0 %v859
      %923 = vmatpush1.bf16.msra.mxu0 %v858
      %924 = vmatprep.subr.bf16.mxu0 %v861
      %925 = vmatpush1.bf16.msra.mxu0 %v860
      %926 = vmatprep.subr.bf16.mxu0 %v863
      %927 = vmatpush1.bf16.msra.mxu0 %v862
      %928 = vmatprep.subr.bf16.mxu0 %v865
      %929 = vmatpush1.bf16.msra.mxu0 %v864
      %930 = vmatprep.subr.bf16.mxu0 %v867
      %931 = vmatpush1.bf16.msra.mxu0 %v866
      %932 = vmatprep.subr.bf16.mxu0 %v869
      %933 = vmatpush1.bf16.msra.mxu0 %v868
      %934 = vmatprep.subr.bf16.mxu0 %v871
      %935 = vmatpush1.bf16.msra.mxu0 %v870
      %936 = vmatprep.subr.bf16.mxu0 %v873
      %937 = vmatpush1.bf16.msra.mxu0 %v872
      %938 = vmatprep.mubr.bf16.mxu0 %v683
      %939 = vmatmul.mubr.bf16.gmra.mrb[0].mxu0 %v682
      %v940 = vpop.f32.mrb[0].mxu0
      %v941 = vadd.f32 0.0, %v940
      %v942 = vpop.f32.mrb[0].mxu0
      %v943 = vadd.f32 0.0, %v942
      %v944 = vpop.f32.mrb[0].mxu0
      %v945 = vadd.f32 0.0, %v944
      %v946 = vpop.f32.mrb[0].mxu0
      %v947 = vadd.f32 0.0, %v946
      %948 = vmatprep.mubr.bf16.mxu0 %v685
      %949 = vmatmul.mubr.bf16.gmra.mrb[0].mxu0 %v684
      %v950 = vpop.f32.mrb[0].mxu0
      %v951 = vadd.f32 0.0, %v950
      %v952 = vpop.f32.mrb[0].mxu0
      %v953 = vadd.f32 0.0, %v952
      %v954 = vpop.f32.mrb[0].mxu0
      %v955 = vadd.f32 0.0, %v954
      %v956 = vpop.f32.mrb[0].mxu0
      %v957 = vadd.f32 0.0, %v956
      %958 = vmatprep.mubr.bf16.mxu0 %v687
      %959 = vmatmul.mubr.bf16.gmra.mrb[0].mxu0 %v686
      %v960 = vpop.f32.mrb[0].mxu0
      %v961 = vadd.f32 0.0, %v960
      %v962 = vpop.f32.mrb[0].mxu0
      %v963 = vadd.f32 0.0, %v962
      %v964 = vpop.f32.mrb[0].mxu0
      %v965 = vadd.f32 0.0, %v964
      %v966 = vpop.f32.mrb[0].mxu0
      %v967 = vadd.f32 0.0, %v966
      %968 = vmatprep.mubr.bf16.mxu0 %v689
      %969 = vmatmul.mubr.bf16.gmra.mrb[0].mxu0 %v688
      %v970 = vpop.f32.mrb[0].mxu0
      %v971 = vadd.f32 0.0, %v970
      %v972 = vpop.f32.mrb[0].mxu0
      %v973 = vadd.f32 0.0, %v972
      %v974 = vpop.f32.mrb[0].mxu0
      %v975 = vadd.f32 0.0, %v974
      %v976 = vpop.f32.mrb[0].mxu0
      %v977 = vadd.f32 0.0, %v976
      %978 = vmatprep.mubr.bf16.mxu0 %v691
      %979 = vmatmul.mubr.bf16.gmra.mrb[0].mxu0 %v690
      %v980 = vpop.f32.mrb[0].mxu0
      %v981 = vadd.f32 0.0, %v980
      %v982 = vpop.f32.mrb[0].mxu0
      %v983 = vadd.f32 0.0, %v982
      %v984 = vpop.f32.mrb[0].mxu0
      %v985 = vadd.f32 0.0, %v984
      %v986 = vpop.f32.mrb[0].mxu0
      %v987 = vadd.f32 0.0, %v986
      %988 = vmatprep.mubr.bf16.mxu0 %v693
      %989 = vmatmul.mubr.bf16.gmra.mrb[0].mxu0 %v692
      %v990 = vpop.f32.mrb[0].mxu0
      %v991 = vadd.f32 0.0, %v990
      %v992 = vpop.f32.mrb[0].mxu0
      %v993 = vadd.f32 0.0, %v992
      %v994 = vpop.f32.mrb[0].mxu0
      %v995 = vadd.f32 0.0, %v994
      %v996 = vpop.f32.mrb[0].mxu0
      %v997 = vadd.f32 0.0, %v996
      %998 = vmatprep.mubr.bf16.mxu0 %v695
      %999 = vmatmul.mubr.bf16.gmra.mrb[0].mxu0 %v694
      %v1000 = vpop.f32.mrb[0].mxu0
      %v1001 = vadd.f32 0.0, %v1000
      %v1002 = vpop.f32.mrb[0].mxu0
      %v1003 = vadd.f32 0.0, %v1002
      %v1004 = vpop.f32.mrb[0].mxu0
      %v1005 = vadd.f32 0.0, %v1004
      %v1006 = vpop.f32.mrb[0].mxu0
      %v1007 = vadd.f32 0.0, %v1006
      %1008 = vmatprep.mubr.bf16.mxu0 %v697
      %1009 = vmatmul.mubr.bf16.gmra.mrb[0].mxu0 %v696
      %v1010 = vpop.f32.mrb[0].mxu0
      %v1011 = vadd.f32 0.0, %v1010
      %v1012 = vpop.f32.mrb[0].mxu0
      %v1013 = vadd.f32 0.0, %v1012
      %v1014 = vpop.f32.mrb[0].mxu0
      %v1015 = vadd.f32 0.0, %v1014
      %v1016 = vpop.f32.mrb[0].mxu0
      %v1017 = vadd.f32 0.0, %v1016
      %1018 = vmatprep.mubr.bf16.mxu0 %v699
      %1019 = vmatmul.mubr.bf16.gmra.mrb[0].mxu0 %v698
      %v1020 = vpop.f32.mrb[0].mxu0
      %v1021 = vadd.f32 0.0, %v1020
      %v1022 = vpop.f32.mrb[0].mxu0
      %v1023 = vadd.f32 0.0, %v1022
      %v1024 = vpop.f32.mrb[0].mxu0
      %v1025 = vadd.f32 0.0, %v1024
      %v1026 = vpop.f32.mrb[0].mxu0
      %v1027 = vadd.f32 0.0, %v1026
      %1028 = vmatprep.mubr.bf16.mxu0 %v701
      %1029 = vmatmul.mubr.bf16.gmra.mrb[0].mxu0 %v700
      %v1030 = vpop.f32.mrb[0].mxu0
      %v1031 = vadd.f32 0.0, %v1030
      %v1032 = vpop.f32.mrb[0].mxu0
      %v1033 = vadd.f32 0.0, %v1032
      %v1034 = vpop.f32.mrb[0].mxu0
      %v1035 = vadd.f32 0.0, %v1034
      %v1036 = vpop.f32.mrb[0].mxu0
      %v1037 = vadd.f32 0.0, %v1036
      %1038 = vmatprep.mubr.bf16.mxu0 %v703
      %1039 = vmatmul.mubr.bf16.gmra.mrb[0].mxu0 %v702
      %v1040 = vpop.f32.mrb[0].mxu0
      %v1041 = vadd.f32 0.0, %v1040
      %v1042 = vpop.f32.mrb[0].mxu0
      %v1043 = vadd.f32 0.0, %v1042
      %v1044 = vpop.f32.mrb[0].mxu0
      %v1045 = vadd.f32 0.0, %v1044
      %v1046 = vpop.f32.mrb[0].mxu0
      %v1047 = vadd.f32 0.0, %v1046
      %1048 = vmatprep.mubr.bf16.mxu0 %v705
      %1049 = vmatmul.mubr.bf16.gmra.mrb[0].mxu0 %v704
      %v1050 = vpop.f32.mrb[0].mxu0
      %v1051 = vadd.f32 0.0, %v1050
      %v1052 = vpop.f32.mrb[0].mxu0
      %v1053 = vadd.f32 0.0, %v1052
      %v1054 = vpop.f32.mrb[0].mxu0
      %v1055 = vadd.f32 0.0, %v1054
      %v1056 = vpop.f32.mrb[0].mxu0
      %v1057 = vadd.f32 0.0, %v1056
      %1058 = vmatprep.mubr.bf16.mxu0 %v707
      %1059 = vmatmul.mubr.bf16.gmra.mrb[0].mxu0 %v706
      %v1060 = vpop.f32.mrb[0].mxu0
      %v1061 = vadd.f32 0.0, %v1060
      %v1062 = vpop.f32.mrb[0].mxu0
      %v1063 = vadd.f32 0.0, %v1062
      %v1064 = vpop.f32.mrb[0].mxu0
      %v1065 = vadd.f32 0.0, %v1064
      %v1066 = vpop.f32.mrb[0].mxu0
      %v1067 = vadd.f32 0.0, %v1066
      %1068 = vmatprep.mubr.bf16.mxu0 %v709
      %1069 = vmatmul.mubr.bf16.gmra.mrb[0].mxu0 %v708
      %v1070 = vpop.f32.mrb[0].mxu0
      %v1071 = vadd.f32 0.0, %v1070
      %v1072 = vpop.f32.mrb[0].mxu0
      %v1073 = vadd.f32 0.0, %v1072
      %v1074 = vpop.f32.mrb[0].mxu0
      %v1075 = vadd.f32 0.0, %v1074
      %v1076 = vpop.f32.mrb[0].mxu0
      %v1077 = vadd.f32 0.0, %v1076
      %1078 = vmatprep.mubr.bf16.mxu0 %v711
      %1079 = vmatmul.mubr.bf16.gmra.mrb[0].mxu0 %v710
      %v1080 = vpop.f32.mrb[0].mxu0
      %v1081 = vadd.f32 0.0, %v1080
      %v1082 = vpop.f32.mrb[0].mxu0
      %v1083 = vadd.f32 0.0, %v1082
      %v1084 = vpop.f32.mrb[0].mxu0
      %v1085 = vadd.f32 0.0, %v1084
      %v1086 = vpop.f32.mrb[0].mxu0
      %v1087 = vadd.f32 0.0, %v1086
      %1088 = vmatprep.mubr.bf16.mxu0 %v713
      %1089 = vmatmul.mubr.bf16.gmra.mrb[0].mxu0 %v712
      %v1090 = vpop.f32.mrb[0].mxu0
      %v1091 = vadd.f32 0.0, %v1090
      %v1092 = vpop.f32.mrb[0].mxu0
      %v1093 = vadd.f32 0.0, %v1092
      %v1094 = vpop.f32.mrb[0].mxu0
      %v1095 = vadd.f32 0.0, %v1094
      %v1096 = vpop.f32.mrb[0].mxu0
      %v1097 = vadd.f32 0.0, %v1096
      %1098 = vdwg.mxu0
      %v1131 = vunpack.c.l.b16 %v457
      %v1132 = vunpack.c.h.b16 %v457
      %v1133 = vunpack.c.l.b16 %v458
      %v1134 = vunpack.c.h.b16 %v458
      %v1135 = vunpack.c.l.b16 %v459
      %v1136 = vunpack.c.h.b16 %v459
      %v1137 = vunpack.c.l.b16 %v460
      %v1138 = vunpack.c.h.b16 %v460
      %v1139 = vunpack.c.l.b16 %v461
      %v1140 = vunpack.c.h.b16 %v461
      %v1141 = vunpack.c.l.b16 %v462
      %v1142 = vunpack.c.h.b16 %v462
      %v1143 = vunpack.c.l.b16 %v463
      %v1144 = vunpack.c.h.b16 %v463
      %v1145 = vunpack.c.l.b16 %v464
      %v1146 = vunpack.c.h.b16 %v464
      %v1147 = vunpack.c.l.b16 %v465
      %v1148 = vunpack.c.h.b16 %v465
      %v1149 = vunpack.c.l.b16 %v466
      %v1150 = vunpack.c.h.b16 %v466
      %v1151 = vunpack.c.l.b16 %v467
      %v1152 = vunpack.c.h.b16 %v467
      %v1153 = vunpack.c.l.b16 %v468
      %v1154 = vunpack.c.h.b16 %v468
      %v1155 = vunpack.c.l.b16 %v469
      %v1156 = vunpack.c.h.b16 %v469
      %v1157 = vunpack.c.l.b16 %v470
      %v1158 = vunpack.c.h.b16 %v470
      %v1159 = vunpack.c.l.b16 %v471
      %v1160 = vunpack.c.h.b16 %v471
      %v1161 = vunpack.c.l.b16 %v472
      %v1162 = vunpack.c.h.b16 %v472
      %v1163 = vunpack.c.l.b16 %v473
      %v1164 = vunpack.c.h.b16 %v473
      %v1165 = vunpack.c.l.b16 %v474
      %v1166 = vunpack.c.h.b16 %v474
      %v1167 = vunpack.c.l.b16 %v475
      %v1168 = vunpack.c.h.b16 %v475
      %v1169 = vunpack.c.l.b16 %v476
      %v1170 = vunpack.c.h.b16 %v476
      %v1171 = vunpack.c.l.b16 %v477
      %v1172 = vunpack.c.h.b16 %v477
      %v1173 = vunpack.c.l.b16 %v478
      %v1174 = vunpack.c.h.b16 %v478
      %v1175 = vunpack.c.l.b16 %v479
      %v1176 = vunpack.c.h.b16 %v479
      %v1177 = vunpack.c.l.b16 %v480
      %v1178 = vunpack.c.h.b16 %v480
      %v1179 = vunpack.c.l.b16 %v481
      %v1180 = vunpack.c.h.b16 %v481
      %v1181 = vunpack.c.l.b16 %v482
      %v1182 = vunpack.c.h.b16 %v482
      %v1183 = vunpack.c.l.b16 %v483
      %v1184 = vunpack.c.h.b16 %v483
      %v1185 = vunpack.c.l.b16 %v484
      %v1186 = vunpack.c.h.b16 %v484
      %v1187 = vunpack.c.l.b16 %v485
      %v1188 = vunpack.c.h.b16 %v485
      %v1189 = vunpack.c.l.b16 %v486
      %v1190 = vunpack.c.h.b16 %v486
      %v1191 = vunpack.c.l.b16 %v487
      %v1192 = vunpack.c.h.b16 %v487
      %v1193 = vunpack.c.l.b16 %v488
      %v1194 = vunpack.c.h.b16 %v488
      %v1195 = vpack.c.b16 %v1133, %v1131
      %v1196 = vpack.c.b16 %v1134, %v1132
      %v1197 = vpack.c.b16 %v1137, %v1135
      %v1198 = vpack.c.b16 %v1138, %v1136
      %v1199 = vpack.c.b16 %v1141, %v1139
      %v1200 = vpack.c.b16 %v1142, %v1140
      %v1201 = vpack.c.b16 %v1145, %v1143
      %v1202 = vpack.c.b16 %v1146, %v1144
      %v1203 = vpack.c.b16 %v1149, %v1147
      %v1204 = vpack.c.b16 %v1150, %v1148
      %v1205 = vpack.c.b16 %v1153, %v1151
      %v1206 = vpack.c.b16 %v1154, %v1152
      %v1207 = vpack.c.b16 %v1157, %v1155
      %v1208 = vpack.c.b16 %v1158, %v1156
      %v1209 = vpack.c.b16 %v1161, %v1159
      %v1210 = vpack.c.b16 %v1162, %v1160
      %v1211 = vpack.c.b16 %v1165, %v1163
      %v1212 = vpack.c.b16 %v1166, %v1164
      %v1213 = vpack.c.b16 %v1169, %v1167
      %v1214 = vpack.c.b16 %v1170, %v1168
      %v1215 = vpack.c.b16 %v1173, %v1171
      %v1216 = vpack.c.b16 %v1174, %v1172
      %v1217 = vpack.c.b16 %v1177, %v1175
      %v1218 = vpack.c.b16 %v1178, %v1176
      %v1219 = vpack.c.b16 %v1181, %v1179
      %v1220 = vpack.c.b16 %v1182, %v1180
      %v1221 = vpack.c.b16 %v1185, %v1183
      %v1222 = vpack.c.b16 %v1186, %v1184
      %v1223 = vpack.c.b16 %v1189, %v1187
      %v1224 = vpack.c.b16 %v1190, %v1188
      %v1225 = vpack.c.b16 %v1193, %v1191
      %v1226 = vpack.c.b16 %v1194, %v1192
      %v1291 = vunpack.c.l.b16 %v489
      %v1292 = vunpack.c.h.b16 %v489
      %v1293 = vunpack.c.l.b16 %v490
      %v1294 = vunpack.c.h.b16 %v490
      %v1295 = vunpack.c.l.b16 %v491
      %v1296 = vunpack.c.h.b16 %v491
      %v1297 = vunpack.c.l.b16 %v492
      %v1298 = vunpack.c.h.b16 %v492
      %v1299 = vunpack.c.l.b16 %v493
      %v1300 = vunpack.c.h.b16 %v493
      %v1301 = vunpack.c.l.b16 %v494
      %v1302 = vunpack.c.h.b16 %v494
      %v1303 = vunpack.c.l.b16 %v495
      %v1304 = vunpack.c.h.b16 %v495
      %v1305 = vunpack.c.l.b16 %v496
      %v1306 = vunpack.c.h.b16 %v496
      %v1307 = vunpack.c.l.b16 %v497
      %v1308 = vunpack.c.h.b16 %v497
      %v1309 = vunpack.c.l.b16 %v498
      %v1310 = vunpack.c.h.b16 %v498
      %v1311 = vunpack.c.l.b16 %v499
      %v1312 = vunpack.c.h.b16 %v499
      %v1313 = vunpack.c.l.b16 %v500
      %v1314 = vunpack.c.h.b16 %v500
      %v1315 = vunpack.c.l.b16 %v501
      %v1316 = vunpack.c.h.b16 %v501
      %v1317 = vunpack.c.l.b16 %v502
      %v1318 = vunpack.c.h.b16 %v502
      %v1319 = vunpack.c.l.b16 %v503
      %v1320 = vunpack.c.h.b16 %v503
      %v1321 = vunpack.c.l.b16 %v504
      %v1322 = vunpack.c.h.b16 %v504
      %v1323 = vunpack.c.l.b16 %v505
      %v1324 = vunpack.c.h.b16 %v505
      %v1325 = vunpack.c.l.b16 %v506
      %v1326 = vunpack.c.h.b16 %v506
      %v1327 = vunpack.c.l.b16 %v507
      %v1328 = vunpack.c.h.b16 %v507
      %v1329 = vunpack.c.l.b16 %v508
      %v1330 = vunpack.c.h.b16 %v508
      %v1331 = vunpack.c.l.b16 %v509
      %v1332 = vunpack.c.h.b16 %v509
      %v1333 = vunpack.c.l.b16 %v510
      %v1334 = vunpack.c.h.b16 %v510
      %v1335 = vunpack.c.l.b16 %v511
      %v1336 = vunpack.c.h.b16 %v511
      %v1337 = vunpack.c.l.b16 %v512
      %v1338 = vunpack.c.h.b16 %v512
      %v1339 = vunpack.c.l.b16 %v513
      %v1340 = vunpack.c.h.b16 %v513
      %v1341 = vunpack.c.l.b16 %v514
      %v1342 = vunpack.c.h.b16 %v514
      %v1343 = vunpack.c.l.b16 %v515
      %v1344 = vunpack.c.h.b16 %v515
      %v1345 = vunpack.c.l.b16 %v516
      %v1346 = vunpack.c.h.b16 %v516
      %v1347 = vunpack.c.l.b16 %v517
      %v1348 = vunpack.c.h.b16 %v517
      %v1349 = vunpack.c.l.b16 %v518
      %v1350 = vunpack.c.h.b16 %v518
      %v1351 = vunpack.c.l.b16 %v519
      %v1352 = vunpack.c.h.b16 %v519
      %v1353 = vunpack.c.l.b16 %v520
      %v1354 = vunpack.c.h.b16 %v520
      %v1355 = vpack.c.b16 %v1293, %v1291
      %v1356 = vpack.c.b16 %v1294, %v1292
      %v1357 = vpack.c.b16 %v1297, %v1295
      %v1358 = vpack.c.b16 %v1298, %v1296
      %v1359 = vpack.c.b16 %v1301, %v1299
      %v1360 = vpack.c.b16 %v1302, %v1300
      %v1361 = vpack.c.b16 %v1305, %v1303
      %v1362 = vpack.c.b16 %v1306, %v1304
      %v1363 = vpack.c.b16 %v1309, %v1307
      %v1364 = vpack.c.b16 %v1310, %v1308
      %v1365 = vpack.c.b16 %v1313, %v1311
      %v1366 = vpack.c.b16 %v1314, %v1312
      %v1367 = vpack.c.b16 %v1317, %v1315
      %v1368 = vpack.c.b16 %v1318, %v1316
      %v1369 = vpack.c.b16 %v1321, %v1319
      %v1370 = vpack.c.b16 %v1322, %v1320
      %v1371 = vpack.c.b16 %v1325, %v1323
      %v1372 = vpack.c.b16 %v1326, %v1324
      %v1373 = vpack.c.b16 %v1329, %v1327
      %v1374 = vpack.c.b16 %v1330, %v1328
      %v1375 = vpack.c.b16 %v1333, %v1331
      %v1376 = vpack.c.b16 %v1334, %v1332
      %v1377 = vpack.c.b16 %v1337, %v1335
      %v1378 = vpack.c.b16 %v1338, %v1336
      %v1379 = vpack.c.b16 %v1341, %v1339
      %v1380 = vpack.c.b16 %v1342, %v1340
      %v1381 = vpack.c.b16 %v1345, %v1343
      %v1382 = vpack.c.b16 %v1346, %v1344
      %v1383 = vpack.c.b16 %v1349, %v1347
      %v1384 = vpack.c.b16 %v1350, %v1348
      %v1385 = vpack.c.b16 %v1353, %v1351
      %v1386 = vpack.c.b16 %v1354, %v1352
      %1419 = vmatprep.subr.bf16.mxu0 %v1356
      %1420 = vmatpush1.bf16.msra.mxu0 %v1355
      %1421 = vmatprep.subr.bf16.mxu0 %v1358
      %1422 = vmatpush1.bf16.msra.mxu0 %v1357
      %1423 = vmatprep.subr.bf16.mxu0 %v1360
      %1424 = vmatpush1.bf16.msra.mxu0 %v1359
      %1425 = vmatprep.subr.bf16.mxu0 %v1362
      %1426 = vmatpush1.bf16.msra.mxu0 %v1361
      %1427 = vmatprep.subr.bf16.mxu0 %v1364
      %1428 = vmatpush1.bf16.msra.mxu0 %v1363
      %1429 = vmatprep.subr.bf16.mxu0 %v1366
      %1430 = vmatpush1.bf16.msra.mxu0 %v1365
      %1431 = vmatprep.subr.bf16.mxu0 %v1368
      %1432 = vmatpush1.bf16.msra.mxu0 %v1367
      %1433 = vmatprep.subr.bf16.mxu0 %v1370
      %1434 = vmatpush1.bf16.msra.mxu0 %v1369
      %1435 = vmatprep.subr.bf16.mxu0 %v1372
      %1436 = vmatpush1.bf16.msra.mxu0 %v1371
      %1437 = vmatprep.subr.bf16.mxu0 %v1374
      %1438 = vmatpush1.bf16.msra.mxu0 %v1373
      %1439 = vmatprep.subr.bf16.mxu0 %v1376
      %1440 = vmatpush1.bf16.msra.mxu0 %v1375
      %1441 = vmatprep.subr.bf16.mxu0 %v1378
      %1442 = vmatpush1.bf16.msra.mxu0 %v1377
      %1443 = vmatprep.subr.bf16.mxu0 %v1380
      %1444 = vmatpush1.bf16.msra.mxu0 %v1379
      %1445 = vmatprep.subr.bf16.mxu0 %v1382
      %1446 = vmatpush1.bf16.msra.mxu0 %v1381
      %1447 = vmatprep.subr.bf16.mxu0 %v1384
      %1448 = vmatpush1.bf16.msra.mxu0 %v1383
      %1449 = vmatprep.subr.bf16.mxu0 %v1386
      %1450 = vmatpush1.bf16.msra.mxu0 %v1385
      %1451 = vmatprep.mubr.bf16.mxu0 %v1196
      %1452 = vmatmul.mubr.bf16.gmra.mrb[0].mxu0 %v1195
      %v1453 = vpop.f32.mrb[0].mxu0
      %v1454 = vadd.f32 %v941, %v1453
      %v1455 = vpop.f32.mrb[0].mxu0
      %v1456 = vadd.f32 %v943, %v1455
      %v1457 = vpop.f32.mrb[0].mxu0
      %v1458 = vadd.f32 %v945, %v1457
      %v1459 = vpop.f32.mrb[0].mxu0
      %v1460 = vadd.f32 %v947, %v1459
      %1461 = vmatprep.mubr.bf16.mxu0 %v1198
      %1462 = vmatmul.mubr.bf16.gmra.mrb[0].mxu0 %v1197
      %v1463 = vpop.f32.mrb[0].mxu0
      %v1464 = vadd.f32 %v951, %v1463
      %v1465 = vpop.f32.mrb[0].mxu0
      %v1466 = vadd.f32 %v953, %v1465
      %v1467 = vpop.f32.mrb[0].mxu0
      %v1468 = vadd.f32 %v955, %v1467
      %v1469 = vpop.f32.mrb[0].mxu0
      %v1470 = vadd.f32 %v957, %v1469
      %1471 = vmatprep.mubr.bf16.mxu0 %v1200
      %1472 = vmatmul.mubr.bf16.gmra.mrb[0].mxu0 %v1199
      %v1473 = vpop.f32.mrb[0].mxu0
      %v1474 = vadd.f32 %v961, %v1473
      %v1475 = vpop.f32.mrb[0].mxu0
      %v1476 = vadd.f32 %v963, %v1475
      %v1477 = vpop.f32.mrb[0].mxu0
      %v1478 = vadd.f32 %v965, %v1477
      %v1479 = vpop.f32.mrb[0].mxu0
      %v1480 = vadd.f32 %v967, %v1479
      %1481 = vmatprep.mubr.bf16.mxu0 %v1202
      %1482 = vmatmul.mubr.bf16.gmra.mrb[0].mxu0 %v1201
      %v1483 = vpop.f32.mrb[0].mxu0
      %v1484 = vadd.f32 %v971, %v1483
      %v1485 = vpop.f32.mrb[0].mxu0
      %v1486 = vadd.f32 %v973, %v1485
      %v1487 = vpop.f32.mrb[0].mxu0
      %v1488 = vadd.f32 %v975, %v1487
      %v1489 = vpop.f32.mrb[0].mxu0
      %v1490 = vadd.f32 %v977, %v1489
      %1491 = vmatprep.mubr.bf16.mxu0 %v1204
      %1492 = vmatmul.mubr.bf16.gmra.mrb[0].mxu0 %v1203
      %v1493 = vpop.f32.mrb[0].mxu0
      %v1494 = vadd.f32 %v981, %v1493
      %v1495 = vpop.f32.mrb[0].mxu0
      %v1496 = vadd.f32 %v983, %v1495
      %v1497 = vpop.f32.mrb[0].mxu0
      %v1498 = vadd.f32 %v985, %v1497
      %v1499 = vpop.f32.mrb[0].mxu0
      %v1500 = vadd.f32 %v987, %v1499
      %1501 = vmatprep.mubr.bf16.mxu0 %v1206
      %1502 = vmatmul.mubr.bf16.gmra.mrb[0].mxu0 %v1205
      %v1503 = vpop.f32.mrb[0].mxu0
      %v1504 = vadd.f32 %v991, %v1503
      %v1505 = vpop.f32.mrb[0].mxu0
      %v1506 = vadd.f32 %v993, %v1505
      %v1507 = vpop.f32.mrb[0].mxu0
      %v1508 = vadd.f32 %v995, %v1507
      %v1509 = vpop.f32.mrb[0].mxu0
      %v1510 = vadd.f32 %v997, %v1509
      %1511 = vmatprep.mubr.bf16.mxu0 %v1208
      %1512 = vmatmul.mubr.bf16.gmra.mrb[0].mxu0 %v1207
      %v1513 = vpop.f32.mrb[0].mxu0
      %v1514 = vadd.f32 %v1001, %v1513
      %v1515 = vpop.f32.mrb[0].mxu0
      %v1516 = vadd.f32 %v1003, %v1515
      %v1517 = vpop.f32.mrb[0].mxu0
      %v1518 = vadd.f32 %v1005, %v1517
      %v1519 = vpop.f32.mrb[0].mxu0
      %v1520 = vadd.f32 %v1007, %v1519
      %1521 = vmatprep.mubr.bf16.mxu0 %v1210
      %1522 = vmatmul.mubr.bf16.gmra.mrb[0].mxu0 %v1209
      %v1523 = vpop.f32.mrb[0].mxu0
      %v1524 = vadd.f32 %v1011, %v1523
      %v1525 = vpop.f32.mrb[0].mxu0
      %v1526 = vadd.f32 %v1013, %v1525
      %v1527 = vpop.f32.mrb[0].mxu0
      %v1528 = vadd.f32 %v1015, %v1527
      %v1529 = vpop.f32.mrb[0].mxu0
      %v1530 = vadd.f32 %v1017, %v1529
      %1531 = vmatprep.mubr.bf16.mxu0 %v1212
      %1532 = vmatmul.mubr.bf16.gmra.mrb[0].mxu0 %v1211
      %v1533 = vpop.f32.mrb[0].mxu0
      %v1534 = vadd.f32 %v1021, %v1533
      %v1535 = vpop.f32.mrb[0].mxu0
      %v1536 = vadd.f32 %v1023, %v1535
      %v1537 = vpop.f32.mrb[0].mxu0
      %v1538 = vadd.f32 %v1025, %v1537
      %v1539 = vpop.f32.mrb[0].mxu0
      %v1540 = vadd.f32 %v1027, %v1539
      %1541 = vmatprep.mubr.bf16.mxu0 %v1214
      %1542 = vmatmul.mubr.bf16.gmra.mrb[0].mxu0 %v1213
      %v1543 = vpop.f32.mrb[0].mxu0
      %v1544 = vadd.f32 %v1031, %v1543
      %v1545 = vpop.f32.mrb[0].mxu0
      %v1546 = vadd.f32 %v1033, %v1545
      %v1547 = vpop.f32.mrb[0].mxu0
      %v1548 = vadd.f32 %v1035, %v1547
      %v1549 = vpop.f32.mrb[0].mxu0
      %v1550 = vadd.f32 %v1037, %v1549
      %1551 = vmatprep.mubr.bf16.mxu0 %v1216
      %1552 = vmatmul.mubr.bf16.gmra.mrb[0].mxu0 %v1215
      %v1553 = vpop.f32.mrb[0].mxu0
      %v1554 = vadd.f32 %v1041, %v1553
      %v1555 = vpop.f32.mrb[0].mxu0
      %v1556 = vadd.f32 %v1043, %v1555
      %v1557 = vpop.f32.mrb[0].mxu0
      %v1558 = vadd.f32 %v1045, %v1557
      %v1559 = vpop.f32.mrb[0].mxu0
      %v1560 = vadd.f32 %v1047, %v1559
      %1561 = vmatprep.mubr.bf16.mxu0 %v1218
      %1562 = vmatmul.mubr.bf16.gmra.mrb[0].mxu0 %v1217
      %v1563 = vpop.f32.mrb[0].mxu0
      %v1564 = vadd.f32 %v1051, %v1563
      %v1565 = vpop.f32.mrb[0].mxu0
      %v1566 = vadd.f32 %v1053, %v1565
      %v1567 = vpop.f32.mrb[0].mxu0
      %v1568 = vadd.f32 %v1055, %v1567
      %v1569 = vpop.f32.mrb[0].mxu0
      %v1570 = vadd.f32 %v1057, %v1569
      %1571 = vmatprep.mubr.bf16.mxu0 %v1220
      %1572 = vmatmul.mubr.bf16.gmra.mrb[0].mxu0 %v1219
      %v1573 = vpop.f32.mrb[0].mxu0
      %v1574 = vadd.f32 %v1061, %v1573
      %v1575 = vpop.f32.mrb[0].mxu0
      %v1576 = vadd.f32 %v1063, %v1575
      %v1577 = vpop.f32.mrb[0].mxu0
      %v1578 = vadd.f32 %v1065, %v1577
      %v1579 = vpop.f32.mrb[0].mxu0
      %v1580 = vadd.f32 %v1067, %v1579
      %1581 = vmatprep.mubr.bf16.mxu0 %v1222
      %1582 = vmatmul.mubr.bf16.gmra.mrb[0].mxu0 %v1221
      %v1583 = vpop.f32.mrb[0].mxu0
      %v1584 = vadd.f32 %v1071, %v1583
      %v1585 = vpop.f32.mrb[0].mxu0
      %v1586 = vadd.f32 %v1073, %v1585
      %v1587 = vpop.f32.mrb[0].mxu0
      %v1588 = vadd.f32 %v1075, %v1587
      %v1589 = vpop.f32.mrb[0].mxu0
      %v1590 = vadd.f32 %v1077, %v1589
      %1591 = vmatprep.mubr.bf16.mxu0 %v1224
      %1592 = vmatmul.mubr.bf16.gmra.mrb[0].mxu0 %v1223
      %v1593 = vpop.f32.mrb[0].mxu0
      %v1594 = vadd.f32 %v1081, %v1593
      %v1595 = vpop.f32.mrb[0].mxu0
      %v1596 = vadd.f32 %v1083, %v1595
      %v1597 = vpop.f32.mrb[0].mxu0
      %v1598 = vadd.f32 %v1085, %v1597
      %v1599 = vpop.f32.mrb[0].mxu0
      %v1600 = vadd.f32 %v1087, %v1599
      %1601 = vmatprep.mubr.bf16.mxu0 %v1226
      %1602 = vmatmul.mubr.bf16.gmra.mrb[0].mxu0 %v1225
      %v1603 = vpop.f32.mrb[0].mxu0
      %v1604 = vadd.f32 %v1091, %v1603
      %v1605 = vpop.f32.mrb[0].mxu0
      %v1606 = vadd.f32 %v1093, %v1605
      %v1607 = vpop.f32.mrb[0].mxu0
      %v1608 = vadd.f32 %v1095, %v1607
      %v1609 = vpop.f32.mrb[0].mxu0
      %v1610 = vadd.f32 %v1097, %v1609
      %1611 = vdwg.mxu0
      %v1612 = vld [vmem:[%s429] sm:$0xff]
      %v1613 = vld [vmem:[%s429 + $0x8] sm:$0xff]
      %v1614 = vld [vmem:[%s429 + $0x10] sm:$0xff]
      %v1615 = vld [vmem:[%s429 + $0x18] sm:$0xff]
      %v1616 = vld [vmem:[%s429 + $0x20] sm:$0xff]
      %v1617 = vld [vmem:[%s429 + $0x28] sm:$0xff]
      %v1618 = vld [vmem:[%s429 + $0x30] sm:$0xff]
      %v1619 = vld [vmem:[%s429 + $0x38] sm:$0xff]
      %v1620 = vld [vmem:[%s429 + $0x40] sm:$0xff]
      %v1621 = vld [vmem:[%s429 + $0x48] sm:$0xff]
      %v1622 = vld [vmem:[%s429 + $0x50] sm:$0xff]
      %v1623 = vld [vmem:[%s429 + $0x58] sm:$0xff]
      %v1624 = vld [vmem:[%s429 + $0x60] sm:$0xff]
      %v1625 = vld [vmem:[%s429 + $0x68] sm:$0xff]
      %v1626 = vld [vmem:[%s429 + $0x70] sm:$0xff]
      %v1627 = vld [vmem:[%s429 + $0x78] sm:$0xff]
      %v1628 = vld [vmem:[%s429 + $0x80] sm:$0xff]
      %v1629 = vld [vmem:[%s429 + $0x88] sm:$0xff]
      %v1630 = vld [vmem:[%s429 + $0x90] sm:$0xff]
      %v1631 = vld [vmem:[%s429 + $0x98] sm:$0xff]
      %v1632 = vld [vmem:[%s429 + $0xa0] sm:$0xff]
      %v1633 = vld [vmem:[%s429 + $0xa8] sm:$0xff]
      %v1634 = vld [vmem:[%s429 + $0xb0] sm:$0xff]
      %v1635 = vld [vmem:[%s429 + $0xb8] sm:$0xff]
      %v1636 = vld [vmem:[%s429 + $0xc0] sm:$0xff]
      %v1637 = vld [vmem:[%s429 + $0xc8] sm:$0xff]
      %v1638 = vld [vmem:[%s429 + $0xd0] sm:$0xff]
      %v1639 = vld [vmem:[%s429 + $0xd8] sm:$0xff]
      %v1640 = vld [vmem:[%s429 + $0xe0] sm:$0xff]
      %v1641 = vld [vmem:[%s429 + $0xe8] sm:$0xff]
      %v1642 = vld [vmem:[%s429 + $0xf0] sm:$0xff]
      %v1643 = vld [vmem:[%s429 + $0xf8] sm:$0xff]
      %s1644 = scalar_lea.vmem %s4, 512
      %v1645 = vld [vmem:[%s1644] sm:$0xff]
      %v1646 = vld [vmem:[%s1644 + $0x8] sm:$0xff]
      %v1647 = vld [vmem:[%s1644 + $0x10] sm:$0xff]
      %v1648 = vld [vmem:[%s1644 + $0x18] sm:$0xff]
      %v1649 = vld [vmem:[%s1644 + $0x20] sm:$0xff]
      %v1650 = vld [vmem:[%s1644 + $0x28] sm:$0xff]
      %v1651 = vld [vmem:[%s1644 + $0x30] sm:$0xff]
      %v1652 = vld [vmem:[%s1644 + $0x38] sm:$0xff]
      %v1653 = vld [vmem:[%s1644 + $0x40] sm:$0xff]
      %v1654 = vld [vmem:[%s1644 + $0x48] sm:$0xff]
      %v1655 = vld [vmem:[%s1644 + $0x50] sm:$0xff]
      %v1656 = vld [vmem:[%s1644 + $0x58] sm:$0xff]
      %v1657 = vld [vmem:[%s1644 + $0x60] sm:$0xff]
      %v1658 = vld [vmem:[%s1644 + $0x68] sm:$0xff]
      %v1659 = vld [vmem:[%s1644 + $0x70] sm:$0xff]
      %v1660 = vld [vmem:[%s1644 + $0x78] sm:$0xff]
      %v1661 = vld [vmem:[%s1644 + $0x80] sm:$0xff]
      %v1662 = vld [vmem:[%s1644 + $0x88] sm:$0xff]
      %v1663 = vld [vmem:[%s1644 + $0x90] sm:$0xff]
      %v1664 = vld [vmem:[%s1644 + $0x98] sm:$0xff]
      %v1665 = vld [vmem:[%s1644 + $0xa0] sm:$0xff]
      %v1666 = vld [vmem:[%s1644 + $0xa8] sm:$0xff]
      %v1667 = vld [vmem:[%s1644 + $0xb0] sm:$0xff]
      %v1668 = vld [vmem:[%s1644 + $0xb8] sm:$0xff]
      %v1669 = vld [vmem:[%s1644 + $0xc0] sm:$0xff]
      %v1670 = vld [vmem:[%s1644 + $0xc8] sm:$0xff]
      %v1671 = vld [vmem:[%s1644 + $0xd0] sm:$0xff]
      %v1672 = vld [vmem:[%s1644 + $0xd8] sm:$0xff]
      %v1673 = vld [vmem:[%s1644 + $0xe0] sm:$0xff]
      %v1674 = vld [vmem:[%s1644 + $0xe8] sm:$0xff]
      %v1675 = vld [vmem:[%s1644 + $0xf0] sm:$0xff]
      %v1676 = vld [vmem:[%s1644 + $0xf8] sm:$0xff]
      %v1709 = vunpack.c.l.b16 %v1612
      %v1710 = vunpack.c.h.b16 %v1612
      %v1711 = vunpack.c.l.b16 %v1613
      %v1712 = vunpack.c.h.b16 %v1613
      %v1713 = vunpack.c.l.b16 %v1614
      %v1714 = vunpack.c.h.b16 %v1614
      %v1715 = vunpack.c.l.b16 %v1615
      %v1716 = vunpack.c.h.b16 %v1615
      %v1717 = vunpack.c.l.b16 %v1616
      %v1718 = vunpack.c.h.b16 %v1616
      %v1719 = vunpack.c.l.b16 %v1617
      %v1720 = vunpack.c.h.b16 %v1617
      %v1721 = vunpack.c.l.b16 %v1618
      %v1722 = vunpack.c.h.b16 %v1618
      %v1723 = vunpack.c.l.b16 %v1619
      %v1724 = vunpack.c.h.b16 %v1619
      %v1725 = vunpack.c.l.b16 %v1620
      %v1726 = vunpack.c.h.b16 %v1620
      %v1727 = vunpack.c.l.b16 %v1621
      %v1728 = vunpack.c.h.b16 %v1621
      %v1729 = vunpack.c.l.b16 %v1622
      %v1730 = vunpack.c.h.b16 %v1622
      %v1731 = vunpack.c.l.b16 %v1623
      %v1732 = vunpack.c.h.b16 %v1623
      %v1733 = vunpack.c.l.b16 %v1624
      %v1734 = vunpack.c.h.b16 %v1624
      %v1735 = vunpack.c.l.b16 %v1625
      %v1736 = vunpack.c.h.b16 %v1625
      %v1737 = vunpack.c.l.b16 %v1626
      %v1738 = vunpack.c.h.b16 %v1626
      %v1739 = vunpack.c.l.b16 %v1627
      %v1740 = vunpack.c.h.b16 %v1627
      %v1741 = vunpack.c.l.b16 %v1628
      %v1742 = vunpack.c.h.b16 %v1628
      %v1743 = vunpack.c.l.b16 %v1629
      %v1744 = vunpack.c.h.b16 %v1629
      %v1745 = vunpack.c.l.b16 %v1630
      %v1746 = vunpack.c.h.b16 %v1630
      %v1747 = vunpack.c.l.b16 %v1631
      %v1748 = vunpack.c.h.b16 %v1631
      %v1749 = vunpack.c.l.b16 %v1632
      %v1750 = vunpack.c.h.b16 %v1632
      %v1751 = vunpack.c.l.b16 %v1633
      %v1752 = vunpack.c.h.b16 %v1633
      %v1753 = vunpack.c.l.b16 %v1634
      %v1754 = vunpack.c.h.b16 %v1634
      %v1755 = vunpack.c.l.b16 %v1635
      %v1756 = vunpack.c.h.b16 %v1635
      %v1757 = vunpack.c.l.b16 %v1636
      %v1758 = vunpack.c.h.b16 %v1636
      %v1759 = vunpack.c.l.b16 %v1637
      %v1760 = vunpack.c.h.b16 %v1637
      %v1761 = vunpack.c.l.b16 %v1638
      %v1762 = vunpack.c.h.b16 %v1638
      %v1763 = vunpack.c.l.b16 %v1639
      %v1764 = vunpack.c.h.b16 %v1639
      %v1765 = vunpack.c.l.b16 %v1640
      %v1766 = vunpack.c.h.b16 %v1640
      %v1767 = vunpack.c.l.b16 %v1641
      %v1768 = vunpack.c.h.b16 %v1641
      %v1769 = vunpack.c.l.b16 %v1642
      %v1770 = vunpack.c.h.b16 %v1642
      %v1771 = vunpack.c.l.b16 %v1643
      %v1772 = vunpack.c.h.b16 %v1643
      %v1773 = vpack.c.b16 %v1711, %v1709
      %v1774 = vpack.c.b16 %v1712, %v1710
      %v1775 = vpack.c.b16 %v1715, %v1713
      %v1776 = vpack.c.b16 %v1716, %v1714
      %v1777 = vpack.c.b16 %v1719, %v1717
      %v1778 = vpack.c.b16 %v1720, %v1718
      %v1779 = vpack.c.b16 %v1723, %v1721
      %v1780 = vpack.c.b16 %v1724, %v1722
      %v1781 = vpack.c.b16 %v1727, %v1725
      %v1782 = vpack.c.b16 %v1728, %v1726
      %v1783 = vpack.c.b16 %v1731, %v1729
      %v1784 = vpack.c.b16 %v1732, %v1730
      %v1785 = vpack.c.b16 %v1735, %v1733
      %v1786 = vpack.c.b16 %v1736, %v1734
      %v1787 = vpack.c.b16 %v1739, %v1737
      %v1788 = vpack.c.b16 %v1740, %v1738
      %v1789 = vpack.c.b16 %v1743, %v1741
      %v1790 = vpack.c.b16 %v1744, %v1742
      %v1791 = vpack.c.b16 %v1747, %v1745
      %v1792 = vpack.c.b16 %v1748, %v1746
      %v1793 = vpack.c.b16 %v1751, %v1749
      %v1794 = vpack.c.b16 %v1752, %v1750
      %v1795 = vpack.c.b16 %v1755, %v1753
      %v1796 = vpack.c.b16 %v1756, %v1754
      %v1797 = vpack.c.b16 %v1759, %v1757
      %v1798 = vpack.c.b16 %v1760, %v1758
      %v1799 = vpack.c.b16 %v1763, %v1761
      %v1800 = vpack.c.b16 %v1764, %v1762
      %v1801 = vpack.c.b16 %v1767, %v1765
      %v1802 = vpack.c.b16 %v1768, %v1766
      %v1803 = vpack.c.b16 %v1771, %v1769
      %v1804 = vpack.c.b16 %v1772, %v1770
      %v1869 = vunpack.c.l.b16 %v1645
      %v1870 = vunpack.c.h.b16 %v1645
      %v1871 = vunpack.c.l.b16 %v1646
      %v1872 = vunpack.c.h.b16 %v1646
      %v1873 = vunpack.c.l.b16 %v1647
      %v1874 = vunpack.c.h.b16 %v1647
      %v1875 = vunpack.c.l.b16 %v1648
      %v1876 = vunpack.c.h.b16 %v1648
      %v1877 = vunpack.c.l.b16 %v1649
      %v1878 = vunpack.c.h.b16 %v1649
      %v1879 = vunpack.c.l.b16 %v1650
      %v1880 = vunpack.c.h.b16 %v1650
      %v1881 = vunpack.c.l.b16 %v1651
      %v1882 = vunpack.c.h.b16 %v1651
      %v1883 = vunpack.c.l.b16 %v1652
      %v1884 = vunpack.c.h.b16 %v1652
      %v1885 = vunpack.c.l.b16 %v1653
      %v1886 = vunpack.c.h.b16 %v1653
      %v1887 = vunpack.c.l.b16 %v1654
      %v1888 = vunpack.c.h.b16 %v1654
      %v1889 = vunpack.c.l.b16 %v1655
      %v1890 = vunpack.c.h.b16 %v1655
      %v1891 = vunpack.c.l.b16 %v1656
      %v1892 = vunpack.c.h.b16 %v1656
      %v1893 = vunpack.c.l.b16 %v1657
      %v1894 = vunpack.c.h.b16 %v1657
      %v1895 = vunpack.c.l.b16 %v1658
      %v1896 = vunpack.c.h.b16 %v1658
      %v1897 = vunpack.c.l.b16 %v1659
      %v1898 = vunpack.c.h.b16 %v1659
      %v1899 = vunpack.c.l.b16 %v1660
      %v1900 = vunpack.c.h.b16 %v1660
      %v1901 = vunpack.c.l.b16 %v1661
      %v1902 = vunpack.c.h.b16 %v1661
      %v1903 = vunpack.c.l.b16 %v1662
      %v1904 = vunpack.c.h.b16 %v1662
      %v1905 = vunpack.c.l.b16 %v1663
      %v1906 = vunpack.c.h.b16 %v1663
      %v1907 = vunpack.c.l.b16 %v1664
      %v1908 = vunpack.c.h.b16 %v1664
      %v1909 = vunpack.c.l.b16 %v1665
      %v1910 = vunpack.c.h.b16 %v1665
      %v1911 = vunpack.c.l.b16 %v1666
      %v1912 = vunpack.c.h.b16 %v1666
      %v1913 = vunpack.c.l.b16 %v1667
      %v1914 = vunpack.c.h.b16 %v1667
      %v1915 = vunpack.c.l.b16 %v1668
      %v1916 = vunpack.c.h.b16 %v1668
      %v1917 = vunpack.c.l.b16 %v1669
      %v1918 = vunpack.c.h.b16 %v1669
      %v1919 = vunpack.c.l.b16 %v1670
      %v1920 = vunpack.c.h.b16 %v1670
      %v1921 = vunpack.c.l.b16 %v1671
      %v1922 = vunpack.c.h.b16 %v1671
      %v1923 = vunpack.c.l.b16 %v1672
      %v1924 = vunpack.c.h.b16 %v1672
      %v1925 = vunpack.c.l.b16 %v1673
      %v1926 = vunpack.c.h.b16 %v1673
      %v1927 = vunpack.c.l.b16 %v1674
      %v1928 = vunpack.c.h.b16 %v1674
      %v1929 = vunpack.c.l.b16 %v1675
      %v1930 = vunpack.c.h.b16 %v1675
      %v1931 = vunpack.c.l.b16 %v1676
      %v1932 = vunpack.c.h.b16 %v1676
      %v1933 = vpack.c.b16 %v1871, %v1869
      %v1934 = vpack.c.b16 %v1872, %v1870
      %v1935 = vpack.c.b16 %v1875, %v1873
      %v1936 = vpack.c.b16 %v1876, %v1874
      %v1937 = vpack.c.b16 %v1879, %v1877
      %v1938 = vpack.c.b16 %v1880, %v1878
      %v1939 = vpack.c.b16 %v1883, %v1881
      %v1940 = vpack.c.b16 %v1884, %v1882
      %v1941 = vpack.c.b16 %v1887, %v1885
      %v1942 = vpack.c.b16 %v1888, %v1886
      %v1943 = vpack.c.b16 %v1891, %v1889
      %v1944 = vpack.c.b16 %v1892, %v1890
      %v1945 = vpack.c.b16 %v1895, %v1893
      %v1946 = vpack.c.b16 %v1896, %v1894
      %v1947 = vpack.c.b16 %v1899, %v1897
      %v1948 = vpack.c.b16 %v1900, %v1898
      %v1949 = vpack.c.b16 %v1903, %v1901
      %v1950 = vpack.c.b16 %v1904, %v1902
      %v1951 = vpack.c.b16 %v1907, %v1905
      %v1952 = vpack.c.b16 %v1908, %v1906
      %v1953 = vpack.c.b16 %v1911, %v1909
      %v1954 = vpack.c.b16 %v1912, %v1910
      %v1955 = vpack.c.b16 %v1915, %v1913
      %v1956 = vpack.c.b16 %v1916, %v1914
      %v1957 = vpack.c.b16 %v1919, %v1917
      %v1958 = vpack.c.b16 %v1920, %v1918
      %v1959 = vpack.c.b16 %v1923, %v1921
      %v1960 = vpack.c.b16 %v1924, %v1922
      %v1961 = vpack.c.b16 %v1927, %v1925
      %v1962 = vpack.c.b16 %v1928, %v1926
      %v1963 = vpack.c.b16 %v1931, %v1929
      %v1964 = vpack.c.b16 %v1932, %v1930
      %1997 = vmatprep.subr.bf16.mxu0 %v1934
      %1998 = vmatpush1.bf16.msra.mxu0 %v1933
      %1999 = vmatprep.subr.bf16.mxu0 %v1936
      %2000 = vmatpush1.bf16.msra.mxu0 %v1935
      %2001 = vmatprep.subr.bf16.mxu0 %v1938
      %2002 = vmatpush1.bf16.msra.mxu0 %v1937
      %2003 = vmatprep.subr.bf16.mxu0 %v1940
      %2004 = vmatpush1.bf16.msra.mxu0 %v1939
      %2005 = vmatprep.subr.bf16.mxu0 %v1942
      %2006 = vmatpush1.bf16.msra.mxu0 %v1941
      %2007 = vmatprep.subr.bf16.mxu0 %v1944
      %2008 = vmatpush1.bf16.msra.mxu0 %v1943
      %2009 = vmatprep.subr.bf16.mxu0 %v1946
      %2010 = vmatpush1.bf16.msra.mxu0 %v1945
      %2011 = vmatprep.subr.bf16.mxu0 %v1948
      %2012 = vmatpush1.bf16.msra.mxu0 %v1947
      %2013 = vmatprep.subr.bf16.mxu0 %v1950
      %2014 = vmatpush1.bf16.msra.mxu0 %v1949
      %2015 = vmatprep.subr.bf16.mxu0 %v1952
      %2016 = vmatpush1.bf16.msra.mxu0 %v1951
      %2017 = vmatprep.subr.bf16.mxu0 %v1954
      %2018 = vmatpush1.bf16.msra.mxu0 %v1953
      %2019 = vmatprep.subr.bf16.mxu0 %v1956
      %2020 = vmatpush1.bf16.msra.mxu0 %v1955
      %2021 = vmatprep.subr.bf16.mxu0 %v1958
      %2022 = vmatpush1.bf16.msra.mxu0 %v1957
      %2023 = vmatprep.subr.bf16.mxu0 %v1960
      %2024 = vmatpush1.bf16.msra.mxu0 %v1959
      %2025 = vmatprep.subr.bf16.mxu0 %v1962
      %2026 = vmatpush1.bf16.msra.mxu0 %v1961
      %2027 = vmatprep.subr.bf16.mxu0 %v1964
      %2028 = vmatpush1.bf16.msra.mxu0 %v1963
      %2029 = vmatprep.mubr.bf16.mxu0 %v1774
      %2030 = vmatmul.mubr.bf16.gmra.mrb[0].mxu0 %v1773
      %v2031 = vpop.f32.mrb[0].mxu0
      %v2032 = vadd.f32 0.0, %v2031
      %v2033 = vpop.f32.mrb[0].mxu0
      %v2034 = vadd.f32 0.0, %v2033
      %v2035 = vpop.f32.mrb[0].mxu0
      %v2036 = vadd.f32 0.0, %v2035
      %v2037 = vpop.f32.mrb[0].mxu0
      %v2038 = vadd.f32 0.0, %v2037
      %2039 = vmatprep.mubr.bf16.mxu0 %v1776
      %2040 = vmatmul.mubr.bf16.gmra.mrb[0].mxu0 %v1775
      %v2041 = vpop.f32.mrb[0].mxu0
      %v2042 = vadd.f32 0.0, %v2041
      %v2043 = vpop.f32.mrb[0].mxu0
      %v2044 = vadd.f32 0.0, %v2043
      %v2045 = vpop.f32.mrb[0].mxu0
      %v2046 = vadd.f32 0.0, %v2045
      %v2047 = vpop.f32.mrb[0].mxu0
      %v2048 = vadd.f32 0.0, %v2047
      %2049 = vmatprep.mubr.bf16.mxu0 %v1778
      %2050 = vmatmul.mubr.bf16.gmra.mrb[0].mxu0 %v1777
      %v2051 = vpop.f32.mrb[0].mxu0
      %v2052 = vadd.f32 0.0, %v2051
      %v2053 = vpop.f32.mrb[0].mxu0
      %v2054 = vadd.f32 0.0, %v2053
      %v2055 = vpop.f32.mrb[0].mxu0
      %v2056 = vadd.f32 0.0, %v2055
      %v2057 = vpop.f32.mrb[0].mxu0
      %v2058 = vadd.f32 0.0, %v2057
      %2059 = vmatprep.mubr.bf16.mxu0 %v1780
      %2060 = vmatmul.mubr.bf16.gmra.mrb[0].mxu0 %v1779
      %v2061 = vpop.f32.mrb[0].mxu0
      %v2062 = vadd.f32 0.0, %v2061
      %v2063 = vpop.f32.mrb[0].mxu0
      %v2064 = vadd.f32 0.0, %v2063
      %v2065 = vpop.f32.mrb[0].mxu0
      %v2066 = vadd.f32 0.0, %v2065
      %v2067 = vpop.f32.mrb[0].mxu0
      %v2068 = vadd.f32 0.0, %v2067
      %2069 = vmatprep.mubr.bf16.mxu0 %v1782
      %2070 = vmatmul.mubr.bf16.gmra.mrb[0].mxu0 %v1781
      %v2071 = vpop.f32.mrb[0].mxu0
      %v2072 = vadd.f32 0.0, %v2071
      %v2073 = vpop.f32.mrb[0].mxu0
      %v2074 = vadd.f32 0.0, %v2073
      %v2075 = vpop.f32.mrb[0].mxu0
      %v2076 = vadd.f32 0.0, %v2075
      %v2077 = vpop.f32.mrb[0].mxu0
      %v2078 = vadd.f32 0.0, %v2077
      %2079 = vmatprep.mubr.bf16.mxu0 %v1784
      %2080 = vmatmul.mubr.bf16.gmra.mrb[0].mxu0 %v1783
      %v2081 = vpop.f32.mrb[0].mxu0
      %v2082 = vadd.f32 0.0, %v2081
      %v2083 = vpop.f32.mrb[0].mxu0
      %v2084 = vadd.f32 0.0, %v2083
      %v2085 = vpop.f32.mrb[0].mxu0
      %v2086 = vadd.f32 0.0, %v2085
      %v2087 = vpop.f32.mrb[0].mxu0
      %v2088 = vadd.f32 0.0, %v2087
      %2089 = vmatprep.mubr.bf16.mxu0 %v1786
      %2090 = vmatmul.mubr.bf16.gmra.mrb[0].mxu0 %v1785
      %v2091 = vpop.f32.mrb[0].mxu0
      %v2092 = vadd.f32 0.0, %v2091
      %v2093 = vpop.f32.mrb[0].mxu0
      %v2094 = vadd.f32 0.0, %v2093
      %v2095 = vpop.f32.mrb[0].mxu0
      %v2096 = vadd.f32 0.0, %v2095
      %v2097 = vpop.f32.mrb[0].mxu0
      %v2098 = vadd.f32 0.0, %v2097
      %2099 = vmatprep.mubr.bf16.mxu0 %v1788
      %2100 = vmatmul.mubr.bf16.gmra.mrb[0].mxu0 %v1787
      %v2101 = vpop.f32.mrb[0].mxu0
      %v2102 = vadd.f32 0.0, %v2101
      %v2103 = vpop.f32.mrb[0].mxu0
      %v2104 = vadd.f32 0.0, %v2103
      %v2105 = vpop.f32.mrb[0].mxu0
      %v2106 = vadd.f32 0.0, %v2105
      %v2107 = vpop.f32.mrb[0].mxu0
      %v2108 = vadd.f32 0.0, %v2107
      %2109 = vmatprep.mubr.bf16.mxu0 %v1790
      %2110 = vmatmul.mubr.bf16.gmra.mrb[0].mxu0 %v1789
      %v2111 = vpop.f32.mrb[0].mxu0
      %v2112 = vadd.f32 0.0, %v2111
      %v2113 = vpop.f32.mrb[0].mxu0
      %v2114 = vadd.f32 0.0, %v2113
      %v2115 = vpop.f32.mrb[0].mxu0
      %v2116 = vadd.f32 0.0, %v2115
      %v2117 = vpop.f32.mrb[0].mxu0
      %v2118 = vadd.f32 0.0, %v2117
      %2119 = vmatprep.mubr.bf16.mxu0 %v1792
      %2120 = vmatmul.mubr.bf16.gmra.mrb[0].mxu0 %v1791
      %v2121 = vpop.f32.mrb[0].mxu0
      %v2122 = vadd.f32 0.0, %v2121
      %v2123 = vpop.f32.mrb[0].mxu0
      %v2124 = vadd.f32 0.0, %v2123
      %v2125 = vpop.f32.mrb[0].mxu0
      %v2126 = vadd.f32 0.0, %v2125
      %v2127 = vpop.f32.mrb[0].mxu0
      %v2128 = vadd.f32 0.0, %v2127
      %2129 = vmatprep.mubr.bf16.mxu0 %v1794
      %2130 = vmatmul.mubr.bf16.gmra.mrb[0].mxu0 %v1793
      %v2131 = vpop.f32.mrb[0].mxu0
      %v2132 = vadd.f32 0.0, %v2131
      %v2133 = vpop.f32.mrb[0].mxu0
      %v2134 = vadd.f32 0.0, %v2133
      %v2135 = vpop.f32.mrb[0].mxu0
      %v2136 = vadd.f32 0.0, %v2135
      %v2137 = vpop.f32.mrb[0].mxu0
      %v2138 = vadd.f32 0.0, %v2137
      %2139 = vmatprep.mubr.bf16.mxu0 %v1796
      %2140 = vmatmul.mubr.bf16.gmra.mrb[0].mxu0 %v1795
      %v2141 = vpop.f32.mrb[0].mxu0
      %v2142 = vadd.f32 0.0, %v2141
      %v2143 = vpop.f32.mrb[0].mxu0
      %v2144 = vadd.f32 0.0, %v2143
      %v2145 = vpop.f32.mrb[0].mxu0
      %v2146 = vadd.f32 0.0, %v2145
      %v2147 = vpop.f32.mrb[0].mxu0
      %v2148 = vadd.f32 0.0, %v2147
      %2149 = vmatprep.mubr.bf16.mxu0 %v1798
      %2150 = vmatmul.mubr.bf16.gmra.mrb[0].mxu0 %v1797
      %v2151 = vpop.f32.mrb[0].mxu0
      %v2152 = vadd.f32 0.0, %v2151
      %v2153 = vpop.f32.mrb[0].mxu0
      %v2154 = vadd.f32 0.0, %v2153
      %v2155 = vpop.f32.mrb[0].mxu0
      %v2156 = vadd.f32 0.0, %v2155
      %v2157 = vpop.f32.mrb[0].mxu0
      %v2158 = vadd.f32 0.0, %v2157
      %2159 = vmatprep.mubr.bf16.mxu0 %v1800
      %2160 = vmatmul.mubr.bf16.gmra.mrb[0].mxu0 %v1799
      %v2161 = vpop.f32.mrb[0].mxu0
      %v2162 = vadd.f32 0.0, %v2161
      %v2163 = vpop.f32.mrb[0].mxu0
      %v2164 = vadd.f32 0.0, %v2163
      %v2165 = vpop.f32.mrb[0].mxu0
      %v2166 = vadd.f32 0.0, %v2165
      %v2167 = vpop.f32.mrb[0].mxu0
      %v2168 = vadd.f32 0.0, %v2167
      %2169 = vmatprep.mubr.bf16.mxu0 %v1802
      %2170 = vmatmul.mubr.bf16.gmra.mrb[0].mxu0 %v1801
      %v2171 = vpop.f32.mrb[0].mxu0
      %v2172 = vadd.f32 0.0, %v2171
      %v2173 = vpop.f32.mrb[0].mxu0
      %v2174 = vadd.f32 0.0, %v2173
      %v2175 = vpop.f32.mrb[0].mxu0
      %v2176 = vadd.f32 0.0, %v2175
      %v2177 = vpop.f32.mrb[0].mxu0
      %v2178 = vadd.f32 0.0, %v2177
      %2179 = vmatprep.mubr.bf16.mxu0 %v1804
      %2180 = vmatmul.mubr.bf16.gmra.mrb[0].mxu0 %v1803
      %v2181 = vpop.f32.mrb[0].mxu0
      %v2182 = vadd.f32 0.0, %v2181
      %v2183 = vpop.f32.mrb[0].mxu0
      %v2184 = vadd.f32 0.0, %v2183
      %v2185 = vpop.f32.mrb[0].mxu0
      %v2186 = vadd.f32 0.0, %v2185
      %v2187 = vpop.f32.mrb[0].mxu0
      %v2188 = vadd.f32 0.0, %v2187
      %2189 = vdwg.mxu0
      %v2190 = vadd.f32 %v1454, %v2032
      %v2191 = vadd.f32 %v1456, %v2034
      %v2192 = vadd.f32 %v1458, %v2036
      %v2193 = vadd.f32 %v1460, %v2038
      %v2194 = vadd.f32 %v1464, %v2042
      %v2195 = vadd.f32 %v1466, %v2044
      %v2196 = vadd.f32 %v1468, %v2046
      %v2197 = vadd.f32 %v1470, %v2048
      %v2198 = vadd.f32 %v1474, %v2052
      %v2199 = vadd.f32 %v1476, %v2054
      %v2200 = vadd.f32 %v1478, %v2056
      %v2201 = vadd.f32 %v1480, %v2058
      %v2202 = vadd.f32 %v1484, %v2062
      %v2203 = vadd.f32 %v1486, %v2064
      %v2204 = vadd.f32 %v1488, %v2066
      %v2205 = vadd.f32 %v1490, %v2068
      %v2206 = vadd.f32 %v1494, %v2072
      %v2207 = vadd.f32 %v1496, %v2074
      %v2208 = vadd.f32 %v1498, %v2076
      %v2209 = vadd.f32 %v1500, %v2078
      %v2210 = vadd.f32 %v1504, %v2082
      %v2211 = vadd.f32 %v1506, %v2084
      %v2212 = vadd.f32 %v1508, %v2086
      %v2213 = vadd.f32 %v1510, %v2088
      %v2214 = vadd.f32 %v1514, %v2092
      %v2215 = vadd.f32 %v1516, %v2094
      %v2216 = vadd.f32 %v1518, %v2096
      %v2217 = vadd.f32 %v1520, %v2098
      %v2218 = vadd.f32 %v1524, %v2102
      %v2219 = vadd.f32 %v1526, %v2104
      %v2220 = vadd.f32 %v1528, %v2106
      %v2221 = vadd.f32 %v1530, %v2108
      %v2222 = vadd.f32 %v1534, %v2112
      %v2223 = vadd.f32 %v1536, %v2114
      %v2224 = vadd.f32 %v1538, %v2116
      %v2225 = vadd.f32 %v1540, %v2118
      %v2226 = vadd.f32 %v1544, %v2122
      %v2227 = vadd.f32 %v1546, %v2124
      %v2228 = vadd.f32 %v1548, %v2126
      %v2229 = vadd.f32 %v1550, %v2128
      %v2230 = vadd.f32 %v1554, %v2132
      %v2231 = vadd.f32 %v1556, %v2134
      %v2232 = vadd.f32 %v1558, %v2136
      %v2233 = vadd.f32 %v1560, %v2138
      %v2234 = vadd.f32 %v1564, %v2142
      %v2235 = vadd.f32 %v1566, %v2144
      %v2236 = vadd.f32 %v1568, %v2146
      %v2237 = vadd.f32 %v1570, %v2148
      %v2238 = vadd.f32 %v1574, %v2152
      %v2239 = vadd.f32 %v1576, %v2154
      %v2240 = vadd.f32 %v1578, %v2156
      %v2241 = vadd.f32 %v1580, %v2158
      %v2242 = vadd.f32 %v1584, %v2162
      %v2243 = vadd.f32 %v1586, %v2164
      %v2244 = vadd.f32 %v1588, %v2166
      %v2245 = vadd.f32 %v1590, %v2168
      %v2246 = vadd.f32 %v1594, %v2172
      %v2247 = vadd.f32 %v1596, %v2174
      %v2248 = vadd.f32 %v1598, %v2176
      %v2249 = vadd.f32 %v1600, %v2178
      %v2250 = vadd.f32 %v1604, %v2182
      %v2251 = vadd.f32 %v1606, %v2184
      %v2252 = vadd.f32 %v1608, %v2186
      %v2253 = vadd.f32 %v1610, %v2188
      %v2254 = vld [vmem:[%s440] sm:$0xff]
      %v2255 = vld [vmem:[%s440 + $0x8] sm:$0xff]
      %v2256 = vld [vmem:[%s440 + $0x10] sm:$0xff]
      %v2257 = vld [vmem:[%s440 + $0x18] sm:$0xff]
      %v2258 = vld [vmem:[%s440 + $0x20] sm:$0xff]
      %v2259 = vld [vmem:[%s440 + $0x28] sm:$0xff]
      %v2260 = vld [vmem:[%s440 + $0x30] sm:$0xff]
      %v2261 = vld [vmem:[%s440 + $0x38] sm:$0xff]
      %v2262 = vld [vmem:[%s440 + $0x40] sm:$0xff]
      %v2263 = vld [vmem:[%s440 + $0x48] sm:$0xff]
      %v2264 = vld [vmem:[%s440 + $0x50] sm:$0xff]
      %v2265 = vld [vmem:[%s440 + $0x58] sm:$0xff]
      %v2266 = vld [vmem:[%s440 + $0x60] sm:$0xff]
      %v2267 = vld [vmem:[%s440 + $0x68] sm:$0xff]
      %v2268 = vld [vmem:[%s440 + $0x70] sm:$0xff]
      %v2269 = vld [vmem:[%s440 + $0x78] sm:$0xff]
      %v2270 = vld [vmem:[%s440 + $0x80] sm:$0xff]
      %v2271 = vld [vmem:[%s440 + $0x88] sm:$0xff]
      %v2272 = vld [vmem:[%s440 + $0x90] sm:$0xff]
      %v2273 = vld [vmem:[%s440 + $0x98] sm:$0xff]
      %v2274 = vld [vmem:[%s440 + $0xa0] sm:$0xff]
      %v2275 = vld [vmem:[%s440 + $0xa8] sm:$0xff]
      %v2276 = vld [vmem:[%s440 + $0xb0] sm:$0xff]
      %v2277 = vld [vmem:[%s440 + $0xb8] sm:$0xff]
      %v2278 = vld [vmem:[%s440 + $0xc0] sm:$0xff]
      %v2279 = vld [vmem:[%s440 + $0xc8] sm:$0xff]
      %v2280 = vld [vmem:[%s440 + $0xd0] sm:$0xff]
      %v2281 = vld [vmem:[%s440 + $0xd8] sm:$0xff]
      %v2282 = vld [vmem:[%s440 + $0xe0] sm:$0xff]
      %v2283 = vld [vmem:[%s440 + $0xe8] sm:$0xff]
      %v2284 = vld [vmem:[%s440 + $0xf0] sm:$0xff]
      %v2285 = vld [vmem:[%s440 + $0xf8] sm:$0xff]
      %s2286 = scalar_lea.vmem %s4, 768
      %v2287 = vld [vmem:[%s2286] sm:$0xff]
      %v2288 = vld [vmem:[%s2286 + $0x8] sm:$0xff]
      %v2289 = vld [vmem:[%s2286 + $0x10] sm:$0xff]
      %v2290 = vld [vmem:[%s2286 + $0x18] sm:$0xff]
      %v2291 = vld [vmem:[%s2286 + $0x20] sm:$0xff]
      %v2292 = vld [vmem:[%s2286 + $0x28] sm:$0xff]
      %v2293 = vld [vmem:[%s2286 + $0x30] sm:$0xff]
      %v2294 = vld [vmem:[%s2286 + $0x38] sm:$0xff]
      %v2295 = vld [vmem:[%s2286 + $0x40] sm:$0xff]
      %v2296 = vld [vmem:[%s2286 + $0x48] sm:$0xff]
      %v2297 = vld [vmem:[%s2286 + $0x50] sm:$0xff]
      %v2298 = vld [vmem:[%s2286 + $0x58] sm:$0xff]
      %v2299 = vld [vmem:[%s2286 + $0x60] sm:$0xff]
      %v2300 = vld [vmem:[%s2286 + $0x68] sm:$0xff]
      %v2301 = vld [vmem:[%s2286 + $0x70] sm:$0xff]
      %v2302 = vld [vmem:[%s2286 + $0x78] sm:$0xff]
      %v2303 = vld [vmem:[%s2286 + $0x80] sm:$0xff]
      %v2304 = vld [vmem:[%s2286 + $0x88] sm:$0xff]
      %v2305 = vld [vmem:[%s2286 + $0x90] sm:$0xff]
      %v2306 = vld [vmem:[%s2286 + $0x98] sm:$0xff]
      %v2307 = vld [vmem:[%s2286 + $0xa0] sm:$0xff]
      %v2308 = vld [vmem:[%s2286 + $0xa8] sm:$0xff]
      %v2309 = vld [vmem:[%s2286 + $0xb0] sm:$0xff]
      %v2310 = vld [vmem:[%s2286 + $0xb8] sm:$0xff]
      %v2311 = vld [vmem:[%s2286 + $0xc0] sm:$0xff]
      %v2312 = vld [vmem:[%s2286 + $0xc8] sm:$0xff]
      %v2313 = vld [vmem:[%s2286 + $0xd0] sm:$0xff]
      %v2314 = vld [vmem:[%s2286 + $0xd8] sm:$0xff]
      %v2315 = vld [vmem:[%s2286 + $0xe0] sm:$0xff]
      %v2316 = vld [vmem:[%s2286 + $0xe8] sm:$0xff]
      %v2317 = vld [vmem:[%s2286 + $0xf0] sm:$0xff]
      %v2318 = vld [vmem:[%s2286 + $0xf8] sm:$0xff]
      %v2351 = vunpack.c.l.b16 %v2254
      %v2352 = vunpack.c.h.b16 %v2254
      %v2353 = vunpack.c.l.b16 %v2255
      %v2354 = vunpack.c.h.b16 %v2255
      %v2355 = vunpack.c.l.b16 %v2256
      %v2356 = vunpack.c.h.b16 %v2256
      %v2357 = vunpack.c.l.b16 %v2257
      %v2358 = vunpack.c.h.b16 %v2257
      %v2359 = vunpack.c.l.b16 %v2258
      %v2360 = vunpack.c.h.b16 %v2258
      %v2361 = vunpack.c.l.b16 %v2259
      %v2362 = vunpack.c.h.b16 %v2259
      %v2363 = vunpack.c.l.b16 %v2260
      %v2364 = vunpack.c.h.b16 %v2260
      %v2365 = vunpack.c.l.b16 %v2261
      %v2366 = vunpack.c.h.b16 %v2261
      %v2367 = vunpack.c.l.b16 %v2262
      %v2368 = vunpack.c.h.b16 %v2262
      %v2369 = vunpack.c.l.b16 %v2263
      %v2370 = vunpack.c.h.b16 %v2263
      %v2371 = vunpack.c.l.b16 %v2264
      %v2372 = vunpack.c.h.b16 %v2264
      %v2373 = vunpack.c.l.b16 %v2265
      %v2374 = vunpack.c.h.b16 %v2265
      %v2375 = vunpack.c.l.b16 %v2266
      %v2376 = vunpack.c.h.b16 %v2266
      %v2377 = vunpack.c.l.b16 %v2267
      %v2378 = vunpack.c.h.b16 %v2267
      %v2379 = vunpack.c.l.b16 %v2268
      %v2380 = vunpack.c.h.b16 %v2268
      %v2381 = vunpack.c.l.b16 %v2269
      %v2382 = vunpack.c.h.b16 %v2269
      %v2383 = vunpack.c.l.b16 %v2270
      %v2384 = vunpack.c.h.b16 %v2270
      %v2385 = vunpack.c.l.b16 %v2271
      %v2386 = vunpack.c.h.b16 %v2271
      %v2387 = vunpack.c.l.b16 %v2272
      %v2388 = vunpack.c.h.b16 %v2272
      %v2389 = vunpack.c.l.b16 %v2273
      %v2390 = vunpack.c.h.b16 %v2273
      %v2391 = vunpack.c.l.b16 %v2274
      %v2392 = vunpack.c.h.b16 %v2274
      %v2393 = vunpack.c.l.b16 %v2275
      %v2394 = vunpack.c.h.b16 %v2275
      %v2395 = vunpack.c.l.b16 %v2276
      %v2396 = vunpack.c.h.b16 %v2276
      %v2397 = vunpack.c.l.b16 %v2277
      %v2398 = vunpack.c.h.b16 %v2277
      %v2399 = vunpack.c.l.b16 %v2278
      %v2400 = vunpack.c.h.b16 %v2278
      %v2401 = vunpack.c.l.b16 %v2279
      %v2402 = vunpack.c.h.b16 %v2279
      %v2403 = vunpack.c.l.b16 %v2280
      %v2404 = vunpack.c.h.b16 %v2280
      %v2405 = vunpack.c.l.b16 %v2281
      %v2406 = vunpack.c.h.b16 %v2281
      %v2407 = vunpack.c.l.b16 %v2282
      %v2408 = vunpack.c.h.b16 %v2282
      %v2409 = vunpack.c.l.b16 %v2283
      %v2410 = vunpack.c.h.b16 %v2283
      %v2411 = vunpack.c.l.b16 %v2284
      %v2412 = vunpack.c.h.b16 %v2284
      %v2413 = vunpack.c.l.b16 %v2285
      %v2414 = vunpack.c.h.b16 %v2285
      %v2415 = vpack.c.b16 %v2353, %v2351
      %v2416 = vpack.c.b16 %v2354, %v2352
      %v2417 = vpack.c.b16 %v2357, %v2355
      %v2418 = vpack.c.b16 %v2358, %v2356
      %v2419 = vpack.c.b16 %v2361, %v2359
      %v2420 = vpack.c.b16 %v2362, %v2360
      %v2421 = vpack.c.b16 %v2365, %v2363
      %v2422 = vpack.c.b16 %v2366, %v2364
      %v2423 = vpack.c.b16 %v2369, %v2367
      %v2424 = vpack.c.b16 %v2370, %v2368
      %v2425 = vpack.c.b16 %v2373, %v2371
      %v2426 = vpack.c.b16 %v2374, %v2372
      %v2427 = vpack.c.b16 %v2377, %v2375
      %v2428 = vpack.c.b16 %v2378, %v2376
      %v2429 = vpack.c.b16 %v2381, %v2379
      %v2430 = vpack.c.b16 %v2382, %v2380
      %v2431 = vpack.c.b16 %v2385, %v2383
      %v2432 = vpack.c.b16 %v2386, %v2384
      %v2433 = vpack.c.b16 %v2389, %v2387
      %v2434 = vpack.c.b16 %v2390, %v2388
      %v2435 = vpack.c.b16 %v2393, %v2391
      %v2436 = vpack.c.b16 %v2394, %v2392
      %v2437 = vpack.c.b16 %v2397, %v2395
      %v2438 = vpack.c.b16 %v2398, %v2396
      %v2439 = vpack.c.b16 %v2401, %v2399
      %v2440 = vpack.c.b16 %v2402, %v2400
      %v2441 = vpack.c.b16 %v2405, %v2403
      %v2442 = vpack.c.b16 %v2406, %v2404
      %v2443 = vpack.c.b16 %v2409, %v2407
      %v2444 = vpack.c.b16 %v2410, %v2408
      %v2445 = vpack.c.b16 %v2413, %v2411
      %v2446 = vpack.c.b16 %v2414, %v2412
      %v2511 = vunpack.c.l.b16 %v2287
      %v2512 = vunpack.c.h.b16 %v2287
      %v2513 = vunpack.c.l.b16 %v2288
      %v2514 = vunpack.c.h.b16 %v2288
      %v2515 = vunpack.c.l.b16 %v2289
      %v2516 = vunpack.c.h.b16 %v2289
      %v2517 = vunpack.c.l.b16 %v2290
      %v2518 = vunpack.c.h.b16 %v2290
      %v2519 = vunpack.c.l.b16 %v2291
      %v2520 = vunpack.c.h.b16 %v2291
      %v2521 = vunpack.c.l.b16 %v2292
      %v2522 = vunpack.c.h.b16 %v2292
      %v2523 = vunpack.c.l.b16 %v2293
      %v2524 = vunpack.c.h.b16 %v2293
      %v2525 = vunpack.c.l.b16 %v2294
      %v2526 = vunpack.c.h.b16 %v2294
      %v2527 = vunpack.c.l.b16 %v2295
      %v2528 = vunpack.c.h.b16 %v2295
      %v2529 = vunpack.c.l.b16 %v2296
      %v2530 = vunpack.c.h.b16 %v2296
      %v2531 = vunpack.c.l.b16 %v2297
      %v2532 = vunpack.c.h.b16 %v2297
      %v2533 = vunpack.c.l.b16 %v2298
      %v2534 = vunpack.c.h.b16 %v2298
      %v2535 = vunpack.c.l.b16 %v2299
      %v2536 = vunpack.c.h.b16 %v2299
      %v2537 = vunpack.c.l.b16 %v2300
      %v2538 = vunpack.c.h.b16 %v2300
      %v2539 = vunpack.c.l.b16 %v2301
      %v2540 = vunpack.c.h.b16 %v2301
      %v2541 = vunpack.c.l.b16 %v2302
      %v2542 = vunpack.c.h.b16 %v2302
      %v2543 = vunpack.c.l.b16 %v2303
      %v2544 = vunpack.c.h.b16 %v2303
      %v2545 = vunpack.c.l.b16 %v2304
      %v2546 = vunpack.c.h.b16 %v2304
      %v2547 = vunpack.c.l.b16 %v2305
      %v2548 = vunpack.c.h.b16 %v2305
      %v2549 = vunpack.c.l.b16 %v2306
      %v2550 = vunpack.c.h.b16 %v2306
      %v2551 = vunpack.c.l.b16 %v2307
      %v2552 = vunpack.c.h.b16 %v2307
      %v2553 = vunpack.c.l.b16 %v2308
      %v2554 = vunpack.c.h.b16 %v2308
      %v2555 = vunpack.c.l.b16 %v2309
      %v2556 = vunpack.c.h.b16 %v2309
      %v2557 = vunpack.c.l.b16 %v2310
      %v2558 = vunpack.c.h.b16 %v2310
      %v2559 = vunpack.c.l.b16 %v2311
      %v2560 = vunpack.c.h.b16 %v2311
      %v2561 = vunpack.c.l.b16 %v2312
      %v2562 = vunpack.c.h.b16 %v2312
      %v2563 = vunpack.c.l.b16 %v2313
      %v2564 = vunpack.c.h.b16 %v2313
      %v2565 = vunpack.c.l.b16 %v2314
      %v2566 = vunpack.c.h.b16 %v2314
      %v2567 = vunpack.c.l.b16 %v2315
      %v2568 = vunpack.c.h.b16 %v2315
      %v2569 = vunpack.c.l.b16 %v2316
      %v2570 = vunpack.c.h.b16 %v2316
      %v2571 = vunpack.c.l.b16 %v2317
      %v2572 = vunpack.c.h.b16 %v2317
      %v2573 = vunpack.c.l.b16 %v2318
      %v2574 = vunpack.c.h.b16 %v2318
      %v2575 = vpack.c.b16 %v2513, %v2511
      %v2576 = vpack.c.b16 %v2514, %v2512
      %v2577 = vpack.c.b16 %v2517, %v2515
      %v2578 = vpack.c.b16 %v2518, %v2516
      %v2579 = vpack.c.b16 %v2521, %v2519
      %v2580 = vpack.c.b16 %v2522, %v2520
      %v2581 = vpack.c.b16 %v2525, %v2523
      %v2582 = vpack.c.b16 %v2526, %v2524
      %v2583 = vpack.c.b16 %v2529, %v2527
      %v2584 = vpack.c.b16 %v2530, %v2528
      %v2585 = vpack.c.b16 %v2533, %v2531
      %v2586 = vpack.c.b16 %v2534, %v2532
      %v2587 = vpack.c.b16 %v2537, %v2535
      %v2588 = vpack.c.b16 %v2538, %v2536
      %v2589 = vpack.c.b16 %v2541, %v2539
      %v2590 = vpack.c.b16 %v2542, %v2540
      %v2591 = vpack.c.b16 %v2545, %v2543
      %v2592 = vpack.c.b16 %v2546, %v2544
      %v2593 = vpack.c.b16 %v2549, %v2547
      %v2594 = vpack.c.b16 %v2550, %v2548
      %v2595 = vpack.c.b16 %v2553, %v2551
      %v2596 = vpack.c.b16 %v2554, %v2552
      %v2597 = vpack.c.b16 %v2557, %v2555
      %v2598 = vpack.c.b16 %v2558, %v2556
      %v2599 = vpack.c.b16 %v2561, %v2559
      %v2600 = vpack.c.b16 %v2562, %v2560
      %v2601 = vpack.c.b16 %v2565, %v2563
      %v2602 = vpack.c.b16 %v2566, %v2564
      %v2603 = vpack.c.b16 %v2569, %v2567
      %v2604 = vpack.c.b16 %v2570, %v2568
      %v2605 = vpack.c.b16 %v2573, %v2571
      %v2606 = vpack.c.b16 %v2574, %v2572
      %2639 = vmatprep.subr.bf16.mxu0 %v2576
      %2640 = vmatpush1.bf16.msra.mxu0 %v2575
      %2641 = vmatprep.subr.bf16.mxu0 %v2578
      %2642 = vmatpush1.bf16.msra.mxu0 %v2577
      %2643 = vmatprep.subr.bf16.mxu0 %v2580
      %2644 = vmatpush1.bf16.msra.mxu0 %v2579
      %2645 = vmatprep.subr.bf16.mxu0 %v2582
      %2646 = vmatpush1.bf16.msra.mxu0 %v2581
      %2647 = vmatprep.subr.bf16.mxu0 %v2584
      %2648 = vmatpush1.bf16.msra.mxu0 %v2583
      %2649 = vmatprep.subr.bf16.mxu0 %v2586
      %2650 = vmatpush1.bf16.msra.mxu0 %v2585
      %2651 = vmatprep.subr.bf16.mxu0 %v2588
      %2652 = vmatpush1.bf16.msra.mxu0 %v2587
      %2653 = vmatprep.subr.bf16.mxu0 %v2590
      %2654 = vmatpush1.bf16.msra.mxu0 %v2589
      %2655 = vmatprep.subr.bf16.mxu0 %v2592
      %2656 = vmatpush1.bf16.msra.mxu0 %v2591
      %2657 = vmatprep.subr.bf16.mxu0 %v2594
      %2658 = vmatpush1.bf16.msra.mxu0 %v2593
      %2659 = vmatprep.subr.bf16.mxu0 %v2596
      %2660 = vmatpush1.bf16.msra.mxu0 %v2595
      %2661 = vmatprep.subr.bf16.mxu0 %v2598
      %2662 = vmatpush1.bf16.msra.mxu0 %v2597
      %2663 = vmatprep.subr.bf16.mxu0 %v2600
      %2664 = vmatpush1.bf16.msra.mxu0 %v2599
      %2665 = vmatprep.subr.bf16.mxu0 %v2602
      %2666 = vmatpush1.bf16.msra.mxu0 %v2601
      %2667 = vmatprep.subr.bf16.mxu0 %v2604
      %2668 = vmatpush1.bf16.msra.mxu0 %v2603
      %2669 = vmatprep.subr.bf16.mxu0 %v2606
      %2670 = vmatpush1.bf16.msra.mxu0 %v2605
      %2671 = vmatprep.mubr.bf16.mxu0 %v2416
      %2672 = vmatmul.mubr.bf16.gmra.mrb[0].mxu0 %v2415
      %v2673 = vpop.f32.mrb[0].mxu0
      %v2674 = vadd.f32 0.0, %v2673
      %v2675 = vpop.f32.mrb[0].mxu0
      %v2676 = vadd.f32 0.0, %v2675
      %v2677 = vpop.f32.mrb[0].mxu0
      %v2678 = vadd.f32 0.0, %v2677
      %v2679 = vpop.f32.mrb[0].mxu0
      %v2680 = vadd.f32 0.0, %v2679
      %2681 = vmatprep.mubr.bf16.mxu0 %v2418
      %2682 = vmatmul.mubr.bf16.gmra.mrb[0].mxu0 %v2417
      %v2683 = vpop.f32.mrb[0].mxu0
      %v2684 = vadd.f32 0.0, %v2683
      %v2685 = vpop.f32.mrb[0].mxu0
      %v2686 = vadd.f32 0.0, %v2685
      %v2687 = vpop.f32.mrb[0].mxu0
      %v2688 = vadd.f32 0.0, %v2687
      %v2689 = vpop.f32.mrb[0].mxu0
      %v2690 = vadd.f32 0.0, %v2689
      %2691 = vmatprep.mubr.bf16.mxu0 %v2420
      %2692 = vmatmul.mubr.bf16.gmra.mrb[0].mxu0 %v2419
      %v2693 = vpop.f32.mrb[0].mxu0
      %v2694 = vadd.f32 0.0, %v2693
      %v2695 = vpop.f32.mrb[0].mxu0
      %v2696 = vadd.f32 0.0, %v2695
      %v2697 = vpop.f32.mrb[0].mxu0
      %v2698 = vadd.f32 0.0, %v2697
      %v2699 = vpop.f32.mrb[0].mxu0
      %v2700 = vadd.f32 0.0, %v2699
      %2701 = vmatprep.mubr.bf16.mxu0 %v2422
      %2702 = vmatmul.mubr.bf16.gmra.mrb[0].mxu0 %v2421
      %v2703 = vpop.f32.mrb[0].mxu0
      %v2704 = vadd.f32 0.0, %v2703
      %v2705 = vpop.f32.mrb[0].mxu0
      %v2706 = vadd.f32 0.0, %v2705
      %v2707 = vpop.f32.mrb[0].mxu0
      %v2708 = vadd.f32 0.0, %v2707
      %v2709 = vpop.f32.mrb[0].mxu0
      %v2710 = vadd.f32 0.0, %v2709
      %2711 = vmatprep.mubr.bf16.mxu0 %v2424
      %2712 = vmatmul.mubr.bf16.gmra.mrb[0].mxu0 %v2423
      %v2713 = vpop.f32.mrb[0].mxu0
      %v2714 = vadd.f32 0.0, %v2713
      %v2715 = vpop.f32.mrb[0].mxu0
      %v2716 = vadd.f32 0.0, %v2715
      %v2717 = vpop.f32.mrb[0].mxu0
      %v2718 = vadd.f32 0.0, %v2717
      %v2719 = vpop.f32.mrb[0].mxu0
      %v2720 = vadd.f32 0.0, %v2719
      %2721 = vmatprep.mubr.bf16.mxu0 %v2426
      %2722 = vmatmul.mubr.bf16.gmra.mrb[0].mxu0 %v2425
      %v2723 = vpop.f32.mrb[0].mxu0
      %v2724 = vadd.f32 0.0, %v2723
      %v2725 = vpop.f32.mrb[0].mxu0
      %v2726 = vadd.f32 0.0, %v2725
      %v2727 = vpop.f32.mrb[0].mxu0
      %v2728 = vadd.f32 0.0, %v2727
      %v2729 = vpop.f32.mrb[0].mxu0
      %v2730 = vadd.f32 0.0, %v2729
      %2731 = vmatprep.mubr.bf16.mxu0 %v2428
      %2732 = vmatmul.mubr.bf16.gmra.mrb[0].mxu0 %v2427
      %v2733 = vpop.f32.mrb[0].mxu0
      %v2734 = vadd.f32 0.0, %v2733
      %v2735 = vpop.f32.mrb[0].mxu0
      %v2736 = vadd.f32 0.0, %v2735
      %v2737 = vpop.f32.mrb[0].mxu0
      %v2738 = vadd.f32 0.0, %v2737
      %v2739 = vpop.f32.mrb[0].mxu0
      %v2740 = vadd.f32 0.0, %v2739
      %2741 = vmatprep.mubr.bf16.mxu0 %v2430
      %2742 = vmatmul.mubr.bf16.gmra.mrb[0].mxu0 %v2429
      %v2743 = vpop.f32.mrb[0].mxu0
      %v2744 = vadd.f32 0.0, %v2743
      %v2745 = vpop.f32.mrb[0].mxu0
      %v2746 = vadd.f32 0.0, %v2745
      %v2747 = vpop.f32.mrb[0].mxu0
      %v2748 = vadd.f32 0.0, %v2747
      %v2749 = vpop.f32.mrb[0].mxu0
      %v2750 = vadd.f32 0.0, %v2749
      %2751 = vmatprep.mubr.bf16.mxu0 %v2432
      %2752 = vmatmul.mubr.bf16.gmra.mrb[0].mxu0 %v2431
      %v2753 = vpop.f32.mrb[0].mxu0
      %v2754 = vadd.f32 0.0, %v2753
      %v2755 = vpop.f32.mrb[0].mxu0
      %v2756 = vadd.f32 0.0, %v2755
      %v2757 = vpop.f32.mrb[0].mxu0
      %v2758 = vadd.f32 0.0, %v2757
      %v2759 = vpop.f32.mrb[0].mxu0
      %v2760 = vadd.f32 0.0, %v2759
      %2761 = vmatprep.mubr.bf16.mxu0 %v2434
      %2762 = vmatmul.mubr.bf16.gmra.mrb[0].mxu0 %v2433
      %v2763 = vpop.f32.mrb[0].mxu0
      %v2764 = vadd.f32 0.0, %v2763
      %v2765 = vpop.f32.mrb[0].mxu0
      %v2766 = vadd.f32 0.0, %v2765
      %v2767 = vpop.f32.mrb[0].mxu0
      %v2768 = vadd.f32 0.0, %v2767
      %v2769 = vpop.f32.mrb[0].mxu0
      %v2770 = vadd.f32 0.0, %v2769
      %2771 = vmatprep.mubr.bf16.mxu0 %v2436
      %2772 = vmatmul.mubr.bf16.gmra.mrb[0].mxu0 %v2435
      %v2773 = vpop.f32.mrb[0].mxu0
      %v2774 = vadd.f32 0.0, %v2773
      %v2775 = vpop.f32.mrb[0].mxu0
      %v2776 = vadd.f32 0.0, %v2775
      %v2777 = vpop.f32.mrb[0].mxu0
      %v2778 = vadd.f32 0.0, %v2777
      %v2779 = vpop.f32.mrb[0].mxu0
      %v2780 = vadd.f32 0.0, %v2779
      %2781 = vmatprep.mubr.bf16.mxu0 %v2438
      %2782 = vmatmul.mubr.bf16.gmra.mrb[0].mxu0 %v2437
      %v2783 = vpop.f32.mrb[0].mxu0
      %v2784 = vadd.f32 0.0, %v2783
      %v2785 = vpop.f32.mrb[0].mxu0
      %v2786 = vadd.f32 0.0, %v2785
      %v2787 = vpop.f32.mrb[0].mxu0
      %v2788 = vadd.f32 0.0, %v2787
      %v2789 = vpop.f32.mrb[0].mxu0
      %v2790 = vadd.f32 0.0, %v2789
      %2791 = vmatprep.mubr.bf16.mxu0 %v2440
      %2792 = vmatmul.mubr.bf16.gmra.mrb[0].mxu0 %v2439
      %v2793 = vpop.f32.mrb[0].mxu0
      %v2794 = vadd.f32 0.0, %v2793
      %v2795 = vpop.f32.mrb[0].mxu0
      %v2796 = vadd.f32 0.0, %v2795
      %v2797 = vpop.f32.mrb[0].mxu0
      %v2798 = vadd.f32 0.0, %v2797
      %v2799 = vpop.f32.mrb[0].mxu0
      %v2800 = vadd.f32 0.0, %v2799
      %2801 = vmatprep.mubr.bf16.mxu0 %v2442
      %2802 = vmatmul.mubr.bf16.gmra.mrb[0].mxu0 %v2441
      %v2803 = vpop.f32.mrb[0].mxu0
      %v2804 = vadd.f32 0.0, %v2803
      %v2805 = vpop.f32.mrb[0].mxu0
      %v2806 = vadd.f32 0.0, %v2805
      %v2807 = vpop.f32.mrb[0].mxu0
      %v2808 = vadd.f32 0.0, %v2807
      %v2809 = vpop.f32.mrb[0].mxu0
      %v2810 = vadd.f32 0.0, %v2809
      %2811 = vmatprep.mubr.bf16.mxu0 %v2444
      %2812 = vmatmul.mubr.bf16.gmra.mrb[0].mxu0 %v2443
      %v2813 = vpop.f32.mrb[0].mxu0
      %v2814 = vadd.f32 0.0, %v2813
      %v2815 = vpop.f32.mrb[0].mxu0
      %v2816 = vadd.f32 0.0, %v2815
      %v2817 = vpop.f32.mrb[0].mxu0
      %v2818 = vadd.f32 0.0, %v2817
      %v2819 = vpop.f32.mrb[0].mxu0
      %v2820 = vadd.f32 0.0, %v2819
      %2821 = vmatprep.mubr.bf16.mxu0 %v2446
      %2822 = vmatmul.mubr.bf16.gmra.mrb[0].mxu0 %v2445
      %v2823 = vpop.f32.mrb[0].mxu0
      %v2824 = vadd.f32 0.0, %v2823
      %v2825 = vpop.f32.mrb[0].mxu0
      %v2826 = vadd.f32 0.0, %v2825
      %v2827 = vpop.f32.mrb[0].mxu0
      %v2828 = vadd.f32 0.0, %v2827
      %v2829 = vpop.f32.mrb[0].mxu0
      %v2830 = vadd.f32 0.0, %v2829
      %2831 = vdwg.mxu0
      %v2832 = vadd.f32 %v2190, %v2674
      %v2833 = vadd.f32 %v2191, %v2676
      %v2834 = vadd.f32 %v2192, %v2678
      %v2835 = vadd.f32 %v2193, %v2680
      %v2836 = vadd.f32 %v2194, %v2684
      %v2837 = vadd.f32 %v2195, %v2686
      %v2838 = vadd.f32 %v2196, %v2688
      %v2839 = vadd.f32 %v2197, %v2690
      %v2840 = vadd.f32 %v2198, %v2694
      %v2841 = vadd.f32 %v2199, %v2696
      %v2842 = vadd.f32 %v2200, %v2698
      %v2843 = vadd.f32 %v2201, %v2700
      %v2844 = vadd.f32 %v2202, %v2704
      %v2845 = vadd.f32 %v2203, %v2706
      %v2846 = vadd.f32 %v2204, %v2708
      %v2847 = vadd.f32 %v2205, %v2710
      %v2848 = vadd.f32 %v2206, %v2714
      %v2849 = vadd.f32 %v2207, %v2716
      %v2850 = vadd.f32 %v2208, %v2718
      %v2851 = vadd.f32 %v2209, %v2720
      %v2852 = vadd.f32 %v2210, %v2724
      %v2853 = vadd.f32 %v2211, %v2726
      %v2854 = vadd.f32 %v2212, %v2728
      %v2855 = vadd.f32 %v2213, %v2730
      %v2856 = vadd.f32 %v2214, %v2734
      %v2857 = vadd.f32 %v2215, %v2736
      %v2858 = vadd.f32 %v2216, %v2738
      %v2859 = vadd.f32 %v2217, %v2740
      %v2860 = vadd.f32 %v2218, %v2744
      %v2861 = vadd.f32 %v2219, %v2746
      %v2862 = vadd.f32 %v2220, %v2748
      %v2863 = vadd.f32 %v2221, %v2750
      %v2864 = vadd.f32 %v2222, %v2754
      %v2865 = vadd.f32 %v2223, %v2756
      %v2866 = vadd.f32 %v2224, %v2758
      %v2867 = vadd.f32 %v2225, %v2760
      %v2868 = vadd.f32 %v2226, %v2764
      %v2869 = vadd.f32 %v2227, %v2766
      %v2870 = vadd.f32 %v2228, %v2768
      %v2871 = vadd.f32 %v2229, %v2770
      %v2872 = vadd.f32 %v2230, %v2774
      %v2873 = vadd.f32 %v2231, %v2776
      %v2874 = vadd.f32 %v2232, %v2778
      %v2875 = vadd.f32 %v2233, %v2780
      %v2876 = vadd.f32 %v2234, %v2784
      %v2877 = vadd.f32 %v2235, %v2786
      %v2878 = vadd.f32 %v2236, %v2788
      %v2879 = vadd.f32 %v2237, %v2790
      %v2880 = vadd.f32 %v2238, %v2794
      %v2881 = vadd.f32 %v2239, %v2796
      %v2882 = vadd.f32 %v2240, %v2798
      %v2883 = vadd.f32 %v2241, %v2800
      %v2884 = vadd.f32 %v2242, %v2804
      %v2885 = vadd.f32 %v2243, %v2806
      %v2886 = vadd.f32 %v2244, %v2808
      %v2887 = vadd.f32 %v2245, %v2810
      %v2888 = vadd.f32 %v2246, %v2814
      %v2889 = vadd.f32 %v2247, %v2816
      %v2890 = vadd.f32 %v2248, %v2818
      %v2891 = vadd.f32 %v2249, %v2820
      %v2892 = vadd.f32 %v2250, %v2824
      %v2893 = vadd.f32 %v2251, %v2826
      %v2894 = vadd.f32 %v2252, %v2828
      %v2895 = vadd.f32 %v2253, %v2830
      %v2896 = vld [vmem:[%s445] sm:$0x3]
      %v2898 = vlaneseq
      %v2899 = vshrl.u32 %v2898, 7
      %v2900 = vsub.s32 0, %v2899
      %v2901 = vrot.slane %v2896, %v2900
      %v2902 = vlaneseq
      %v2903 = vshrl.u32 %v2902, 7
      %v2904 = vsub.s32 1, %v2903
      %v2905 = vrot.slane %v2896, %v2904
      %v2908 = vadd.f32 %v2832, %v2901
      %v2909 = vadd.f32 %v2833, %v2905
      %v2910 = vadd.f32 %v2834, %v2901
      %v2911 = vadd.f32 %v2835, %v2905
      %v2912 = vadd.f32 %v2836, %v2901
      %v2913 = vadd.f32 %v2837, %v2905
      %v2914 = vadd.f32 %v2838, %v2901
      %v2915 = vadd.f32 %v2839, %v2905
      %v2916 = vadd.f32 %v2840, %v2901
      %v2917 = vadd.f32 %v2841, %v2905
      %v2918 = vadd.f32 %v2842, %v2901
      %v2919 = vadd.f32 %v2843, %v2905
      %v2920 = vadd.f32 %v2844, %v2901
      %v2921 = vadd.f32 %v2845, %v2905
      %v2922 = vadd.f32 %v2846, %v2901
      %v2923 = vadd.f32 %v2847, %v2905
      %v2924 = vadd.f32 %v2848, %v2901
      %v2925 = vadd.f32 %v2849, %v2905
      %v2926 = vadd.f32 %v2850, %v2901
      %v2927 = vadd.f32 %v2851, %v2905
      %v2928 = vadd.f32 %v2852, %v2901
      %v2929 = vadd.f32 %v2853, %v2905
      %v2930 = vadd.f32 %v2854, %v2901
      %v2931 = vadd.f32 %v2855, %v2905
      %v2932 = vadd.f32 %v2856, %v2901
      %v2933 = vadd.f32 %v2857, %v2905
      %v2934 = vadd.f32 %v2858, %v2901
      %v2935 = vadd.f32 %v2859, %v2905
      %v2936 = vadd.f32 %v2860, %v2901
      %v2937 = vadd.f32 %v2861, %v2905
      %v2938 = vadd.f32 %v2862, %v2901
      %v2939 = vadd.f32 %v2863, %v2905
      %v2940 = vadd.f32 %v2864, %v2901
      %v2941 = vadd.f32 %v2865, %v2905
      %v2942 = vadd.f32 %v2866, %v2901
      %v2943 = vadd.f32 %v2867, %v2905
      %v2944 = vadd.f32 %v2868, %v2901
      %v2945 = vadd.f32 %v2869, %v2905
      %v2946 = vadd.f32 %v2870, %v2901
      %v2947 = vadd.f32 %v2871, %v2905
      %v2948 = vadd.f32 %v2872, %v2901
      %v2949 = vadd.f32 %v2873, %v2905
      %v2950 = vadd.f32 %v2874, %v2901
      %v2951 = vadd.f32 %v2875, %v2905
      %v2952 = vadd.f32 %v2876, %v2901
      %v2953 = vadd.f32 %v2877, %v2905
      %v2954 = vadd.f32 %v2878, %v2901
      %v2955 = vadd.f32 %v2879, %v2905
      %v2956 = vadd.f32 %v2880, %v2901
      %v2957 = vadd.f32 %v2881, %v2905
      %v2958 = vadd.f32 %v2882, %v2901
      %v2959 = vadd.f32 %v2883, %v2905
      %v2960 = vadd.f32 %v2884, %v2901
      %v2961 = vadd.f32 %v2885, %v2905
      %v2962 = vadd.f32 %v2886, %v2901
      %v2963 = vadd.f32 %v2887, %v2905
      %v2964 = vadd.f32 %v2888, %v2901
      %v2965 = vadd.f32 %v2889, %v2905
      %v2966 = vadd.f32 %v2890, %v2901
      %v2967 = vadd.f32 %v2891, %v2905
      %v2968 = vadd.f32 %v2892, %v2901
      %v2969 = vadd.f32 %v2893, %v2905
      %v2970 = vadd.f32 %v2894, %v2901
      %v2971 = vadd.f32 %v2895, %v2905
      %v2972 = vld [vmem:[%s6] sm:$0x3]
      %v2974 = vlaneseq
      %v2975 = vshrl.u32 %v2974, 7
      %v2976 = vsub.s32 0, %v2975
      %v2977 = vrot.slane %v2972, %v2976
      %v2978 = vlaneseq
      %v2979 = vshrl.u32 %v2978, 7
      %v2980 = vsub.s32 1, %v2979
      %v2981 = vrot.slane %v2972, %v2980
      %v2984 = vadd.f32 %v2908, %v2977
      %v2985 = vadd.f32 %v2909, %v2981
      %v2986 = vadd.f32 %v2910, %v2977
      %v2987 = vadd.f32 %v2911, %v2981
      %v2988 = vadd.f32 %v2912, %v2977
      %v2989 = vadd.f32 %v2913, %v2981
      %v2990 = vadd.f32 %v2914, %v2977
      %v2991 = vadd.f32 %v2915, %v2981
      %v2992 = vadd.f32 %v2916, %v2977
      %v2993 = vadd.f32 %v2917, %v2981
      %v2994 = vadd.f32 %v2918, %v2977
      %v2995 = vadd.f32 %v2919, %v2981
      %v2996 = vadd.f32 %v2920, %v2977
      %v2997 = vadd.f32 %v2921, %v2981
      %v2998 = vadd.f32 %v2922, %v2977
      %v2999 = vadd.f32 %v2923, %v2981
      %v3000 = vadd.f32 %v2924, %v2977
      %v3001 = vadd.f32 %v2925, %v2981
      %v3002 = vadd.f32 %v2926, %v2977
      %v3003 = vadd.f32 %v2927, %v2981
      %v3004 = vadd.f32 %v2928, %v2977
      %v3005 = vadd.f32 %v2929, %v2981
      %v3006 = vadd.f32 %v2930, %v2977
      %v3007 = vadd.f32 %v2931, %v2981
      %v3008 = vadd.f32 %v2932, %v2977
      %v3009 = vadd.f32 %v2933, %v2981
      %v3010 = vadd.f32 %v2934, %v2977
      %v3011 = vadd.f32 %v2935, %v2981
      %v3012 = vadd.f32 %v2936, %v2977
      %v3013 = vadd.f32 %v2937, %v2981
      %v3014 = vadd.f32 %v2938, %v2977
      %v3015 = vadd.f32 %v2939, %v2981
      %v3016 = vadd.f32 %v2940, %v2977
      %v3017 = vadd.f32 %v2941, %v2981
      %v3018 = vadd.f32 %v2942, %v2977
      %v3019 = vadd.f32 %v2943, %v2981
      %v3020 = vadd.f32 %v2944, %v2977
      %v3021 = vadd.f32 %v2945, %v2981
      %v3022 = vadd.f32 %v2946, %v2977
      %v3023 = vadd.f32 %v2947, %v2981
      %v3024 = vadd.f32 %v2948, %v2977
      %v3025 = vadd.f32 %v2949, %v2981
      %v3026 = vadd.f32 %v2950, %v2977
      %v3027 = vadd.f32 %v2951, %v2981
      %v3028 = vadd.f32 %v2952, %v2977
      %v3029 = vadd.f32 %v2953, %v2981
      %v3030 = vadd.f32 %v2954, %v2977
      %v3031 = vadd.f32 %v2955, %v2981
      %v3032 = vadd.f32 %v2956, %v2977
      %v3033 = vadd.f32 %v2957, %v2981
      %v3034 = vadd.f32 %v2958, %v2977
      %v3035 = vadd.f32 %v2959, %v2981
      %v3036 = vadd.f32 %v2960, %v2977
      %v3037 = vadd.f32 %v2961, %v2981
      %v3038 = vadd.f32 %v2962, %v2977
      %v3039 = vadd.f32 %v2963, %v2981
      %v3040 = vadd.f32 %v2964, %v2977
      %v3041 = vadd.f32 %v2965, %v2981
      %v3042 = vadd.f32 %v2966, %v2977
      %v3043 = vadd.f32 %v2967, %v2981
      %v3044 = vadd.f32 %v2968, %v2977
      %v3045 = vadd.f32 %v2969, %v2981
      %v3046 = vadd.f32 %v2970, %v2977
      %v3047 = vadd.f32 %v2971, %v2981
      %v3048 = vmax.f32 %v2984, 0.0
      %v3049 = vmax.f32 %v2985, 0.0
      %v3050 = vmax.f32 %v2986, 0.0
      %v3051 = vmax.f32 %v2987, 0.0
      %v3052 = vmax.f32 %v2988, 0.0
      %v3053 = vmax.f32 %v2989, 0.0
      %v3054 = vmax.f32 %v2990, 0.0
      %v3055 = vmax.f32 %v2991, 0.0
      %v3056 = vmax.f32 %v2992, 0.0
      %v3057 = vmax.f32 %v2993, 0.0
      %v3058 = vmax.f32 %v2994, 0.0
      %v3059 = vmax.f32 %v2995, 0.0
      %v3060 = vmax.f32 %v2996, 0.0
      %v3061 = vmax.f32 %v2997, 0.0
      %v3062 = vmax.f32 %v2998, 0.0
      %v3063 = vmax.f32 %v2999, 0.0
      %v3064 = vmax.f32 %v3000, 0.0
      %v3065 = vmax.f32 %v3001, 0.0
      %v3066 = vmax.f32 %v3002, 0.0
      %v3067 = vmax.f32 %v3003, 0.0
      %v3068 = vmax.f32 %v3004, 0.0
      %v3069 = vmax.f32 %v3005, 0.0
      %v3070 = vmax.f32 %v3006, 0.0
      %v3071 = vmax.f32 %v3007, 0.0
      %v3072 = vmax.f32 %v3008, 0.0
      %v3073 = vmax.f32 %v3009, 0.0
      %v3074 = vmax.f32 %v3010, 0.0
      %v3075 = vmax.f32 %v3011, 0.0
      %v3076 = vmax.f32 %v3012, 0.0
      %v3077 = vmax.f32 %v3013, 0.0
      %v3078 = vmax.f32 %v3014, 0.0
      %v3079 = vmax.f32 %v3015, 0.0
      %v3080 = vmax.f32 %v3016, 0.0
      %v3081 = vmax.f32 %v3017, 0.0
      %v3082 = vmax.f32 %v3018, 0.0
      %v3083 = vmax.f32 %v3019, 0.0
      %v3084 = vmax.f32 %v3020, 0.0
      %v3085 = vmax.f32 %v3021, 0.0
      %v3086 = vmax.f32 %v3022, 0.0
      %v3087 = vmax.f32 %v3023, 0.0
      %v3088 = vmax.f32 %v3024, 0.0
      %v3089 = vmax.f32 %v3025, 0.0
      %v3090 = vmax.f32 %v3026, 0.0
      %v3091 = vmax.f32 %v3027, 0.0
      %v3092 = vmax.f32 %v3028, 0.0
      %v3093 = vmax.f32 %v3029, 0.0
      %v3094 = vmax.f32 %v3030, 0.0
      %v3095 = vmax.f32 %v3031, 0.0
      %v3096 = vmax.f32 %v3032, 0.0
      %v3097 = vmax.f32 %v3033, 0.0
      %v3098 = vmax.f32 %v3034, 0.0
      %v3099 = vmax.f32 %v3035, 0.0
      %v3100 = vmax.f32 %v3036, 0.0
      %v3101 = vmax.f32 %v3037, 0.0
      %v3102 = vmax.f32 %v3038, 0.0
      %v3103 = vmax.f32 %v3039, 0.0
      %v3104 = vmax.f32 %v3040, 0.0
      %v3105 = vmax.f32 %v3041, 0.0
      %v3106 = vmax.f32 %v3042, 0.0
      %v3107 = vmax.f32 %v3043, 0.0
      %v3108 = vmax.f32 %v3044, 0.0
      %v3109 = vmax.f32 %v3045, 0.0
      %v3110 = vmax.f32 %v3046, 0.0
      %v3111 = vmax.f32 %v3047, 0.0
      %v3112 = vpack.c.bf16 %v3050, %v3048
      %v3113 = vpack.c.bf16 %v3051, %v3049
      %v3114 = vpack.c.bf16 %v3054, %v3052
      %v3115 = vpack.c.bf16 %v3055, %v3053
      %v3116 = vpack.c.bf16 %v3058, %v3056
      %v3117 = vpack.c.bf16 %v3059, %v3057
      %v3118 = vpack.c.bf16 %v3062, %v3060
      %v3119 = vpack.c.bf16 %v3063, %v3061
      %v3120 = vpack.c.bf16 %v3066, %v3064
      %v3121 = vpack.c.bf16 %v3067, %v3065
      %v3122 = vpack.c.bf16 %v3070, %v3068
      %v3123 = vpack.c.bf16 %v3071, %v3069
      %v3124 = vpack.c.bf16 %v3074, %v3072
      %v3125 = vpack.c.bf16 %v3075, %v3073
      %v3126 = vpack.c.bf16 %v3078, %v3076
      %v3127 = vpack.c.bf16 %v3079, %v3077
      %v3128 = vpack.c.bf16 %v3082, %v3080
      %v3129 = vpack.c.bf16 %v3083, %v3081
      %v3130 = vpack.c.bf16 %v3086, %v3084
      %v3131 = vpack.c.bf16 %v3087, %v3085
      %v3132 = vpack.c.bf16 %v3090, %v3088
      %v3133 = vpack.c.bf16 %v3091, %v3089
      %v3134 = vpack.c.bf16 %v3094, %v3092
      %v3135 = vpack.c.bf16 %v3095, %v3093
      %v3136 = vpack.c.bf16 %v3098, %v3096
      %v3137 = vpack.c.bf16 %v3099, %v3097
      %v3138 = vpack.c.bf16 %v3102, %v3100
      %v3139 = vpack.c.bf16 %v3103, %v3101
      %v3140 = vpack.c.bf16 %v3106, %v3104
      %v3141 = vpack.c.bf16 %v3107, %v3105
      %v3142 = vpack.c.bf16 %v3110, %v3108
      %v3143 = vpack.c.bf16 %v3111, %v3109
      %v3176 = vunpack.c.l.b16 %v3112
      %v3177 = vunpack.c.l.b16 %v3113
      %v3178 = vunpack.c.h.b16 %v3112
      %v3179 = vunpack.c.h.b16 %v3113
      %v3180 = vunpack.c.l.b16 %v3114
      %v3181 = vunpack.c.l.b16 %v3115
      %v3182 = vunpack.c.h.b16 %v3114
      %v3183 = vunpack.c.h.b16 %v3115
      %v3184 = vunpack.c.l.b16 %v3116
      %v3185 = vunpack.c.l.b16 %v3117
      %v3186 = vunpack.c.h.b16 %v3116
      %v3187 = vunpack.c.h.b16 %v3117
      %v3188 = vunpack.c.l.b16 %v3118
      %v3189 = vunpack.c.l.b16 %v3119
      %v3190 = vunpack.c.h.b16 %v3118
      %v3191 = vunpack.c.h.b16 %v3119
      %v3192 = vunpack.c.l.b16 %v3120
      %v3193 = vunpack.c.l.b16 %v3121
      %v3194 = vunpack.c.h.b16 %v3120
      %v3195 = vunpack.c.h.b16 %v3121
      %v3196 = vunpack.c.l.b16 %v3122
      %v3197 = vunpack.c.l.b16 %v3123
      %v3198 = vunpack.c.h.b16 %v3122
      %v3199 = vunpack.c.h.b16 %v3123
      %v3200 = vunpack.c.l.b16 %v3124
      %v3201 = vunpack.c.l.b16 %v3125
      %v3202 = vunpack.c.h.b16 %v3124
      %v3203 = vunpack.c.h.b16 %v3125
      %v3204 = vunpack.c.l.b16 %v3126
      %v3205 = vunpack.c.l.b16 %v3127
      %v3206 = vunpack.c.h.b16 %v3126
      %v3207 = vunpack.c.h.b16 %v3127
      %v3208 = vunpack.c.l.b16 %v3128
      %v3209 = vunpack.c.l.b16 %v3129
      %v3210 = vunpack.c.h.b16 %v3128
      %v3211 = vunpack.c.h.b16 %v3129
      %v3212 = vunpack.c.l.b16 %v3130
      %v3213 = vunpack.c.l.b16 %v3131
      %v3214 = vunpack.c.h.b16 %v3130
      %v3215 = vunpack.c.h.b16 %v3131
      %v3216 = vunpack.c.l.b16 %v3132
      %v3217 = vunpack.c.l.b16 %v3133
      %v3218 = vunpack.c.h.b16 %v3132
      %v3219 = vunpack.c.h.b16 %v3133
      %v3220 = vunpack.c.l.b16 %v3134
      %v3221 = vunpack.c.l.b16 %v3135
      %v3222 = vunpack.c.h.b16 %v3134
      %v3223 = vunpack.c.h.b16 %v3135
      %v3224 = vunpack.c.l.b16 %v3136
      %v3225 = vunpack.c.l.b16 %v3137
      %v3226 = vunpack.c.h.b16 %v3136
      %v3227 = vunpack.c.h.b16 %v3137
      %v3228 = vunpack.c.l.b16 %v3138
      %v3229 = vunpack.c.l.b16 %v3139
      %v3230 = vunpack.c.h.b16 %v3138
      %v3231 = vunpack.c.h.b16 %v3139
      %v3232 = vunpack.c.l.b16 %v3140
      %v3233 = vunpack.c.l.b16 %v3141
      %v3234 = vunpack.c.h.b16 %v3140
      %v3235 = vunpack.c.h.b16 %v3141
      %v3236 = vunpack.c.l.b16 %v3142
      %v3237 = vunpack.c.l.b16 %v3143
      %v3238 = vunpack.c.h.b16 %v3142
      %v3239 = vunpack.c.h.b16 %v3143
      %v3240 = vpack.c.b16 %v3177, %v3176
      %v3241 = vpack.c.b16 %v3179, %v3178
      %v3242 = vpack.c.b16 %v3181, %v3180
      %v3243 = vpack.c.b16 %v3183, %v3182
      %v3244 = vpack.c.b16 %v3185, %v3184
      %v3245 = vpack.c.b16 %v3187, %v3186
      %v3246 = vpack.c.b16 %v3189, %v3188
      %v3247 = vpack.c.b16 %v3191, %v3190
      %v3248 = vpack.c.b16 %v3193, %v3192
      %v3249 = vpack.c.b16 %v3195, %v3194
      %v3250 = vpack.c.b16 %v3197, %v3196
      %v3251 = vpack.c.b16 %v3199, %v3198
      %v3252 = vpack.c.b16 %v3201, %v3200
      %v3253 = vpack.c.b16 %v3203, %v3202
      %v3254 = vpack.c.b16 %v3205, %v3204
      %v3255 = vpack.c.b16 %v3207, %v3206
      %v3256 = vpack.c.b16 %v3209, %v3208
      %v3257 = vpack.c.b16 %v3211, %v3210
      %v3258 = vpack.c.b16 %v3213, %v3212
      %v3259 = vpack.c.b16 %v3215, %v3214
      %v3260 = vpack.c.b16 %v3217, %v3216
      %v3261 = vpack.c.b16 %v3219, %v3218
      %v3262 = vpack.c.b16 %v3221, %v3220
      %v3263 = vpack.c.b16 %v3223, %v3222
      %v3264 = vpack.c.b16 %v3225, %v3224
      %v3265 = vpack.c.b16 %v3227, %v3226
      %v3266 = vpack.c.b16 %v3229, %v3228
      %v3267 = vpack.c.b16 %v3231, %v3230
      %v3268 = vpack.c.b16 %v3233, %v3232
      %v3269 = vpack.c.b16 %v3235, %v3234
      %v3270 = vpack.c.b16 %v3237, %v3236
      %v3271 = vpack.c.b16 %v3239, %v3238
      %3304 = vst [vmem:[%s455] sm:$0xff] %v3240
      %3305 = vst [vmem:[%s455 + $0x8] sm:$0xff] %v3241
      %3306 = vst [vmem:[%s455 + $0x10] sm:$0xff] %v3242
      %3307 = vst [vmem:[%s455 + $0x18] sm:$0xff] %v3243
      %3308 = vst [vmem:[%s455 + $0x20] sm:$0xff] %v3244
      %3309 = vst [vmem:[%s455 + $0x28] sm:$0xff] %v3245
      %3310 = vst [vmem:[%s455 + $0x30] sm:$0xff] %v3246
      %3311 = vst [vmem:[%s455 + $0x38] sm:$0xff] %v3247
      %3312 = vst [vmem:[%s455 + $0x40] sm:$0xff] %v3248
      %3313 = vst [vmem:[%s455 + $0x48] sm:$0xff] %v3249
      %3314 = vst [vmem:[%s455 + $0x50] sm:$0xff] %v3250
      %3315 = vst [vmem:[%s455 + $0x58] sm:$0xff] %v3251
      %3316 = vst [vmem:[%s455 + $0x60] sm:$0xff] %v3252
      %3317 = vst [vmem:[%s455 + $0x68] sm:$0xff] %v3253
      %3318 = vst [vmem:[%s455 + $0x70] sm:$0xff] %v3254
      %3319 = vst [vmem:[%s455 + $0x78] sm:$0xff] %v3255
      %3320 = vst [vmem:[%s455 + $0x80] sm:$0xff] %v3256
      %3321 = vst [vmem:[%s455 + $0x88] sm:$0xff] %v3257
      %3322 = vst [vmem:[%s455 + $0x90] sm:$0xff] %v3258
      %3323 = vst [vmem:[%s455 + $0x98] sm:$0xff] %v3259
      %3324 = vst [vmem:[%s455 + $0xa0] sm:$0xff] %v3260
      %3325 = vst [vmem:[%s455 + $0xa8] sm:$0xff] %v3261
      %3326 = vst [vmem:[%s455 + $0xb0] sm:$0xff] %v3262
      %3327 = vst [vmem:[%s455 + $0xb8] sm:$0xff] %v3263
      %3328 = vst [vmem:[%s455 + $0xc0] sm:$0xff] %v3264
      %3329 = vst [vmem:[%s455 + $0xc8] sm:$0xff] %v3265
      %3330 = vst [vmem:[%s455 + $0xd0] sm:$0xff] %v3266
      %3331 = vst [vmem:[%s455 + $0xd8] sm:$0xff] %v3267
      %3332 = vst [vmem:[%s455 + $0xe0] sm:$0xff] %v3268
      %3333 = vst [vmem:[%s455 + $0xe8] sm:$0xff] %v3269
      %3334 = vst [vmem:[%s455 + $0xf0] sm:$0xff] %v3270
      %3335 = vst [vmem:[%s455 + $0xf8] sm:$0xff] %v3271
      %s3336 = smul.u32 32, %s23
      %p3337 = scmp.lt.s32.totalorder %s22, 1
      %s3338 = scalar_select %p3337, %s22, 1
      %p3339 = scmp.lt.s32.totalorder %s3336, 31
      %s3340 = scalar_select %p3339, %s3336, 31
      %s3341 = smul.addr %s3340, 2
      %s3342 = smul.addr %s3338, 64
      %s3343 = sadd.s32 %s3341, %s3342
      %s3344 = smul.addr %s3343, 4
      %s3345 = scalar_lea.vmem %s7, %s3344
      // Predicated region
      $region49: #{nbs_deeplab_head_forward.13} parent=47 // pred_check
        %p3346 = pneg %p230
      $region50: #{nbs_deeplab_head_forward.13} parent=47 // pred_check_branch
        %3348 = sbr.rel (%p3346) target = $region52
      $region51: #{nbs_deeplab_head_forward.13} parent=47 // pred_region
        %s3349 = smul.u32 32, %s23
      $region52: #{nbs_deeplab_head_forward.13} parent=47 // pred_fallthru
        _
    $region48: #{nbs_deeplab_head_forward.13} parent=5 // pred_fallthru
      _
    %p3350 = scmp.le.s32.totalorder 2, %s13
    // Predicated region
    $region53: #{nbs_deeplab_head_forward.13} parent=5 // pred_check
      %p3351 = pneg %p3350
    $region54: #{nbs_deeplab_head_forward.13} parent=5 // pred_check_branch
      %3353 = sbr.rel (%p3351) target = $region56
    $region55: #{nbs_deeplab_head_forward.13} parent=5 // pred_region
      %s3354 = ssub.s32 %s13, 2
      // Predicated region
      $region57: #{nbs_deeplab_head_forward.13} parent=55 // pred_check
        %p3355 = pneg %p236
      $region58: #{nbs_deeplab_head_forward.13} parent=55 // pred_check_branch
        %3357 = sbr.rel (%p3355) target = $region60
      $region59: #{nbs_deeplab_head_forward.13} parent=55 // pred_region
        %s3358 = smul.u32 32, %s25
        %p3359 = scmp.lt.s32.totalorder %s24, 1
        %s3360 = scalar_select %p3359, %s24, 1
        %p3361 = scmp.lt.s32.totalorder %s3358, 31
        %s3362 = scalar_select %p3361, %s3358, 31
        %s3363 = smul.addr %s3362, 2
        %s3364 = smul.addr %s3360, 64
        %s3365 = sadd.s32 %s3363, %s3364
        %s3366 = smul.addr %s3365, 4
        %s3367 = scalar_lea.vmem %s7, %s3366
      $region60: #{nbs_deeplab_head_forward.13} parent=55 // pred_fallthru
        _
    $region56: #{nbs_deeplab_head_forward.13} parent=5 // pred_fallthru
      _
  $region6: #{nbs_deeplab_head_forward.13} parent=0 // loop_footer
    %s17 = sadd.s32 1, %s13
  $region7: #{nbs_deeplab_head_forward.13} parent=0 // loop_footer_branch
    %12 = sbr.rel target = $region3
  $region8: #{nbs_deeplab_head_forward.13} parent=0 // loop_exit
    _

// kernel: nbs_deeplab_head_forward.14
$region0: #{nbs_deeplab_head_forward.14}
  #allocation0 [shape = 'u32[]', space=smem, size = 0x4, offset = 0x4, fixed_abs, tag = 'smem constant byte address 0x4 - core index']
  #allocation1 [shape = 'u32[144,128]{1,0:T(1,128)}', space=vmem, size = 0x12000, scoped, tag = 'internal scratch']
  #allocation2 [shape = 'f32[256,256]{1,0:T(8,128)}', space=vmem, size = 0x40000, scoped, tag = 'scratch operand']
  %s0 = inlined_call_operand.vmem [shape: bf16[512,2304], index: 0, kind: input, shape index: {}]
  %s1 = inlined_call_operand.vmem [shape: bf16[2304,256], index: 1, kind: input, shape index: {}]
  %s2 = inlined_call_operand.vmem [shape: f32[1,256], index: 2, kind: input, shape index: {}]
  %s3 = inlined_call_operand.vmem [shape: bf16[512,256], index: 3, kind: output, shape index: {}]
  %s4 = sld [smem:[#allocation0]]
  $region91: #{nbs_deeplab_head_forward.14} parent=0
    _
  %s6 = ssub.s32 1, %s4
  %s7 = scalar_select 0, %s6, %s4
  $region1: #{nbs_deeplab_head_forward.14} parent=0
    #allocation3 [shape = 'u8[262144]{0}', space=vmem, size = 0x40000, scoped, tag = 'input window, operand 0']
    loop: start=0, step=1, limit=20
    $region2: #{nbs_deeplab_head_forward.14} parent=1 // loop_pre_header
      _
    $region3: #{nbs_deeplab_head_forward.14} parent=1 // loop_header
      %s9 = sphi 0, %s13
      %p10 = scmp.ge.s32.totalorder %s9, 20
      %s16 = sphi 0, %s28
      %s17 = sphi 0, %s24
      %s18 = sphi 0, %s16
      %s19 = sphi 0, %s17
      %s20 = sphi 0, %s18
      %s21 = sphi 0, %s19
      %s33 = sphi 0, %s35
      %s36 = sphi 0, %s33
      %s37 = sphi 0, %s36
      %s53 = sphi 0, %s37
      %s59 = sphi 0, %s61
      %s62 = sphi 0, %s59
      %s63 = sphi 0, %s62
      %s79 = sphi 0, %s63
      %s83 = sphi 0, %s83
      %s85 = sphi 0, %s83
      %s86 = sphi 0, %s85
      %s100 = sphi 0, %s86
      %s106 = sphi 0, %s108
      %s109 = sphi 0, %s106
      %s110 = sphi 0, %s109
      %s126 = sphi 0, %s110
    $region4: #{nbs_deeplab_head_forward.14} parent=1 // loop_header_branch
      %12 = sbr.rel (%p10) target = $region8
    $region5: #{nbs_deeplab_head_forward.14} parent=1 // loop_body
      %s14 = ssub.s32 %s9, 1
      %s15 = ssub.s32 %s9, 2
      %s22 = sadd.s32 1, %s17
      %p23 = scmp.ge.s32.totalorder %s22, 9
      %s24 = scalar_select %p23, 0, %s22
      %s25 = sadd.s32 1, %s16
      %s26 = scalar_select %p23, %s25, %s16
      %p27 = scmp.ge.s32.totalorder %s26, 2
      %s28 = scalar_select %p27, 0, %s26
      %s29 = ssub.s32 %s16, %s28
      %s30 = ssub.s32 %s17, %s24
      %s31 = sor.u32 %s29, %s30
      %p32 = scmp.eq.s32.totalorder %s31, 0
      %s34 = sadd.s32 %s33, 1
      %s35 = scalar_select %p32, %s33, %s34
      %p38 = pneg %p32
      %p39 = scmp.eq.s32.totalorder %s9, 17
      %p40 = por %p38, %p39
      %p41 = scmp.ne.s32.totalorder %s33, %s36
      %p42 = scmp.eq.s32.totalorder %s9, 0
      %p43 = por %p41, %p42
      %p44 = scmp.ne.s32.totalorder %s33, %s36
      %p45 = scmp.eq.s32.totalorder %s14, 17
      %p46 = por %p44, %p45
      %p47 = scmp.ne.s32.totalorder %s36, %s37
      %p48 = scmp.eq.s32.totalorder %s14, 0
      %p49 = por %p47, %p48
      %p50 = scmp.ne.s32.totalorder %s36, %s37
      %p51 = scmp.eq.s32.totalorder %s15, 17
      %p52 = por %p50, %p51
      %p54 = scmp.ne.s32.totalorder %s37, %s53
      %p55 = scmp.eq.s32.totalorder %s15, 0
      %p56 = por %p54, %p55
      %s57 = ssub.s32 %s17, %s24
      %p58 = scmp.eq.s32.totalorder %s57, 0
      %s60 = sadd.s32 %s59, 1
      %s61 = scalar_select %p58, %s59, %s60
      %p64 = pneg %p58
      %p65 = scmp.eq.s32.totalorder %s9, 17
      %p66 = por %p64, %p65
      %p67 = scmp.ne.s32.totalorder %s59, %s62
      %p68 = scmp.eq.s32.totalorder %s9, 0
      %p69 = por %p67, %p68
      %p70 = scmp.ne.s32.totalorder %s59, %s62
      %p71 = scmp.eq.s32.totalorder %s14, 17
      %p72 = por %p70, %p71
      %p73 = scmp.ne.s32.totalorder %s62, %s63
      %p74 = scmp.eq.s32.totalorder %s14, 0
      %p75 = por %p73, %p74
      %p76 = scmp.ne.s32.totalorder %s62, %s63
      %p77 = scmp.eq.s32.totalorder %s15, 17
      %p78 = por %p76, %p77
      %p80 = scmp.ne.s32.totalorder %s63, %s79
      %p81 = scmp.eq.s32.totalorder %s15, 0
      %p82 = por %p80, %p81
      %s84 = sadd.s32 %s83, 1
      %p87 = scmp.eq.s32.totalorder %s9, 17
      %p88 = scmp.ne.s32.totalorder %s83, %s85
      %p89 = scmp.eq.s32.totalorder %s9, 0
      %p90 = por %p88, %p89
      %p91 = scmp.ne.s32.totalorder %s83, %s85
      %p92 = scmp.eq.s32.totalorder %s14, 17
      %p93 = por %p91, %p92
      %p94 = scmp.ne.s32.totalorder %s85, %s86
      %p95 = scmp.eq.s32.totalorder %s14, 0
      %p96 = por %p94, %p95
      %p97 = scmp.ne.s32.totalorder %s85, %s86
      %p98 = scmp.eq.s32.totalorder %s15, 17
      %p99 = por %p97, %p98
      %p101 = scmp.ne.s32.totalorder %s86, %s100
      %p102 = scmp.eq.s32.totalorder %s15, 0
      %p103 = por %p101, %p102
      %s104 = ssub.s32 %s16, %s28
      %p105 = scmp.eq.s32.totalorder %s104, 0
      %s107 = sadd.s32 %s106, 1
      %s108 = scalar_select %p105, %s106, %s107
      %p111 = pneg %p105
      %p112 = scmp.eq.s32.totalorder %s9, 17
      %p113 = por %p111, %p112
      %p114 = scmp.ne.s32.totalorder %s106, %s109
      %p115 = scmp.eq.s32.totalorder %s9, 0
      %p116 = por %p114, %p115
      %p117 = scmp.ne.s32.totalorder %s106, %s109
      %p118 = scmp.eq.s32.totalorder %s14, 17
      %p119 = por %p117, %p118
      %p120 = scmp.ne.s32.totalorder %s109, %s110
      %p121 = scmp.eq.s32.totalorder %s14, 0
      %p122 = por %p120, %p121
      %p123 = scmp.ne.s32.totalorder %s109, %s110
      %p124 = scmp.eq.s32.totalorder %s15, 17
      %p125 = por %p123, %p124
      %p127 = scmp.ne.s32.totalorder %s110, %s126
      %p128 = scmp.eq.s32.totalorder %s15, 0
      %p129 = por %p127, %p128
      %p130 = scmp.le.s32.totalorder 1, %s9
      %p131 = scmp.lt.s32.totalorder %s9, 19
      %p132 = pnand %p130, %p131
      %p133 = pneg %p132
      // Predicated region
      $region9: #{nbs_deeplab_head_forward.14} parent=5 // pred_check
        _
      $region10: #{nbs_deeplab_head_forward.14} parent=5 // pred_check_branch
        %135 = sbr.rel (%p132) target = $region12
      $region11: #{nbs_deeplab_head_forward.14} parent=5 // pred_region
        %s136 = ssub.s32 %s9, 1
        // Predicated region
        $region13: #{nbs_deeplab_head_forward.14} parent=11 // pred_check
          %p137 = pneg %p96
        $region14: #{nbs_deeplab_head_forward.14} parent=11 // pred_check_branch
          %139 = sbr.rel (%p137) target = $region16
        $region15: #{nbs_deeplab_head_forward.14} parent=11 // pred_region
          _
        $region16: #{nbs_deeplab_head_forward.14} parent=11 // pred_fallthru
          _
      $region12: #{nbs_deeplab_head_forward.14} parent=5 // pred_fallthru
        _
      %p140 = scmp.lt.s32.totalorder %s9, 18
      // Predicated region
      $region17: #{nbs_deeplab_head_forward.14} parent=5 // pred_check
        %p141 = pneg %p140
      $region18: #{nbs_deeplab_head_forward.14} parent=5 // pred_check_branch
        %143 = sbr.rel (%p141) target = $region20
      $region19: #{nbs_deeplab_head_forward.14} parent=5 // pred_region
        // Predicated region
        $region21: #{nbs_deeplab_head_forward.14} parent=19 // pred_check
          %p144 = pneg %p43
        $region22: #{nbs_deeplab_head_forward.14} parent=19 // pred_check_branch
          %146 = sbr.rel (%p144) target = $region24
        $region23: #{nbs_deeplab_head_forward.14} parent=19 // pred_region
          %s147 = sand.u32 %s33, 1
          %s148 = sand.u32 %s33, 1
          %s149 = smul.addr %s148, 256
          %s150 = scalar_lea.vmem [#allocation3], %s149
          %s151 = smul.u32 32, %s16
          %s152 = smul.u32 2, %s17
          %s153 = smul.addr %s151, 18
          %s154 = sadd.s32 %s152, %s153
          %s155 = smul.addr %s154, 4
          %s156 = scalar_lea.vmem %s0, %s155
          // Predicated region
          $region25: #{nbs_deeplab_head_forward.14} parent=23 // pred_check
            _
          $region26: #{nbs_deeplab_head_forward.14} parent=23 // pred_check_branch
            %158 = sbr.rel (0) target = $region28
          $region27: #{nbs_deeplab_head_forward.14} parent=23 // pred_region
            // Predicated region
            $region29: #{nbs_deeplab_head_forward.14} parent=27 // pred_check
              _
            $region30: #{nbs_deeplab_head_forward.14} parent=27 // pred_check_branch
              %160 = sbr.rel (0) target = $region32
            $region31: #{nbs_deeplab_head_forward.14} parent=27 // pred_region
              // Predicated region
              $region44: #{nbs_deeplab_head_forward.14} parent=31 // pred_check
                _
              $region45: #{nbs_deeplab_head_forward.14} parent=31 // pred_check_branch
                %237 = sbr.rel (0) target = $region47
              $region46: #{nbs_deeplab_head_forward.14} parent=31 // pred_region
                loop: start=0, step=1, limit=1
                $region48: #{nbs_deeplab_head_forward.14} parent=46 // loop_pre_header
                  _
                $region49: #{nbs_deeplab_head_forward.14} parent=46 // loop_header
                  %s239 = sphi 0, %s243
                  %p240 = scmp.ge.s32.totalorder %s239, 1
                  %s244 = sphi %s156, %s156
                  %s245 = sphi %s150, %s150
                $region50: #{nbs_deeplab_head_forward.14} parent=46 // loop_header_branch
                  %242 = sbr.rel (%p240) target = $region54
                $region51: #{nbs_deeplab_head_forward.14} parent=46 // loop_body
                  %v246 = vld [vmem:[%s244] sm:$0xff]
                  %247 = vst [vmem:[%s245] sm:$0xff] %v246
                  %v248 = vld [vmem:[%s244 + $0x48] sm:$0xff]
                  %249 = vst [vmem:[%s245 + $0x8] sm:$0xff] %v248
                  %v250 = vld [vmem:[%s244 + $0x90] sm:$0xff]
                  %251 = vst [vmem:[%s245 + $0x10] sm:$0xff] %v250
                  %v252 = vld [vmem:[%s244 + $0xd8] sm:$0xff]
                  %253 = vst [vmem:[%s245 + $0x18] sm:$0xff] %v252
                  %v254 = vld [vmem:[%s244 + $0x120] sm:$0xff]
                  %255 = vst [vmem:[%s245 + $0x20] sm:$0xff] %v254
                  %v256 = vld [vmem:[%s244 + $0x168] sm:$0xff]
                  %257 = vst [vmem:[%s245 + $0x28] sm:$0xff] %v256
                  %v258 = vld [vmem:[%s244 + $0x1b0] sm:$0xff]
                  %259 = vst [vmem:[%s245 + $0x30] sm:$0xff] %v258
                  %v260 = vld [vmem:[%s244 + $0x1f8] sm:$0xff]
                  %261 = vst [vmem:[%s245 + $0x38] sm:$0xff] %v260
                  %v262 = vld [vmem:[%s244 + $0x240] sm:$0xff]
                  %263 = vst [vmem:[%s245 + $0x40] sm:$0xff] %v262
                  %v264 = vld [vmem:[%s244 + $0x288] sm:$0xff]
                  %265 = vst [vmem:[%s245 + $0x48] sm:$0xff] %v264
                  %v266 = vld [vmem:[%s244 + $0x2d0] sm:$0xff]
                  %267 = vst [vmem:[%s245 + $0x50] sm:$0xff] %v266
                  %v268 = vld [vmem:[%s244 + $0x318] sm:$0xff]
                  %269 = vst [vmem:[%s245 + $0x58] sm:$0xff] %v268
                  %v270 = vld [vmem:[%s244 + $0x360] sm:$0xff]
                  %271 = vst [vmem:[%s245 + $0x60] sm:$0xff] %v270
                  %v272 = vld [vmem:[%s244 + $0x3a8] sm:$0xff]
                  %273 = vst [vmem:[%s245 + $0x68] sm:$0xff] %v272
                  %v274 = vld [vmem:[%s244 + $0x3f0] sm:$0xff]
                  %275 = vst [vmem:[%s245 + $0x70] sm:$0xff] %v274
                  %v276 = vld [vmem:[%s244 + $0x438] sm:$0xff]
                  %277 = vst [vmem:[%s245 + $0x78] sm:$0xff] %v276
                  %v278 = vld [vmem:[%s244 + $0x480] sm:$0xff]
                  %279 = vst [vmem:[%s245 + $0x80] sm:$0xff] %v278
                  %v280 = vld [vmem:[%s244 + $0x4c8] sm:$0xff]
                  %281 = vst [vmem:[%s245 + $0x88] sm:$0xff] %v280
                  %v282 = vld [vmem:[%s244 + $0x510] sm:$0xff]
                  %283 = vst [vmem:[%s245 + $0x90] sm:$0xff] %v282
                  %v284 = vld [vmem:[%s244 + $0x558] sm:$0xff]
                  %285 = vst [vmem:[%s245 + $0x98] sm:$0xff] %v284
                  %v286 = vld [vmem:[%s244 + $0x5a0] sm:$0xff]
                  %287 = vst [vmem:[%s245 + $0xa0] sm:$0xff] %v286
                  %v288 = vld [vmem:[%s244 + $0x5e8] sm:$0xff]
                  %289 = vst [vmem:[%s245 + $0xa8] sm:$0xff] %v288
                  %v290 = vld [vmem:[%s244 + $0x630] sm:$0xff]
                  %291 = vst [vmem:[%s245 + $0xb0] sm:$0xff] %v290
                  %v292 = vld [vmem:[%s244 + $0x678] sm:$0xff]
                  %293 = vst [vmem:[%s245 + $0xb8] sm:$0xff] %v292
                  %v294 = vld [vmem:[%s244 + $0x6c0] sm:$0xff]
                  %295 = vst [vmem:[%s245 + $0xc0] sm:$0xff] %v294
                  %v296 = vld [vmem:[%s244 + $0x708] sm:$0xff]
                  %297 = vst [vmem:[%s245 + $0xc8] sm:$0xff] %v296
                  %v298 = vld [vmem:[%s244 + $0x750] sm:$0xff]
                  %299 = vst [vmem:[%s245 + $0xd0] sm:$0xff] %v298
                  %v300 = vld [vmem:[%s244 + $0x798] sm:$0xff]
                  %301 = vst [vmem:[%s245 + $0xd8] sm:$0xff] %v300
                  %v302 = vld [vmem:[%s244 + $0x7e0] sm:$0xff]
                  %303 = vst [vmem:[%s245 + $0xe0] sm:$0xff] %v302
                  %v304 = vld [vmem:[%s244 + $0x828] sm:$0xff]
                  %305 = vst [vmem:[%s245 + $0xe8] sm:$0xff] %v304
                  %v306 = vld [vmem:[%s244 + $0x870] sm:$0xff]
                  %307 = vst [vmem:[%s245 + $0xf0] sm:$0xff] %v306
                  %v308 = vld [vmem:[%s244 + $0x8b8] sm:$0xff]
                  %309 = vst [vmem:[%s245 + $0xf8] sm:$0xff] %v308
                $region52: #{nbs_deeplab_head_forward.14} parent=46 // loop_footer
                  %s243 = sadd.s32 1, %s239
                $region53: #{nbs_deeplab_head_forward.14} parent=46 // loop_footer_branch
                  %238 = sbr.rel target = $region49
                $region54: #{nbs_deeplab_head_forward.14} parent=46 // loop_exit
                  _
              $region47: #{nbs_deeplab_head_forward.14} parent=31 // pred_fallthru
                _
              // Predicated region
              $region55: #{nbs_deeplab_head_forward.14} parent=31 // pred_check
                _
              $region56: #{nbs_deeplab_head_forward.14} parent=31 // pred_check_branch
                %311 = sbr.rel target = $region58
              $region57: #{nbs_deeplab_head_forward.14} parent=31 // pred_region
                _
              $region58: #{nbs_deeplab_head_forward.14} parent=31 // pred_fallthru
                _
            $region32: #{nbs_deeplab_head_forward.14} parent=27 // pred_fallthru
              _
            // Predicated region
            $region33: #{nbs_deeplab_head_forward.14} parent=27 // pred_check
              _
            $region34: #{nbs_deeplab_head_forward.14} parent=27 // pred_check_branch
              %162 = sbr.rel target = $region36
            $region35: #{nbs_deeplab_head_forward.14} parent=27 // pred_region
              loop: start=0, step=1, limit=1
              $region37: #{nbs_deeplab_head_forward.14} parent=35 // loop_pre_header
                _
              $region38: #{nbs_deeplab_head_forward.14} parent=35 // loop_header
                %s165 = sphi 0, %s169
                %p166 = scmp.ge.s32.totalorder %s165, 1
                %s170 = sphi %s156, %s156
                %s171 = sphi %s150, %s150
              $region39: #{nbs_deeplab_head_forward.14} parent=35 // loop_header_branch
                %168 = sbr.rel (%p166) target = $region43
              $region40: #{nbs_deeplab_head_forward.14} parent=35 // loop_body
                %v172 = vld [vmem:[%s170] sm:$0xff]
                %173 = vst [vmem:[%s171] sm:$0xff] %v172
                %v174 = vld [vmem:[%s170 + $0x48] sm:$0xff]
                %175 = vst [vmem:[%s171 + $0x8] sm:$0xff] %v174
                %v176 = vld [vmem:[%s170 + $0x90] sm:$0xff]
                %177 = vst [vmem:[%s171 + $0x10] sm:$0xff] %v176
                %v178 = vld [vmem:[%s170 + $0xd8] sm:$0xff]
                %179 = vst [vmem:[%s171 + $0x18] sm:$0xff] %v178
                %v180 = vld [vmem:[%s170 + $0x120] sm:$0xff]
                %181 = vst [vmem:[%s171 + $0x20] sm:$0xff] %v180
                %v182 = vld [vmem:[%s170 + $0x168] sm:$0xff]
                %183 = vst [vmem:[%s171 + $0x28] sm:$0xff] %v182
                %v184 = vld [vmem:[%s170 + $0x1b0] sm:$0xff]
                %185 = vst [vmem:[%s171 + $0x30] sm:$0xff] %v184
                %v186 = vld [vmem:[%s170 + $0x1f8] sm:$0xff]
                %187 = vst [vmem:[%s171 + $0x38] sm:$0xff] %v186
                %v188 = vld [vmem:[%s170 + $0x240] sm:$0xff]
                %189 = vst [vmem:[%s171 + $0x40] sm:$0xff] %v188
                %v190 = vld [vmem:[%s170 + $0x288] sm:$0xff]
                %191 = vst [vmem:[%s171 + $0x48] sm:$0xff] %v190
                %v192 = vld [vmem:[%s170 + $0x2d0] sm:$0xff]
                %193 = vst [vmem:[%s171 + $0x50] sm:$0xff] %v192
                %v194 = vld [vmem:[%s170 + $0x318] sm:$0xff]
                %195 = vst [vmem:[%s171 + $0x58] sm:$0xff] %v194
                %v196 = vld [vmem:[%s170 + $0x360] sm:$0xff]
                %197 = vst [vmem:[%s171 + $0x60] sm:$0xff] %v196
                %v198 = vld [vmem:[%s170 + $0x3a8] sm:$0xff]
                %199 = vst [vmem:[%s171 + $0x68] sm:$0xff] %v198
                %v200 = vld [vmem:[%s170 + $0x3f0] sm:$0xff]
                %201 = vst [vmem:[%s171 + $0x70] sm:$0xff] %v200
                %v202 = vld [vmem:[%s170 + $0x438] sm:$0xff]
                %203 = vst [vmem:[%s171 + $0x78] sm:$0xff] %v202
                %v204 = vld [vmem:[%s170 + $0x480] sm:$0xff]
                %205 = vst [vmem:[%s171 + $0x80] sm:$0xff] %v204
                %v206 = vld [vmem:[%s170 + $0x4c8] sm:$0xff]
                %207 = vst [vmem:[%s171 + $0x88] sm:$0xff] %v206
                %v208 = vld [vmem:[%s170 + $0x510] sm:$0xff]
                %209 = vst [vmem:[%s171 + $0x90] sm:$0xff] %v208
                %v210 = vld [vmem:[%s170 + $0x558] sm:$0xff]
                %211 = vst [vmem:[%s171 + $0x98] sm:$0xff] %v210
                %v212 = vld [vmem:[%s170 + $0x5a0] sm:$0xff]
                %213 = vst [vmem:[%s171 + $0xa0] sm:$0xff] %v212
                %v214 = vld [vmem:[%s170 + $0x5e8] sm:$0xff]
                %215 = vst [vmem:[%s171 + $0xa8] sm:$0xff] %v214
                %v216 = vld [vmem:[%s170 + $0x630] sm:$0xff]
                %217 = vst [vmem:[%s171 + $0xb0] sm:$0xff] %v216
                %v218 = vld [vmem:[%s170 + $0x678] sm:$0xff]
                %219 = vst [vmem:[%s171 + $0xb8] sm:$0xff] %v218
                %v220 = vld [vmem:[%s170 + $0x6c0] sm:$0xff]
                %221 = vst [vmem:[%s171 + $0xc0] sm:$0xff] %v220
                %v222 = vld [vmem:[%s170 + $0x708] sm:$0xff]
                %223 = vst [vmem:[%s171 + $0xc8] sm:$0xff] %v222
                %v224 = vld [vmem:[%s170 + $0x750] sm:$0xff]
                %225 = vst [vmem:[%s171 + $0xd0] sm:$0xff] %v224
                %v226 = vld [vmem:[%s170 + $0x798] sm:$0xff]
                %227 = vst [vmem:[%s171 + $0xd8] sm:$0xff] %v226
                %v228 = vld [vmem:[%s170 + $0x7e0] sm:$0xff]
                %229 = vst [vmem:[%s171 + $0xe0] sm:$0xff] %v228
                %v230 = vld [vmem:[%s170 + $0x828] sm:$0xff]
                %231 = vst [vmem:[%s171 + $0xe8] sm:$0xff] %v230
                %v232 = vld [vmem:[%s170 + $0x870] sm:$0xff]
                %233 = vst [vmem:[%s171 + $0xf0] sm:$0xff] %v232
                %v234 = vld [vmem:[%s170 + $0x8b8] sm:$0xff]
                %235 = vst [vmem:[%s171 + $0xf8] sm:$0xff] %v234
              $region41: #{nbs_deeplab_head_forward.14} parent=35 // loop_footer
                %s169 = sadd.s32 1, %s165
              $region42: #{nbs_deeplab_head_forward.14} parent=35 // loop_footer_branch
                %164 = sbr.rel target = $region38
              $region43: #{nbs_deeplab_head_forward.14} parent=35 // loop_exit
                _
            $region36: #{nbs_deeplab_head_forward.14} parent=27 // pred_fallthru
              _
          $region28: #{nbs_deeplab_head_forward.14} parent=23 // pred_fallthru
            _
          %312 = vnop
        $region24: #{nbs_deeplab_head_forward.14} parent=19 // pred_fallthru
          _
        // Predicated region
        $region59: #{nbs_deeplab_head_forward.14} parent=19 // pred_check
          %p313 = pneg %p69
        $region60: #{nbs_deeplab_head_forward.14} parent=19 // pred_check_branch
          %315 = sbr.rel (%p313) target = $region62
        $region61: #{nbs_deeplab_head_forward.14} parent=19 // pred_region
          %s316 = smul.u32 32, %s17
          %p317 = scmp.lt.s32.totalorder %s316, 287
          %s318 = scalar_select %p317, %s316, 287
          %s319 = smul.addr %s318, 2
          %s320 = smul.addr %s319, 4
          %s321 = scalar_lea.vmem %s1, %s320
          %s322 = smul.u32 32, %s17
        $region62: #{nbs_deeplab_head_forward.14} parent=19 // pred_fallthru
          _
      $region20: #{nbs_deeplab_head_forward.14} parent=5 // pred_fallthru
        _
      %p323 = scmp.le.s32.totalorder 1, %s9
      %p324 = scmp.lt.s32.totalorder %s9, 19
      %p325 = pnand %p323, %p324
      %p326 = pneg %p325
      // Predicated region
      $region63: #{nbs_deeplab_head_forward.14} parent=5 // pred_check
        _
      $region64: #{nbs_deeplab_head_forward.14} parent=5 // pred_check_branch
        %328 = sbr.rel (%p325) target = $region66
      $region65: #{nbs_deeplab_head_forward.14} parent=5 // pred_region
        %s329 = ssub.s32 %s9, 1
        %s330 = sand.u32 %s36, 1
        %s331 = sand.u32 %s36, 1
        %s332 = smul.addr %s331, 256
        %s333 = scalar_lea.vmem [#allocation3], %s332
        // Predicated region
        $region67: #{nbs_deeplab_head_forward.14} parent=65 // pred_check
          %p334 = pneg %p49
        $region68: #{nbs_deeplab_head_forward.14} parent=65 // pred_check_branch
          %336 = sbr.rel (%p334) target = $region70
        $region69: #{nbs_deeplab_head_forward.14} parent=65 // pred_region
          _
        $region70: #{nbs_deeplab_head_forward.14} parent=65 // pred_fallthru
          _
        %s337 = sand.u32 %s36, 1
        %s338 = sand.u32 %s36, 1
        %s339 = smul.addr %s338, 256
        %s340 = scalar_lea.vmem [#allocation3], %s339
        %p341 = pneg %p49
        %p342 = pneg %p46
        %s343 = smul.u32 32, %s19
        %p344 = scmp.lt.s32.totalorder %s343, 287
        %s345 = scalar_select %p344, %s343, 287
        %s346 = smul.addr %s345, 2
        %s347 = smul.addr %s346, 4
        %s348 = scalar_lea.vmem %s1, %s347
        %p349 = pneg %p75
        %p350 = pneg %p72
        %p351 = pneg %p96
        %p352 = pneg %p93
        %p353 = pneg %p122
        %p354 = pneg %p119
        %s355 = smul.u32 32, %s18
        %p356 = scmp.lt.s32.totalorder %s355, 63
        %s357 = scalar_select %p356, %s355, 63
        %s358 = smul.addr %s357, 2
        %s359 = smul.addr %s358, 4
        %s360 = scalar_lea.vmem %s3, %s359
        %s361 = smul.u32 32, %s18
        %s362 = smul.u32 2, %s19
        %s363 = smul.u32 32, %s19
        %p364 = scmp.lt.s32.totalorder %s363, 287
        %s365 = scalar_select %p364, %s363, 287
        %s366 = smul.addr %s365, 2
        %s367 = smul.addr %s366, 4
        %s368 = scalar_lea.vmem %s1, %s367
        %s369 = smul.u32 32, %s19
        %s370 = smul.u32 32, %s18
        %p371 = scmp.lt.s32.totalorder %s370, 63
        %s372 = scalar_select %p371, %s370, 63
        %s373 = smul.addr %s372, 2
        %s374 = smul.addr %s373, 4
        %s375 = scalar_lea.vmem %s3, %s374
        %s376 = smul.u32 32, %s18
        %p377 = scmp.eq.s32.totalorder %s19, 0
        // Predicated region
        $region71: #{nbs_deeplab_head_forward.14} parent=65 // pred_check
          %p378 = pneg %p377
        $region72: #{nbs_deeplab_head_forward.14} parent=65 // pred_check_branch
          %380 = sbr.rel (%p378) target = $region74
        $region73: #{nbs_deeplab_head_forward.14} parent=65 // pred_region
          %381 = vst [vmem:[#allocation2] sm:$0xff] 0.0
          %382 = vst [vmem:[#allocation2 + $0x8] sm:$0xff] 0.0
          %383 = vst [vmem:[#allocation2 + $0x10] sm:$0xff] 0.0
          %384 = vst [vmem:[#allocation2 + $0x18] sm:$0xff] 0.0
          %385 = vst [vmem:[#allocation2 + $0x20] sm:$0xff] 0.0
          %386 = vst [vmem:[#allocation2 + $0x28] sm:$0xff] 0.0
          %387 = vst [vmem:[#allocation2 + $0x30] sm:$0xff] 0.0
          %388 = vst [vmem:[#allocation2 + $0x38] sm:$0xff] 0.0
          %389 = vst [vmem:[#allocation2 + $0x40] sm:$0xff] 0.0
          %390 = vst [vmem:[#allocation2 + $0x48] sm:$0xff] 0.0
          %391 = vst [vmem:[#allocation2 + $0x50] sm:$0xff] 0.0
          %392 = vst [vmem:[#allocation2 + $0x58] sm:$0xff] 0.0
          %393 = vst [vmem:[#allocation2 + $0x60] sm:$0xff] 0.0
          %394 = vst [vmem:[#allocation2 + $0x68] sm:$0xff] 0.0
          %395 = vst [vmem:[#allocation2 + $0x70] sm:$0xff] 0.0
          %396 = vst [vmem:[#allocation2 + $0x78] sm:$0xff] 0.0
          %397 = vst [vmem:[#allocation2 + $0x80] sm:$0xff] 0.0
          %398 = vst [vmem:[#allocation2 + $0x88] sm:$0xff] 0.0
          %399 = vst [vmem:[#allocation2 + $0x90] sm:$0xff] 0.0
          %400 = vst [vmem:[#allocation2 + $0x98] sm:$0xff] 0.0
          %401 = vst [vmem:[#allocation2 + $0xa0] sm:$0xff] 0.0
          %402 = vst [vmem:[#allocation2 + $0xa8] sm:$0xff] 0.0
          %403 = vst [vmem:[#allocation2 + $0xb0] sm:$0xff] 0.0
          %404 = vst [vmem:[#allocation2 + $0xb8] sm:$0xff] 0.0
          %405 = vst [vmem:[#allocation2 + $0xc0] sm:$0xff] 0.0
          %406 = vst [vmem:[#allocation2 + $0xc8] sm:$0xff] 0.0
          %407 = vst [vmem:[#allocation2 + $0xd0] sm:$0xff] 0.0
          %408 = vst [vmem:[#allocation2 + $0xd8] sm:$0xff] 0.0
          %409 = vst [vmem:[#allocation2 + $0xe0] sm:$0xff] 0.0
          %410 = vst [vmem:[#allocation2 + $0xe8] sm:$0xff] 0.0
          %411 = vst [vmem:[#allocation2 + $0xf0] sm:$0xff] 0.0
          %412 = vst [vmem:[#allocation2 + $0xf8] sm:$0xff] 0.0
          %413 = vst [vmem:[#allocation2 + $0x100] sm:$0xff] 0.0
          %414 = vst [vmem:[#allocation2 + $0x108] sm:$0xff] 0.0
          %415 = vst [vmem:[#allocation2 + $0x110] sm:$0xff] 0.0
          %416 = vst [vmem:[#allocation2 + $0x118] sm:$0xff] 0.0
          %417 = vst [vmem:[#allocation2 + $0x120] sm:$0xff] 0.0
          %418 = vst [vmem:[#allocation2 + $0x128] sm:$0xff] 0.0
          %419 = vst [vmem:[#allocation2 + $0x130] sm:$0xff] 0.0
          %420 = vst [vmem:[#allocation2 + $0x138] sm:$0xff] 0.0
          %421 = vst [vmem:[#allocation2 + $0x140] sm:$0xff] 0.0
          %422 = vst [vmem:[#allocation2 + $0x148] sm:$0xff] 0.0
          %423 = vst [vmem:[#allocation2 + $0x150] sm:$0xff] 0.0
          %424 = vst [vmem:[#allocation2 + $0x158] sm:$0xff] 0.0
          %425 = vst [vmem:[#allocation2 + $0x160] sm:$0xff] 0.0
          %426 = vst [vmem:[#allocation2 + $0x168] sm:$0xff] 0.0
          %427 = vst [vmem:[#allocation2 + $0x170] sm:$0xff] 0.0
          %428 = vst [vmem:[#allocation2 + $0x178] sm:$0xff] 0.0
          %429 = vst [vmem:[#allocation2 + $0x180] sm:$0xff] 0.0
          %430 = vst [vmem:[#allocation2 + $0x188] sm:$0xff] 0.0
          %431 = vst [vmem:[#allocation2 + $0x190] sm:$0xff] 0.0
          %432 = vst [vmem:[#allocation2 + $0x198] sm:$0xff] 0.0
          %433 = vst [vmem:[#allocation2 + $0x1a0] sm:$0xff] 0.0
          %434 = vst [vmem:[#allocation2 + $0x1a8] sm:$0xff] 0.0
          %435 = vst [vmem:[#allocation2 + $0x1b0] sm:$0xff] 0.0
          %436 = vst [vmem:[#allocation2 + $0x1b8] sm:$0xff] 0.0
          %437 = vst [vmem:[#allocation2 + $0x1c0] sm:$0xff] 0.0
          %438 = vst [vmem:[#allocation2 + $0x1c8] sm:$0xff] 0.0
          %439 = vst [vmem:[#allocation2 + $0x1d0] sm:$0xff] 0.0
          %440 = vst [vmem:[#allocation2 + $0x1d8] sm:$0xff] 0.0
          %441 = vst [vmem:[#allocation2 + $0x1e0] sm:$0xff] 0.0
          %442 = vst [vmem:[#allocation2 + $0x1e8] sm:$0xff] 0.0
          %443 = vst [vmem:[#allocation2 + $0x1f0] sm:$0xff] 0.0
          %444 = vst [vmem:[#allocation2 + $0x1f8] sm:$0xff] 0.0
        $region74: #{nbs_deeplab_head_forward.14} parent=65 // pred_fallthru
          _
        %v445 = vld [vmem:[#allocation2] sm:$0xff]
        %v446 = vld [vmem:[#allocation2 + $0x8] sm:$0xff]
        %v447 = vld [vmem:[#allocation2 + $0x10] sm:$0xff]
        %v448 = vld [vmem:[#allocation2 + $0x18] sm:$0xff]
        %v449 = vld [vmem:[#allocation2 + $0x20] sm:$0xff]
        %v450 = vld [vmem:[#allocation2 + $0x28] sm:$0xff]
        %v451 = vld [vmem:[#allocation2 + $0x30] sm:$0xff]
        %v452 = vld [vmem:[#allocation2 + $0x38] sm:$0xff]
        %v453 = vld [vmem:[#allocation2 + $0x40] sm:$0xff]
        %v454 = vld [vmem:[#allocation2 + $0x48] sm:$0xff]
        %v455 = vld [vmem:[#allocation2 + $0x50] sm:$0xff]
        %v456 = vld [vmem:[#allocation2 + $0x58] sm:$0xff]
        %v457 = vld [vmem:[#allocation2 + $0x60] sm:$0xff]
        %v458 = vld [vmem:[#allocation2 + $0x68] sm:$0xff]
        %v459 = vld [vmem:[#allocation2 + $0x70] sm:$0xff]
        %v460 = vld [vmem:[#allocation2 + $0x78] sm:$0xff]
        %v461 = vld [vmem:[#allocation2 + $0x80] sm:$0xff]
        %v462 = vld [vmem:[#allocation2 + $0x88] sm:$0xff]
        %v463 = vld [vmem:[#allocation2 + $0x90] sm:$0xff]
        %v464 = vld [vmem:[#allocation2 + $0x98] sm:$0xff]
        %v465 = vld [vmem:[#allocation2 + $0xa0] sm:$0xff]
        %v466 = vld [vmem:[#allocation2 + $0xa8] sm:$0xff]
        %v467 = vld [vmem:[#allocation2 + $0xb0] sm:$0xff]
        %v468 = vld [vmem:[#allocation2 + $0xb8] sm:$0xff]
        %v469 = vld [vmem:[#allocation2 + $0xc0] sm:$0xff]
        %v470 = vld [vmem:[#allocation2 + $0xc8] sm:$0xff]
        %v471 = vld [vmem:[#allocation2 + $0xd0] sm:$0xff]
        %v472 = vld [vmem:[#allocation2 + $0xd8] sm:$0xff]
        %v473 = vld [vmem:[#allocation2 + $0xe0] sm:$0xff]
        %v474 = vld [vmem:[#allocation2 + $0xe8] sm:$0xff]
        %v475 = vld [vmem:[#allocation2 + $0xf0] sm:$0xff]
        %v476 = vld [vmem:[#allocation2 + $0xf8] sm:$0xff]
        %v477 = vld [vmem:[#allocation2 + $0x100] sm:$0xff]
        %v478 = vld [vmem:[#allocation2 + $0x108] sm:$0xff]
        %v479 = vld [vmem:[#allocation2 + $0x110] sm:$0xff]
        %v480 = vld [vmem:[#allocation2 + $0x118] sm:$0xff]
        %v481 = vld [vmem:[#allocation2 + $0x120] sm:$0xff]
        %v482 = vld [vmem:[#allocation2 + $0x128] sm:$0xff]
        %v483 = vld [vmem:[#allocation2 + $0x130] sm:$0xff]
        %v484 = vld [vmem:[#allocation2 + $0x138] sm:$0xff]
        %v485 = vld [vmem:[#allocation2 + $0x140] sm:$0xff]
        %v486 = vld [vmem:[#allocation2 + $0x148] sm:$0xff]
        %v487 = vld [vmem:[#allocation2 + $0x150] sm:$0xff]
        %v488 = vld [vmem:[#allocation2 + $0x158] sm:$0xff]
        %v489 = vld [vmem:[#allocation2 + $0x160] sm:$0xff]
        %v490 = vld [vmem:[#allocation2 + $0x168] sm:$0xff]
        %v491 = vld [vmem:[#allocation2 + $0x170] sm:$0xff]
        %v492 = vld [vmem:[#allocation2 + $0x178] sm:$0xff]
        %v493 = vld [vmem:[#allocation2 + $0x180] sm:$0xff]
        %v494 = vld [vmem:[#allocation2 + $0x188] sm:$0xff]
        %v495 = vld [vmem:[#allocation2 + $0x190] sm:$0xff]
        %v496 = vld [vmem:[#allocation2 + $0x198] sm:$0xff]
        %v497 = vld [vmem:[#allocation2 + $0x1a0] sm:$0xff]
        %v498 = vld [vmem:[#allocation2 + $0x1a8] sm:$0xff]
        %v499 = vld [vmem:[#allocation2 + $0x1b0] sm:$0xff]
        %v500 = vld [vmem:[#allocation2 + $0x1b8] sm:$0xff]
        %v501 = vld [vmem:[#allocation2 + $0x1c0] sm:$0xff]
        %v502 = vld [vmem:[#allocation2 + $0x1c8] sm:$0xff]
        %v503 = vld [vmem:[#allocation2 + $0x1d0] sm:$0xff]
        %v504 = vld [vmem:[#allocation2 + $0x1d8] sm:$0xff]
        %v505 = vld [vmem:[#allocation2 + $0x1e0] sm:$0xff]
        %v506 = vld [vmem:[#allocation2 + $0x1e8] sm:$0xff]
        %v507 = vld [vmem:[#allocation2 + $0x1f0] sm:$0xff]
        %v508 = vld [vmem:[#allocation2 + $0x1f8] sm:$0xff]
        %v509 = vld [vmem:[%s333] sm:$0xff]
        %v510 = vld [vmem:[%s333 + $0x8] sm:$0xff]
        %v511 = vld [vmem:[%s333 + $0x10] sm:$0xff]
        %v512 = vld [vmem:[%s333 + $0x18] sm:$0xff]
        %v513 = vld [vmem:[%s333 + $0x20] sm:$0xff]
        %v514 = vld [vmem:[%s333 + $0x28] sm:$0xff]
        %v515 = vld [vmem:[%s333 + $0x30] sm:$0xff]
        %v516 = vld [vmem:[%s333 + $0x38] sm:$0xff]
        %v517 = vld [vmem:[%s333 + $0x40] sm:$0xff]
        %v518 = vld [vmem:[%s333 + $0x48] sm:$0xff]
        %v519 = vld [vmem:[%s333 + $0x50] sm:$0xff]
        %v520 = vld [vmem:[%s333 + $0x58] sm:$0xff]
        %v521 = vld [vmem:[%s333 + $0x60] sm:$0xff]
        %v522 = vld [vmem:[%s333 + $0x68] sm:$0xff]
        %v523 = vld [vmem:[%s333 + $0x70] sm:$0xff]
        %v524 = vld [vmem:[%s333 + $0x78] sm:$0xff]
        %v525 = vld [vmem:[%s333 + $0x80] sm:$0xff]
        %v526 = vld [vmem:[%s333 + $0x88] sm:$0xff]
        %v527 = vld [vmem:[%s333 + $0x90] sm:$0xff]
        %v528 = vld [vmem:[%s333 + $0x98] sm:$0xff]
        %v529 = vld [vmem:[%s333 + $0xa0] sm:$0xff]
        %v530 = vld [vmem:[%s333 + $0xa8] sm:$0xff]
        %v531 = vld [vmem:[%s333 + $0xb0] sm:$0xff]
        %v532 = vld [vmem:[%s333 + $0xb8] sm:$0xff]
        %v533 = vld [vmem:[%s333 + $0xc0] sm:$0xff]
        %v534 = vld [vmem:[%s333 + $0xc8] sm:$0xff]
        %v535 = vld [vmem:[%s333 + $0xd0] sm:$0xff]
        %v536 = vld [vmem:[%s333 + $0xd8] sm:$0xff]
        %v537 = vld [vmem:[%s333 + $0xe0] sm:$0xff]
        %v538 = vld [vmem:[%s333 + $0xe8] sm:$0xff]
        %v539 = vld [vmem:[%s333 + $0xf0] sm:$0xff]
        %v540 = vld [vmem:[%s333 + $0xf8] sm:$0xff]
        %v541 = vld [vmem:[%s368] sm:$0xff]
        %v542 = vld [vmem:[%s368 + $0x8] sm:$0xff]
        %v543 = vld [vmem:[%s368 + $0x10] sm:$0xff]
        %v544 = vld [vmem:[%s368 + $0x18] sm:$0xff]
        %v545 = vld [vmem:[%s368 + $0x20] sm:$0xff]
        %v546 = vld [vmem:[%s368 + $0x28] sm:$0xff]
        %v547 = vld [vmem:[%s368 + $0x30] sm:$0xff]
        %v548 = vld [vmem:[%s368 + $0x38] sm:$0xff]
        %v549 = vld [vmem:[%s368 + $0x40] sm:$0xff]
        %v550 = vld [vmem:[%s368 + $0x48] sm:$0xff]
        %v551 = vld [vmem:[%s368 + $0x50] sm:$0xff]
        %v552 = vld [vmem:[%s368 + $0x58] sm:$0xff]
        %v553 = vld [vmem:[%s368 + $0x60] sm:$0xff]
        %v554 = vld [vmem:[%s368 + $0x68] sm:$0xff]
        %v555 = vld [vmem:[%s368 + $0x70] sm:$0xff]
        %v556 = vld [vmem:[%s368 + $0x78] sm:$0xff]
        %v557 = vld [vmem:[%s368 + $0x80] sm:$0xff]
        %v558 = vld [vmem:[%s368 + $0x88] sm:$0xff]
        %v559 = vld [vmem:[%s368 + $0x90] sm:$0xff]
        %v560 = vld [vmem:[%s368 + $0x98] sm:$0xff]
        %v561 = vld [vmem:[%s368 + $0xa0] sm:$0xff]
        %v562 = vld [vmem:[%s368 + $0xa8] sm:$0xff]
        %v563 = vld [vmem:[%s368 + $0xb0] sm:$0xff]
        %v564 = vld [vmem:[%s368 + $0xb8] sm:$0xff]
        %v565 = vld [vmem:[%s368 + $0xc0] sm:$0xff]
        %v566 = vld [vmem:[%s368 + $0xc8] sm:$0xff]
        %v567 = vld [vmem:[%s368 + $0xd0] sm:$0xff]
        %v568 = vld [vmem:[%s368 + $0xd8] sm:$0xff]
        %v569 = vld [vmem:[%s368 + $0xe0] sm:$0xff]
        %v570 = vld [vmem:[%s368 + $0xe8] sm:$0xff]
        %v571 = vld [vmem:[%s368 + $0xf0] sm:$0xff]
        %v572 = vld [vmem:[%s368 + $0xf8] sm:$0xff]
        %v605 = vunpack.c.l.b16 %v509
        %v606 = vunpack.c.h.b16 %v509
        %v607 = vunpack.c.l.b16 %v510
        %v608 = vunpack.c.h.b16 %v510
        %v609 = vunpack.c.l.b16 %v511
        %v610 = vunpack.c.h.b16 %v511
        %v611 = vunpack.c.l.b16 %v512
        %v612 = vunpack.c.h.b16 %v512
        %v613 = vunpack.c.l.b16 %v513
        %v614 = vunpack.c.h.b16 %v513
        %v615 = vunpack.c.l.b16 %v514
        %v616 = vunpack.c.h.b16 %v514
        %v617 = vunpack.c.l.b16 %v515
        %v618 = vunpack.c.h.b16 %v515
        %v619 = vunpack.c.l.b16 %v516
        %v620 = vunpack.c.h.b16 %v516
        %v621 = vunpack.c.l.b16 %v517
        %v622 = vunpack.c.h.b16 %v517
        %v623 = vunpack.c.l.b16 %v518
        %v624 = vunpack.c.h.b16 %v518
        %v625 = vunpack.c.l.b16 %v519
        %v626 = vunpack.c.h.b16 %v519
        %v627 = vunpack.c.l.b16 %v520
        %v628 = vunpack.c.h.b16 %v520
        %v629 = vunpack.c.l.b16 %v521
        %v630 = vunpack.c.h.b16 %v521
        %v631 = vunpack.c.l.b16 %v522
        %v632 = vunpack.c.h.b16 %v522
        %v633 = vunpack.c.l.b16 %v523
        %v634 = vunpack.c.h.b16 %v523
        %v635 = vunpack.c.l.b16 %v524
        %v636 = vunpack.c.h.b16 %v524
        %v637 = vunpack.c.l.b16 %v525
        %v638 = vunpack.c.h.b16 %v525
        %v639 = vunpack.c.l.b16 %v526
        %v640 = vunpack.c.h.b16 %v526
        %v641 = vunpack.c.l.b16 %v527
        %v642 = vunpack.c.h.b16 %v527
        %v643 = vunpack.c.l.b16 %v528
        %v644 = vunpack.c.h.b16 %v528
        %v645 = vunpack.c.l.b16 %v529
        %v646 = vunpack.c.h.b16 %v529
        %v647 = vunpack.c.l.b16 %v530
        %v648 = vunpack.c.h.b16 %v530
        %v649 = vunpack.c.l.b16 %v531
        %v650 = vunpack.c.h.b16 %v531
        %v651 = vunpack.c.l.b16 %v532
        %v652 = vunpack.c.h.b16 %v532
        %v653 = vunpack.c.l.b16 %v533
        %v654 = vunpack.c.h.b16 %v533
        %v655 = vunpack.c.l.b16 %v534
        %v656 = vunpack.c.h.b16 %v534
        %v657 = vunpack.c.l.b16 %v535
        %v658 = vunpack.c.h.b16 %v535
        %v659 = vunpack.c.l.b16 %v536
        %v660 = vunpack.c.h.b16 %v536
        %v661 = vunpack.c.l.b16 %v537
        %v662 = vunpack.c.h.b16 %v537
        %v663 = vunpack.c.l.b16 %v538
        %v664 = vunpack.c.h.b16 %v538
        %v665 = vunpack.c.l.b16 %v539
        %v666 = vunpack.c.h.b16 %v539
        %v667 = vunpack.c.l.b16 %v540
        %v668 = vunpack.c.h.b16 %v540
        %v669 = vpack.c.b16 %v607, %v605
        %v670 = vpack.c.b16 %v608, %v606
        %v671 = vpack.c.b16 %v611, %v609
        %v672 = vpack.c.b16 %v612, %v610
        %v673 = vpack.c.b16 %v615, %v613
        %v674 = vpack.c.b16 %v616, %v614
        %v675 = vpack.c.b16 %v619, %v617
        %v676 = vpack.c.b16 %v620, %v618
        %v677 = vpack.c.b16 %v623, %v621
        %v678 = vpack.c.b16 %v624, %v622
        %v679 = vpack.c.b16 %v627, %v625
        %v680 = vpack.c.b16 %v628, %v626
        %v681 = vpack.c.b16 %v631, %v629
        %v682 = vpack.c.b16 %v632, %v630
        %v683 = vpack.c.b16 %v635, %v633
        %v684 = vpack.c.b16 %v636, %v634
        %v685 = vpack.c.b16 %v639, %v637
        %v686 = vpack.c.b16 %v640, %v638
        %v687 = vpack.c.b16 %v643, %v641
        %v688 = vpack.c.b16 %v644, %v642
        %v689 = vpack.c.b16 %v647, %v645
        %v690 = vpack.c.b16 %v648, %v646
        %v691 = vpack.c.b16 %v651, %v649
        %v692 = vpack.c.b16 %v652, %v650
        %v693 = vpack.c.b16 %v655, %v653
        %v694 = vpack.c.b16 %v656, %v654
        %v695 = vpack.c.b16 %v659, %v657
        %v696 = vpack.c.b16 %v660, %v658
        %v697 = vpack.c.b16 %v663, %v661
        %v698 = vpack.c.b16 %v664, %v662
        %v699 = vpack.c.b16 %v667, %v665
        %v700 = vpack.c.b16 %v668, %v666
        %v765 = vunpack.c.l.b16 %v541
        %v766 = vunpack.c.h.b16 %v541
        %v767 = vunpack.c.l.b16 %v542
        %v768 = vunpack.c.h.b16 %v542
        %v769 = vunpack.c.l.b16 %v543
        %v770 = vunpack.c.h.b16 %v543
        %v771 = vunpack.c.l.b16 %v544
        %v772 = vunpack.c.h.b16 %v544
        %v773 = vunpack.c.l.b16 %v545
        %v774 = vunpack.c.h.b16 %v545
        %v775 = vunpack.c.l.b16 %v546
        %v776 = vunpack.c.h.b16 %v546
        %v777 = vunpack.c.l.b16 %v547
        %v778 = vunpack.c.h.b16 %v547
        %v779 = vunpack.c.l.b16 %v548
        %v780 = vunpack.c.h.b16 %v548
        %v781 = vunpack.c.l.b16 %v549
        %v782 = vunpack.c.h.b16 %v549
        %v783 = vunpack.c.l.b16 %v550
        %v784 = vunpack.c.h.b16 %v550
        %v785 = vunpack.c.l.b16 %v551
        %v786 = vunpack.c.h.b16 %v551
        %v787 = vunpack.c.l.b16 %v552
        %v788 = vunpack.c.h.b16 %v552
        %v789 = vunpack.c.l.b16 %v553
        %v790 = vunpack.c.h.b16 %v553
        %v791 = vunpack.c.l.b16 %v554
        %v792 = vunpack.c.h.b16 %v554
        %v793 = vunpack.c.l.b16 %v555
        %v794 = vunpack.c.h.b16 %v555
        %v795 = vunpack.c.l.b16 %v556
        %v796 = vunpack.c.h.b16 %v556
        %v797 = vunpack.c.l.b16 %v557
        %v798 = vunpack.c.h.b16 %v557
        %v799 = vunpack.c.l.b16 %v558
        %v800 = vunpack.c.h.b16 %v558
        %v801 = vunpack.c.l.b16 %v559
        %v802 = vunpack.c.h.b16 %v559
        %v803 = vunpack.c.l.b16 %v560
        %v804 = vunpack.c.h.b16 %v560
        %v805 = vunpack.c.l.b16 %v561
        %v806 = vunpack.c.h.b16 %v561
        %v807 = vunpack.c.l.b16 %v562
        %v808 = vunpack.c.h.b16 %v562
        %v809 = vunpack.c.l.b16 %v563
        %v810 = vunpack.c.h.b16 %v563
        %v811 = vunpack.c.l.b16 %v564
        %v812 = vunpack.c.h.b16 %v564
        %v813 = vunpack.c.l.b16 %v565
        %v814 = vunpack.c.h.b16 %v565
        %v815 = vunpack.c.l.b16 %v566
        %v816 = vunpack.c.h.b16 %v566
        %v817 = vunpack.c.l.b16 %v567
        %v818 = vunpack.c.h.b16 %v567
        %v819 = vunpack.c.l.b16 %v568
        %v820 = vunpack.c.h.b16 %v568
        %v821 = vunpack.c.l.b16 %v569
        %v822 = vunpack.c.h.b16 %v569
        %v823 = vunpack.c.l.b16 %v570
        %v824 = vunpack.c.h.b16 %v570
        %v825 = vunpack.c.l.b16 %v571
        %v826 = vunpack.c.h.b16 %v571
        %v827 = vunpack.c.l.b16 %v572
        %v828 = vunpack.c.h.b16 %v572
        %v829 = vpack.c.b16 %v767, %v765
        %v830 = vpack.c.b16 %v768, %v766
        %v831 = vpack.c.b16 %v771, %v769
        %v832 = vpack.c.b16 %v772, %v770
        %v833 = vpack.c.b16 %v775, %v773
        %v834 = vpack.c.b16 %v776, %v774
        %v835 = vpack.c.b16 %v779, %v777
        %v836 = vpack.c.b16 %v780, %v778
        %v837 = vpack.c.b16 %v783, %v781
        %v838 = vpack.c.b16 %v784, %v782
        %v839 = vpack.c.b16 %v787, %v785
        %v840 = vpack.c.b16 %v788, %v786
        %v841 = vpack.c.b16 %v791, %v789
        %v842 = vpack.c.b16 %v792, %v790
        %v843 = vpack.c.b16 %v795, %v793
        %v844 = vpack.c.b16 %v796, %v794
        %v845 = vpack.c.b16 %v799, %v797
        %v846 = vpack.c.b16 %v800, %v798
        %v847 = vpack.c.b16 %v803, %v801
        %v848 = vpack.c.b16 %v804, %v802
        %v849 = vpack.c.b16 %v807, %v805
        %v850 = vpack.c.b16 %v808, %v806
        %v851 = vpack.c.b16 %v811, %v809
        %v852 = vpack.c.b16 %v812, %v810
        %v853 = vpack.c.b16 %v815, %v813
        %v854 = vpack.c.b16 %v816, %v814
        %v855 = vpack.c.b16 %v819, %v817
        %v856 = vpack.c.b16 %v820, %v818
        %v857 = vpack.c.b16 %v823, %v821
        %v858 = vpack.c.b16 %v824, %v822
        %v859 = vpack.c.b16 %v827, %v825
        %v860 = vpack.c.b16 %v828, %v826
        %893 = vmatprep.subr.bf16.mxu0 %v830
        %894 = vmatpush1.bf16.msra.mxu0 %v829
        %895 = vmatprep.subr.bf16.mxu0 %v832
        %896 = vmatpush1.bf16.msra.mxu0 %v831
        %897 = vmatprep.subr.bf16.mxu0 %v834
        %898 = vmatpush1.bf16.msra.mxu0 %v833
        %899 = vmatprep.subr.bf16.mxu0 %v836
        %900 = vmatpush1.bf16.msra.mxu0 %v835
        %901 = vmatprep.subr.bf16.mxu0 %v838
        %902 = vmatpush1.bf16.msra.mxu0 %v837
        %903 = vmatprep.subr.bf16.mxu0 %v840
        %904 = vmatpush1.bf16.msra.mxu0 %v839
        %905 = vmatprep.subr.bf16.mxu0 %v842
        %906 = vmatpush1.bf16.msra.mxu0 %v841
        %907 = vmatprep.subr.bf16.mxu0 %v844
        %908 = vmatpush1.bf16.msra.mxu0 %v843
        %909 = vmatprep.subr.bf16.mxu0 %v846
        %910 = vmatpush1.bf16.msra.mxu0 %v845
        %911 = vmatprep.subr.bf16.mxu0 %v848
        %912 = vmatpush1.bf16.msra.mxu0 %v847
        %913 = vmatprep.subr.bf16.mxu0 %v850
        %914 = vmatpush1.bf16.msra.mxu0 %v849
        %915 = vmatprep.subr.bf16.mxu0 %v852
        %916 = vmatpush1.bf16.msra.mxu0 %v851
        %917 = vmatprep.subr.bf16.mxu0 %v854
        %918 = vmatpush1.bf16.msra.mxu0 %v853
        %919 = vmatprep.subr.bf16.mxu0 %v856
        %920 = vmatpush1.bf16.msra.mxu0 %v855
        %921 = vmatprep.subr.bf16.mxu0 %v858
        %922 = vmatpush1.bf16.msra.mxu0 %v857
        %923 = vmatprep.subr.bf16.mxu0 %v860
        %924 = vmatpush1.bf16.msra.mxu0 %v859
        %925 = vmatprep.mubr.bf16.mxu0 %v670
        %926 = vmatmul.mubr.bf16.gmra.mrb[0].mxu0 %v669
        %v927 = vpop.f32.mrb[0].mxu0
        %v928 = vadd.f32 0.0, %v927
        %v929 = vpop.f32.mrb[0].mxu0
        %v930 = vadd.f32 0.0, %v929
        %v931 = vpop.f32.mrb[0].mxu0
        %v932 = vadd.f32 0.0, %v931
        %v933 = vpop.f32.mrb[0].mxu0
        %v934 = vadd.f32 0.0, %v933
        %935 = vmatprep.mubr.bf16.mxu0 %v672
        %936 = vmatmul.mubr.bf16.gmra.mrb[0].mxu0 %v671
        %v937 = vpop.f32.mrb[0].mxu0
        %v938 = vadd.f32 0.0, %v937
        %v939 = vpop.f32.mrb[0].mxu0
        %v940 = vadd.f32 0.0, %v939
        %v941 = vpop.f32.mrb[0].mxu0
        %v942 = vadd.f32 0.0, %v941
        %v943 = vpop.f32.mrb[0].mxu0
        %v944 = vadd.f32 0.0, %v943
        %945 = vmatprep.mubr.bf16.mxu0 %v674
        %946 = vmatmul.mubr.bf16.gmra.mrb[0].mxu0 %v673
        %v947 = vpop.f32.mrb[0].mxu0
        %v948 = vadd.f32 0.0, %v947
        %v949 = vpop.f32.mrb[0].mxu0
        %v950 = vadd.f32 0.0, %v949
        %v951 = vpop.f32.mrb[0].mxu0
        %v952 = vadd.f32 0.0, %v951
        %v953 = vpop.f32.mrb[0].mxu0
        %v954 = vadd.f32 0.0, %v953
        %955 = vmatprep.mubr.bf16.mxu0 %v676
        %956 = vmatmul.mubr.bf16.gmra.mrb[0].mxu0 %v675
        %v957 = vpop.f32.mrb[0].mxu0
        %v958 = vadd.f32 0.0, %v957
        %v959 = vpop.f32.mrb[0].mxu0
        %v960 = vadd.f32 0.0, %v959
        %v961 = vpop.f32.mrb[0].mxu0
        %v962 = vadd.f32 0.0, %v961
        %v963 = vpop.f32.mrb[0].mxu0
        %v964 = vadd.f32 0.0, %v963
        %965 = vmatprep.mubr.bf16.mxu0 %v678
        %966 = vmatmul.mubr.bf16.gmra.mrb[0].mxu0 %v677
        %v967 = vpop.f32.mrb[0].mxu0
        %v968 = vadd.f32 0.0, %v967
        %v969 = vpop.f32.mrb[0].mxu0
        %v970 = vadd.f32 0.0, %v969
        %v971 = vpop.f32.mrb[0].mxu0
        %v972 = vadd.f32 0.0, %v971
        %v973 = vpop.f32.mrb[0].mxu0
        %v974 = vadd.f32 0.0, %v973
        %975 = vmatprep.mubr.bf16.mxu0 %v680
        %976 = vmatmul.mubr.bf16.gmra.mrb[0].mxu0 %v679
        %v977 = vpop.f32.mrb[0].mxu0
        %v978 = vadd.f32 0.0, %v977
        %v979 = vpop.f32.mrb[0].mxu0
        %v980 = vadd.f32 0.0, %v979
        %v981 = vpop.f32.mrb[0].mxu0
        %v982 = vadd.f32 0.0, %v981
        %v983 = vpop.f32.mrb[0].mxu0
        %v984 = vadd.f32 0.0, %v983
        %985 = vmatprep.mubr.bf16.mxu0 %v682
        %986 = vmatmul.mubr.bf16.gmra.mrb[0].mxu0 %v681
        %v987 = vpop.f32.mrb[0].mxu0
        %v988 = vadd.f32 0.0, %v987
        %v989 = vpop.f32.mrb[0].mxu0
        %v990 = vadd.f32 0.0, %v989
        %v991 = vpop.f32.mrb[0].mxu0
        %v992 = vadd.f32 0.0, %v991
        %v993 = vpop.f32.mrb[0].mxu0
        %v994 = vadd.f32 0.0, %v993
        %995 = vmatprep.mubr.bf16.mxu0 %v684
        %996 = vmatmul.mubr.bf16.gmra.mrb[0].mxu0 %v683
        %v997 = vpop.f32.mrb[0].mxu0
        %v998 = vadd.f32 0.0, %v997
        %v999 = vpop.f32.mrb[0].mxu0
        %v1000 = vadd.f32 0.0, %v999
        %v1001 = vpop.f32.mrb[0].mxu0
        %v1002 = vadd.f32 0.0, %v1001
        %v1003 = vpop.f32.mrb[0].mxu0
        %v1004 = vadd.f32 0.0, %v1003
        %1005 = vmatprep.mubr.bf16.mxu0 %v686
        %1006 = vmatmul.mubr.bf16.gmra.mrb[0].mxu0 %v685
        %v1007 = vpop.f32.mrb[0].mxu0
        %v1008 = vadd.f32 0.0, %v1007
        %v1009 = vpop.f32.mrb[0].mxu0
        %v1010 = vadd.f32 0.0, %v1009
        %v1011 = vpop.f32.mrb[0].mxu0
        %v1012 = vadd.f32 0.0, %v1011
        %v1013 = vpop.f32.mrb[0].mxu0
        %v1014 = vadd.f32 0.0, %v1013
        %1015 = vmatprep.mubr.bf16.mxu0 %v688
        %1016 = vmatmul.mubr.bf16.gmra.mrb[0].mxu0 %v687
        %v1017 = vpop.f32.mrb[0].mxu0
        %v1018 = vadd.f32 0.0, %v1017
        %v1019 = vpop.f32.mrb[0].mxu0
        %v1020 = vadd.f32 0.0, %v1019
        %v1021 = vpop.f32.mrb[0].mxu0
        %v1022 = vadd.f32 0.0, %v1021
        %v1023 = vpop.f32.mrb[0].mxu0
        %v1024 = vadd.f32 0.0, %v1023
        %1025 = vmatprep.mubr.bf16.mxu0 %v690
        %1026 = vmatmul.mubr.bf16.gmra.mrb[0].mxu0 %v689
        %v1027 = vpop.f32.mrb[0].mxu0
        %v1028 = vadd.f32 0.0, %v1027
        %v1029 = vpop.f32.mrb[0].mxu0
        %v1030 = vadd.f32 0.0, %v1029
        %v1031 = vpop.f32.mrb[0].mxu0
        %v1032 = vadd.f32 0.0, %v1031
        %v1033 = vpop.f32.mrb[0].mxu0
        %v1034 = vadd.f32 0.0, %v1033
        %1035 = vmatprep.mubr.bf16.mxu0 %v692
        %1036 = vmatmul.mubr.bf16.gmra.mrb[0].mxu0 %v691
        %v1037 = vpop.f32.mrb[0].mxu0
        %v1038 = vadd.f32 0.0, %v1037
        %v1039 = vpop.f32.mrb[0].mxu0
        %v1040 = vadd.f32 0.0, %v1039
        %v1041 = vpop.f32.mrb[0].mxu0
        %v1042 = vadd.f32 0.0, %v1041
        %v1043 = vpop.f32.mrb[0].mxu0
        %v1044 = vadd.f32 0.0, %v1043
        %1045 = vmatprep.mubr.bf16.mxu0 %v694
        %1046 = vmatmul.mubr.bf16.gmra.mrb[0].mxu0 %v693
        %v1047 = vpop.f32.mrb[0].mxu0
        %v1048 = vadd.f32 0.0, %v1047
        %v1049 = vpop.f32.mrb[0].mxu0
        %v1050 = vadd.f32 0.0, %v1049
        %v1051 = vpop.f32.mrb[0].mxu0
        %v1052 = vadd.f32 0.0, %v1051
        %v1053 = vpop.f32.mrb[0].mxu0
        %v1054 = vadd.f32 0.0, %v1053
        %1055 = vmatprep.mubr.bf16.mxu0 %v696
        %1056 = vmatmul.mubr.bf16.gmra.mrb[0].mxu0 %v695
        %v1057 = vpop.f32.mrb[0].mxu0
        %v1058 = vadd.f32 0.0, %v1057
        %v1059 = vpop.f32.mrb[0].mxu0
        %v1060 = vadd.f32 0.0, %v1059
        %v1061 = vpop.f32.mrb[0].mxu0
        %v1062 = vadd.f32 0.0, %v1061
        %v1063 = vpop.f32.mrb[0].mxu0
        %v1064 = vadd.f32 0.0, %v1063
        %1065 = vmatprep.mubr.bf16.mxu0 %v698
        %1066 = vmatmul.mubr.bf16.gmra.mrb[0].mxu0 %v697
        %v1067 = vpop.f32.mrb[0].mxu0
        %v1068 = vadd.f32 0.0, %v1067
        %v1069 = vpop.f32.mrb[0].mxu0
        %v1070 = vadd.f32 0.0, %v1069
        %v1071 = vpop.f32.mrb[0].mxu0
        %v1072 = vadd.f32 0.0, %v1071
        %v1073 = vpop.f32.mrb[0].mxu0
        %v1074 = vadd.f32 0.0, %v1073
        %1075 = vmatprep.mubr.bf16.mxu0 %v700
        %1076 = vmatmul.mubr.bf16.gmra.mrb[0].mxu0 %v699
        %v1077 = vpop.f32.mrb[0].mxu0
        %v1078 = vadd.f32 0.0, %v1077
        %v1079 = vpop.f32.mrb[0].mxu0
        %v1080 = vadd.f32 0.0, %v1079
        %v1081 = vpop.f32.mrb[0].mxu0
        %v1082 = vadd.f32 0.0, %v1081
        %v1083 = vpop.f32.mrb[0].mxu0
        %v1084 = vadd.f32 0.0, %v1083
        %1085 = vdwg.mxu0
        %v1086 = vadd.f32 %v445, %v928
        %v1087 = vadd.f32 %v446, %v930
        %v1088 = vadd.f32 %v447, %v932
        %v1089 = vadd.f32 %v448, %v934
        %v1090 = vadd.f32 %v449, %v938
        %v1091 = vadd.f32 %v450, %v940
        %v1092 = vadd.f32 %v451, %v942
        %v1093 = vadd.f32 %v452, %v944
        %v1094 = vadd.f32 %v453, %v948
        %v1095 = vadd.f32 %v454, %v950
        %v1096 = vadd.f32 %v455, %v952
        %v1097 = vadd.f32 %v456, %v954
        %v1098 = vadd.f32 %v457, %v958
        %v1099 = vadd.f32 %v458, %v960
        %v1100 = vadd.f32 %v459, %v962
        %v1101 = vadd.f32 %v460, %v964
        %v1102 = vadd.f32 %v461, %v968
        %v1103 = vadd.f32 %v462, %v970
        %v1104 = vadd.f32 %v463, %v972
        %v1105 = vadd.f32 %v464, %v974
        %v1106 = vadd.f32 %v465, %v978
        %v1107 = vadd.f32 %v466, %v980
        %v1108 = vadd.f32 %v467, %v982
        %v1109 = vadd.f32 %v468, %v984
        %v1110 = vadd.f32 %v469, %v988
        %v1111 = vadd.f32 %v470, %v990
        %v1112 = vadd.f32 %v471, %v992
        %v1113 = vadd.f32 %v472, %v994
        %v1114 = vadd.f32 %v473, %v998
        %v1115 = vadd.f32 %v474, %v1000
        %v1116 = vadd.f32 %v475, %v1002
        %v1117 = vadd.f32 %v476, %v1004
        %v1118 = vadd.f32 %v477, %v1008
        %v1119 = vadd.f32 %v478, %v1010
        %v1120 = vadd.f32 %v479, %v1012
        %v1121 = vadd.f32 %v480, %v1014
        %v1122 = vadd.f32 %v481, %v1018
        %v1123 = vadd.f32 %v482, %v1020
        %v1124 = vadd.f32 %v483, %v1022
        %v1125 = vadd.f32 %v484, %v1024
        %v1126 = vadd.f32 %v485, %v1028
        %v1127 = vadd.f32 %v486, %v1030
        %v1128 = vadd.f32 %v487, %v1032
        %v1129 = vadd.f32 %v488, %v1034
        %v1130 = vadd.f32 %v489, %v1038
        %v1131 = vadd.f32 %v490, %v1040
        %v1132 = vadd.f32 %v491, %v1042
        %v1133 = vadd.f32 %v492, %v1044
        %v1134 = vadd.f32 %v493, %v1048
        %v1135 = vadd.f32 %v494, %v1050
        %v1136 = vadd.f32 %v495, %v1052
        %v1137 = vadd.f32 %v496, %v1054
        %v1138 = vadd.f32 %v497, %v1058
        %v1139 = vadd.f32 %v498, %v1060
        %v1140 = vadd.f32 %v499, %v1062
        %v1141 = vadd.f32 %v500, %v1064
        %v1142 = vadd.f32 %v501, %v1068
        %v1143 = vadd.f32 %v502, %v1070
        %v1144 = vadd.f32 %v503, %v1072
        %v1145 = vadd.f32 %v504, %v1074
        %v1146 = vadd.f32 %v505, %v1078
        %v1147 = vadd.f32 %v506, %v1080
        %v1148 = vadd.f32 %v507, %v1082
        %v1149 = vadd.f32 %v508, %v1084
        %1150 = vst [vmem:[#allocation2] sm:$0xff] %v1086
        %1151 = vst [vmem:[#allocation2 + $0x8] sm:$0xff] %v1087
        %1152 = vst [vmem:[#allocation2 + $0x10] sm:$0xff] %v1088
        %1153 = vst [vmem:[#allocation2 + $0x18] sm:$0xff] %v1089
        %1154 = vst [vmem:[#allocation2 + $0x20] sm:$0xff] %v1090
        %1155 = vst [vmem:[#allocation2 + $0x28] sm:$0xff] %v1091
        %1156 = vst [vmem:[#allocation2 + $0x30] sm:$0xff] %v1092
        %1157 = vst [vmem:[#allocation2 + $0x38] sm:$0xff] %v1093
        %1158 = vst [vmem:[#allocation2 + $0x40] sm:$0xff] %v1094
        %1159 = vst [vmem:[#allocation2 + $0x48] sm:$0xff] %v1095
        %1160 = vst [vmem:[#allocation2 + $0x50] sm:$0xff] %v1096
        %1161 = vst [vmem:[#allocation2 + $0x58] sm:$0xff] %v1097
        %1162 = vst [vmem:[#allocation2 + $0x60] sm:$0xff] %v1098
        %1163 = vst [vmem:[#allocation2 + $0x68] sm:$0xff] %v1099
        %1164 = vst [vmem:[#allocation2 + $0x70] sm:$0xff] %v1100
        %1165 = vst [vmem:[#allocation2 + $0x78] sm:$0xff] %v1101
        %1166 = vst [vmem:[#allocation2 + $0x80] sm:$0xff] %v1102
        %1167 = vst [vmem:[#allocation2 + $0x88] sm:$0xff] %v1103
        %1168 = vst [vmem:[#allocation2 + $0x90] sm:$0xff] %v1104
        %1169 = vst [vmem:[#allocation2 + $0x98] sm:$0xff] %v1105
        %1170 = vst [vmem:[#allocation2 + $0xa0] sm:$0xff] %v1106
        %1171 = vst [vmem:[#allocation2 + $0xa8] sm:$0xff] %v1107
        %1172 = vst [vmem:[#allocation2 + $0xb0] sm:$0xff] %v1108
        %1173 = vst [vmem:[#allocation2 + $0xb8] sm:$0xff] %v1109
        %1174 = vst [vmem:[#allocation2 + $0xc0] sm:$0xff] %v1110
        %1175 = vst [vmem:[#allocation2 + $0xc8] sm:$0xff] %v1111
        %1176 = vst [vmem:[#allocation2 + $0xd0] sm:$0xff] %v1112
        %1177 = vst [vmem:[#allocation2 + $0xd8] sm:$0xff] %v1113
        %1178 = vst [vmem:[#allocation2 + $0xe0] sm:$0xff] %v1114
        %1179 = vst [vmem:[#allocation2 + $0xe8] sm:$0xff] %v1115
        %1180 = vst [vmem:[#allocation2 + $0xf0] sm:$0xff] %v1116
        %1181 = vst [vmem:[#allocation2 + $0xf8] sm:$0xff] %v1117
        %1182 = vst [vmem:[#allocation2 + $0x100] sm:$0xff] %v1118
        %1183 = vst [vmem:[#allocation2 + $0x108] sm:$0xff] %v1119
        %1184 = vst [vmem:[#allocation2 + $0x110] sm:$0xff] %v1120
        %1185 = vst [vmem:[#allocation2 + $0x118] sm:$0xff] %v1121
        %1186 = vst [vmem:[#allocation2 + $0x120] sm:$0xff] %v1122
        %1187 = vst [vmem:[#allocation2 + $0x128] sm:$0xff] %v1123
        %1188 = vst [vmem:[#allocation2 + $0x130] sm:$0xff] %v1124
        %1189 = vst [vmem:[#allocation2 + $0x138] sm:$0xff] %v1125
        %1190 = vst [vmem:[#allocation2 + $0x140] sm:$0xff] %v1126
        %1191 = vst [vmem:[#allocation2 + $0x148] sm:$0xff] %v1127
        %1192 = vst [vmem:[#allocation2 + $0x150] sm:$0xff] %v1128
        %1193 = vst [vmem:[#allocation2 + $0x158] sm:$0xff] %v1129
        %1194 = vst [vmem:[#allocation2 + $0x160] sm:$0xff] %v1130
        %1195 = vst [vmem:[#allocation2 + $0x168] sm:$0xff] %v1131
        %1196 = vst [vmem:[#allocation2 + $0x170] sm:$0xff] %v1132
        %1197 = vst [vmem:[#allocation2 + $0x178] sm:$0xff] %v1133
        %1198 = vst [vmem:[#allocation2 + $0x180] sm:$0xff] %v1134
        %1199 = vst [vmem:[#allocation2 + $0x188] sm:$0xff] %v1135
        %1200 = vst [vmem:[#allocation2 + $0x190] sm:$0xff] %v1136
        %1201 = vst [vmem:[#allocation2 + $0x198] sm:$0xff] %v1137
        %1202 = vst [vmem:[#allocation2 + $0x1a0] sm:$0xff] %v1138
        %1203 = vst [vmem:[#allocation2 + $0x1a8] sm:$0xff] %v1139
        %1204 = vst [vmem:[#allocation2 + $0x1b0] sm:$0xff] %v1140
        %1205 = vst [vmem:[#allocation2 + $0x1b8] sm:$0xff] %v1141
        %1206 = vst [vmem:[#allocation2 + $0x1c0] sm:$0xff] %v1142
        %1207 = vst [vmem:[#allocation2 + $0x1c8] sm:$0xff] %v1143
        %1208 = vst [vmem:[#allocation2 + $0x1d0] sm:$0xff] %v1144
        %1209 = vst [vmem:[#allocation2 + $0x1d8] sm:$0xff] %v1145
        %1210 = vst [vmem:[#allocation2 + $0x1e0] sm:$0xff] %v1146
        %1211 = vst [vmem:[#allocation2 + $0x1e8] sm:$0xff] %v1147
        %1212 = vst [vmem:[#allocation2 + $0x1f0] sm:$0xff] %v1148
        %1213 = vst [vmem:[#allocation2 + $0x1f8] sm:$0xff] %v1149
        %p1214 = scmp.eq.s32.totalorder %s19, 8
        // Predicated region
        $region75: #{nbs_deeplab_head_forward.14} parent=65 // pred_check
          %p1215 = pneg %p1214
        $region76: #{nbs_deeplab_head_forward.14} parent=65 // pred_check_branch
          %1217 = sbr.rel (%p1215) target = $region78
        $region77: #{nbs_deeplab_head_forward.14} parent=65 // pred_region
          %v1218 = vld [vmem:[#allocation2] sm:$0xff]
          %v1219 = vld [vmem:[#allocation2 + $0x8] sm:$0xff]
          %v1220 = vld [vmem:[#allocation2 + $0x10] sm:$0xff]
          %v1221 = vld [vmem:[#allocation2 + $0x18] sm:$0xff]
          %v1222 = vld [vmem:[#allocation2 + $0x20] sm:$0xff]
          %v1223 = vld [vmem:[#allocation2 + $0x28] sm:$0xff]
          %v1224 = vld [vmem:[#allocation2 + $0x30] sm:$0xff]
          %v1225 = vld [vmem:[#allocation2 + $0x38] sm:$0xff]
          %v1226 = vld [vmem:[#allocation2 + $0x40] sm:$0xff]
          %v1227 = vld [vmem:[#allocation2 + $0x48] sm:$0xff]
          %v1228 = vld [vmem:[#allocation2 + $0x50] sm:$0xff]
          %v1229 = vld [vmem:[#allocation2 + $0x58] sm:$0xff]
          %v1230 = vld [vmem:[#allocation2 + $0x60] sm:$0xff]
          %v1231 = vld [vmem:[#allocation2 + $0x68] sm:$0xff]
          %v1232 = vld [vmem:[#allocation2 + $0x70] sm:$0xff]
          %v1233 = vld [vmem:[#allocation2 + $0x78] sm:$0xff]
          %v1234 = vld [vmem:[#allocation2 + $0x80] sm:$0xff]
          %v1235 = vld [vmem:[#allocation2 + $0x88] sm:$0xff]
          %v1236 = vld [vmem:[#allocation2 + $0x90] sm:$0xff]
          %v1237 = vld [vmem:[#allocation2 + $0x98] sm:$0xff]
          %v1238 = vld [vmem:[#allocation2 + $0xa0] sm:$0xff]
          %v1239 = vld [vmem:[#allocation2 + $0xa8] sm:$0xff]
          %v1240 = vld [vmem:[#allocation2 + $0xb0] sm:$0xff]
          %v1241 = vld [vmem:[#allocation2 + $0xb8] sm:$0xff]
          %v1242 = vld [vmem:[#allocation2 + $0xc0] sm:$0xff]
          %v1243 = vld [vmem:[#allocation2 + $0xc8] sm:$0xff]
          %v1244 = vld [vmem:[#allocation2 + $0xd0] sm:$0xff]
          %v1245 = vld [vmem:[#allocation2 + $0xd8] sm:$0xff]
          %v1246 = vld [vmem:[#allocation2 + $0xe0] sm:$0xff]
          %v1247 = vld [vmem:[#allocation2 + $0xe8] sm:$0xff]
          %v1248 = vld [vmem:[#allocation2 + $0xf0] sm:$0xff]
          %v1249 = vld [vmem:[#allocation2 + $0xf8] sm:$0xff]
          %v1250 = vld [vmem:[#allocation2 + $0x100] sm:$0xff]
          %v1251 = vld [vmem:[#allocation2 + $0x108] sm:$0xff]
          %v1252 = vld [vmem:[#allocation2 + $0x110] sm:$0xff]
          %v1253 = vld [vmem:[#allocation2 + $0x118] sm:$0xff]
          %v1254 = vld [vmem:[#allocation2 + $0x120] sm:$0xff]
          %v1255 = vld [vmem:[#allocation2 + $0x128] sm:$0xff]
          %v1256 = vld [vmem:[#allocation2 + $0x130] sm:$0xff]
          %v1257 = vld [vmem:[#allocation2 + $0x138] sm:$0xff]
          %v1258 = vld [vmem:[#allocation2 + $0x140] sm:$0xff]
          %v1259 = vld [vmem:[#allocation2 + $0x148] sm:$0xff]
          %v1260 = vld [vmem:[#allocation2 + $0x150] sm:$0xff]
          %v1261 = vld [vmem:[#allocation2 + $0x158] sm:$0xff]
          %v1262 = vld [vmem:[#allocation2 + $0x160] sm:$0xff]
          %v1263 = vld [vmem:[#allocation2 + $0x168] sm:$0xff]
          %v1264 = vld [vmem:[#allocation2 + $0x170] sm:$0xff]
          %v1265 = vld [vmem:[#allocation2 + $0x178] sm:$0xff]
          %v1266 = vld [vmem:[#allocation2 + $0x180] sm:$0xff]
          %v1267 = vld [vmem:[#allocation2 + $0x188] sm:$0xff]
          %v1268 = vld [vmem:[#allocation2 + $0x190] sm:$0xff]
          %v1269 = vld [vmem:[#allocation2 + $0x198] sm:$0xff]
          %v1270 = vld [vmem:[#allocation2 + $0x1a0] sm:$0xff]
          %v1271 = vld [vmem:[#allocation2 + $0x1a8] sm:$0xff]
          %v1272 = vld [vmem:[#allocation2 + $0x1b0] sm:$0xff]
          %v1273 = vld [vmem:[#allocation2 + $0x1b8] sm:$0xff]
          %v1274 = vld [vmem:[#allocation2 + $0x1c0] sm:$0xff]
          %v1275 = vld [vmem:[#allocation2 + $0x1c8] sm:$0xff]
          %v1276 = vld [vmem:[#allocation2 + $0x1d0] sm:$0xff]
          %v1277 = vld [vmem:[#allocation2 + $0x1d8] sm:$0xff]
          %v1278 = vld [vmem:[#allocation2 + $0x1e0] sm:$0xff]
          %v1279 = vld [vmem:[#allocation2 + $0x1e8] sm:$0xff]
          %v1280 = vld [vmem:[#allocation2 + $0x1f0] sm:$0xff]
          %v1281 = vld [vmem:[#allocation2 + $0x1f8] sm:$0xff]
          %v1282 = vld [vmem:[%s2] sm:$0x3]
          %v1284 = vlaneseq
          %v1285 = vshrl.u32 %v1284, 7
          %v1286 = vsub.s32 0, %v1285
          %v1287 = vrot.slane %v1282, %v1286
          %v1288 = vlaneseq
          %v1289 = vshrl.u32 %v1288, 7
          %v1290 = vsub.s32 1, %v1289
          %v1291 = vrot.slane %v1282, %v1290
          %v1294 = vadd.f32 %v1218, %v1287
          %v1295 = vadd.f32 %v1219, %v1291
          %v1296 = vadd.f32 %v1220, %v1287
          %v1297 = vadd.f32 %v1221, %v1291
          %v1298 = vadd.f32 %v1222, %v1287
          %v1299 = vadd.f32 %v1223, %v1291
          %v1300 = vadd.f32 %v1224, %v1287
          %v1301 = vadd.f32 %v1225, %v1291
          %v1302 = vadd.f32 %v1226, %v1287
          %v1303 = vadd.f32 %v1227, %v1291
          %v1304 = vadd.f32 %v1228, %v1287
          %v1305 = vadd.f32 %v1229, %v1291
          %v1306 = vadd.f32 %v1230, %v1287
          %v1307 = vadd.f32 %v1231, %v1291
          %v1308 = vadd.f32 %v1232, %v1287
          %v1309 = vadd.f32 %v1233, %v1291
          %v1310 = vadd.f32 %v1234, %v1287
          %v1311 = vadd.f32 %v1235, %v1291
          %v1312 = vadd.f32 %v1236, %v1287
          %v1313 = vadd.f32 %v1237, %v1291
          %v1314 = vadd.f32 %v1238, %v1287
          %v1315 = vadd.f32 %v1239, %v1291
          %v1316 = vadd.f32 %v1240, %v1287
          %v1317 = vadd.f32 %v1241, %v1291
          %v1318 = vadd.f32 %v1242, %v1287
          %v1319 = vadd.f32 %v1243, %v1291
          %v1320 = vadd.f32 %v1244, %v1287
          %v1321 = vadd.f32 %v1245, %v1291
          %v1322 = vadd.f32 %v1246, %v1287
          %v1323 = vadd.f32 %v1247, %v1291
          %v1324 = vadd.f32 %v1248, %v1287
          %v1325 = vadd.f32 %v1249, %v1291
          %v1326 = vadd.f32 %v1250, %v1287
          %v1327 = vadd.f32 %v1251, %v1291
          %v1328 = vadd.f32 %v1252, %v1287
          %v1329 = vadd.f32 %v1253, %v1291
          %v1330 = vadd.f32 %v1254, %v1287
          %v1331 = vadd.f32 %v1255, %v1291
          %v1332 = vadd.f32 %v1256, %v1287
          %v1333 = vadd.f32 %v1257, %v1291
          %v1334 = vadd.f32 %v1258, %v1287
          %v1335 = vadd.f32 %v1259, %v1291
          %v1336 = vadd.f32 %v1260, %v1287
          %v1337 = vadd.f32 %v1261, %v1291
          %v1338 = vadd.f32 %v1262, %v1287
          %v1339 = vadd.f32 %v1263, %v1291
          %v1340 = vadd.f32 %v1264, %v1287
          %v1341 = vadd.f32 %v1265, %v1291
          %v1342 = vadd.f32 %v1266, %v1287
          %v1343 = vadd.f32 %v1267, %v1291
          %v1344 = vadd.f32 %v1268, %v1287
          %v1345 = vadd.f32 %v1269, %v1291
          %v1346 = vadd.f32 %v1270, %v1287
          %v1347 = vadd.f32 %v1271, %v1291
          %v1348 = vadd.f32 %v1272, %v1287
          %v1349 = vadd.f32 %v1273, %v1291
          %v1350 = vadd.f32 %v1274, %v1287
          %v1351 = vadd.f32 %v1275, %v1291
          %v1352 = vadd.f32 %v1276, %v1287
          %v1353 = vadd.f32 %v1277, %v1291
          %v1354 = vadd.f32 %v1278, %v1287
          %v1355 = vadd.f32 %v1279, %v1291
          %v1356 = vadd.f32 %v1280, %v1287
          %v1357 = vadd.f32 %v1281, %v1291
          %v1358 = vmax.f32 %v1294, 0.0
          %v1359 = vmax.f32 %v1295, 0.0
          %v1360 = vmax.f32 %v1296, 0.0
          %v1361 = vmax.f32 %v1297, 0.0
          %v1362 = vmax.f32 %v1298, 0.0
          %v1363 = vmax.f32 %v1299, 0.0
          %v1364 = vmax.f32 %v1300, 0.0
          %v1365 = vmax.f32 %v1301, 0.0
          %v1366 = vmax.f32 %v1302, 0.0
          %v1367 = vmax.f32 %v1303, 0.0
          %v1368 = vmax.f32 %v1304, 0.0
          %v1369 = vmax.f32 %v1305, 0.0
          %v1370 = vmax.f32 %v1306, 0.0
          %v1371 = vmax.f32 %v1307, 0.0
          %v1372 = vmax.f32 %v1308, 0.0
          %v1373 = vmax.f32 %v1309, 0.0
          %v1374 = vmax.f32 %v1310, 0.0
          %v1375 = vmax.f32 %v1311, 0.0
          %v1376 = vmax.f32 %v1312, 0.0
          %v1377 = vmax.f32 %v1313, 0.0
          %v1378 = vmax.f32 %v1314, 0.0
          %v1379 = vmax.f32 %v1315, 0.0
          %v1380 = vmax.f32 %v1316, 0.0
          %v1381 = vmax.f32 %v1317, 0.0
          %v1382 = vmax.f32 %v1318, 0.0
          %v1383 = vmax.f32 %v1319, 0.0
          %v1384 = vmax.f32 %v1320, 0.0
          %v1385 = vmax.f32 %v1321, 0.0
          %v1386 = vmax.f32 %v1322, 0.0
          %v1387 = vmax.f32 %v1323, 0.0
          %v1388 = vmax.f32 %v1324, 0.0
          %v1389 = vmax.f32 %v1325, 0.0
          %v1390 = vmax.f32 %v1326, 0.0
          %v1391 = vmax.f32 %v1327, 0.0
          %v1392 = vmax.f32 %v1328, 0.0
          %v1393 = vmax.f32 %v1329, 0.0
          %v1394 = vmax.f32 %v1330, 0.0
          %v1395 = vmax.f32 %v1331, 0.0
          %v1396 = vmax.f32 %v1332, 0.0
          %v1397 = vmax.f32 %v1333, 0.0
          %v1398 = vmax.f32 %v1334, 0.0
          %v1399 = vmax.f32 %v1335, 0.0
          %v1400 = vmax.f32 %v1336, 0.0
          %v1401 = vmax.f32 %v1337, 0.0
          %v1402 = vmax.f32 %v1338, 0.0
          %v1403 = vmax.f32 %v1339, 0.0
          %v1404 = vmax.f32 %v1340, 0.0
          %v1405 = vmax.f32 %v1341, 0.0
          %v1406 = vmax.f32 %v1342, 0.0
          %v1407 = vmax.f32 %v1343, 0.0
          %v1408 = vmax.f32 %v1344, 0.0
          %v1409 = vmax.f32 %v1345, 0.0
          %v1410 = vmax.f32 %v1346, 0.0
          %v1411 = vmax.f32 %v1347, 0.0
          %v1412 = vmax.f32 %v1348, 0.0
          %v1413 = vmax.f32 %v1349, 0.0
          %v1414 = vmax.f32 %v1350, 0.0
          %v1415 = vmax.f32 %v1351, 0.0
          %v1416 = vmax.f32 %v1352, 0.0
          %v1417 = vmax.f32 %v1353, 0.0
          %v1418 = vmax.f32 %v1354, 0.0
          %v1419 = vmax.f32 %v1355, 0.0
          %v1420 = vmax.f32 %v1356, 0.0
          %v1421 = vmax.f32 %v1357, 0.0
          %v1422 = vpack.c.bf16 %v1360, %v1358
          %v1423 = vpack.c.bf16 %v1361, %v1359
          %v1424 = vpack.c.bf16 %v1364, %v1362
          %v1425 = vpack.c.bf16 %v1365, %v1363
          %v1426 = vpack.c.bf16 %v1368, %v1366
          %v1427 = vpack.c.bf16 %v1369, %v1367
          %v1428 = vpack.c.bf16 %v1372, %v1370
          %v1429 = vpack.c.bf16 %v1373, %v1371
          %v1430 = vpack.c.bf16 %v1376, %v1374
          %v1431 = vpack.c.bf16 %v1377, %v1375
          %v1432 = vpack.c.bf16 %v1380, %v1378
          %v1433 = vpack.c.bf16 %v1381, %v1379
          %v1434 = vpack.c.bf16 %v1384, %v1382
          %v1435 = vpack.c.bf16 %v1385, %v1383
          %v1436 = vpack.c.bf16 %v1388, %v1386
          %v1437 = vpack.c.bf16 %v1389, %v1387
          %v1438 = vpack.c.bf16 %v1392, %v1390
          %v1439 = vpack.c.bf16 %v1393, %v1391
          %v1440 = vpack.c.bf16 %v1396, %v1394
          %v1441 = vpack.c.bf16 %v1397, %v1395
          %v1442 = vpack.c.bf16 %v1400, %v1398
          %v1443 = vpack.c.bf16 %v1401, %v1399
          %v1444 = vpack.c.bf16 %v1404, %v1402
          %v1445 = vpack.c.bf16 %v1405, %v1403
          %v1446 = vpack.c.bf16 %v1408, %v1406
          %v1447 = vpack.c.bf16 %v1409, %v1407
          %v1448 = vpack.c.bf16 %v1412, %v1410
          %v1449 = vpack.c.bf16 %v1413, %v1411
          %v1450 = vpack.c.bf16 %v1416, %v1414
          %v1451 = vpack.c.bf16 %v1417, %v1415
          %v1452 = vpack.c.bf16 %v1420, %v1418
          %v1453 = vpack.c.bf16 %v1421, %v1419
          %v1486 = vunpack.c.l.b16 %v1422
          %v1487 = vunpack.c.l.b16 %v1423
          %v1488 = vunpack.c.h.b16 %v1422
          %v1489 = vunpack.c.h.b16 %v1423
          %v1490 = vunpack.c.l.b16 %v1424
          %v1491 = vunpack.c.l.b16 %v1425
          %v1492 = vunpack.c.h.b16 %v1424
          %v1493 = vunpack.c.h.b16 %v1425
          %v1494 = vunpack.c.l.b16 %v1426
          %v1495 = vunpack.c.l.b16 %v1427
          %v1496 = vunpack.c.h.b16 %v1426
          %v1497 = vunpack.c.h.b16 %v1427
          %v1498 = vunpack.c.l.b16 %v1428
          %v1499 = vunpack.c.l.b16 %v1429
          %v1500 = vunpack.c.h.b16 %v1428
          %v1501 = vunpack.c.h.b16 %v1429
          %v1502 = vunpack.c.l.b16 %v1430
          %v1503 = vunpack.c.l.b16 %v1431
          %v1504 = vunpack.c.h.b16 %v1430
          %v1505 = vunpack.c.h.b16 %v1431
          %v1506 = vunpack.c.l.b16 %v1432
          %v1507 = vunpack.c.l.b16 %v1433
          %v1508 = vunpack.c.h.b16 %v1432
          %v1509 = vunpack.c.h.b16 %v1433
          %v1510 = vunpack.c.l.b16 %v1434
          %v1511 = vunpack.c.l.b16 %v1435
          %v1512 = vunpack.c.h.b16 %v1434
          %v1513 = vunpack.c.h.b16 %v1435
          %v1514 = vunpack.c.l.b16 %v1436
          %v1515 = vunpack.c.l.b16 %v1437
          %v1516 = vunpack.c.h.b16 %v1436
          %v1517 = vunpack.c.h.b16 %v1437
          %v1518 = vunpack.c.l.b16 %v1438
          %v1519 = vunpack.c.l.b16 %v1439
          %v1520 = vunpack.c.h.b16 %v1438
          %v1521 = vunpack.c.h.b16 %v1439
          %v1522 = vunpack.c.l.b16 %v1440
          %v1523 = vunpack.c.l.b16 %v1441
          %v1524 = vunpack.c.h.b16 %v1440
          %v1525 = vunpack.c.h.b16 %v1441
          %v1526 = vunpack.c.l.b16 %v1442
          %v1527 = vunpack.c.l.b16 %v1443
          %v1528 = vunpack.c.h.b16 %v1442
          %v1529 = vunpack.c.h.b16 %v1443
          %v1530 = vunpack.c.l.b16 %v1444
          %v1531 = vunpack.c.l.b16 %v1445
          %v1532 = vunpack.c.h.b16 %v1444
          %v1533 = vunpack.c.h.b16 %v1445
          %v1534 = vunpack.c.l.b16 %v1446
          %v1535 = vunpack.c.l.b16 %v1447
          %v1536 = vunpack.c.h.b16 %v1446
          %v1537 = vunpack.c.h.b16 %v1447
          %v1538 = vunpack.c.l.b16 %v1448
          %v1539 = vunpack.c.l.b16 %v1449
          %v1540 = vunpack.c.h.b16 %v1448
          %v1541 = vunpack.c.h.b16 %v1449
          %v1542 = vunpack.c.l.b16 %v1450
          %v1543 = vunpack.c.l.b16 %v1451
          %v1544 = vunpack.c.h.b16 %v1450
          %v1545 = vunpack.c.h.b16 %v1451
          %v1546 = vunpack.c.l.b16 %v1452
          %v1547 = vunpack.c.l.b16 %v1453
          %v1548 = vunpack.c.h.b16 %v1452
          %v1549 = vunpack.c.h.b16 %v1453
          %v1550 = vpack.c.b16 %v1487, %v1486
          %v1551 = vpack.c.b16 %v1489, %v1488
          %v1552 = vpack.c.b16 %v1491, %v1490
          %v1553 = vpack.c.b16 %v1493, %v1492
          %v1554 = vpack.c.b16 %v1495, %v1494
          %v1555 = vpack.c.b16 %v1497, %v1496
          %v1556 = vpack.c.b16 %v1499, %v1498
          %v1557 = vpack.c.b16 %v1501, %v1500
          %v1558 = vpack.c.b16 %v1503, %v1502
          %v1559 = vpack.c.b16 %v1505, %v1504
          %v1560 = vpack.c.b16 %v1507, %v1506
          %v1561 = vpack.c.b16 %v1509, %v1508
          %v1562 = vpack.c.b16 %v1511, %v1510
          %v1563 = vpack.c.b16 %v1513, %v1512
          %v1564 = vpack.c.b16 %v1515, %v1514
          %v1565 = vpack.c.b16 %v1517, %v1516
          %v1566 = vpack.c.b16 %v1519, %v1518
          %v1567 = vpack.c.b16 %v1521, %v1520
          %v1568 = vpack.c.b16 %v1523, %v1522
          %v1569 = vpack.c.b16 %v1525, %v1524
          %v1570 = vpack.c.b16 %v1527, %v1526
          %v1571 = vpack.c.b16 %v1529, %v1528
          %v1572 = vpack.c.b16 %v1531, %v1530
          %v1573 = vpack.c.b16 %v1533, %v1532
          %v1574 = vpack.c.b16 %v1535, %v1534
          %v1575 = vpack.c.b16 %v1537, %v1536
          %v1576 = vpack.c.b16 %v1539, %v1538
          %v1577 = vpack.c.b16 %v1541, %v1540
          %v1578 = vpack.c.b16 %v1543, %v1542
          %v1579 = vpack.c.b16 %v1545, %v1544
          %v1580 = vpack.c.b16 %v1547, %v1546
          %v1581 = vpack.c.b16 %v1549, %v1548
          %1614 = vst [vmem:[%s375] sm:$0xff] %v1550
          %1615 = vst [vmem:[%s375 + $0x8] sm:$0xff] %v1551
          %1616 = vst [vmem:[%s375 + $0x10] sm:$0xff] %v1552
          %1617 = vst [vmem:[%s375 + $0x18] sm:$0xff] %v1553
          %1618 = vst [vmem:[%s375 + $0x20] sm:$0xff] %v1554
          %1619 = vst [vmem:[%s375 + $0x28] sm:$0xff] %v1555
          %1620 = vst [vmem:[%s375 + $0x30] sm:$0xff] %v1556
          %1621 = vst [vmem:[%s375 + $0x38] sm:$0xff] %v1557
          %1622 = vst [vmem:[%s375 + $0x40] sm:$0xff] %v1558
          %1623 = vst [vmem:[%s375 + $0x48] sm:$0xff] %v1559
          %1624 = vst [vmem:[%s375 + $0x50] sm:$0xff] %v1560
          %1625 = vst [vmem:[%s375 + $0x58] sm:$0xff] %v1561
          %1626 = vst [vmem:[%s375 + $0x60] sm:$0xff] %v1562
          %1627 = vst [vmem:[%s375 + $0x68] sm:$0xff] %v1563
          %1628 = vst [vmem:[%s375 + $0x70] sm:$0xff] %v1564
          %1629 = vst [vmem:[%s375 + $0x78] sm:$0xff] %v1565
          %1630 = vst [vmem:[%s375 + $0x80] sm:$0xff] %v1566
          %1631 = vst [vmem:[%s375 + $0x88] sm:$0xff] %v1567
          %1632 = vst [vmem:[%s375 + $0x90] sm:$0xff] %v1568
          %1633 = vst [vmem:[%s375 + $0x98] sm:$0xff] %v1569
          %1634 = vst [vmem:[%s375 + $0xa0] sm:$0xff] %v1570
          %1635 = vst [vmem:[%s375 + $0xa8] sm:$0xff] %v1571
          %1636 = vst [vmem:[%s375 + $0xb0] sm:$0xff] %v1572
          %1637 = vst [vmem:[%s375 + $0xb8] sm:$0xff] %v1573
          %1638 = vst [vmem:[%s375 + $0xc0] sm:$0xff] %v1574
          %1639 = vst [vmem:[%s375 + $0xc8] sm:$0xff] %v1575
          %1640 = vst [vmem:[%s375 + $0xd0] sm:$0xff] %v1576
          %1641 = vst [vmem:[%s375 + $0xd8] sm:$0xff] %v1577
          %1642 = vst [vmem:[%s375 + $0xe0] sm:$0xff] %v1578
          %1643 = vst [vmem:[%s375 + $0xe8] sm:$0xff] %v1579
          %1644 = vst [vmem:[%s375 + $0xf0] sm:$0xff] %v1580
          %1645 = vst [vmem:[%s375 + $0xf8] sm:$0xff] %v1581
        $region78: #{nbs_deeplab_head_forward.14} parent=65 // pred_fallthru
          _
        %s1646 = smul.u32 32, %s18
        %p1647 = scmp.lt.s32.totalorder %s1646, 63
        %s1648 = scalar_select %p1647, %s1646, 63
        %s1649 = smul.addr %s1648, 2
        %s1650 = smul.addr %s1649, 4
        %s1651 = scalar_lea.vmem %s3, %s1650
        // Predicated region
        $region79: #{nbs_deeplab_head_forward.14} parent=65 // pred_check
          %p1652 = pneg %p119
        $region80: #{nbs_deeplab_head_forward.14} parent=65 // pred_check_branch
          %1654 = sbr.rel (%p1652) target = $region82
        $region81: #{nbs_deeplab_head_forward.14} parent=65 // pred_region
          %s1655 = smul.u32 32, %s18
        $region82: #{nbs_deeplab_head_forward.14} parent=65 // pred_fallthru
          _
      $region66: #{nbs_deeplab_head_forward.14} parent=5 // pred_fallthru
        _
      %p1656 = scmp.le.s32.totalorder 2, %s9
      // Predicated region
      $region83: #{nbs_deeplab_head_forward.14} parent=5 // pred_check
        %p1657 = pneg %p1656
      $region84: #{nbs_deeplab_head_forward.14} parent=5 // pred_check_branch
        %1659 = sbr.rel (%p1657) target = $region86
      $region85: #{nbs_deeplab_head_forward.14} parent=5 // pred_region
        %s1660 = ssub.s32 %s9, 2
        // Predicated region
        $region87: #{nbs_deeplab_head_forward.14} parent=85 // pred_check
          %p1661 = pneg %p125
        $region88: #{nbs_deeplab_head_forward.14} parent=85 // pred_check_branch
          %1663 = sbr.rel (%p1661) target = $region90
        $region89: #{nbs_deeplab_head_forward.14} parent=85 // pred_region
          %s1664 = smul.u32 32, %s20
          %p1665 = scmp.lt.s32.totalorder %s1664, 63
          %s1666 = scalar_select %p1665, %s1664, 63
          %s1667 = smul.addr %s1666, 2
          %s1668 = smul.addr %s1667, 4
          %s1669 = scalar_lea.vmem %s3, %s1668
        $region90: #{nbs_deeplab_head_forward.14} parent=85 // pred_fallthru
          _
      $region86: #{nbs_deeplab_head_forward.14} parent=5 // pred_fallthru
        _
    $region6: #{nbs_deeplab_head_forward.14} parent=1 // loop_footer
      %s13 = sadd.s32 1, %s9
    $region7: #{nbs_deeplab_head_forward.14} parent=1 // loop_footer_branch
      %8 = sbr.rel target = $region3
    $region8: #{nbs_deeplab_head_forward.14} parent=1 // loop_exit
      _

// kernel: nbs_deeplab_head_forward.15
$region0: #{nbs_deeplab_head_forward.15}
  #allocation0 [shape = 'u32[]', space=smem, size = 0x4, offset = 0x4, fixed_abs, tag = 'smem constant byte address 0x4 - core index']
  #allocation1 [shape = 'u32[144,128]{1,0:T(1,128)}', space=vmem, size = 0x12000, scoped, tag = 'internal scratch']
  %s0 = inlined_call_operand.vmem [shape: bf16[2,256,256], index: 0, kind: input, shape index: {}]
  %s1 = inlined_call_operand.vmem [shape: bf16[2,256,128], index: 1, kind: input, shape index: {}]
  %s2 = inlined_call_operand.vmem [shape: f32[1,128], index: 2, kind: input, shape index: {}]
  %s3 = inlined_call_operand.vmem [shape: f32[2,256,128], index: 3, kind: output, shape index: {}]
  %s4 = sld [smem:[#allocation0]]
  $region45: #{nbs_deeplab_head_forward.15} parent=0
    _
  %s6 = ssub.s32 1, %s4
  %s7 = scalar_select 0, %s6, %s4
  loop: start=0, step=1, limit=4
  $region2: #{nbs_deeplab_head_forward.15} parent=0 // loop_pre_header
    _
  $region3: #{nbs_deeplab_head_forward.15} parent=0 // loop_header
    %s9 = sphi 0, %s13
    %p10 = scmp.ge.s32.totalorder %s9, 4
    %s16 = sphi 0, %s28
    %s17 = sphi 0, %s24
    %s18 = sphi 0, %s16
    %s19 = sphi 0, %s17
    %s20 = sphi 0, %s18
    %s21 = sphi 0, %s19
    %s33 = sphi 0, %s35
    %s36 = sphi 0, %s33
    %s37 = sphi 0, %s36
    %s53 = sphi 0, %s37
    %s59 = sphi 0, %s61
    %s62 = sphi 0, %s59
    %s63 = sphi 0, %s62
    %s79 = sphi 0, %s63
    %s83 = sphi 0, %s83
    %s85 = sphi 0, %s83
    %s86 = sphi 0, %s85
    %s100 = sphi 0, %s86
    %s108 = sphi 0, %s110
    %s111 = sphi 0, %s108
    %s112 = sphi 0, %s111
    %s128 = sphi 0, %s112
  $region4: #{nbs_deeplab_head_forward.15} parent=0 // loop_header_branch
    %12 = sbr.rel (%p10) target = $region8
  $region5: #{nbs_deeplab_head_forward.15} parent=0 // loop_body
    %s14 = ssub.s32 %s9, 1
    %s15 = ssub.s32 %s9, 2
    %s22 = sadd.s32 1, %s17
    %p23 = scmp.ge.s32.totalorder %s22, 1
    %s24 = scalar_select %p23, 0, %s22
    %s25 = sadd.s32 1, %s16
    %s26 = scalar_select %p23, %s25, %s16
    %p27 = scmp.ge.s32.totalorder %s26, 2
    %s28 = scalar_select %p27, 0, %s26
    %s29 = ssub.s32 %s16, %s28
    %s30 = ssub.s32 %s17, %s24
    %s31 = sor.u32 %s29, %s30
    %p32 = scmp.eq.s32.totalorder %s31, 0
    %s34 = sadd.s32 %s33, 1
    %s35 = scalar_select %p32, %s33, %s34
    %p38 = pneg %p32
    %p39 = scmp.eq.s32.totalorder %s9, 1
    %p40 = por %p38, %p39
    %p41 = scmp.ne.s32.totalorder %s33, %s36
    %p42 = scmp.eq.s32.totalorder %s9, 0
    %p43 = por %p41, %p42
    %p44 = scmp.ne.s32.totalorder %s33, %s36
    %p45 = scmp.eq.s32.totalorder %s14, 1
    %p46 = por %p44, %p45
    %p47 = scmp.ne.s32.totalorder %s36, %s37
    %p48 = scmp.eq.s32.totalorder %s14, 0
    %p49 = por %p47, %p48
    %p50 = scmp.ne.s32.totalorder %s36, %s37
    %p51 = scmp.eq.s32.totalorder %s15, 1
    %p52 = por %p50, %p51
    %p54 = scmp.ne.s32.totalorder %s37, %s53
    %p55 = scmp.eq.s32.totalorder %s15, 0
    %p56 = por %p54, %p55
    %s57 = ssub.s32 %s16, %s28
    %p58 = scmp.eq.s32.totalorder %s57, 0
    %s60 = sadd.s32 %s59, 1
    %s61 = scalar_select %p58, %s59, %s60
    %p64 = pneg %p58
    %p65 = scmp.eq.s32.totalorder %s9, 1
    %p66 = por %p64, %p65
    %p67 = scmp.ne.s32.totalorder %s59, %s62
    %p68 = scmp.eq.s32.totalorder %s9, 0
    %p69 = por %p67, %p68
    %p70 = scmp.ne.s32.totalorder %s59, %s62
    %p71 = scmp.eq.s32.totalorder %s14, 1
    %p72 = por %p70, %p71
    %p73 = scmp.ne.s32.totalorder %s62, %s63
    %p74 = scmp.eq.s32.totalorder %s14, 0
    %p75 = por %p73, %p74
    %p76 = scmp.ne.s32.totalorder %s62, %s63
    %p77 = scmp.eq.s32.totalorder %s15, 1
    %p78 = por %p76, %p77
    %p80 = scmp.ne.s32.totalorder %s63, %s79
    %p81 = scmp.eq.s32.totalorder %s15, 0
    %p82 = por %p80, %p81
    %s84 = sadd.s32 %s83, 1
    %p87 = scmp.eq.s32.totalorder %s9, 1
    %p88 = scmp.ne.s32.totalorder %s83, %s85
    %p89 = scmp.eq.s32.totalorder %s9, 0
    %p90 = por %p88, %p89
    %p91 = scmp.ne.s32.totalorder %s83, %s85
    %p92 = scmp.eq.s32.totalorder %s14, 1
    %p93 = por %p91, %p92
    %p94 = scmp.ne.s32.totalorder %s85, %s86
    %p95 = scmp.eq.s32.totalorder %s14, 0
    %p96 = por %p94, %p95
    %p97 = scmp.ne.s32.totalorder %s85, %s86
    %p98 = scmp.eq.s32.totalorder %s15, 1
    %p99 = por %p97, %p98
    %p101 = scmp.ne.s32.totalorder %s86, %s100
    %p102 = scmp.eq.s32.totalorder %s15, 0
    %p103 = por %p101, %p102
    %s104 = ssub.s32 %s16, %s28
    %s105 = ssub.s32 %s17, %s24
    %s106 = sor.u32 %s104, %s105
    %p107 = scmp.eq.s32.totalorder %s106, 0
    %s109 = sadd.s32 %s108, 1
    %s110 = scalar_select %p107, %s108, %s109
    %p113 = pneg %p107
    %p114 = scmp.eq.s32.totalorder %s9, 1
    %p115 = por %p113, %p114
    %p116 = scmp.ne.s32.totalorder %s108, %s111
    %p117 = scmp.eq.s32.totalorder %s9, 0
    %p118 = por %p116, %p117
    %p119 = scmp.ne.s32.totalorder %s108, %s111
    %p120 = scmp.eq.s32.totalorder %s14, 1
    %p121 = por %p119, %p120
    %p122 = scmp.ne.s32.totalorder %s111, %s112
    %p123 = scmp.eq.s32.totalorder %s14, 0
    %p124 = por %p122, %p123
    %p125 = scmp.ne.s32.totalorder %s111, %s112
    %p126 = scmp.eq.s32.totalorder %s15, 1
    %p127 = por %p125, %p126
    %p129 = scmp.ne.s32.totalorder %s112, %s128
    %p130 = scmp.eq.s32.totalorder %s15, 0
    %p131 = por %p129, %p130
    %p132 = scmp.le.s32.totalorder 1, %s9
    %p133 = scmp.lt.s32.totalorder %s9, 3
    %p134 = pnand %p132, %p133
    %p135 = pneg %p134
    // Predicated region
    $region9: #{nbs_deeplab_head_forward.15} parent=5 // pred_check
      _
    $region10: #{nbs_deeplab_head_forward.15} parent=5 // pred_check_branch
      %137 = sbr.rel (%p134) target = $region12
    $region11: #{nbs_deeplab_head_forward.15} parent=5 // pred_region
      %s138 = ssub.s32 %s9, 1
      // Predicated region
      $region13: #{nbs_deeplab_head_forward.15} parent=11 // pred_check
        %p139 = pneg %p96
      $region14: #{nbs_deeplab_head_forward.15} parent=11 // pred_check_branch
        %141 = sbr.rel (%p139) target = $region16
      $region15: #{nbs_deeplab_head_forward.15} parent=11 // pred_region
        _
      $region16: #{nbs_deeplab_head_forward.15} parent=11 // pred_fallthru
        _
    $region12: #{nbs_deeplab_head_forward.15} parent=5 // pred_fallthru
      _
    %p142 = scmp.lt.s32.totalorder %s9, 2
    // Predicated region
    $region17: #{nbs_deeplab_head_forward.15} parent=5 // pred_check
      %p143 = pneg %p142
    $region18: #{nbs_deeplab_head_forward.15} parent=5 // pred_check_branch
      %145 = sbr.rel (%p143) target = $region20
    $region19: #{nbs_deeplab_head_forward.15} parent=5 // pred_region
      // Predicated region
      $region21: #{nbs_deeplab_head_forward.15} parent=19 // pred_check
        %p146 = pneg %p43
      $region22: #{nbs_deeplab_head_forward.15} parent=19 // pred_check_branch
        %148 = sbr.rel (%p146) target = $region24
      $region23: #{nbs_deeplab_head_forward.15} parent=19 // pred_region
        %s149 = smul.u32 32, %s17
        %p150 = scmp.lt.s32.totalorder %s16, 1
        %s151 = scalar_select %p150, %s16, 1
        %p152 = scmp.lt.s32.totalorder %s149, 31
        %s153 = scalar_select %p152, %s149, 31
        %s154 = smul.addr %s153, 2
        %s155 = smul.addr %s151, 64
        %s156 = sadd.s32 %s154, %s155
        %s157 = smul.addr %s156, 4
        %s158 = scalar_lea.vmem %s0, %s157
        %s159 = smul.u32 32, %s17
      $region24: #{nbs_deeplab_head_forward.15} parent=19 // pred_fallthru
        _
      // Predicated region
      $region25: #{nbs_deeplab_head_forward.15} parent=19 // pred_check
        %p160 = pneg %p69
      $region26: #{nbs_deeplab_head_forward.15} parent=19 // pred_check_branch
        %162 = sbr.rel (%p160) target = $region28
      $region27: #{nbs_deeplab_head_forward.15} parent=19 // pred_region
        %p163 = scmp.lt.s32.totalorder %s16, 1
        %s164 = scalar_select %p163, %s16, 1
        %s165 = smul.addr %s164, 32
        %s166 = smul.addr %s165, 4
        %s167 = scalar_lea.vmem %s1, %s166
      $region28: #{nbs_deeplab_head_forward.15} parent=19 // pred_fallthru
        _
    $region20: #{nbs_deeplab_head_forward.15} parent=5 // pred_fallthru
      _
    %p168 = scmp.le.s32.totalorder 1, %s9
    %p169 = scmp.lt.s32.totalorder %s9, 3
    %p170 = pnand %p168, %p169
    %p171 = pneg %p170
    // Predicated region
    $region29: #{nbs_deeplab_head_forward.15} parent=5 // pred_check
      _
    $region30: #{nbs_deeplab_head_forward.15} parent=5 // pred_check_branch
      %173 = sbr.rel (%p170) target = $region32
    $region31: #{nbs_deeplab_head_forward.15} parent=5 // pred_region
      %s174 = ssub.s32 %s9, 1
      %s175 = smul.u32 32, %s19
      %p176 = scmp.lt.s32.totalorder %s18, 1
      %s177 = scalar_select %p176, %s18, 1
      %p178 = scmp.lt.s32.totalorder %s175, 31
      %s179 = scalar_select %p178, %s175, 31
      %s180 = smul.addr %s179, 2
      %s181 = smul.addr %s177, 64
      %s182 = sadd.s32 %s180, %s181
      %s183 = smul.addr %s182, 4
      %s184 = scalar_lea.vmem %s0, %s183
      %p185 = pneg %p49
      %p186 = pneg %p46
      %p187 = scmp.lt.s32.totalorder %s18, 1
      %s188 = scalar_select %p187, %s18, 1
      %s189 = smul.addr %s188, 32
      %s190 = smul.addr %s189, 4
      %s191 = scalar_lea.vmem %s1, %s190
      %p192 = pneg %p75
      %p193 = pneg %p72
      %p194 = pneg %p96
      %p195 = pneg %p93
      %p196 = pneg %p124
      %p197 = pneg %p121
      %s198 = smul.u32 32, %s19
      %p199 = scmp.lt.s32.totalorder %s18, 1
      %s200 = scalar_select %p199, %s18, 1
      %p201 = scmp.lt.s32.totalorder %s198, 31
      %s202 = scalar_select %p201, %s198, 31
      %s203 = smul.addr %s200, 32
      %s204 = sadd.s32 %s202, %s203
      %s205 = smul.addr %s204, 8
      %s206 = scalar_lea.vmem %s3, %s205
      %s207 = smul.u32 32, %s19
      %p208 = scmp.lt.s32.totalorder %s18, 1
      %s209 = scalar_select %p208, %s18, 1
      %p210 = scmp.lt.s32.totalorder %s207, 31
      %s211 = scalar_select %p210, %s207, 31
      %s212 = smul.addr %s211, 2
      %s213 = smul.addr %s209, 64
      %s214 = sadd.s32 %s212, %s213
      %s215 = smul.addr %s214, 4
      %s216 = scalar_lea.vmem %s0, %s215
      %s217 = smul.u32 32, %s19
      %p218 = scmp.lt.s32.totalorder %s18, 1
      %s219 = scalar_select %p218, %s18, 1
      %s220 = smul.addr %s219, 32
      %s221 = smul.addr %s220, 4
      %s222 = scalar_lea.vmem %s1, %s221
      %s223 = smul.u32 32, %s19
      %p224 = scmp.lt.s32.totalorder %s18, 1
      %s225 = scalar_select %p224, %s18, 1
      %p226 = scmp.lt.s32.totalorder %s223, 31
      %s227 = scalar_select %p226, %s223, 31
      %s228 = smul.addr %s225, 32
      %s229 = sadd.s32 %s227, %s228
      %s230 = smul.addr %s229, 8
      %s231 = scalar_lea.vmem %s3, %s230
      %s232 = smul.u32 32, %s19
      %v234 = vld [vmem:[%s216] sm:$0xff]
      %v235 = vld [vmem:[%s216 + $0x8] sm:$0xff]
      %v236 = vld [vmem:[%s216 + $0x10] sm:$0xff]
      %v237 = vld [vmem:[%s216 + $0x18] sm:$0xff]
      %v238 = vld [vmem:[%s216 + $0x20] sm:$0xff]
      %v239 = vld [vmem:[%s216 + $0x28] sm:$0xff]
      %v240 = vld [vmem:[%s216 + $0x30] sm:$0xff]
      %v241 = vld [vmem:[%s216 + $0x38] sm:$0xff]
      %v242 = vld [vmem:[%s216 + $0x40] sm:$0xff]
      %v243 = vld [vmem:[%s216 + $0x48] sm:$0xff]
      %v244 = vld [vmem:[%s216 + $0x50] sm:$0xff]
      %v245 = vld [vmem:[%s216 + $0x58] sm:$0xff]
      %v246 = vld [vmem:[%s216 + $0x60] sm:$0xff]
      %v247 = vld [vmem:[%s216 + $0x68] sm:$0xff]
      %v248 = vld [vmem:[%s216 + $0x70] sm:$0xff]
      %v249 = vld [vmem:[%s216 + $0x78] sm:$0xff]
      %v250 = vld [vmem:[%s216 + $0x80] sm:$0xff]
      %v251 = vld [vmem:[%s216 + $0x88] sm:$0xff]
      %v252 = vld [vmem:[%s216 + $0x90] sm:$0xff]
      %v253 = vld [vmem:[%s216 + $0x98] sm:$0xff]
      %v254 = vld [vmem:[%s216 + $0xa0] sm:$0xff]
      %v255 = vld [vmem:[%s216 + $0xa8] sm:$0xff]
      %v256 = vld [vmem:[%s216 + $0xb0] sm:$0xff]
      %v257 = vld [vmem:[%s216 + $0xb8] sm:$0xff]
      %v258 = vld [vmem:[%s216 + $0xc0] sm:$0xff]
      %v259 = vld [vmem:[%s216 + $0xc8] sm:$0xff]
      %v260 = vld [vmem:[%s216 + $0xd0] sm:$0xff]
      %v261 = vld [vmem:[%s216 + $0xd8] sm:$0xff]
      %v262 = vld [vmem:[%s216 + $0xe0] sm:$0xff]
      %v263 = vld [vmem:[%s216 + $0xe8] sm:$0xff]
      %v264 = vld [vmem:[%s216 + $0xf0] sm:$0xff]
      %v265 = vld [vmem:[%s216 + $0xf8] sm:$0xff]
      %v266 = vld [vmem:[%s222] sm:$0xf]
      %v267 = vld [vmem:[%s222 + $0x4] sm:$0xf]
      %v268 = vld [vmem:[%s222 + $0x8] sm:$0xf]
      %v269 = vld [vmem:[%s222 + $0xc] sm:$0xf]
      %v270 = vld [vmem:[%s222 + $0x10] sm:$0xf]
      %v271 = vld [vmem:[%s222 + $0x14] sm:$0xf]
      %v272 = vld [vmem:[%s222 + $0x18] sm:$0xf]
      %v273 = vld [vmem:[%s222 + $0x1c] sm:$0xf]
      %v274 = vld [vmem:[%s222 + $0x20] sm:$0xf]
      %v275 = vld [vmem:[%s222 + $0x24] sm:$0xf]
      %v276 = vld [vmem:[%s222 + $0x28] sm:$0xf]
      %v277 = vld [vmem:[%s222 + $0x2c] sm:$0xf]
      %v278 = vld [vmem:[%s222 + $0x30] sm:$0xf]
      %v279 = vld [vmem:[%s222 + $0x34] sm:$0xf]
      %v280 = vld [vmem:[%s222 + $0x38] sm:$0xf]
      %v281 = vld [vmem:[%s222 + $0x3c] sm:$0xf]
      %v282 = vld [vmem:[%s222 + $0x40] sm:$0xf]
      %v283 = vld [vmem:[%s222 + $0x44] sm:$0xf]
      %v284 = vld [vmem:[%s222 + $0x48] sm:$0xf]
      %v285 = vld [vmem:[%s222 + $0x4c] sm:$0xf]
      %v286 = vld [vmem:[%s222 + $0x50] sm:$0xf]
      %v287 = vld [vmem:[%s222 + $0x54] sm:$0xf]
      %v288 = vld [vmem:[%s222 + $0x58] sm:$0xf]
      %v289 = vld [vmem:[%s222 + $0x5c] sm:$0xf]
      %v290 = vld [vmem:[%s222 + $0x60] sm:$0xf]
      %v291 = vld [vmem:[%s222 + $0x64] sm:$0xf]
      %v292 = vld [vmem:[%s222 + $0x68] sm:$0xf]
      %v293 = vld [vmem:[%s222 + $0x6c] sm:$0xf]
      %v294 = vld [vmem:[%s222 + $0x70] sm:$0xf]
      %v295 = vld [vmem:[%s222 + $0x74] sm:$0xf]
      %v296 = vld [vmem:[%s222 + $0x78] sm:$0xf]
      %v297 = vld [vmem:[%s222 + $0x7c] sm:$0xf]
      %v298 = vld [vmem:[%s2] sm:$0x1]
      %v300 = vlaneseq
      %v301 = vshrl.u32 %v300, 7
      %v302 = vsub.s32 0, %v301
      %v303 = vrot.slane %v298, %v302
      %v337 = vunpack.c.l.b16 %v234
      %v338 = vunpack.c.h.b16 %v234
      %v339 = vunpack.c.l.b16 %v235
      %v340 = vunpack.c.h.b16 %v235
      %v341 = vunpack.c.l.b16 %v236
      %v342 = vunpack.c.h.b16 %v236
      %v343 = vunpack.c.l.b16 %v237
      %v344 = vunpack.c.h.b16 %v237
      %v345 = vunpack.c.l.b16 %v238
      %v346 = vunpack.c.h.b16 %v238
      %v347 = vunpack.c.l.b16 %v239
      %v348 = vunpack.c.h.b16 %v239
      %v349 = vunpack.c.l.b16 %v240
      %v350 = vunpack.c.h.b16 %v240
      %v351 = vunpack.c.l.b16 %v241
      %v352 = vunpack.c.h.b16 %v241
      %v353 = vunpack.c.l.b16 %v242
      %v354 = vunpack.c.h.b16 %v242
      %v355 = vunpack.c.l.b16 %v243
      %v356 = vunpack.c.h.b16 %v243
      %v357 = vunpack.c.l.b16 %v244
      %v358 = vunpack.c.h.b16 %v244
      %v359 = vunpack.c.l.b16 %v245
      %v360 = vunpack.c.h.b16 %v245
      %v361 = vunpack.c.l.b16 %v246
      %v362 = vunpack.c.h.b16 %v246
      %v363 = vunpack.c.l.b16 %v247
      %v364 = vunpack.c.h.b16 %v247
      %v365 = vunpack.c.l.b16 %v248
      %v366 = vunpack.c.h.b16 %v248
      %v367 = vunpack.c.l.b16 %v249
      %v368 = vunpack.c.h.b16 %v249
      %v369 = vunpack.c.l.b16 %v250
      %v370 = vunpack.c.h.b16 %v250
      %v371 = vunpack.c.l.b16 %v251
      %v372 = vunpack.c.h.b16 %v251
      %v373 = vunpack.c.l.b16 %v252
      %v374 = vunpack.c.h.b16 %v252
      %v375 = vunpack.c.l.b16 %v253
      %v376 = vunpack.c.h.b16 %v253
      %v377 = vunpack.c.l.b16 %v254
      %v378 = vunpack.c.h.b16 %v254
      %v379 = vunpack.c.l.b16 %v255
      %v380 = vunpack.c.h.b16 %v255
      %v381 = vunpack.c.l.b16 %v256
      %v382 = vunpack.c.h.b16 %v256
      %v383 = vunpack.c.l.b16 %v257
      %v384 = vunpack.c.h.b16 %v257
      %v385 = vunpack.c.l.b16 %v258
      %v386 = vunpack.c.h.b16 %v258
      %v387 = vunpack.c.l.b16 %v259
      %v388 = vunpack.c.h.b16 %v259
      %v389 = vunpack.c.l.b16 %v260
      %v390 = vunpack.c.h.b16 %v260
      %v391 = vunpack.c.l.b16 %v261
      %v392 = vunpack.c.h.b16 %v261
      %v393 = vunpack.c.l.b16 %v262
      %v394 = vunpack.c.h.b16 %v262
      %v395 = vunpack.c.l.b16 %v263
      %v396 = vunpack.c.h.b16 %v263
      %v397 = vunpack.c.l.b16 %v264
      %v398 = vunpack.c.h.b16 %v264
      %v399 = vunpack.c.l.b16 %v265
      %v400 = vunpack.c.h.b16 %v265
      %v401 = vpack.c.b16 %v339, %v337
      %v402 = vpack.c.b16 %v340, %v338
      %v403 = vpack.c.b16 %v343, %v341
      %v404 = vpack.c.b16 %v344, %v342
      %v405 = vpack.c.b16 %v347, %v345
      %v406 = vpack.c.b16 %v348, %v346
      %v407 = vpack.c.b16 %v351, %v349
      %v408 = vpack.c.b16 %v352, %v350
      %v409 = vpack.c.b16 %v355, %v353
      %v410 = vpack.c.b16 %v356, %v354
      %v411 = vpack.c.b16 %v359, %v357
      %v412 = vpack.c.b16 %v360, %v358
      %v413 = vpack.c.b16 %v363, %v361
      %v414 = vpack.c.b16 %v364, %v362
      %v415 = vpack.c.b16 %v367, %v365
      %v416 = vpack.c.b16 %v368, %v366
      %v417 = vpack.c.b16 %v371, %v369
      %v418 = vpack.c.b16 %v372, %v370
      %v419 = vpack.c.b16 %v375, %v373
      %v420 = vpack.c.b16 %v376, %v374
      %v421 = vpack.c.b16 %v379, %v377
      %v422 = vpack.c.b16 %v380, %v378
      %v423 = vpack.c.b16 %v383, %v381
      %v424 = vpack.c.b16 %v384, %v382
      %v425 = vpack.c.b16 %v387, %v385
      %v426 = vpack.c.b16 %v388, %v386
      %v427 = vpack.c.b16 %v391, %v389
      %v428 = vpack.c.b16 %v392, %v390
      %v429 = vpack.c.b16 %v395, %v393
      %v430 = vpack.c.b16 %v396, %v394
      %v431 = vpack.c.b16 %v399, %v397
      %v432 = vpack.c.b16 %v400, %v398
      %v497 = vunpack.c.l.b16 %v266
      %v498 = vunpack.c.l.b16 %v267
      %v499 = vunpack.c.l.b16 %v268
      %v500 = vunpack.c.l.b16 %v269
      %v501 = vunpack.c.l.b16 %v270
      %v502 = vunpack.c.l.b16 %v271
      %v503 = vunpack.c.l.b16 %v272
      %v504 = vunpack.c.l.b16 %v273
      %v505 = vunpack.c.l.b16 %v274
      %v506 = vunpack.c.l.b16 %v275
      %v507 = vunpack.c.l.b16 %v276
      %v508 = vunpack.c.l.b16 %v277
      %v509 = vunpack.c.l.b16 %v278
      %v510 = vunpack.c.l.b16 %v279
      %v511 = vunpack.c.l.b16 %v280
      %v512 = vunpack.c.l.b16 %v281
      %v513 = vunpack.c.l.b16 %v282
      %v514 = vunpack.c.l.b16 %v283
      %v515 = vunpack.c.l.b16 %v284
      %v516 = vunpack.c.l.b16 %v285
      %v517 = vunpack.c.l.b16 %v286
      %v518 = vunpack.c.l.b16 %v287
      %v519 = vunpack.c.l.b16 %v288
      %v520 = vunpack.c.l.b16 %v289
      %v521 = vunpack.c.l.b16 %v290
      %v522 = vunpack.c.l.b16 %v291
      %v523 = vunpack.c.l.b16 %v292
      %v524 = vunpack.c.l.b16 %v293
      %v525 = vunpack.c.l.b16 %v294
      %v526 = vunpack.c.l.b16 %v295
      %v527 = vunpack.c.l.b16 %v296
      %v528 = vunpack.c.l.b16 %v297
      %v529 = vpack.c.b16 %v498, %v497
      %v530 = vpack.c.b16 %v500, %v499
      %v531 = vpack.c.b16 %v502, %v501
      %v532 = vpack.c.b16 %v504, %v503
      %v533 = vpack.c.b16 %v506, %v505
      %v534 = vpack.c.b16 %v508, %v507
      %v535 = vpack.c.b16 %v510, %v509
      %v536 = vpack.c.b16 %v512, %v511
      %v537 = vpack.c.b16 %v514, %v513
      %v538 = vpack.c.b16 %v516, %v515
      %v539 = vpack.c.b16 %v518, %v517
      %v540 = vpack.c.b16 %v520, %v519
      %v541 = vpack.c.b16 %v522, %v521
      %v542 = vpack.c.b16 %v524, %v523
      %v543 = vpack.c.b16 %v526, %v525
      %v544 = vpack.c.b16 %v528, %v527
      %561 = vmatprep.subr.bf16.mxu0 0
      %562 = vmatpush1.bf16.msra.mxu0 %v529
      %563 = vmatprep.subr.bf16.mxu0 0
      %564 = vmatpush1.bf16.msra.mxu0 %v530
      %565 = vmatprep.subr.bf16.mxu0 0
      %566 = vmatpush1.bf16.msra.mxu0 %v531
      %567 = vmatprep.subr.bf16.mxu0 0
      %568 = vmatpush1.bf16.msra.mxu0 %v532
      %569 = vmatprep.subr.bf16.mxu0 0
      %570 = vmatpush1.bf16.msra.mxu0 %v533
      %571 = vmatprep.subr.bf16.mxu0 0
      %572 = vmatpush1.bf16.msra.mxu0 %v534
      %573 = vmatprep.subr.bf16.mxu0 0
      %574 = vmatpush1.bf16.msra.mxu0 %v535
      %575 = vmatprep.subr.bf16.mxu0 0
      %576 = vmatpush1.bf16.msra.mxu0 %v536
      %577 = vmatprep.subr.bf16.mxu0 0
      %578 = vmatpush1.bf16.msra.mxu0 %v537
      %579 = vmatprep.subr.bf16.mxu0 0
      %580 = vmatpush1.bf16.msra.mxu0 %v538
      %581 = vmatprep.subr.bf16.mxu0 0
      %582 = vmatpush1.bf16.msra.mxu0 %v539
      %583 = vmatprep.subr.bf16.mxu0 0
      %584 = vmatpush1.bf16.msra.mxu0 %v540
      %585 = vmatprep.subr.bf16.mxu0 0
      %586 = vmatpush1.bf16.msra.mxu0 %v541
      %587 = vmatprep.subr.bf16.mxu0 0
      %588 = vmatpush1.bf16.msra.mxu0 %v542
      %589 = vmatprep.subr.bf16.mxu0 0
      %590 = vmatpush1.bf16.msra.mxu0 %v543
      %591 = vmatprep.subr.bf16.mxu0 0
      %592 = vmatpush1.bf16.msra.mxu0 %v544
      %593 = vmatprep.mubr.bf16.mxu0 %v402
      %594 = vmatmul.mubr.bf16.gmra.mrb[0].mxu0 %v401
      %v595 = vpop.f32.mrb[0].mxu0
      %v596 = vadd.f32 %v303, %v595
      %v597 = vpop.f32.mrb[0].mxu0
      %v598 = vpop.f32.mrb[0].mxu0
      %v599 = vadd.f32 %v303, %v598
      %v600 = vpop.f32.mrb[0].mxu0
      %601 = vmatprep.mubr.bf16.mxu0 %v404
      %602 = vmatmul.mubr.bf16.gmra.mrb[0].mxu0 %v403
      %v603 = vpop.f32.mrb[0].mxu0
      %v604 = vadd.f32 %v303, %v603
      %v605 = vpop.f32.mrb[0].mxu0
      %v606 = vpop.f32.mrb[0].mxu0
      %v607 = vadd.f32 %v303, %v606
      %v608 = vpop.f32.mrb[0].mxu0
      %609 = vmatprep.mubr.bf16.mxu0 %v406
      %610 = vmatmul.mubr.bf16.gmra.mrb[0].mxu0 %v405
      %v611 = vpop.f32.mrb[0].mxu0
      %v612 = vadd.f32 %v303, %v611
      %v613 = vpop.f32.mrb[0].mxu0
      %v614 = vpop.f32.mrb[0].mxu0
      %v615 = vadd.f32 %v303, %v614
      %v616 = vpop.f32.mrb[0].mxu0
      %617 = vmatprep.mubr.bf16.mxu0 %v408
      %618 = vmatmul.mubr.bf16.gmra.mrb[0].mxu0 %v407
      %v619 = vpop.f32.mrb[0].mxu0
      %v620 = vadd.f32 %v303, %v619
      %v621 = vpop.f32.mrb[0].mxu0
      %v622 = vpop.f32.mrb[0].mxu0
      %v623 = vadd.f32 %v303, %v622
      %v624 = vpop.f32.mrb[0].mxu0
      %625 = vmatprep.mubr.bf16.mxu0 %v410
      %626 = vmatmul.mubr.bf16.gmra.mrb[0].mxu0 %v409
      %v627 = vpop.f32.mrb[0].mxu0
      %v628 = vadd.f32 %v303, %v627
      %v629 = vpop.f32.mrb[0].mxu0
      %v630 = vpop.f32.mrb[0].mxu0
      %v631 = vadd.f32 %v303, %v630
      %v632 = vpop.f32.mrb[0].mxu0
      %633 = vmatprep.mubr.bf16.mxu0 %v412
      %634 = vmatmul.mubr.bf16.gmra.mrb[0].mxu0 %v411
      %v635 = vpop.f32.mrb[0].mxu0
      %v636 = vadd.f32 %v303, %v635
      %v637 = vpop.f32.mrb[0].mxu0
      %v638 = vpop.f32.mrb[0].mxu0
      %v639 = vadd.f32 %v303, %v638
      %v640 = vpop.f32.mrb[0].mxu0
      %641 = vmatprep.mubr.bf16.mxu0 %v414
      %642 = vmatmul.mubr.bf16.gmra.mrb[0].mxu0 %v413
      %v643 = vpop.f32.mrb[0].mxu0
      %v644 = vadd.f32 %v303, %v643
      %v645 = vpop.f32.mrb[0].mxu0
      %v646 = vpop.f32.mrb[0].mxu0
      %v647 = vadd.f32 %v303, %v646
      %v648 = vpop.f32.mrb[0].mxu0
      %649 = vmatprep.mubr.bf16.mxu0 %v416
      %650 = vmatmul.mubr.bf16.gmra.mrb[0].mxu0 %v415
      %v651 = vpop.f32.mrb[0].mxu0
      %v652 = vadd.f32 %v303, %v651
      %v653 = vpop.f32.mrb[0].mxu0
      %v654 = vpop.f32.mrb[0].mxu0
      %v655 = vadd.f32 %v303, %v654
      %v656 = vpop.f32.mrb[0].mxu0
      %657 = vmatprep.mubr.bf16.mxu0 %v418
      %658 = vmatmul.mubr.bf16.gmra.mrb[0].mxu0 %v417
      %v659 = vpop.f32.mrb[0].mxu0
      %v660 = vadd.f32 %v303, %v659
      %v661 = vpop.f32.mrb[0].mxu0
      %v662 = vpop.f32.mrb[0].mxu0
      %v663 = vadd.f32 %v303, %v662
      %v664 = vpop.f32.mrb[0].mxu0
      %665 = vmatprep.mubr.bf16.mxu0 %v420
      %666 = vmatmul.mubr.bf16.gmra.mrb[0].mxu0 %v419
      %v667 = vpop.f32.mrb[0].mxu0
      %v668 = vadd.f32 %v303, %v667
      %v669 = vpop.f32.mrb[0].mxu0
      %v670 = vpop.f32.mrb[0].mxu0
      %v671 = vadd.f32 %v303, %v670
      %v672 = vpop.f32.mrb[0].mxu0
      %673 = vmatprep.mubr.bf16.mxu0 %v422
      %674 = vmatmul.mubr.bf16.gmra.mrb[0].mxu0 %v421
      %v675 = vpop.f32.mrb[0].mxu0
      %v676 = vadd.f32 %v303, %v675
      %v677 = vpop.f32.mrb[0].mxu0
      %v678 = vpop.f32.mrb[0].mxu0
      %v679 = vadd.f32 %v303, %v678
      %v680 = vpop.f32.mrb[0].mxu0
      %681 = vmatprep.mubr.bf16.mxu0 %v424
      %682 = vmatmul.mubr.bf16.gmra.mrb[0].mxu0 %v423
      %v683 = vpop.f32.mrb[0].mxu0
      %v684 = vadd.f32 %v303, %v683
      %v685 = vpop.f32.mrb[0].mxu0
      %v686 = vpop.f32.mrb[0].mxu0
      %v687 = vadd.f32 %v303, %v686
      %v688 = vpop.f32.mrb[0].mxu0
      %689 = vmatprep.mubr.bf16.mxu0 %v426
      %690 = vmatmul.mubr.bf16.gmra.mrb[0].mxu0 %v425
      %v691 = vpop.f32.mrb[0].mxu0
      %v692 = vadd.f32 %v303, %v691
      %v693 = vpop.f32.mrb[0].mxu0
      %v694 = vpop.f32.mrb[0].mxu0
      %v695 = vadd.f32 %v303, %v694
      %v696 = vpop.f32.mrb[0].mxu0
      %697 = vmatprep.mubr.bf16.mxu0 %v428
      %698 = vmatmul.mubr.bf16.gmra.mrb[0].mxu0 %v427
      %v699 = vpop.f32.mrb[0].mxu0
      %v700 = vadd.f32 %v303, %v699
      %v701 = vpop.f32.mrb[0].mxu0
      %v702 = vpop.f32.mrb[0].mxu0
      %v703 = vadd.f32 %v303, %v702
      %v704 = vpop.f32.mrb[0].mxu0
      %705 = vmatprep.mubr.bf16.mxu0 %v430
      %706 = vmatmul.mubr.bf16.gmra.mrb[0].mxu0 %v429
      %v707 = vpop.f32.mrb[0].mxu0
      %v708 = vadd.f32 %v303, %v707
      %v709 = vpop.f32.mrb[0].mxu0
      %v710 = vpop.f32.mrb[0].mxu0
      %v711 = vadd.f32 %v303, %v710
      %v712 = vpop.f32.mrb[0].mxu0
      %713 = vmatprep.mubr.bf16.mxu0 %v432
      %714 = vmatmul.mubr.bf16.gmra.mrb[0].mxu0 %v431
      %v715 = vpop.f32.mrb[0].mxu0
      %v716 = vadd.f32 %v303, %v715
      %v717 = vpop.f32.mrb[0].mxu0
      %v718 = vpop.f32.mrb[0].mxu0
      %v719 = vadd.f32 %v303, %v718
      %v720 = vpop.f32.mrb[0].mxu0
      %721 = vdwg.mxu0
      %722 = vst [vmem:[%s231] sm:$0xff] %v596
      %723 = vst [vmem:[%s231 + $0x8] sm:$0xff] %v599
      %724 = vst [vmem:[%s231 + $0x10] sm:$0xff] %v604
      %725 = vst [vmem:[%s231 + $0x18] sm:$0xff] %v607
      %726 = vst [vmem:[%s231 + $0x20] sm:$0xff] %v612
      %727 = vst [vmem:[%s231 + $0x28] sm:$0xff] %v615
      %728 = vst [vmem:[%s231 + $0x30] sm:$0xff] %v620
      %729 = vst [vmem:[%s231 + $0x38] sm:$0xff] %v623
      %730 = vst [vmem:[%s231 + $0x40] sm:$0xff] %v628
      %731 = vst [vmem:[%s231 + $0x48] sm:$0xff] %v631
      %732 = vst [vmem:[%s231 + $0x50] sm:$0xff] %v636
      %733 = vst [vmem:[%s231 + $0x58] sm:$0xff] %v639
      %734 = vst [vmem:[%s231 + $0x60] sm:$0xff] %v644
      %735 = vst [vmem:[%s231 + $0x68] sm:$0xff] %v647
      %736 = vst [vmem:[%s231 + $0x70] sm:$0xff] %v652
      %737 = vst [vmem:[%s231 + $0x78] sm:$0xff] %v655
      %738 = vst [vmem:[%s231 + $0x80] sm:$0xff] %v660
      %739 = vst [vmem:[%s231 + $0x88] sm:$0xff] %v663
      %740 = vst [vmem:[%s231 + $0x90] sm:$0xff] %v668
      %741 = vst [vmem:[%s231 + $0x98] sm:$0xff] %v671
      %742 = vst [vmem:[%s231 + $0xa0] sm:$0xff] %v676
      %743 = vst [vmem:[%s231 + $0xa8] sm:$0xff] %v679
      %744 = vst [vmem:[%s231 + $0xb0] sm:$0xff] %v684
      %745 = vst [vmem:[%s231 + $0xb8] sm:$0xff] %v687
      %746 = vst [vmem:[%s231 + $0xc0] sm:$0xff] %v692
      %747 = vst [vmem:[%s231 + $0xc8] sm:$0xff] %v695
      %748 = vst [vmem:[%s231 + $0xd0] sm:$0xff] %v700
      %749 = vst [vmem:[%s231 + $0xd8] sm:$0xff] %v703
      %750 = vst [vmem:[%s231 + $0xe0] sm:$0xff] %v708
      %751 = vst [vmem:[%s231 + $0xe8] sm:$0xff] %v711
      %752 = vst [vmem:[%s231 + $0xf0] sm:$0xff] %v716
      %753 = vst [vmem:[%s231 + $0xf8] sm:$0xff] %v719
      %s754 = smul.u32 32, %s19
      %p755 = scmp.lt.s32.totalorder %s18, 1
      %s756 = scalar_select %p755, %s18, 1
      %p757 = scmp.lt.s32.totalorder %s754, 31
      %s758 = scalar_select %p757, %s754, 31
      %s759 = smul.addr %s756, 32
      %s760 = sadd.s32 %s758, %s759
      %s761 = smul.addr %s760, 8
      %s762 = scalar_lea.vmem %s3, %s761
      // Predicated region
      $region33: #{nbs_deeplab_head_forward.15} parent=31 // pred_check
        %p763 = pneg %p121
      $region34: #{nbs_deeplab_head_forward.15} parent=31 // pred_check_branch
        %765 = sbr.rel (%p763) target = $region36
      $region35: #{nbs_deeplab_head_forward.15} parent=31 // pred_region
        %s766 = smul.u32 32, %s19
      $region36: #{nbs_deeplab_head_forward.15} parent=31 // pred_fallthru
        _
    $region32: #{nbs_deeplab_head_forward.15} parent=5 // pred_fallthru
      _
    %p767 = scmp.le.s32.totalorder 2, %s9
    // Predicated region
    $region37: #{nbs_deeplab_head_forward.15} parent=5 // pred_check
      %p768 = pneg %p767
    $region38: #{nbs_deeplab_head_forward.15} parent=5 // pred_check_branch
      %770 = sbr.rel (%p768) target = $region40
    $region39: #{nbs_deeplab_head_forward.15} parent=5 // pred_region
      %s771 = ssub.s32 %s9, 2
      // Predicated region
      $region41: #{nbs_deeplab_head_forward.15} parent=39 // pred_check
        %p772 = pneg %p127
      $region42: #{nbs_deeplab_head_forward.15} parent=39 // pred_check_branch
        %774 = sbr.rel (%p772) target = $region44
      $region43: #{nbs_deeplab_head_forward.15} parent=39 // pred_region
        %s775 = smul.u32 32, %s21
        %p776 = scmp.lt.s32.totalorder %s20, 1
        %s777 = scalar_select %p776, %s20, 1
        %p778 = scmp.lt.s32.totalorder %s775, 31
        %s779 = scalar_select %p778, %s775, 31
        %s780 = smul.addr %s777, 32
        %s781 = sadd.s32 %s779, %s780
        %s782 = smul.addr %s781, 8
        %s783 = scalar_lea.vmem %s3, %s782
      $region44: #{nbs_deeplab_head_forward.15} parent=39 // pred_fallthru
        _
    $region40: #{nbs_deeplab_head_forward.15} parent=5 // pred_fallthru
      _
  $region6: #{nbs_deeplab_head_forward.15} parent=0 // loop_footer
    %s13 = sadd.s32 1, %s9
  $region7: #{nbs_deeplab_head_forward.15} parent=0 // loop_footer_branch
    %8 = sbr.rel target = $region3
  $region8: #{nbs_deeplab_head_forward.15} parent=0 // loop_exit
    _

</llo_original>
